<compile_context>
chip_gen: v7x
topology: tpu7x:2x2x1
jax: 0.10.0
libtpu: 0.0.40
codegen_flags: <defaults>
</compile_context>

<pallas_src>
import functools
import math

import jax
import jax.numpy as jnp
from jax.experimental import pallas as pl
from jax.experimental.pallas import tpu as pltpu

D_IMG = 1664          # densenet169  features.norm5.num_features
D_TXT = 128           # bert-tiny    hidden_size
D_FC = 512
NUM_CLASSES = 10
CLS_PAD = 128         # lane-dense logits width (sliced to NUM_CLASSES outside)
PATCH = 8
VOCAB = 64


# ---------------------------------------------------------------------------
# Kernel 1: patch-embedding + ReLU + global-average-pool (image backbone stand-in)
#   grid over patch tiles, (B, 1664) f32 accumulator scratch.
# ---------------------------------------------------------------------------
def _patch_pool_kernel(x_ref, w_ref, b_ref, o_ref, acc_ref, *, inv_n):
    p = pl.program_id(0)

    @pl.when(p == 0)
    def _init():
        acc_ref[...] = jnp.zeros_like(acc_ref)

    bsz = x_ref.shape[0]
    w = w_ref[...]                                   # (192, 1664) bf16, resident
    bias = b_ref[...]                                # (1, 1664) f32
    for bi in range(bsz):                            # tiny static batch, unrolled
        xb = x_ref[bi].astype(jnp.bfloat16)          # (tp, 192)
        y = jnp.dot(xb, w, preferred_element_type=jnp.float32) + bias
        y = jnp.maximum(y, 0.0)
        acc_ref[pl.ds(bi, 1), :] += jnp.sum(y, axis=0, keepdims=True)

    @pl.when(p == pl.num_programs(0) - 1)
    def _finalize():
        o_ref[...] = acc_ref[...] * inv_n


def patch_embed_pool(images, w_patch_bf16, b_patch_2d, *, tile=8):
    b, c, h, w = images.shape
    ph, pw = h // PATCH, w // PATCH
    n_patches = ph * pw
    d_patch = c * PATCH * PATCH
    # NCHW -> (B, P, C*PATCH*PATCH) patchification in XLA glue.
    x = images.reshape(b, c, ph, PATCH, pw, PATCH)
    x = x.transpose(0, 2, 4, 1, 3, 5).reshape(b, n_patches, d_patch)

    tp = min(tile, n_patches)
    assert n_patches % tp == 0, (n_patches, tp)

    return pl.pallas_call(
        functools.partial(_patch_pool_kernel, inv_n=1.0 / n_patches),
        out_shape=jax.ShapeDtypeStruct((b, D_IMG), jnp.float32),
        grid_spec=pltpu.PrefetchScalarGridSpec(
            num_scalar_prefetch=0,
            grid=(n_patches // tp,),
            in_specs=[
                pl.BlockSpec((b, tp, d_patch), lambda p: (0, p, 0)),
                pl.BlockSpec((d_patch, D_IMG), lambda p: (0, 0)),   # resident
                pl.BlockSpec((1, D_IMG), lambda p: (0, 0)),         # resident
            ],
            out_specs=pl.BlockSpec((b, D_IMG), lambda p: (0, 0)),   # accumulator
            scratch_shapes=[pltpu.VMEM((b, D_IMG), jnp.float32)],
        ),
        compiler_params=pltpu.CompilerParams(
            dimension_semantics=("arbitrary",)),     # reduction over patches
    )(x, w_patch_bf16, b_patch_2d)


# ---------------------------------------------------------------------------
# Kernel 2: fused text path + head
#   text encoder (linear+tanh) -> batched QKV -> per-sample softmax(QK^T/sqrt d)V
#   -> mean over seq -> text fc ; folded image linear ; split-weight classifier.
# ---------------------------------------------------------------------------
def _text_head_kernel(emb_ref, img_ref,
                      we_ref, be_ref,
                      wq_ref, bq_ref, wk_ref, bk_ref, wv_ref, bv_ref,
                      wtf_ref, btf_ref,
                      wic_ref, bic_ref,
                      wci_ref, wct_ref, bc_ref,
                      o_ref, pool_sc, *, bsz, seq):
    d = emb_ref.shape[-1]
    scale = 1.0 / math.sqrt(d)

    # stand-in text encoder: tanh(emb @ W + b), all (B*S, 128) at once
    h = jnp.tanh(jnp.dot(emb_ref[...], we_ref[...],
                         preferred_element_type=jnp.float32) + be_ref[...])

    # batched QKV projection (single M = B*S matmul per weight)
    q = jnp.dot(h, wq_ref[...], preferred_element_type=jnp.float32) + bq_ref[...]
    k = jnp.dot(h, wk_ref[...], preferred_element_type=jnp.float32) + bk_ref[...]
    v = jnp.dot(h, wv_ref[...], preferred_element_type=jnp.float32) + bv_ref[...]

    # per-sample attention + mean pool (tiny (S,S) work, statically unrolled)
    for bi in range(bsz):
        sl = slice(bi * seq, (bi + 1) * seq)
        qi, ki, vi = q[sl], k[sl], v[sl]
        scores = jax.lax.dot_general(
            qi, ki, (((1,), (1,)), ((), ())),
            preferred_element_type=jnp.float32) * scale          # (S, S)
        m = jnp.max(scores, axis=-1, keepdims=True)
        p = jnp.exp(scores - m)
        p = p / jnp.sum(p, axis=-1, keepdims=True)
        oi = jnp.dot(p, vi, preferred_element_type=jnp.float32)  # (S, 128)
        pool_sc[pl.ds(bi, 1), :] = jnp.mean(oi, axis=0, keepdims=True)

    txt_pooled = pool_sc[...]                                     # (B, 128)
    txt_f = (jnp.dot(txt_pooled, wtf_ref[...],
                     preferred_element_type=jnp.float32) + btf_ref[...])   # (B, 512)

    # image branch: S=1 attention softmax == 1, so SelfAttention+mean+fc folds
    # to a single linear with precomputed W_comb / b_comb.
    img_f = (jnp.dot(img_ref[...].astype(jnp.bfloat16), wic_ref[...],
                     preferred_element_type=jnp.float32) + bic_ref[...])   # (B, 512)

    # classifier(concat([img_f, txt_f])) == img_f @ Wc[:512] + txt_f @ Wc[512:] + b
    logits = (jnp.dot(img_f, wci_ref[...], preferred_element_type=jnp.float32)
              + jnp.dot(txt_f, wct_ref[...], preferred_element_type=jnp.float32)
              + bc_ref[...])
    o_ref[...] = logits                                           # (B, 128) lane-dense


def text_head_fused(emb_flat, img_pooled, prep, *, bsz, seq):
    return pl.pallas_call(
        functools.partial(_text_head_kernel, bsz=bsz, seq=seq),
        out_shape=jax.ShapeDtypeStruct((bsz, CLS_PAD), jnp.float32),
        scratch_shapes=[pltpu.VMEM((bsz, D_TXT), jnp.float32)],
    )(emb_flat, img_pooled,
      prep["w_txt_enc"], prep["b_txt_enc"],
      prep["wq_t"], prep["bq_t"], prep["wk_t"], prep["bk_t"],
      prep["wv_t"], prep["bv_t"],
      prep["w_txt_fc"], prep["b_txt_fc"],
      prep["w_img_comb"], prep["b_img_comb"],
      prep["w_cls_img"], prep["w_cls_txt"], prep["b_cls"])


# ---------------------------------------------------------------------------
# Full forward (mirrors Bensity.forward)
# ---------------------------------------------------------------------------
def bensity_forward(images, input_ids, attention_mask, prep):
    # TODO(synk): frozen pretrained DenseNet169 replaced by a deterministic
    # patch-embedding + ReLU + global-average-pool stand-in (same (B,1664)
    # pooled feature shape; no checkpoint loading in-script).
    img_pooled = patch_embed_pool(images, prep["w_patch"], prep["b_patch"])

    # TODO(synk): frozen pretrained BERT-tiny replaced by a deterministic token
    # embedding + linear + tanh stand-in (hidden_size=128); attention_mask is
    # accepted but unused by the stand-in encoder.
    del attention_mask
    emb = prep["emb_table"][input_ids]                 # (B, S, 128), XLA gather
    b, s, d = emb.shape

    logits_pad = text_head_fused(emb.reshape(b * s, d), img_pooled,
                                 prep, bsz=b, seq=s)   # (B, 128)
    return logits_pad[:, :NUM_CLASSES]                 # (B, num_classes)


# ---------------------------------------------------------------------------
# Deterministic parameter init + one-time kernel-ready preparation (folding,
# bf16 casts, lane padding, bias reshapes)
# ---------------------------------------------------------------------------
def init_params(key):
    def normal(k, shape, scale=0.02):
        return scale * jax.random.normal(k, shape, dtype=jnp.float32)

    ks = jax.random.split(key, 12)
    return {
        # stand-in backbones
        "w_patch": normal(ks[0], (3 * PATCH * PATCH, D_IMG)),
        "b_patch": jnp.zeros((D_IMG,), jnp.float32),
        "emb_table": normal(ks[1], (VOCAB, D_TXT)),
        "w_txt_enc": normal(ks[2], (D_TXT, D_TXT)),
        "b_txt_enc": jnp.zeros((D_TXT,), jnp.float32),
        # image SelfAttention (dim 1664).  wq_i/wk_i/bq_i/bk_i are part of the
        # module but mathematically unused in the forward: the image sequence
        # length is 1, so softmax of the 1x1 score matrix is identically 1.
        "wq_i": normal(ks[3], (D_IMG, D_IMG)),
        "wk_i": normal(ks[4], (D_IMG, D_IMG)),
        "wv_i": normal(ks[5], (D_IMG, D_IMG)),
        "bq_i": jnp.zeros((D_IMG,), jnp.float32),
        "bk_i": jnp.zeros((D_IMG,), jnp.float32),
        "bv_i": jnp.zeros((D_IMG,), jnp.float32),
        # text SelfAttention (dim 128)
        "wq_t": normal(ks[6], (D_TXT, D_TXT)),
        "wk_t": normal(ks[7], (D_TXT, D_TXT)),
        "wv_t": normal(ks[8], (D_TXT, D_TXT)),
        "bq_t": jnp.zeros((D_TXT,), jnp.float32),
        "bk_t": jnp.zeros((D_TXT,), jnp.float32),
        "bv_t": jnp.zeros((D_TXT,), jnp.float32),
        # heads
        "w_img_fc": normal(ks[9], (D_IMG, D_FC)),
        "b_img_fc": jnp.zeros((D_FC,), jnp.float32),
        "w_txt_fc": normal(ks[10], (D_TXT, D_FC)),
        "b_txt_fc": jnp.zeros((D_FC,), jnp.float32),
        "w_cls": normal(ks[11], (2 * D_FC, NUM_CLASSES)),
        "b_cls": jnp.zeros((NUM_CLASSES,), jnp.float32),
    }


def prepare_params(params):
    # Exact fold of the image branch:
    #   img_pooled @ Wv + bv  then  @ W_img_fc + b_img_fc
    #   == img_pooled @ (Wv @ W_img_fc) + (bv @ W_img_fc + b_img_fc)
    w_img_comb = jnp.dot(params["wv_i"], params["w_img_fc"]).astype(jnp.bfloat16)
    b_img_comb = (jnp.dot(params["bv_i"].reshape(1, -1), params["w_img_fc"])
                  + params["b_img_fc"].reshape(1, -1))             # (1, 512) f32

    # Lane-dense classifier: pad N from NUM_CLASSES to 128 with zero columns.
    w_cls_pad = jnp.zeros((2 * D_FC, CLS_PAD), jnp.float32)
    w_cls_pad = w_cls_pad.at[:, :NUM_CLASSES].set(params["w_cls"])
    b_cls_pad = jnp.zeros((1, CLS_PAD), jnp.float32)
    b_cls_pad = b_cls_pad.at[:, :NUM_CLASSES].set(params["b_cls"].reshape(1, -1))

    return {
        # image backbone stand-in (bf16 weight halves HBM traffic, f32 acc)
        "w_patch": params["w_patch"].astype(jnp.bfloat16),
        "b_patch": params["b_patch"].reshape(1, D_IMG),
        # text path (small 128-wide weights stay f32)
        "emb_table": params["emb_table"],
        "w_txt_enc": params["w_txt_enc"],
        "b_txt_enc": params["b_txt_enc"].reshape(1, D_TXT),
        "wq_t": params["wq_t"], "bq_t": params["bq_t"].reshape(1, D_TXT),
        "wk_t": params["wk_t"], "bk_t": params["bk_t"].reshape(1, D_TXT),
        "wv_t": params["wv_t"], "bv_t": params["bv_t"].reshape(1, D_TXT),
        "w_txt_fc": params["w_txt_fc"],
        "b_txt_fc": params["b_txt_fc"].reshape(1, D_FC),
        # folded image linear + split classifier
        "w_img_comb": w_img_comb,           # (1664, 512) bf16
        "b_img_comb": b_img_comb,           # (1, 512)    f32
        "w_cls_img": w_cls_pad[:D_FC],      # (512, 128)
        "w_cls_txt": w_cls_pad[D_FC:],      # (512, 128)
        "b_cls": b_cls_pad,                 # (1, 128)
    }


if __name__ == "__main__":
    root = jax.random.PRNGKey(0)
    k_params, k_img, k_ids = jax.random.split(root, 3)
    params = init_params(k_params)
    prep = prepare_params(params)            # one-time fold / cast / pad

    B, S = 2, 8
    images = jax.random.normal(k_img, (B, 3, 32, 32), dtype=jnp.float32)
    input_ids = jax.random.randint(k_ids, (B, S), 0, VOCAB, dtype=jnp.int32)
    attention_mask = jnp.ones((B, S), dtype=jnp.int32)

    logits = jax.jit(bensity_forward)(images, input_ids, attention_mask, prep)
    jax.block_until_ready(logits)

    assert logits.shape == (B, NUM_CLASSES), logits.shape
    assert bool(jnp.all(jnp.isfinite(logits)))
    print("KERNEL_OK")
</pallas_src>

<mosaic_0001>
module attributes {stable_mosaic.version = 11 : i64} {
  func.func @_patch_pool_kernel(%arg0: i32, %arg1: memref<2x8x192xf32, #tpu.memory_space<vmem>>, %arg2: memref<192x1664xbf16, #tpu.memory_space<vmem>>, %arg3: memref<1x1664xf32, #tpu.memory_space<vmem>>, %arg4: memref<2x1664xf32, #tpu.memory_space<vmem>>, %arg5: memref<2x1664xf32, #tpu.memory_space<vmem>>) attributes {dimension_semantics = [#tpu.dimension_semantics<arbitrary>], iteration_bounds = array<i64: 2>, scalar_prefetch = 0 : i64, scratch_operands = 1 : i64, tpu.core_type = #tpu.core_type<tc>, window_params = [{transform_indices = @transform_0, window_bounds = array<i64: 2, 8, 192>}, {pipeline_mode = #tpu.pipeline_mode<synchronous>, transform_indices = @transform_1, window_bounds = array<i64: 192, 1664>}, {pipeline_mode = #tpu.pipeline_mode<synchronous>, transform_indices = @transform_2, window_bounds = array<i64: 1, 1664>}, {pipeline_mode = #tpu.pipeline_mode<synchronous>, transform_indices = @transform_3, window_bounds = array<i64: 2, 1664>}]} {
    %c0_i32 = arith.constant 0 : i32
    %0 = arith.cmpi eq, %arg0, %c0_i32 : i32
    %1 = arith.extui %0 : i1 to i32
    %c0_i32_0 = arith.constant 0 : i32
    %2 = arith.cmpi ne, %1, %c0_i32_0 : i32
    scf.if %2 {
      %cst_23 = arith.constant 0.000000e+00 : f32
      %34 = vector.broadcast %cst_23 : f32 to vector<2x1664xf32>
      %c0_24 = arith.constant 0 : index
      %c0_25 = arith.constant 0 : index
      %35 = vector.load %arg5[%c0_24, %c0_25] : memref<2x1664xf32, #tpu.memory_space<vmem>>, vector<2x1664xf32>
      tpu.vector_store %arg5[%c0_24, %c0_25], %34 {strides = array<i32>} : memref<2x1664xf32, #tpu.memory_space<vmem>>, vector<2x1664xf32>,
    } else {
    }
    %c0 = arith.constant 0 : index
    %c0_1 = arith.constant 0 : index
    %3 = vector.load %arg2[%c0, %c0_1] : memref<192x1664xbf16, #tpu.memory_space<vmem>>, vector<192x1664xbf16>
    %c0_2 = arith.constant 0 : index
    %c0_3 = arith.constant 0 : index
    %4 = vector.load %arg3[%c0_2, %c0_3] : memref<1x1664xf32, #tpu.memory_space<vmem>>, vector<1x1664xf32>
    %c0_4 = arith.constant 0 : index
    %c0_5 = arith.constant 0 : index
    %c0_6 = arith.constant 0 : index
    %5 = vector.load %arg1[%c0_4, %c0_5, %c0_6] : memref<2x8x192xf32, #tpu.memory_space<vmem>>, vector<1x8x192xf32>
    %6 = vector.shape_cast %5 : vector<1x8x192xf32> to vector<8x192xf32>
    %7 = arith.truncf %6 : vector<8x192xf32> to vector<8x192xbf16>
    %cst = arith.constant dense<0.000000e+00> : vector<8x1664xf32>
    %8 = tpu.matmul %7, %3, %cst {dimension_numbers = #tpu.dot_dimension_numbers<[1], [0], [0], [1], [0, 0, 1, 1], [], []>} : vector<8x192xbf16>, vector<192x1664xbf16>, vector<8x1664xf32> -> vector<8x1664xf32>
    %9 = vector.broadcast %4 : vector<1x1664xf32> to vector<8x1664xf32>
    %10 = arith.addf %8, %9 : vector<8x1664xf32>
    %cst_7 = arith.constant 0.000000e+00 : f32
    %11 = vector.broadcast %cst_7 : f32 to vector<8x1664xf32>
    %12 = arith.maximumf %10, %11 : vector<8x1664xf32>
    %c0_8 = arith.constant 0 : index
    %c0_9 = arith.constant 0 : index
    %13 = vector.load %arg5[%c0_8, %c0_9] : memref<2x1664xf32, #tpu.memory_space<vmem>>, vector<1x1664xf32>
    %cst_10 = arith.constant dense<0.000000e+00> : vector<1664xf32>
    %14 = vector.multi_reduction <add>, %12, %cst_10 [0] : vector<8x1664xf32> to vector<1664xf32>
    %15 = vector.shape_cast %14 : vector<1664xf32> to vector<1x1664xf32>
    %16 = arith.addf %13, %15 : vector<1x1664xf32>
    %c0_11 = arith.constant 0 : index
    %c0_12 = arith.constant 0 : index
    %17 = vector.load %arg5[%c0_11, %c0_12] : memref<2x1664xf32, #tpu.memory_space<vmem>>, vector<1x1664xf32>
    tpu.vector_store %arg5[%c0_11, %c0_12], %16 {strides = array<i32>} : memref<2x1664xf32, #tpu.memory_space<vmem>>, vector<1x1664xf32>,
    %c1 = arith.constant 1 : index
    %c0_13 = arith.constant 0 : index
    %c0_14 = arith.constant 0 : index
    %18 = vector.load %arg1[%c1, %c0_13, %c0_14] : memref<2x8x192xf32, #tpu.memory_space<vmem>>, vector<1x8x192xf32>
    %19 = vector.shape_cast %18 : vector<1x8x192xf32> to vector<8x192xf32>
    %20 = arith.truncf %19 : vector<8x192xf32> to vector<8x192xbf16>
    %cst_15 = arith.constant dense<0.000000e+00> : vector<8x1664xf32>
    %21 = tpu.matmul %20, %3, %cst_15 {dimension_numbers = #tpu.dot_dimension_numbers<[1], [0], [0], [1], [0, 0, 1, 1], [], []>} : vector<8x192xbf16>, vector<192x1664xbf16>, vector<8x1664xf32> -> vector<8x1664xf32>
    %22 = vector.broadcast %4 : vector<1x1664xf32> to vector<8x1664xf32>
    %23 = arith.addf %21, %22 : vector<8x1664xf32>
    %cst_16 = arith.constant 0.000000e+00 : f32
    %24 = vector.broadcast %cst_16 : f32 to vector<8x1664xf32>
    %25 = arith.maximumf %23, %24 : vector<8x1664xf32>
    %c1_17 = arith.constant 1 : index
    %c0_18 = arith.constant 0 : index
    %26 = vector.load %arg5[%c1_17, %c0_18] : memref<2x1664xf32, #tpu.memory_space<vmem>>, vector<1x1664xf32>
    %cst_19 = arith.constant dense<0.000000e+00> : vector<1664xf32>
    %27 = vector.multi_reduction <add>, %25, %cst_19 [0] : vector<8x1664xf32> to vector<1664xf32>
    %28 = vector.shape_cast %27 : vector<1664xf32> to vector<1x1664xf32>
    %29 = arith.addf %26, %28 : vector<1x1664xf32>
    %c1_20 = arith.constant 1 : index
    %c0_21 = arith.constant 0 : index
    %30 = vector.load %arg5[%c1_20, %c0_21] : memref<2x1664xf32, #tpu.memory_space<vmem>>, vector<1x1664xf32>
    tpu.vector_store %arg5[%c1_20, %c0_21], %29 {strides = array<i32>} : memref<2x1664xf32, #tpu.memory_space<vmem>>, vector<1x1664xf32>,
    %c1_i32 = arith.constant 1 : i32
    %31 = arith.cmpi eq, %arg0, %c1_i32 : i32
    %32 = arith.extui %31 : i1 to i32
    %c0_i32_22 = arith.constant 0 : i32
    %33 = arith.cmpi ne, %32, %c0_i32_22 : i32
    scf.if %33 {
      %c0_23 = arith.constant 0 : index
      %c0_24 = arith.constant 0 : index
      %34 = vector.load %arg5[%c0_23, %c0_24] : memref<2x1664xf32, #tpu.memory_space<vmem>>, vector<2x1664xf32>
      %cst_25 = arith.constant 6.250000e-02 : f32
      %35 = vector.broadcast %cst_25 : f32 to vector<2x1664xf32>
      %36 = arith.mulf %34, %35 : vector<2x1664xf32>
      %c0_26 = arith.constant 0 : index
      %c0_27 = arith.constant 0 : index
      %37 = vector.load %arg4[%c0_26, %c0_27] : memref<2x1664xf32, #tpu.memory_space<vmem>>, vector<2x1664xf32>
      tpu.vector_store %arg4[%c0_26, %c0_27], %36 {strides = array<i32>} : memref<2x1664xf32, #tpu.memory_space<vmem>>, vector<2x1664xf32>,
    } else {
    }
    return
  }
  func.func @transform_0(%arg0: i32) -> (i32, i32, i32) {
    %c0_i32 = arith.constant 0 : i32
    %c0_i32_0 = arith.constant 0 : i32
    %c0_i32_1 = arith.constant 0 : i32
    return %c0_i32, %arg0, %c0_i32_0 : i32, i32, i32
  }
  func.func @transform_1(%arg0: i32) -> (i32, i32) {
    %c0_i32 = arith.constant 0 : i32
    %c0_i32_0 = arith.constant 0 : i32
    %c0_i32_1 = arith.constant 0 : i32
    return %c0_i32, %c0_i32_0 : i32, i32
  }
  func.func @transform_2(%arg0: i32) -> (i32, i32) {
    %c0_i32 = arith.constant 0 : i32
    %c0_i32_0 = arith.constant 0 : i32
    %c0_i32_1 = arith.constant 0 : i32
    return %c0_i32, %c0_i32_0 : i32, i32
  }
  func.func @transform_3(%arg0: i32) -> (i32, i32) {
    %c0_i32 = arith.constant 0 : i32
    %c0_i32_0 = arith.constant 0 : i32
    %c0_i32_1 = arith.constant 0 : i32
    return %c0_i32, %c0_i32_0 : i32, i32
  }
}

module attributes {stable_mosaic.version = 11 : i64} {
  func.func @_text_head_kernel(%arg0: memref<16x128xf32, #tpu.memory_space<vmem>>, %arg1: memref<2x1664xf32, #tpu.memory_space<vmem>>, %arg2: memref<128x128xf32, #tpu.memory_space<vmem>>, %arg3: memref<1x128xf32, #tpu.memory_space<vmem>>, %arg4: memref<128x128xf32, #tpu.memory_space<vmem>>, %arg5: memref<1x128xf32, #tpu.memory_space<vmem>>, %arg6: memref<128x128xf32, #tpu.memory_space<vmem>>, %arg7: memref<1x128xf32, #tpu.memory_space<vmem>>, %arg8: memref<128x128xf32, #tpu.memory_space<vmem>>, %arg9: memref<1x128xf32, #tpu.memory_space<vmem>>, %arg10: memref<128x512xf32, #tpu.memory_space<vmem>>, %arg11: memref<1x512xf32, #tpu.memory_space<vmem>>, %arg12: memref<1664x512xbf16, #tpu.memory_space<vmem>>, %arg13: memref<1x512xf32, #tpu.memory_space<vmem>>, %arg14: memref<512x128xf32, #tpu.memory_space<vmem>>, %arg15: memref<512x128xf32, #tpu.memory_space<vmem>>, %arg16: memref<1x128xf32, #tpu.memory_space<vmem>>, %arg17: memref<2x128xf32, #tpu.memory_space<vmem>>, %arg18: memref<2x128xf32, #tpu.memory_space<vmem>>) attributes {dimension_semantics = [], scalar_prefetch = 0 : i64, scratch_operands = 1 : i64, tpu.core_type = #tpu.core_type<tc>} {
    %c0 = arith.constant 0 : index
    %c0_0 = arith.constant 0 : index
    %0 = vector.load %arg0[%c0, %c0_0] : memref<16x128xf32, #tpu.memory_space<vmem>>, vector<16x128xf32>
    %c0_1 = arith.constant 0 : index
    %c0_2 = arith.constant 0 : index
    %1 = vector.load %arg2[%c0_1, %c0_2] : memref<128x128xf32, #tpu.memory_space<vmem>>, vector<128x128xf32>
    %cst = arith.constant dense<0.000000e+00> : vector<16x128xf32>
    %2 = tpu.matmul %0, %1, %cst {dimension_numbers = #tpu.dot_dimension_numbers<[1], [0], [0], [1], [0, 0, 1, 1], [], []>} : vector<16x128xf32>, vector<128x128xf32>, vector<16x128xf32> -> vector<16x128xf32>
    %c0_3 = arith.constant 0 : index
    %c0_4 = arith.constant 0 : index
    %3 = vector.load %arg3[%c0_3, %c0_4] : memref<1x128xf32, #tpu.memory_space<vmem>>, vector<1x128xf32>
    %4 = vector.broadcast %3 : vector<1x128xf32> to vector<16x128xf32>
    %5 = arith.addf %2, %4 : vector<16x128xf32>
    %6 = math.tanh %5 : vector<16x128xf32>
    %c0_5 = arith.constant 0 : index
    %c0_6 = arith.constant 0 : index
    %7 = vector.load %arg4[%c0_5, %c0_6] : memref<128x128xf32, #tpu.memory_space<vmem>>, vector<128x128xf32>
    %cst_7 = arith.constant dense<0.000000e+00> : vector<16x128xf32>
    %8 = tpu.matmul %6, %7, %cst_7 {dimension_numbers = #tpu.dot_dimension_numbers<[1], [0], [0], [1], [0, 0, 1, 1], [], []>} : vector<16x128xf32>, vector<128x128xf32>, vector<16x128xf32> -> vector<16x128xf32>
    %c0_8 = arith.constant 0 : index
    %c0_9 = arith.constant 0 : index
    %9 = vector.load %arg5[%c0_8, %c0_9] : memref<1x128xf32, #tpu.memory_space<vmem>>, vector<1x128xf32>
    %10 = vector.broadcast %9 : vector<1x128xf32> to vector<16x128xf32>
    %11 = arith.addf %8, %10 : vector<16x128xf32>
    %c0_10 = arith.constant 0 : index
    %c0_11 = arith.constant 0 : index
    %12 = vector.load %arg6[%c0_10, %c0_11] : memref<128x128xf32, #tpu.memory_space<vmem>>, vector<128x128xf32>
    %cst_12 = arith.constant dense<0.000000e+00> : vector<16x128xf32>
    %13 = tpu.matmul %6, %12, %cst_12 {dimension_numbers = #tpu.dot_dimension_numbers<[1], [0], [0], [1], [0, 0, 1, 1], [], []>} : vector<16x128xf32>, vector<128x128xf32>, vector<16x128xf32> -> vector<16x128xf32>
    %c0_13 = arith.constant 0 : index
    %c0_14 = arith.constant 0 : index
    %14 = vector.load %arg7[%c0_13, %c0_14] : memref<1x128xf32, #tpu.memory_space<vmem>>, vector<1x128xf32>
    %15 = vector.broadcast %14 : vector<1x128xf32> to vector<16x128xf32>
    %16 = arith.addf %13, %15 : vector<16x128xf32>
    %c0_15 = arith.constant 0 : index
    %c0_16 = arith.constant 0 : index
    %17 = vector.load %arg8[%c0_15, %c0_16] : memref<128x128xf32, #tpu.memory_space<vmem>>, vector<128x128xf32>
    %cst_17 = arith.constant dense<0.000000e+00> : vector<16x128xf32>
    %18 = tpu.matmul %6, %17, %cst_17 {dimension_numbers = #tpu.dot_dimension_numbers<[1], [0], [0], [1], [0, 0, 1, 1], [], []>} : vector<16x128xf32>, vector<128x128xf32>, vector<16x128xf32> -> vector<16x128xf32>
    %c0_18 = arith.constant 0 : index
    %c0_19 = arith.constant 0 : index
    %19 = vector.load %arg9[%c0_18, %c0_19] : memref<1x128xf32, #tpu.memory_space<vmem>>, vector<1x128xf32>
    %20 = vector.broadcast %19 : vector<1x128xf32> to vector<16x128xf32>
    %21 = arith.addf %18, %20 : vector<16x128xf32>
    %22 = vector.extract_strided_slice %11 {offsets = [0, 0], sizes = [8, 128], strides = [1, 1]} : vector<16x128xf32> to vector<8x128xf32>
    %23 = vector.extract_strided_slice %16 {offsets = [0, 0], sizes = [8, 128], strides = [1, 1]} : vector<16x128xf32> to vector<8x128xf32>
    %24 = vector.extract_strided_slice %21 {offsets = [0, 0], sizes = [8, 128], strides = [1, 1]} : vector<16x128xf32> to vector<8x128xf32>
    %cst_20 = arith.constant dense<0.000000e+00> : vector<8x8xf32>
    %25 = tpu.matmul %22, %23, %cst_20 {dimension_numbers = #tpu.dot_dimension_numbers<[1], [1], [0], [0], [0, 0, 1, 0], [], []>} : vector<8x128xf32>, vector<8x128xf32>, vector<8x8xf32> -> vector<8x8xf32>
    %cst_21 = arith.constant 0.0883883461 : f32
    %26 = vector.broadcast %cst_21 : f32 to vector<8x8xf32>
    %27 = arith.mulf %25, %26 : vector<8x8xf32>
    %cst_22 = arith.constant dense<0xFF800000> : vector<8xf32>
    %28 = vector.multi_reduction <maximumf>, %27, %cst_22 [1] : vector<8x8xf32> to vector<8xf32>
    %29 = vector.shape_cast %28 : vector<8xf32> to vector<8x1xf32>
    %30 = vector.broadcast %29 : vector<8x1xf32> to vector<8x8xf32>
    %31 = arith.subf %27, %30 : vector<8x8xf32>
    %32 = math.exp %31 : vector<8x8xf32>
    %cst_23 = arith.constant dense<0.000000e+00> : vector<8xf32>
    %33 = vector.multi_reduction <add>, %32, %cst_23 [1] : vector<8x8xf32> to vector<8xf32>
    %34 = vector.shape_cast %33 : vector<8xf32> to vector<8x1xf32>
    %35 = vector.broadcast %34 : vector<8x1xf32> to vector<8x8xf32>
    %36 = arith.divf %32, %35 : vector<8x8xf32>
    %cst_24 = arith.constant dense<0.000000e+00> : vector<8x128xf32>
    %37 = tpu.matmul %36, %24, %cst_24 {dimension_numbers = #tpu.dot_dimension_numbers<[1], [0], [0], [1], [0, 0, 1, 1], [], []>} : vector<8x8xf32>, vector<8x128xf32>, vector<8x128xf32> -> vector<8x128xf32>
    %cst_25 = arith.constant dense<0.000000e+00> : vector<128xf32>
    %38 = vector.multi_reduction <add>, %37, %cst_25 [0] : vector<8x128xf32> to vector<128xf32>
    %39 = vector.shape_cast %38 : vector<128xf32> to vector<1x128xf32>
    %cst_26 = arith.constant 8.000000e+00 : f32
    %40 = vector.broadcast %cst_26 : f32 to vector<1x128xf32>
    %41 = arith.divf %39, %40 : vector<1x128xf32>
    %c0_27 = arith.constant 0 : index
    %c0_28 = arith.constant 0 : index
    %42 = vector.load %arg18[%c0_27, %c0_28] : memref<2x128xf32, #tpu.memory_space<vmem>>, vector<1x128xf32>
    tpu.vector_store %arg18[%c0_27, %c0_28], %41 {strides = array<i32>} : memref<2x128xf32, #tpu.memory_space<vmem>>, vector<1x128xf32>,
    %43 = vector.extract_strided_slice %11 {offsets = [8, 0], sizes = [8, 128], strides = [1, 1]} : vector<16x128xf32> to vector<8x128xf32>
    %44 = vector.extract_strided_slice %16 {offsets = [8, 0], sizes = [8, 128], strides = [1, 1]} : vector<16x128xf32> to vector<8x128xf32>
    %45 = vector.extract_strided_slice %21 {offsets = [8, 0], sizes = [8, 128], strides = [1, 1]} : vector<16x128xf32> to vector<8x128xf32>
    %cst_29 = arith.constant dense<0.000000e+00> : vector<8x8xf32>
    %46 = tpu.matmul %43, %44, %cst_29 {dimension_numbers = #tpu.dot_dimension_numbers<[1], [1], [0], [0], [0, 0, 1, 0], [], []>} : vector<8x128xf32>, vector<8x128xf32>, vector<8x8xf32> -> vector<8x8xf32>
    %cst_30 = arith.constant 0.0883883461 : f32
    %47 = vector.broadcast %cst_30 : f32 to vector<8x8xf32>
    %48 = arith.mulf %46, %47 : vector<8x8xf32>
    %cst_31 = arith.constant dense<0xFF800000> : vector<8xf32>
    %49 = vector.multi_reduction <maximumf>, %48, %cst_31 [1] : vector<8x8xf32> to vector<8xf32>
    %50 = vector.shape_cast %49 : vector<8xf32> to vector<8x1xf32>
    %51 = vector.broadcast %50 : vector<8x1xf32> to vector<8x8xf32>
    %52 = arith.subf %48, %51 : vector<8x8xf32>
    %53 = math.exp %52 : vector<8x8xf32>
    %cst_32 = arith.constant dense<0.000000e+00> : vector<8xf32>
    %54 = vector.multi_reduction <add>, %53, %cst_32 [1] : vector<8x8xf32> to vector<8xf32>
    %55 = vector.shape_cast %54 : vector<8xf32> to vector<8x1xf32>
    %56 = vector.broadcast %55 : vector<8x1xf32> to vector<8x8xf32>
    %57 = arith.divf %53, %56 : vector<8x8xf32>
    %cst_33 = arith.constant dense<0.000000e+00> : vector<8x128xf32>
    %58 = tpu.matmul %57, %45, %cst_33 {dimension_numbers = #tpu.dot_dimension_numbers<[1], [0], [0], [1], [0, 0, 1, 1], [], []>} : vector<8x8xf32>, vector<8x128xf32>, vector<8x128xf32> -> vector<8x128xf32>
    %cst_34 = arith.constant dense<0.000000e+00> : vector<128xf32>
    %59 = vector.multi_reduction <add>, %58, %cst_34 [0] : vector<8x128xf32> to vector<128xf32>
    %60 = vector.shape_cast %59 : vector<128xf32> to vector<1x128xf32>
    %cst_35 = arith.constant 8.000000e+00 : f32
    %61 = vector.broadcast %cst_35 : f32 to vector<1x128xf32>
    %62 = arith.divf %60, %61 : vector<1x128xf32>
    %c1 = arith.constant 1 : index
    %c0_36 = arith.constant 0 : index
    %63 = vector.load %arg18[%c1, %c0_36] : memref<2x128xf32, #tpu.memory_space<vmem>>, vector<1x128xf32>
    tpu.vector_store %arg18[%c1, %c0_36], %62 {strides = array<i32>} : memref<2x128xf32, #tpu.memory_space<vmem>>, vector<1x128xf32>,
    %c0_37 = arith.constant 0 : index
    %c0_38 = arith.constant 0 : index
    %64 = vector.load %arg18[%c0_37, %c0_38] : memref<2x128xf32, #tpu.memory_space<vmem>>, vector<2x128xf32>
    %c0_39 = arith.constant 0 : index
    %c0_40 = arith.constant 0 : index
    %65 = vector.load %arg10[%c0_39, %c0_40] : memref<128x512xf32, #tpu.memory_space<vmem>>, vector<128x512xf32>
    %cst_41 = arith.constant dense<0.000000e+00> : vector<2x512xf32>
    %66 = tpu.matmul %64, %65, %cst_41 {dimension_numbers = #tpu.dot_dimension_numbers<[1], [0], [0], [1], [0, 0, 1, 1], [], []>} : vector<2x128xf32>, vector<128x512xf32>, vector<2x512xf32> -> vector<2x512xf32>
    %c0_42 = arith.constant 0 : index
    %c0_43 = arith.constant 0 : index
    %67 = vector.load %arg11[%c0_42, %c0_43] : memref<1x512xf32, #tpu.memory_space<vmem>>, vector<1x512xf32>
    %68 = vector.broadcast %67 : vector<1x512xf32> to vector<2x512xf32>
    %69 = arith.addf %66, %68 : vector<2x512xf32>
    %c0_44 = arith.constant 0 : index
    %c0_45 = arith.constant 0 : index
    %70 = vector.load %arg1[%c0_44, %c0_45] : memref<2x1664xf32, #tpu.memory_space<vmem>>, vector<2x1664xf32>
    %71 = arith.truncf %70 : vector<2x1664xf32> to vector<2x1664xbf16>
    %c0_46 = arith.constant 0 : index
    %c0_47 = arith.constant 0 : index
    %72 = vector.load %arg12[%c0_46, %c0_47] : memref<1664x512xbf16, #tpu.memory_space<vmem>>, vector<1664x512xbf16>
    %cst_48 = arith.constant dense<0.000000e+00> : vector<2x512xf32>
    %73 = tpu.matmul %71, %72, %cst_48 {dimension_numbers = #tpu.dot_dimension_numbers<[1], [0], [0], [1], [0, 0, 1, 1], [], []>} : vector<2x1664xbf16>, vector<1664x512xbf16>, vector<2x512xf32> -> vector<2x512xf32>
    %c0_49 = arith.constant 0 : index
    %c0_50 = arith.constant 0 : index
    %74 = vector.load %arg13[%c0_49, %c0_50] : memref<1x512xf32, #tpu.memory_space<vmem>>, vector<1x512xf32>
    %75 = vector.broadcast %74 : vector<1x512xf32> to vector<2x512xf32>
    %76 = arith.addf %73, %75 : vector<2x512xf32>
    %c0_51 = arith.constant 0 : index
    %c0_52 = arith.constant 0 : index
    %77 = vector.load %arg14[%c0_51, %c0_52] : memref<512x128xf32, #tpu.memory_space<vmem>>, vector<512x128xf32>
    %cst_53 = arith.constant dense<0.000000e+00> : vector<2x128xf32>
    %78 = tpu.matmul %76, %77, %cst_53 {dimension_numbers = #tpu.dot_dimension_numbers<[1], [0], [0], [1], [0, 0, 1, 1], [], []>} : vector<2x512xf32>, vector<512x128xf32>, vector<2x128xf32> -> vector<2x128xf32>
    %c0_54 = arith.constant 0 : index
    %c0_55 = arith.constant 0 : index
    %79 = vector.load %arg15[%c0_54, %c0_55] : memref<512x128xf32, #tpu.memory_space<vmem>>, vector<512x128xf32>
    %cst_56 = arith.constant dense<0.000000e+00> : vector<2x128xf32>
    %80 = tpu.matmul %69, %79, %cst_56 {dimension_numbers = #tpu.dot_dimension_numbers<[1], [0], [0], [1], [0, 0, 1, 1], [], []>} : vector<2x512xf32>, vector<512x128xf32>, vector<2x128xf32> -> vector<2x128xf32>
    %81 = arith.addf %78, %80 : vector<2x128xf32>
    %c0_57 = arith.constant 0 : index
    %c0_58 = arith.constant 0 : index
    %82 = vector.load %arg16[%c0_57, %c0_58] : memref<1x128xf32, #tpu.memory_space<vmem>>, vector<1x128xf32>
    %83 = vector.broadcast %82 : vector<1x128xf32> to vector<2x128xf32>
    %84 = arith.addf %81, %83 : vector<2x128xf32>
    %c0_59 = arith.constant 0 : index
    %c0_60 = arith.constant 0 : index
    %85 = vector.load %arg17[%c0_59, %c0_60] : memref<2x128xf32, #tpu.memory_space<vmem>>, vector<2x128xf32>
    tpu.vector_store %arg17[%c0_59, %c0_60], %84 {strides = array<i32>} : memref<2x128xf32, #tpu.memory_space<vmem>>, vector<2x128xf32>,
    return
  }
}

</mosaic_0001>

<llo_original>
// kernel: bensity_forward.2
$region0: #{bensity_forward.2}
  #allocation0 [shape = 'u32[]', space=smem, size = 0x4, offset = 0x4, fixed_abs, tag = 'smem constant byte address 0x4 - core index']
  #allocation1 [shape = 'u32[144,128]{1,0:T(1,128)}', space=vmem, size = 0x12000, scoped, tag = 'internal scratch']
  #allocation2 [shape = 'f32[2,1664]{1,0:T(2,128)}', space=vmem, size = 0x3400, scoped, tag = 'scratch operand']
  %s0 = inlined_call_operand.vmem [shape: f32[2,16,192], index: 0, kind: input, shape index: {}]
  %s1 = inlined_call_operand.vmem [shape: bf16[192,1664], index: 1, kind: input, shape index: {}]
  %s2 = inlined_call_operand.vmem [shape: f32[1,1664], index: 2, kind: input, shape index: {}]
  %s3 = inlined_call_operand.vmem [shape: f32[2,1664], index: 3, kind: output, shape index: {}]
  %s4 = sld [smem:[#allocation0]]
  $region76: #{bensity_forward.2} parent=0
    _
  %s6 = ssub.s32 1, %s4
  %s7 = scalar_select 0, %s6, %s4
  $region1: #{bensity_forward.2} parent=0
    #allocation3 [shape = 'u8[32768]{0}', space=vmem, size = 0x8000, scoped, tag = 'input window, operand 0']
    loop: start=0, step=1, limit=4
    $region2: #{bensity_forward.2} parent=1 // loop_pre_header
      _
    $region3: #{bensity_forward.2} parent=1 // loop_header
      %s9 = sphi 0, %s13
      %p10 = scmp.ge.s32.totalorder %s9, 4
      %s19 = sphi 0, %s21
      %s22 = sphi 0, %s19
      %s23 = sphi 0, %s22
      %s39 = sphi 0, %s23
      %s43 = sphi 0, %s43
      %s45 = sphi 0, %s43
      %s46 = sphi 0, %s45
      %s60 = sphi 0, %s46
      %s64 = sphi 0, %s64
      %s66 = sphi 0, %s64
      %s67 = sphi 0, %s66
      %s81 = sphi 0, %s67
      %s85 = sphi 0, %s85
      %s87 = sphi 0, %s85
      %s88 = sphi 0, %s87
      %s102 = sphi 0, %s88
    $region4: #{bensity_forward.2} parent=1 // loop_header_branch
      %12 = sbr.rel (%p10) target = $region8
    $region5: #{bensity_forward.2} parent=1 // loop_body
      %s14 = ssub.s32 %s9, 1
      %s15 = ssub.s32 %s9, 2
      %s16 = sadd.s32 %s9, 1
      %s17 = ssub.s32 %s9, %s16
      %p18 = scmp.eq.s32.totalorder %s17, 0
      %s20 = sadd.s32 %s19, 1
      %s21 = scalar_select %p18, %s19, %s20
      %p24 = pneg %p18
      %p25 = scmp.eq.s32.totalorder %s9, 1
      %p26 = por %p24, %p25
      %p27 = scmp.ne.s32.totalorder %s19, %s22
      %p28 = scmp.eq.s32.totalorder %s9, 0
      %p29 = por %p27, %p28
      %p30 = scmp.ne.s32.totalorder %s19, %s22
      %p31 = scmp.eq.s32.totalorder %s14, 1
      %p32 = por %p30, %p31
      %p33 = scmp.ne.s32.totalorder %s22, %s23
      %p34 = scmp.eq.s32.totalorder %s14, 0
      %p35 = por %p33, %p34
      %p36 = scmp.ne.s32.totalorder %s22, %s23
      %p37 = scmp.eq.s32.totalorder %s15, 1
      %p38 = por %p36, %p37
      %p40 = scmp.ne.s32.totalorder %s23, %s39
      %p41 = scmp.eq.s32.totalorder %s15, 0
      %p42 = por %p40, %p41
      %s44 = sadd.s32 %s43, 1
      %p47 = scmp.eq.s32.totalorder %s9, 1
      %p48 = scmp.ne.s32.totalorder %s43, %s45
      %p49 = scmp.eq.s32.totalorder %s9, 0
      %p50 = por %p48, %p49
      %p51 = scmp.ne.s32.totalorder %s43, %s45
      %p52 = scmp.eq.s32.totalorder %s14, 1
      %p53 = por %p51, %p52
      %p54 = scmp.ne.s32.totalorder %s45, %s46
      %p55 = scmp.eq.s32.totalorder %s14, 0
      %p56 = por %p54, %p55
      %p57 = scmp.ne.s32.totalorder %s45, %s46
      %p58 = scmp.eq.s32.totalorder %s15, 1
      %p59 = por %p57, %p58
      %p61 = scmp.ne.s32.totalorder %s46, %s60
      %p62 = scmp.eq.s32.totalorder %s15, 0
      %p63 = por %p61, %p62
      %s65 = sadd.s32 %s64, 1
      %p68 = scmp.eq.s32.totalorder %s9, 1
      %p69 = scmp.ne.s32.totalorder %s64, %s66
      %p70 = scmp.eq.s32.totalorder %s9, 0
      %p71 = por %p69, %p70
      %p72 = scmp.ne.s32.totalorder %s64, %s66
      %p73 = scmp.eq.s32.totalorder %s14, 1
      %p74 = por %p72, %p73
      %p75 = scmp.ne.s32.totalorder %s66, %s67
      %p76 = scmp.eq.s32.totalorder %s14, 0
      %p77 = por %p75, %p76
      %p78 = scmp.ne.s32.totalorder %s66, %s67
      %p79 = scmp.eq.s32.totalorder %s15, 1
      %p80 = por %p78, %p79
      %p82 = scmp.ne.s32.totalorder %s67, %s81
      %p83 = scmp.eq.s32.totalorder %s15, 0
      %p84 = por %p82, %p83
      %s86 = sadd.s32 %s85, 1
      %p89 = scmp.eq.s32.totalorder %s9, 1
      %p90 = scmp.ne.s32.totalorder %s85, %s87
      %p91 = scmp.eq.s32.totalorder %s9, 0
      %p92 = por %p90, %p91
      %p93 = scmp.ne.s32.totalorder %s85, %s87
      %p94 = scmp.eq.s32.totalorder %s14, 1
      %p95 = por %p93, %p94
      %p96 = scmp.ne.s32.totalorder %s87, %s88
      %p97 = scmp.eq.s32.totalorder %s14, 0
      %p98 = por %p96, %p97
      %p99 = scmp.ne.s32.totalorder %s87, %s88
      %p100 = scmp.eq.s32.totalorder %s15, 1
      %p101 = por %p99, %p100
      %p103 = scmp.ne.s32.totalorder %s88, %s102
      %p104 = scmp.eq.s32.totalorder %s15, 0
      %p105 = por %p103, %p104
      %p106 = scmp.le.s32.totalorder 1, %s9
      %p107 = scmp.lt.s32.totalorder %s9, 3
      %p108 = pnand %p106, %p107
      %p109 = pneg %p108
      // Predicated region
      $region9: #{bensity_forward.2} parent=5 // pred_check
        _
      $region10: #{bensity_forward.2} parent=5 // pred_check_branch
        %111 = sbr.rel (%p108) target = $region12
      $region11: #{bensity_forward.2} parent=5 // pred_region
        %s112 = ssub.s32 %s9, 1
        // Predicated region
        $region13: #{bensity_forward.2} parent=11 // pred_check
          %p113 = pneg %p56
        $region14: #{bensity_forward.2} parent=11 // pred_check_branch
          %115 = sbr.rel (%p113) target = $region16
        $region15: #{bensity_forward.2} parent=11 // pred_region
          _
        $region16: #{bensity_forward.2} parent=11 // pred_fallthru
          _
        // Predicated region
        $region17: #{bensity_forward.2} parent=11 // pred_check
          %p116 = pneg %p77
        $region18: #{bensity_forward.2} parent=11 // pred_check_branch
          %118 = sbr.rel (%p116) target = $region20
        $region19: #{bensity_forward.2} parent=11 // pred_region
          _
        $region20: #{bensity_forward.2} parent=11 // pred_fallthru
          _
      $region12: #{bensity_forward.2} parent=5 // pred_fallthru
        _
      %p119 = scmp.lt.s32.totalorder %s9, 2
      // Predicated region
      $region21: #{bensity_forward.2} parent=5 // pred_check
        %p120 = pneg %p119
      $region22: #{bensity_forward.2} parent=5 // pred_check_branch
        %122 = sbr.rel (%p120) target = $region24
      $region23: #{bensity_forward.2} parent=5 // pred_region
        // Predicated region
        $region25: #{bensity_forward.2} parent=23 // pred_check
          %p123 = pneg %p29
        $region26: #{bensity_forward.2} parent=23 // pred_check_branch
          %125 = sbr.rel (%p123) target = $region28
        $region27: #{bensity_forward.2} parent=23 // pred_region
          %s126 = sand.u32 %s19, 1
          %s127 = sand.u32 %s19, 1
          %s128 = smul.addr %s127, 32
          %s129 = scalar_lea.vmem [#allocation3], %s128
          %s130 = smul.addr %s9, 2
          %s131 = smul.addr %s130, 8
          %s132 = scalar_lea.vmem %s0, %s131
          // Predicated region
          $region29: #{bensity_forward.2} parent=27 // pred_check
            _
          $region30: #{bensity_forward.2} parent=27 // pred_check_branch
            %134 = sbr.rel (0) target = $region32
          $region31: #{bensity_forward.2} parent=27 // pred_region
            // Predicated region
            $region33: #{bensity_forward.2} parent=31 // pred_check
              _
            $region34: #{bensity_forward.2} parent=31 // pred_check_branch
              %136 = sbr.rel (0) target = $region36
            $region35: #{bensity_forward.2} parent=31 // pred_region
              loop: start=0, step=1, limit=1
              $region37: #{bensity_forward.2} parent=35 // loop_pre_header
                _
              $region38: #{bensity_forward.2} parent=35 // loop_header
                %s138 = sphi 0, %s142
                %p139 = scmp.ge.s32.totalorder %s138, 1
                %s143 = sphi %s132, %s132
                %s144 = sphi %s129, %s129
              $region39: #{bensity_forward.2} parent=35 // loop_header_branch
                %141 = sbr.rel (%p139) target = $region43
              $region40: #{bensity_forward.2} parent=35 // loop_body
                %v145 = vld [vmem:[%s143] sm:$0xff]
                %146 = vst [vmem:[%s144] sm:$0xff] %v145
                %v147 = vld [vmem:[%s143 + $0x8] sm:$0xff]
                %148 = vst [vmem:[%s144 + $0x8] sm:$0xff] %v147
                %v149 = vld [vmem:[%s143 + $0x20] sm:$0xff]
                %150 = vst [vmem:[%s144 + $0x10] sm:$0xff] %v149
                %v151 = vld [vmem:[%s143 + $0x28] sm:$0xff]
                %152 = vst [vmem:[%s144 + $0x18] sm:$0xff] %v151
              $region41: #{bensity_forward.2} parent=35 // loop_footer
                %s142 = sadd.s32 1, %s138
              $region42: #{bensity_forward.2} parent=35 // loop_footer_branch
                %137 = sbr.rel target = $region38
              $region43: #{bensity_forward.2} parent=35 // loop_exit
                _
            $region36: #{bensity_forward.2} parent=31 // pred_fallthru
              _
            // Predicated region
            $region44: #{bensity_forward.2} parent=31 // pred_check
              _
            $region45: #{bensity_forward.2} parent=31 // pred_check_branch
              %154 = sbr.rel target = $region47
            $region46: #{bensity_forward.2} parent=31 // pred_region
              _
            $region47: #{bensity_forward.2} parent=31 // pred_fallthru
              _
          $region32: #{bensity_forward.2} parent=27 // pred_fallthru
            _
          %155 = vnop
        $region28: #{bensity_forward.2} parent=23 // pred_fallthru
          _
      $region24: #{bensity_forward.2} parent=5 // pred_fallthru
        _
      %p156 = scmp.le.s32.totalorder 1, %s9
      %p157 = scmp.lt.s32.totalorder %s9, 3
      %p158 = pnand %p156, %p157
      %p159 = pneg %p158
      // Predicated region
      $region48: #{bensity_forward.2} parent=5 // pred_check
        _
      $region49: #{bensity_forward.2} parent=5 // pred_check_branch
        %161 = sbr.rel (%p158) target = $region51
      $region50: #{bensity_forward.2} parent=5 // pred_region
        %s162 = ssub.s32 %s9, 1
        %s163 = sand.u32 %s22, 1
        %s164 = sand.u32 %s22, 1
        %s165 = smul.addr %s164, 32
        %s166 = scalar_lea.vmem [#allocation3], %s165
        // Predicated region
        $region52: #{bensity_forward.2} parent=50 // pred_check
          %p167 = pneg %p35
        $region53: #{bensity_forward.2} parent=50 // pred_check_branch
          %169 = sbr.rel (%p167) target = $region55
        $region54: #{bensity_forward.2} parent=50 // pred_region
          _
        $region55: #{bensity_forward.2} parent=50 // pred_fallthru
          _
        %s170 = sand.u32 %s22, 1
        %s171 = sand.u32 %s22, 1
        %s172 = smul.addr %s171, 32
        %s173 = scalar_lea.vmem [#allocation3], %s172
        %p174 = pneg %p35
        %p175 = pneg %p32
        %p176 = pneg %p56
        %p177 = pneg %p53
        %p178 = pneg %p77
        %p179 = pneg %p74
        %p180 = pneg %p98
        %p181 = pneg %p95
        %p183 = scmp.eq.s32.totalorder %s14, 0
        // Predicated region
        $region56: #{bensity_forward.2} parent=50 // pred_check
          %p184 = pneg %p183
        $region57: #{bensity_forward.2} parent=50 // pred_check_branch
          %186 = sbr.rel (%p184) target = $region59
        $region58: #{bensity_forward.2} parent=50 // pred_region
          %187 = vst [vmem:[#allocation2] sm:$0xff] 0.0
          %188 = vst [vmem:[#allocation2 + $0x8] sm:$0xff] 0.0
          %189 = vst [vmem:[#allocation2 + $0x10] sm:$0xff] 0.0
          %190 = vst [vmem:[#allocation2 + $0x18] sm:$0x3] 0.0
        $region59: #{bensity_forward.2} parent=50 // pred_fallthru
          _
        %v191 = vld [vmem:[%s1] sm:$0xff]
        %v192 = vld [vmem:[%s1 + $0x8] sm:$0xff]
        %v193 = vld [vmem:[%s1 + $0x10] sm:$0xff]
        %v194 = vld [vmem:[%s1 + $0x18] sm:$0xff]
        %v195 = vld [vmem:[%s1 + $0x20] sm:$0xff]
        %v196 = vld [vmem:[%s1 + $0x28] sm:$0xff]
        %v197 = vld [vmem:[%s1 + $0x30] sm:$0xf]
        %v198 = vld [vmem:[%s1 + $0x34] sm:$0xff]
        %v199 = vld [vmem:[%s1 + $0x3c] sm:$0xff]
        %v200 = vld [vmem:[%s1 + $0x44] sm:$0xff]
        %v201 = vld [vmem:[%s1 + $0x4c] sm:$0xff]
        %v202 = vld [vmem:[%s1 + $0x54] sm:$0xff]
        %v203 = vld [vmem:[%s1 + $0x5c] sm:$0xff]
        %v204 = vld [vmem:[%s1 + $0x64] sm:$0xf]
        %v205 = vld [vmem:[%s1 + $0x68] sm:$0xff]
        %v206 = vld [vmem:[%s1 + $0x70] sm:$0xff]
        %v207 = vld [vmem:[%s1 + $0x78] sm:$0xff]
        %v208 = vld [vmem:[%s1 + $0x80] sm:$0xff]
        %v209 = vld [vmem:[%s1 + $0x88] sm:$0xff]
        %v210 = vld [vmem:[%s1 + $0x90] sm:$0xff]
        %v211 = vld [vmem:[%s1 + $0x98] sm:$0xf]
        %v212 = vld [vmem:[%s1 + $0x9c] sm:$0xff]
        %v213 = vld [vmem:[%s1 + $0xa4] sm:$0xff]
        %v214 = vld [vmem:[%s1 + $0xac] sm:$0xff]
        %v215 = vld [vmem:[%s1 + $0xb4] sm:$0xff]
        %v216 = vld [vmem:[%s1 + $0xbc] sm:$0xff]
        %v217 = vld [vmem:[%s1 + $0xc4] sm:$0xff]
        %v218 = vld [vmem:[%s1 + $0xcc] sm:$0xf]
        %v219 = vld [vmem:[%s1 + $0xd0] sm:$0xff]
        %v220 = vld [vmem:[%s1 + $0xd8] sm:$0xff]
        %v221 = vld [vmem:[%s1 + $0xe0] sm:$0xff]
        %v222 = vld [vmem:[%s1 + $0xe8] sm:$0xff]
        %v223 = vld [vmem:[%s1 + $0xf0] sm:$0xff]
        %v224 = vld [vmem:[%s1 + $0xf8] sm:$0xff]
        %v225 = vld [vmem:[%s1 + $0x100] sm:$0xf]
        %v226 = vld [vmem:[%s1 + $0x104] sm:$0xff]
        %v227 = vld [vmem:[%s1 + $0x10c] sm:$0xff]
        %v228 = vld [vmem:[%s1 + $0x114] sm:$0xff]
        %v229 = vld [vmem:[%s1 + $0x11c] sm:$0xff]
        %v230 = vld [vmem:[%s1 + $0x124] sm:$0xff]
        %v231 = vld [vmem:[%s1 + $0x12c] sm:$0xff]
        %v232 = vld [vmem:[%s1 + $0x134] sm:$0xf]
        %v233 = vld [vmem:[%s1 + $0x138] sm:$0xff]
        %v234 = vld [vmem:[%s1 + $0x140] sm:$0xff]
        %v235 = vld [vmem:[%s1 + $0x148] sm:$0xff]
        %v236 = vld [vmem:[%s1 + $0x150] sm:$0xff]
        %v237 = vld [vmem:[%s1 + $0x158] sm:$0xff]
        %v238 = vld [vmem:[%s1 + $0x160] sm:$0xff]
        %v239 = vld [vmem:[%s1 + $0x168] sm:$0xf]
        %v240 = vld [vmem:[%s1 + $0x16c] sm:$0xff]
        %v241 = vld [vmem:[%s1 + $0x174] sm:$0xff]
        %v242 = vld [vmem:[%s1 + $0x17c] sm:$0xff]
        %v243 = vld [vmem:[%s1 + $0x184] sm:$0xff]
        %v244 = vld [vmem:[%s1 + $0x18c] sm:$0xff]
        %v245 = vld [vmem:[%s1 + $0x194] sm:$0xff]
        %v246 = vld [vmem:[%s1 + $0x19c] sm:$0xf]
        %v247 = vld [vmem:[%s1 + $0x1a0] sm:$0xff]
        %v248 = vld [vmem:[%s1 + $0x1a8] sm:$0xff]
        %v249 = vld [vmem:[%s1 + $0x1b0] sm:$0xff]
        %v250 = vld [vmem:[%s1 + $0x1b8] sm:$0xff]
        %v251 = vld [vmem:[%s1 + $0x1c0] sm:$0xff]
        %v252 = vld [vmem:[%s1 + $0x1c8] sm:$0xff]
        %v253 = vld [vmem:[%s1 + $0x1d0] sm:$0xf]
        %v254 = vld [vmem:[%s1 + $0x1d4] sm:$0xff]
        %v255 = vld [vmem:[%s1 + $0x1dc] sm:$0xff]
        %v256 = vld [vmem:[%s1 + $0x1e4] sm:$0xff]
        %v257 = vld [vmem:[%s1 + $0x1ec] sm:$0xff]
        %v258 = vld [vmem:[%s1 + $0x1f4] sm:$0xff]
        %v259 = vld [vmem:[%s1 + $0x1fc] sm:$0xff]
        %v260 = vld [vmem:[%s1 + $0x204] sm:$0xf]
        %v261 = vld [vmem:[%s1 + $0x208] sm:$0xff]
        %v262 = vld [vmem:[%s1 + $0x210] sm:$0xff]
        %v263 = vld [vmem:[%s1 + $0x218] sm:$0xff]
        %v264 = vld [vmem:[%s1 + $0x220] sm:$0xff]
        %v265 = vld [vmem:[%s1 + $0x228] sm:$0xff]
        %v266 = vld [vmem:[%s1 + $0x230] sm:$0xff]
        %v267 = vld [vmem:[%s1 + $0x238] sm:$0xf]
        %v268 = vld [vmem:[%s1 + $0x23c] sm:$0xff]
        %v269 = vld [vmem:[%s1 + $0x244] sm:$0xff]
        %v270 = vld [vmem:[%s1 + $0x24c] sm:$0xff]
        %v271 = vld [vmem:[%s1 + $0x254] sm:$0xff]
        %v272 = vld [vmem:[%s1 + $0x25c] sm:$0xff]
        %v273 = vld [vmem:[%s1 + $0x264] sm:$0xff]
        %v274 = vld [vmem:[%s1 + $0x26c] sm:$0xf]
        %v275 = vld [vmem:[%s1 + $0x270] sm:$0xff]
        %v276 = vld [vmem:[%s1 + $0x278] sm:$0xff]
        %v277 = vld [vmem:[%s1 + $0x280] sm:$0xff]
        %v278 = vld [vmem:[%s1 + $0x288] sm:$0xff]
        %v279 = vld [vmem:[%s1 + $0x290] sm:$0xff]
        %v280 = vld [vmem:[%s1 + $0x298] sm:$0xff]
        %v281 = vld [vmem:[%s1 + $0x2a0] sm:$0xf]
        %v282 = vld [vmem:[%s1 + $0x2a4] sm:$0xff]
        %v283 = vld [vmem:[%s1 + $0x2ac] sm:$0xff]
        %v284 = vld [vmem:[%s1 + $0x2b4] sm:$0xff]
        %v285 = vld [vmem:[%s1 + $0x2bc] sm:$0xff]
        %v286 = vld [vmem:[%s1 + $0x2c4] sm:$0xff]
        %v287 = vld [vmem:[%s1 + $0x2cc] sm:$0xff]
        %v288 = vld [vmem:[%s1 + $0x2d4] sm:$0xf]
        %v289 = vld [vmem:[%s1 + $0x2d8] sm:$0xff]
        %v290 = vld [vmem:[%s1 + $0x2e0] sm:$0xff]
        %v291 = vld [vmem:[%s1 + $0x2e8] sm:$0xff]
        %v292 = vld [vmem:[%s1 + $0x2f0] sm:$0xff]
        %v293 = vld [vmem:[%s1 + $0x2f8] sm:$0xff]
        %v294 = vld [vmem:[%s1 + $0x300] sm:$0xff]
        %v295 = vld [vmem:[%s1 + $0x308] sm:$0xf]
        %v296 = vld [vmem:[%s1 + $0x30c] sm:$0xff]
        %v297 = vld [vmem:[%s1 + $0x314] sm:$0xff]
        %v298 = vld [vmem:[%s1 + $0x31c] sm:$0xff]
        %v299 = vld [vmem:[%s1 + $0x324] sm:$0xff]
        %v300 = vld [vmem:[%s1 + $0x32c] sm:$0xff]
        %v301 = vld [vmem:[%s1 + $0x334] sm:$0xff]
        %v302 = vld [vmem:[%s1 + $0x33c] sm:$0xf]
        %v303 = vld [vmem:[%s1 + $0x340] sm:$0xff]
        %v304 = vld [vmem:[%s1 + $0x348] sm:$0xff]
        %v305 = vld [vmem:[%s1 + $0x350] sm:$0xff]
        %v306 = vld [vmem:[%s1 + $0x358] sm:$0xff]
        %v307 = vld [vmem:[%s1 + $0x360] sm:$0xff]
        %v308 = vld [vmem:[%s1 + $0x368] sm:$0xff]
        %v309 = vld [vmem:[%s1 + $0x370] sm:$0xf]
        %v310 = vld [vmem:[%s1 + $0x374] sm:$0xff]
        %v311 = vld [vmem:[%s1 + $0x37c] sm:$0xff]
        %v312 = vld [vmem:[%s1 + $0x384] sm:$0xff]
        %v313 = vld [vmem:[%s1 + $0x38c] sm:$0xff]
        %v314 = vld [vmem:[%s1 + $0x394] sm:$0xff]
        %v315 = vld [vmem:[%s1 + $0x39c] sm:$0xff]
        %v316 = vld [vmem:[%s1 + $0x3a4] sm:$0xf]
        %v317 = vld [vmem:[%s1 + $0x3a8] sm:$0xff]
        %v318 = vld [vmem:[%s1 + $0x3b0] sm:$0xff]
        %v319 = vld [vmem:[%s1 + $0x3b8] sm:$0xff]
        %v320 = vld [vmem:[%s1 + $0x3c0] sm:$0xff]
        %v321 = vld [vmem:[%s1 + $0x3c8] sm:$0xff]
        %v322 = vld [vmem:[%s1 + $0x3d0] sm:$0xff]
        %v323 = vld [vmem:[%s1 + $0x3d8] sm:$0xf]
        %v324 = vld [vmem:[%s1 + $0x3dc] sm:$0xff]
        %v325 = vld [vmem:[%s1 + $0x3e4] sm:$0xff]
        %v326 = vld [vmem:[%s1 + $0x3ec] sm:$0xff]
        %v327 = vld [vmem:[%s1 + $0x3f4] sm:$0xff]
        %v328 = vld [vmem:[%s1 + $0x3fc] sm:$0xff]
        %v329 = vld [vmem:[%s1 + $0x404] sm:$0xff]
        %v330 = vld [vmem:[%s1 + $0x40c] sm:$0xf]
        %v331 = vld [vmem:[%s1 + $0x410] sm:$0xff]
        %v332 = vld [vmem:[%s1 + $0x418] sm:$0xff]
        %v333 = vld [vmem:[%s1 + $0x420] sm:$0xff]
        %v334 = vld [vmem:[%s1 + $0x428] sm:$0xff]
        %v335 = vld [vmem:[%s1 + $0x430] sm:$0xff]
        %v336 = vld [vmem:[%s1 + $0x438] sm:$0xff]
        %v337 = vld [vmem:[%s1 + $0x440] sm:$0xf]
        %v338 = vld [vmem:[%s1 + $0x444] sm:$0xff]
        %v339 = vld [vmem:[%s1 + $0x44c] sm:$0xff]
        %v340 = vld [vmem:[%s1 + $0x454] sm:$0xff]
        %v341 = vld [vmem:[%s1 + $0x45c] sm:$0xff]
        %v342 = vld [vmem:[%s1 + $0x464] sm:$0xff]
        %v343 = vld [vmem:[%s1 + $0x46c] sm:$0xff]
        %v344 = vld [vmem:[%s1 + $0x474] sm:$0xf]
        %v345 = vld [vmem:[%s1 + $0x478] sm:$0xff]
        %v346 = vld [vmem:[%s1 + $0x480] sm:$0xff]
        %v347 = vld [vmem:[%s1 + $0x488] sm:$0xff]
        %v348 = vld [vmem:[%s1 + $0x490] sm:$0xff]
        %v349 = vld [vmem:[%s1 + $0x498] sm:$0xff]
        %v350 = vld [vmem:[%s1 + $0x4a0] sm:$0xff]
        %v351 = vld [vmem:[%s1 + $0x4a8] sm:$0xf]
        %v352 = vld [vmem:[%s1 + $0x4ac] sm:$0xff]
        %v353 = vld [vmem:[%s1 + $0x4b4] sm:$0xff]
        %v354 = vld [vmem:[%s1 + $0x4bc] sm:$0xff]
        %v355 = vld [vmem:[%s1 + $0x4c4] sm:$0xff]
        %v356 = vld [vmem:[%s1 + $0x4cc] sm:$0xff]
        %v357 = vld [vmem:[%s1 + $0x4d4] sm:$0xff]
        %v358 = vld [vmem:[%s1 + $0x4dc] sm:$0xf]
        %v359 = vld [vmem:[%s2] sm:$0xff]
        %v360 = vld [vmem:[%s2 + $0x8] sm:$0x1f]
        %v361 = vld [vmem:[%s166] sm:$0xff]
        %v362 = vld [vmem:[%s166 + $0x8] sm:$0xff]
        %v363 = vpack.c.bf16 %v361, %v361
        %v364 = vpack.c.bf16 %v362, %v362
        %v367 = vlaneseq
        %v368 = vshrl.u32 %v367, 7
        %v369 = vsub.s32 0, %v368
        %v370 = vrot.slane %v359, %v369
        %v371 = vlaneseq
        %v372 = vshrl.u32 %v371, 7
        %v373 = vsub.s32 1, %v372
        %v374 = vrot.slane %v359, %v373
        %v375 = vlaneseq
        %v376 = vshrl.u32 %v375, 7
        %v377 = vsub.s32 2, %v376
        %v378 = vrot.slane %v359, %v377
        %v379 = vlaneseq
        %v380 = vshrl.u32 %v379, 7
        %v381 = vsub.s32 3, %v380
        %v382 = vrot.slane %v359, %v381
        %v383 = vlaneseq
        %v384 = vshrl.u32 %v383, 7
        %v385 = vsub.s32 4, %v384
        %v386 = vrot.slane %v359, %v385
        %v387 = vlaneseq
        %v388 = vshrl.u32 %v387, 7
        %v389 = vsub.s32 5, %v388
        %v390 = vrot.slane %v359, %v389
        %v391 = vlaneseq
        %v392 = vshrl.u32 %v391, 7
        %v393 = vsub.s32 6, %v392
        %v394 = vrot.slane %v359, %v393
        %v395 = vlaneseq
        %v396 = vshrl.u32 %v395, 7
        %v397 = vsub.s32 7, %v396
        %v398 = vrot.slane %v359, %v397
        %v399 = vlaneseq
        %v400 = vshrl.u32 %v399, 7
        %v401 = vsub.s32 0, %v400
        %v402 = vrot.slane %v360, %v401
        %v403 = vlaneseq
        %v404 = vshrl.u32 %v403, 7
        %v405 = vsub.s32 1, %v404
        %v406 = vrot.slane %v360, %v405
        %v407 = vlaneseq
        %v408 = vshrl.u32 %v407, 7
        %v409 = vsub.s32 2, %v408
        %v410 = vrot.slane %v360, %v409
        %v411 = vlaneseq
        %v412 = vshrl.u32 %v411, 7
        %v413 = vsub.s32 3, %v412
        %v414 = vrot.slane %v360, %v413
        %v415 = vlaneseq
        %v416 = vshrl.u32 %v415, 7
        %v417 = vsub.s32 4, %v416
        %v418 = vrot.slane %v360, %v417
        %v600 = vunpack.c.l.b16 %v191
        %v601 = vunpack.c.h.b16 %v191
        %v602 = vunpack.c.l.b16 %v192
        %v603 = vunpack.c.h.b16 %v192
        %v604 = vunpack.c.l.b16 %v193
        %v605 = vunpack.c.h.b16 %v193
        %v606 = vunpack.c.l.b16 %v194
        %v607 = vunpack.c.h.b16 %v194
        %v608 = vunpack.c.l.b16 %v195
        %v609 = vunpack.c.h.b16 %v195
        %v610 = vunpack.c.l.b16 %v196
        %v611 = vunpack.c.h.b16 %v196
        %v612 = vunpack.c.l.b16 %v197
        %v613 = vunpack.c.l.b16 %v198
        %v614 = vunpack.c.h.b16 %v198
        %v615 = vunpack.c.l.b16 %v199
        %v616 = vunpack.c.h.b16 %v199
        %v617 = vunpack.c.l.b16 %v200
        %v618 = vunpack.c.h.b16 %v200
        %v619 = vunpack.c.l.b16 %v201
        %v620 = vunpack.c.h.b16 %v201
        %v621 = vunpack.c.l.b16 %v202
        %v622 = vunpack.c.h.b16 %v202
        %v623 = vunpack.c.l.b16 %v203
        %v624 = vunpack.c.h.b16 %v203
        %v625 = vunpack.c.l.b16 %v204
        %v626 = vunpack.c.l.b16 %v205
        %v627 = vunpack.c.h.b16 %v205
        %v628 = vunpack.c.l.b16 %v206
        %v629 = vunpack.c.h.b16 %v206
        %v630 = vunpack.c.l.b16 %v207
        %v631 = vunpack.c.h.b16 %v207
        %v632 = vunpack.c.l.b16 %v208
        %v633 = vunpack.c.h.b16 %v208
        %v634 = vunpack.c.l.b16 %v209
        %v635 = vunpack.c.h.b16 %v209
        %v636 = vunpack.c.l.b16 %v210
        %v637 = vunpack.c.h.b16 %v210
        %v638 = vunpack.c.l.b16 %v211
        %v639 = vunpack.c.l.b16 %v212
        %v640 = vunpack.c.h.b16 %v212
        %v641 = vunpack.c.l.b16 %v213
        %v642 = vunpack.c.h.b16 %v213
        %v643 = vunpack.c.l.b16 %v214
        %v644 = vunpack.c.h.b16 %v214
        %v645 = vunpack.c.l.b16 %v215
        %v646 = vunpack.c.h.b16 %v215
        %v647 = vunpack.c.l.b16 %v216
        %v648 = vunpack.c.h.b16 %v216
        %v649 = vunpack.c.l.b16 %v217
        %v650 = vunpack.c.h.b16 %v217
        %v651 = vunpack.c.l.b16 %v218
        %v652 = vunpack.c.l.b16 %v219
        %v653 = vunpack.c.h.b16 %v219
        %v654 = vunpack.c.l.b16 %v220
        %v655 = vunpack.c.h.b16 %v220
        %v656 = vunpack.c.l.b16 %v221
        %v657 = vunpack.c.h.b16 %v221
        %v658 = vunpack.c.l.b16 %v222
        %v659 = vunpack.c.h.b16 %v222
        %v660 = vunpack.c.l.b16 %v223
        %v661 = vunpack.c.h.b16 %v223
        %v662 = vunpack.c.l.b16 %v224
        %v663 = vunpack.c.h.b16 %v224
        %v664 = vunpack.c.l.b16 %v225
        %v665 = vunpack.c.l.b16 %v226
        %v666 = vunpack.c.h.b16 %v226
        %v667 = vunpack.c.l.b16 %v227
        %v668 = vunpack.c.h.b16 %v227
        %v669 = vunpack.c.l.b16 %v228
        %v670 = vunpack.c.h.b16 %v228
        %v671 = vunpack.c.l.b16 %v229
        %v672 = vunpack.c.h.b16 %v229
        %v673 = vunpack.c.l.b16 %v230
        %v674 = vunpack.c.h.b16 %v230
        %v675 = vunpack.c.l.b16 %v231
        %v676 = vunpack.c.h.b16 %v231
        %v677 = vunpack.c.l.b16 %v232
        %v678 = vunpack.c.l.b16 %v233
        %v679 = vunpack.c.h.b16 %v233
        %v680 = vunpack.c.l.b16 %v234
        %v681 = vunpack.c.h.b16 %v234
        %v682 = vunpack.c.l.b16 %v235
        %v683 = vunpack.c.h.b16 %v235
        %v684 = vunpack.c.l.b16 %v236
        %v685 = vunpack.c.h.b16 %v236
        %v686 = vunpack.c.l.b16 %v237
        %v687 = vunpack.c.h.b16 %v237
        %v688 = vunpack.c.l.b16 %v238
        %v689 = vunpack.c.h.b16 %v238
        %v690 = vunpack.c.l.b16 %v239
        %v691 = vunpack.c.l.b16 %v240
        %v692 = vunpack.c.h.b16 %v240
        %v693 = vunpack.c.l.b16 %v241
        %v694 = vunpack.c.h.b16 %v241
        %v695 = vunpack.c.l.b16 %v242
        %v696 = vunpack.c.h.b16 %v242
        %v697 = vunpack.c.l.b16 %v243
        %v698 = vunpack.c.h.b16 %v243
        %v699 = vunpack.c.l.b16 %v244
        %v700 = vunpack.c.h.b16 %v244
        %v701 = vunpack.c.l.b16 %v245
        %v702 = vunpack.c.h.b16 %v245
        %v703 = vunpack.c.l.b16 %v246
        %v704 = vunpack.c.l.b16 %v247
        %v705 = vunpack.c.h.b16 %v247
        %v706 = vunpack.c.l.b16 %v248
        %v707 = vunpack.c.h.b16 %v248
        %v708 = vunpack.c.l.b16 %v249
        %v709 = vunpack.c.h.b16 %v249
        %v710 = vunpack.c.l.b16 %v250
        %v711 = vunpack.c.h.b16 %v250
        %v712 = vunpack.c.l.b16 %v251
        %v713 = vunpack.c.h.b16 %v251
        %v714 = vunpack.c.l.b16 %v252
        %v715 = vunpack.c.h.b16 %v252
        %v716 = vunpack.c.l.b16 %v253
        %v717 = vunpack.c.l.b16 %v254
        %v718 = vunpack.c.h.b16 %v254
        %v719 = vunpack.c.l.b16 %v255
        %v720 = vunpack.c.h.b16 %v255
        %v721 = vunpack.c.l.b16 %v256
        %v722 = vunpack.c.h.b16 %v256
        %v723 = vunpack.c.l.b16 %v257
        %v724 = vunpack.c.h.b16 %v257
        %v725 = vunpack.c.l.b16 %v258
        %v726 = vunpack.c.h.b16 %v258
        %v727 = vunpack.c.l.b16 %v259
        %v728 = vunpack.c.h.b16 %v259
        %v729 = vunpack.c.l.b16 %v260
        %v730 = vunpack.c.l.b16 %v261
        %v731 = vunpack.c.h.b16 %v261
        %v732 = vunpack.c.l.b16 %v262
        %v733 = vunpack.c.h.b16 %v262
        %v734 = vunpack.c.l.b16 %v263
        %v735 = vunpack.c.h.b16 %v263
        %v736 = vunpack.c.l.b16 %v264
        %v737 = vunpack.c.h.b16 %v264
        %v738 = vunpack.c.l.b16 %v265
        %v739 = vunpack.c.h.b16 %v265
        %v740 = vunpack.c.l.b16 %v266
        %v741 = vunpack.c.h.b16 %v266
        %v742 = vunpack.c.l.b16 %v267
        %v743 = vunpack.c.l.b16 %v268
        %v744 = vunpack.c.h.b16 %v268
        %v745 = vunpack.c.l.b16 %v269
        %v746 = vunpack.c.h.b16 %v269
        %v747 = vunpack.c.l.b16 %v270
        %v748 = vunpack.c.h.b16 %v270
        %v749 = vunpack.c.l.b16 %v271
        %v750 = vunpack.c.h.b16 %v271
        %v751 = vunpack.c.l.b16 %v272
        %v752 = vunpack.c.h.b16 %v272
        %v753 = vunpack.c.l.b16 %v273
        %v754 = vunpack.c.h.b16 %v273
        %v755 = vunpack.c.l.b16 %v274
        %v756 = vunpack.c.l.b16 %v275
        %v757 = vunpack.c.h.b16 %v275
        %v758 = vunpack.c.l.b16 %v276
        %v759 = vunpack.c.h.b16 %v276
        %v760 = vunpack.c.l.b16 %v277
        %v761 = vunpack.c.h.b16 %v277
        %v762 = vunpack.c.l.b16 %v278
        %v763 = vunpack.c.h.b16 %v278
        %v764 = vunpack.c.l.b16 %v279
        %v765 = vunpack.c.h.b16 %v279
        %v766 = vunpack.c.l.b16 %v280
        %v767 = vunpack.c.h.b16 %v280
        %v768 = vunpack.c.l.b16 %v281
        %v769 = vunpack.c.l.b16 %v282
        %v770 = vunpack.c.h.b16 %v282
        %v771 = vunpack.c.l.b16 %v283
        %v772 = vunpack.c.h.b16 %v283
        %v773 = vunpack.c.l.b16 %v284
        %v774 = vunpack.c.h.b16 %v284
        %v775 = vunpack.c.l.b16 %v285
        %v776 = vunpack.c.h.b16 %v285
        %v777 = vunpack.c.l.b16 %v286
        %v778 = vunpack.c.h.b16 %v286
        %v779 = vunpack.c.l.b16 %v287
        %v780 = vunpack.c.h.b16 %v287
        %v781 = vunpack.c.l.b16 %v288
        %v782 = vunpack.c.l.b16 %v289
        %v783 = vunpack.c.h.b16 %v289
        %v784 = vunpack.c.l.b16 %v290
        %v785 = vunpack.c.h.b16 %v290
        %v786 = vunpack.c.l.b16 %v291
        %v787 = vunpack.c.h.b16 %v291
        %v788 = vunpack.c.l.b16 %v292
        %v789 = vunpack.c.h.b16 %v292
        %v790 = vunpack.c.l.b16 %v293
        %v791 = vunpack.c.h.b16 %v293
        %v792 = vunpack.c.l.b16 %v294
        %v793 = vunpack.c.h.b16 %v294
        %v794 = vunpack.c.l.b16 %v295
        %v795 = vunpack.c.l.b16 %v296
        %v796 = vunpack.c.h.b16 %v296
        %v797 = vunpack.c.l.b16 %v297
        %v798 = vunpack.c.h.b16 %v297
        %v799 = vunpack.c.l.b16 %v298
        %v800 = vunpack.c.h.b16 %v298
        %v801 = vunpack.c.l.b16 %v299
        %v802 = vunpack.c.h.b16 %v299
        %v803 = vunpack.c.l.b16 %v300
        %v804 = vunpack.c.h.b16 %v300
        %v805 = vunpack.c.l.b16 %v301
        %v806 = vunpack.c.h.b16 %v301
        %v807 = vunpack.c.l.b16 %v302
        %v808 = vunpack.c.l.b16 %v303
        %v809 = vunpack.c.h.b16 %v303
        %v810 = vunpack.c.l.b16 %v304
        %v811 = vunpack.c.h.b16 %v304
        %v812 = vunpack.c.l.b16 %v305
        %v813 = vunpack.c.h.b16 %v305
        %v814 = vunpack.c.l.b16 %v306
        %v815 = vunpack.c.h.b16 %v306
        %v816 = vunpack.c.l.b16 %v307
        %v817 = vunpack.c.h.b16 %v307
        %v818 = vunpack.c.l.b16 %v308
        %v819 = vunpack.c.h.b16 %v308
        %v820 = vunpack.c.l.b16 %v309
        %v821 = vunpack.c.l.b16 %v310
        %v822 = vunpack.c.h.b16 %v310
        %v823 = vunpack.c.l.b16 %v311
        %v824 = vunpack.c.h.b16 %v311
        %v825 = vunpack.c.l.b16 %v312
        %v826 = vunpack.c.h.b16 %v312
        %v827 = vunpack.c.l.b16 %v313
        %v828 = vunpack.c.h.b16 %v313
        %v829 = vunpack.c.l.b16 %v314
        %v830 = vunpack.c.h.b16 %v314
        %v831 = vunpack.c.l.b16 %v315
        %v832 = vunpack.c.h.b16 %v315
        %v833 = vunpack.c.l.b16 %v316
        %v834 = vunpack.c.l.b16 %v317
        %v835 = vunpack.c.h.b16 %v317
        %v836 = vunpack.c.l.b16 %v318
        %v837 = vunpack.c.h.b16 %v318
        %v838 = vunpack.c.l.b16 %v319
        %v839 = vunpack.c.h.b16 %v319
        %v840 = vunpack.c.l.b16 %v320
        %v841 = vunpack.c.h.b16 %v320
        %v842 = vunpack.c.l.b16 %v321
        %v843 = vunpack.c.h.b16 %v321
        %v844 = vunpack.c.l.b16 %v322
        %v845 = vunpack.c.h.b16 %v322
        %v846 = vunpack.c.l.b16 %v323
        %v847 = vunpack.c.l.b16 %v324
        %v848 = vunpack.c.h.b16 %v324
        %v849 = vunpack.c.l.b16 %v325
        %v850 = vunpack.c.h.b16 %v325
        %v851 = vunpack.c.l.b16 %v326
        %v852 = vunpack.c.h.b16 %v326
        %v853 = vunpack.c.l.b16 %v327
        %v854 = vunpack.c.h.b16 %v327
        %v855 = vunpack.c.l.b16 %v328
        %v856 = vunpack.c.h.b16 %v328
        %v857 = vunpack.c.l.b16 %v329
        %v858 = vunpack.c.h.b16 %v329
        %v859 = vunpack.c.l.b16 %v330
        %v860 = vunpack.c.l.b16 %v331
        %v861 = vunpack.c.h.b16 %v331
        %v862 = vunpack.c.l.b16 %v332
        %v863 = vunpack.c.h.b16 %v332
        %v864 = vunpack.c.l.b16 %v333
        %v865 = vunpack.c.h.b16 %v333
        %v866 = vunpack.c.l.b16 %v334
        %v867 = vunpack.c.h.b16 %v334
        %v868 = vunpack.c.l.b16 %v335
        %v869 = vunpack.c.h.b16 %v335
        %v870 = vunpack.c.l.b16 %v336
        %v871 = vunpack.c.h.b16 %v336
        %v872 = vunpack.c.l.b16 %v337
        %v873 = vunpack.c.l.b16 %v338
        %v874 = vunpack.c.h.b16 %v338
        %v875 = vunpack.c.l.b16 %v339
        %v876 = vunpack.c.h.b16 %v339
        %v877 = vunpack.c.l.b16 %v340
        %v878 = vunpack.c.h.b16 %v340
        %v879 = vunpack.c.l.b16 %v341
        %v880 = vunpack.c.h.b16 %v341
        %v881 = vunpack.c.l.b16 %v342
        %v882 = vunpack.c.h.b16 %v342
        %v883 = vunpack.c.l.b16 %v343
        %v884 = vunpack.c.h.b16 %v343
        %v885 = vunpack.c.l.b16 %v344
        %v886 = vunpack.c.l.b16 %v345
        %v887 = vunpack.c.h.b16 %v345
        %v888 = vunpack.c.l.b16 %v346
        %v889 = vunpack.c.h.b16 %v346
        %v890 = vunpack.c.l.b16 %v347
        %v891 = vunpack.c.h.b16 %v347
        %v892 = vunpack.c.l.b16 %v348
        %v893 = vunpack.c.h.b16 %v348
        %v894 = vunpack.c.l.b16 %v349
        %v895 = vunpack.c.h.b16 %v349
        %v896 = vunpack.c.l.b16 %v350
        %v897 = vunpack.c.h.b16 %v350
        %v898 = vunpack.c.l.b16 %v351
        %v899 = vunpack.c.l.b16 %v352
        %v900 = vunpack.c.h.b16 %v352
        %v901 = vunpack.c.l.b16 %v353
        %v902 = vunpack.c.h.b16 %v353
        %v903 = vunpack.c.l.b16 %v354
        %v904 = vunpack.c.h.b16 %v354
        %v905 = vunpack.c.l.b16 %v355
        %v906 = vunpack.c.h.b16 %v355
        %v907 = vunpack.c.l.b16 %v356
        %v908 = vunpack.c.h.b16 %v356
        %v909 = vunpack.c.l.b16 %v357
        %v910 = vunpack.c.h.b16 %v357
        %v911 = vunpack.c.l.b16 %v358
        %v912 = vpack.c.b16 %v613, %v600
        %v913 = vpack.c.b16 %v614, %v601
        %v914 = vpack.c.b16 %v615, %v602
        %v915 = vpack.c.b16 %v616, %v603
        %v916 = vpack.c.b16 %v617, %v604
        %v917 = vpack.c.b16 %v618, %v605
        %v918 = vpack.c.b16 %v619, %v606
        %v919 = vpack.c.b16 %v620, %v607
        %v920 = vpack.c.b16 %v621, %v608
        %v921 = vpack.c.b16 %v622, %v609
        %v922 = vpack.c.b16 %v623, %v610
        %v923 = vpack.c.b16 %v624, %v611
        %v924 = vpack.c.b16 %v625, %v612
        %v925 = vpack.c.b16 %v639, %v626
        %v926 = vpack.c.b16 %v640, %v627
        %v927 = vpack.c.b16 %v641, %v628
        %v928 = vpack.c.b16 %v642, %v629
        %v929 = vpack.c.b16 %v643, %v630
        %v930 = vpack.c.b16 %v644, %v631
        %v931 = vpack.c.b16 %v645, %v632
        %v932 = vpack.c.b16 %v646, %v633
        %v933 = vpack.c.b16 %v647, %v634
        %v934 = vpack.c.b16 %v648, %v635
        %v935 = vpack.c.b16 %v649, %v636
        %v936 = vpack.c.b16 %v650, %v637
        %v937 = vpack.c.b16 %v651, %v638
        %v938 = vpack.c.b16 %v665, %v652
        %v939 = vpack.c.b16 %v666, %v653
        %v940 = vpack.c.b16 %v667, %v654
        %v941 = vpack.c.b16 %v668, %v655
        %v942 = vpack.c.b16 %v669, %v656
        %v943 = vpack.c.b16 %v670, %v657
        %v944 = vpack.c.b16 %v671, %v658
        %v945 = vpack.c.b16 %v672, %v659
        %v946 = vpack.c.b16 %v673, %v660
        %v947 = vpack.c.b16 %v674, %v661
        %v948 = vpack.c.b16 %v675, %v662
        %v949 = vpack.c.b16 %v676, %v663
        %v950 = vpack.c.b16 %v677, %v664
        %v951 = vpack.c.b16 %v691, %v678
        %v952 = vpack.c.b16 %v692, %v679
        %v953 = vpack.c.b16 %v693, %v680
        %v954 = vpack.c.b16 %v694, %v681
        %v955 = vpack.c.b16 %v695, %v682
        %v956 = vpack.c.b16 %v696, %v683
        %v957 = vpack.c.b16 %v697, %v684
        %v958 = vpack.c.b16 %v698, %v685
        %v959 = vpack.c.b16 %v699, %v686
        %v960 = vpack.c.b16 %v700, %v687
        %v961 = vpack.c.b16 %v701, %v688
        %v962 = vpack.c.b16 %v702, %v689
        %v963 = vpack.c.b16 %v703, %v690
        %v964 = vpack.c.b16 %v717, %v704
        %v965 = vpack.c.b16 %v718, %v705
        %v966 = vpack.c.b16 %v719, %v706
        %v967 = vpack.c.b16 %v720, %v707
        %v968 = vpack.c.b16 %v721, %v708
        %v969 = vpack.c.b16 %v722, %v709
        %v970 = vpack.c.b16 %v723, %v710
        %v971 = vpack.c.b16 %v724, %v711
        %v972 = vpack.c.b16 %v725, %v712
        %v973 = vpack.c.b16 %v726, %v713
        %v974 = vpack.c.b16 %v727, %v714
        %v975 = vpack.c.b16 %v728, %v715
        %v976 = vpack.c.b16 %v729, %v716
        %v977 = vpack.c.b16 %v743, %v730
        %v978 = vpack.c.b16 %v744, %v731
        %v979 = vpack.c.b16 %v745, %v732
        %v980 = vpack.c.b16 %v746, %v733
        %v981 = vpack.c.b16 %v747, %v734
        %v982 = vpack.c.b16 %v748, %v735
        %v983 = vpack.c.b16 %v749, %v736
        %v984 = vpack.c.b16 %v750, %v737
        %v985 = vpack.c.b16 %v751, %v738
        %v986 = vpack.c.b16 %v752, %v739
        %v987 = vpack.c.b16 %v753, %v740
        %v988 = vpack.c.b16 %v754, %v741
        %v989 = vpack.c.b16 %v755, %v742
        %v990 = vpack.c.b16 %v769, %v756
        %v991 = vpack.c.b16 %v770, %v757
        %v992 = vpack.c.b16 %v771, %v758
        %v993 = vpack.c.b16 %v772, %v759
        %v994 = vpack.c.b16 %v773, %v760
        %v995 = vpack.c.b16 %v774, %v761
        %v996 = vpack.c.b16 %v775, %v762
        %v997 = vpack.c.b16 %v776, %v763
        %v998 = vpack.c.b16 %v777, %v764
        %v999 = vpack.c.b16 %v778, %v765
        %v1000 = vpack.c.b16 %v779, %v766
        %v1001 = vpack.c.b16 %v780, %v767
        %v1002 = vpack.c.b16 %v781, %v768
        %v1003 = vpack.c.b16 %v795, %v782
        %v1004 = vpack.c.b16 %v796, %v783
        %v1005 = vpack.c.b16 %v797, %v784
        %v1006 = vpack.c.b16 %v798, %v785
        %v1007 = vpack.c.b16 %v799, %v786
        %v1008 = vpack.c.b16 %v800, %v787
        %v1009 = vpack.c.b16 %v801, %v788
        %v1010 = vpack.c.b16 %v802, %v789
        %v1011 = vpack.c.b16 %v803, %v790
        %v1012 = vpack.c.b16 %v804, %v791
        %v1013 = vpack.c.b16 %v805, %v792
        %v1014 = vpack.c.b16 %v806, %v793
        %v1015 = vpack.c.b16 %v807, %v794
        %v1016 = vpack.c.b16 %v821, %v808
        %v1017 = vpack.c.b16 %v822, %v809
        %v1018 = vpack.c.b16 %v823, %v810
        %v1019 = vpack.c.b16 %v824, %v811
        %v1020 = vpack.c.b16 %v825, %v812
        %v1021 = vpack.c.b16 %v826, %v813
        %v1022 = vpack.c.b16 %v827, %v814
        %v1023 = vpack.c.b16 %v828, %v815
        %v1024 = vpack.c.b16 %v829, %v816
        %v1025 = vpack.c.b16 %v830, %v817
        %v1026 = vpack.c.b16 %v831, %v818
        %v1027 = vpack.c.b16 %v832, %v819
        %v1028 = vpack.c.b16 %v833, %v820
        %v1029 = vpack.c.b16 %v847, %v834
        %v1030 = vpack.c.b16 %v848, %v835
        %v1031 = vpack.c.b16 %v849, %v836
        %v1032 = vpack.c.b16 %v850, %v837
        %v1033 = vpack.c.b16 %v851, %v838
        %v1034 = vpack.c.b16 %v852, %v839
        %v1035 = vpack.c.b16 %v853, %v840
        %v1036 = vpack.c.b16 %v854, %v841
        %v1037 = vpack.c.b16 %v855, %v842
        %v1038 = vpack.c.b16 %v856, %v843
        %v1039 = vpack.c.b16 %v857, %v844
        %v1040 = vpack.c.b16 %v858, %v845
        %v1041 = vpack.c.b16 %v859, %v846
        %v1042 = vpack.c.b16 %v873, %v860
        %v1043 = vpack.c.b16 %v874, %v861
        %v1044 = vpack.c.b16 %v875, %v862
        %v1045 = vpack.c.b16 %v876, %v863
        %v1046 = vpack.c.b16 %v877, %v864
        %v1047 = vpack.c.b16 %v878, %v865
        %v1048 = vpack.c.b16 %v879, %v866
        %v1049 = vpack.c.b16 %v880, %v867
        %v1050 = vpack.c.b16 %v881, %v868
        %v1051 = vpack.c.b16 %v882, %v869
        %v1052 = vpack.c.b16 %v883, %v870
        %v1053 = vpack.c.b16 %v884, %v871
        %v1054 = vpack.c.b16 %v885, %v872
        %v1055 = vpack.c.b16 %v899, %v886
        %v1056 = vpack.c.b16 %v900, %v887
        %v1057 = vpack.c.b16 %v901, %v888
        %v1058 = vpack.c.b16 %v902, %v889
        %v1059 = vpack.c.b16 %v903, %v890
        %v1060 = vpack.c.b16 %v904, %v891
        %v1061 = vpack.c.b16 %v905, %v892
        %v1062 = vpack.c.b16 %v906, %v893
        %v1063 = vpack.c.b16 %v907, %v894
        %v1064 = vpack.c.b16 %v908, %v895
        %v1065 = vpack.c.b16 %v909, %v896
        %v1066 = vpack.c.b16 %v910, %v897
        %v1067 = vpack.c.b16 %v911, %v898
        %vm1224 = vcmask 523264
        %v1226 = vsel %vm1224, %v364, 0
        %1228 = vmatprep.subr.bf16.mxu0 %v913
        %1229 = vmatpush1.bf16.msra.mxu0 %v912
        %1230 = vmatprep.subr.bf16.mxu0 %v926
        %1231 = vmatpush1.bf16.msra.mxu0 %v925
        %1232 = vmatprep.subr.bf16.mxu0 %v939
        %1233 = vmatpush1.bf16.msra.mxu0 %v938
        %1234 = vmatprep.subr.bf16.mxu0 %v952
        %1235 = vmatpush1.bf16.msra.mxu0 %v951
        %1236 = vmatprep.subr.bf16.mxu0 %v965
        %1237 = vmatpush1.bf16.msra.mxu0 %v964
        %1238 = vmatprep.subr.bf16.mxu0 %v978
        %1239 = vmatpush1.bf16.msra.mxu0 %v977
        %1240 = vmatprep.subr.bf16.mxu0 %v991
        %1241 = vmatpush1.bf16.msra.mxu0 %v990
        %1242 = vmatprep.subr.bf16.mxu0 %v1004
        %1243 = vmatpush1.bf16.msra.mxu0 %v1003
        %1244 = vmatprep.subr.bf16.mxu0 %v1017
        %1245 = vmatpush1.bf16.msra.mxu0 %v1016
        %1246 = vmatprep.subr.bf16.mxu0 %v1030
        %1247 = vmatpush1.bf16.msra.mxu0 %v1029
        %1248 = vmatprep.subr.bf16.mxu0 %v1043
        %1249 = vmatpush1.bf16.msra.mxu0 %v1042
        %1250 = vmatprep.subr.bf16.mxu0 %v1056
        %1251 = vmatpush1.bf16.msra.mxu0 %v1055
        %1252 = vmatprep.subr.bf16.mxu0 0
        %1253 = vmatpush1.bf16.msra.mxu0 0
        %1254 = vmatprep.subr.bf16.mxu0 0
        %1255 = vmatpush1.bf16.msra.mxu0 0
        %1256 = vmatprep.subr.bf16.mxu0 0
        %1257 = vmatpush1.bf16.msra.mxu0 0
        %1258 = vmatprep.subr.bf16.mxu0 0
        %1259 = vmatpush1.bf16.msra.mxu0 0
        %1260 = vmatprep.mubr.bf16.mxu0 %v1226
        %1261 = vmatmul.mubr.bf16.gmra.mrb[0].mxu0 %v363
        %v1262 = vpop.f32.mrb[0].mxu0
        %v1263 = vadd.f32 %v370, %v1262
        %v1264 = vpop.f32.mrb[0].mxu0
        %v1265 = vadd.f32 %v374, %v1264
        %v1266 = vpop.f32.mrb[0].mxu0
        %v1267 = vpop.f32.mrb[0].mxu0
        %1268 = vdwg.mxu0
        %1269 = vmatprep.subr.bf16.mxu0 %v915
        %1270 = vmatpush1.bf16.msra.mxu0 %v914
        %1271 = vmatprep.subr.bf16.mxu0 %v928
        %1272 = vmatpush1.bf16.msra.mxu0 %v927
        %1273 = vmatprep.subr.bf16.mxu0 %v941
        %1274 = vmatpush1.bf16.msra.mxu0 %v940
        %1275 = vmatprep.subr.bf16.mxu0 %v954
        %1276 = vmatpush1.bf16.msra.mxu0 %v953
        %1277 = vmatprep.subr.bf16.mxu0 %v967
        %1278 = vmatpush1.bf16.msra.mxu0 %v966
        %1279 = vmatprep.subr.bf16.mxu0 %v980
        %1280 = vmatpush1.bf16.msra.mxu0 %v979
        %1281 = vmatprep.subr.bf16.mxu0 %v993
        %1282 = vmatpush1.bf16.msra.mxu0 %v992
        %1283 = vmatprep.subr.bf16.mxu0 %v1006
        %1284 = vmatpush1.bf16.msra.mxu0 %v1005
        %1285 = vmatprep.subr.bf16.mxu0 %v1019
        %1286 = vmatpush1.bf16.msra.mxu0 %v1018
        %1287 = vmatprep.subr.bf16.mxu0 %v1032
        %1288 = vmatpush1.bf16.msra.mxu0 %v1031
        %1289 = vmatprep.subr.bf16.mxu0 %v1045
        %1290 = vmatpush1.bf16.msra.mxu0 %v1044
        %1291 = vmatprep.subr.bf16.mxu0 %v1058
        %1292 = vmatpush1.bf16.msra.mxu0 %v1057
        %1293 = vmatprep.subr.bf16.mxu0 0
        %1294 = vmatpush1.bf16.msra.mxu0 0
        %1295 = vmatprep.subr.bf16.mxu0 0
        %1296 = vmatpush1.bf16.msra.mxu0 0
        %1297 = vmatprep.subr.bf16.mxu0 0
        %1298 = vmatpush1.bf16.msra.mxu0 0
        %1299 = vmatprep.subr.bf16.mxu0 0
        %1300 = vmatpush1.bf16.msra.mxu0 0
        %1301 = vmatprep.mubr.bf16.mxu0 %v1226
        %1302 = vmatmul.mubr.bf16.gmra.mrb[0].mxu0 %v363
        %v1303 = vpop.f32.mrb[0].mxu0
        %v1304 = vadd.f32 %v378, %v1303
        %v1305 = vpop.f32.mrb[0].mxu0
        %v1306 = vadd.f32 %v382, %v1305
        %v1307 = vpop.f32.mrb[0].mxu0
        %v1308 = vpop.f32.mrb[0].mxu0
        %1309 = vdwg.mxu0
        %1310 = vmatprep.subr.bf16.mxu0 %v917
        %1311 = vmatpush1.bf16.msra.mxu0 %v916
        %1312 = vmatprep.subr.bf16.mxu0 %v930
        %1313 = vmatpush1.bf16.msra.mxu0 %v929
        %1314 = vmatprep.subr.bf16.mxu0 %v943
        %1315 = vmatpush1.bf16.msra.mxu0 %v942
        %1316 = vmatprep.subr.bf16.mxu0 %v956
        %1317 = vmatpush1.bf16.msra.mxu0 %v955
        %1318 = vmatprep.subr.bf16.mxu0 %v969
        %1319 = vmatpush1.bf16.msra.mxu0 %v968
        %1320 = vmatprep.subr.bf16.mxu0 %v982
        %1321 = vmatpush1.bf16.msra.mxu0 %v981
        %1322 = vmatprep.subr.bf16.mxu0 %v995
        %1323 = vmatpush1.bf16.msra.mxu0 %v994
        %1324 = vmatprep.subr.bf16.mxu0 %v1008
        %1325 = vmatpush1.bf16.msra.mxu0 %v1007
        %1326 = vmatprep.subr.bf16.mxu0 %v1021
        %1327 = vmatpush1.bf16.msra.mxu0 %v1020
        %1328 = vmatprep.subr.bf16.mxu0 %v1034
        %1329 = vmatpush1.bf16.msra.mxu0 %v1033
        %1330 = vmatprep.subr.bf16.mxu0 %v1047
        %1331 = vmatpush1.bf16.msra.mxu0 %v1046
        %1332 = vmatprep.subr.bf16.mxu0 %v1060
        %1333 = vmatpush1.bf16.msra.mxu0 %v1059
        %1334 = vmatprep.subr.bf16.mxu0 0
        %1335 = vmatpush1.bf16.msra.mxu0 0
        %1336 = vmatprep.subr.bf16.mxu0 0
        %1337 = vmatpush1.bf16.msra.mxu0 0
        %1338 = vmatprep.subr.bf16.mxu0 0
        %1339 = vmatpush1.bf16.msra.mxu0 0
        %1340 = vmatprep.subr.bf16.mxu0 0
        %1341 = vmatpush1.bf16.msra.mxu0 0
        %1342 = vmatprep.mubr.bf16.mxu0 %v1226
        %1343 = vmatmul.mubr.bf16.gmra.mrb[0].mxu0 %v363
        %v1344 = vpop.f32.mrb[0].mxu0
        %v1345 = vadd.f32 %v386, %v1344
        %v1346 = vpop.f32.mrb[0].mxu0
        %v1347 = vadd.f32 %v390, %v1346
        %v1348 = vpop.f32.mrb[0].mxu0
        %v1349 = vpop.f32.mrb[0].mxu0
        %1350 = vdwg.mxu0
        %1351 = vmatprep.subr.bf16.mxu0 %v919
        %1352 = vmatpush1.bf16.msra.mxu0 %v918
        %1353 = vmatprep.subr.bf16.mxu0 %v932
        %1354 = vmatpush1.bf16.msra.mxu0 %v931
        %1355 = vmatprep.subr.bf16.mxu0 %v945
        %1356 = vmatpush1.bf16.msra.mxu0 %v944
        %1357 = vmatprep.subr.bf16.mxu0 %v958
        %1358 = vmatpush1.bf16.msra.mxu0 %v957
        %1359 = vmatprep.subr.bf16.mxu0 %v971
        %1360 = vmatpush1.bf16.msra.mxu0 %v970
        %1361 = vmatprep.subr.bf16.mxu0 %v984
        %1362 = vmatpush1.bf16.msra.mxu0 %v983
        %1363 = vmatprep.subr.bf16.mxu0 %v997
        %1364 = vmatpush1.bf16.msra.mxu0 %v996
        %1365 = vmatprep.subr.bf16.mxu0 %v1010
        %1366 = vmatpush1.bf16.msra.mxu0 %v1009
        %1367 = vmatprep.subr.bf16.mxu0 %v1023
        %1368 = vmatpush1.bf16.msra.mxu0 %v1022
        %1369 = vmatprep.subr.bf16.mxu0 %v1036
        %1370 = vmatpush1.bf16.msra.mxu0 %v1035
        %1371 = vmatprep.subr.bf16.mxu0 %v1049
        %1372 = vmatpush1.bf16.msra.mxu0 %v1048
        %1373 = vmatprep.subr.bf16.mxu0 %v1062
        %1374 = vmatpush1.bf16.msra.mxu0 %v1061
        %1375 = vmatprep.subr.bf16.mxu0 0
        %1376 = vmatpush1.bf16.msra.mxu0 0
        %1377 = vmatprep.subr.bf16.mxu0 0
        %1378 = vmatpush1.bf16.msra.mxu0 0
        %1379 = vmatprep.subr.bf16.mxu0 0
        %1380 = vmatpush1.bf16.msra.mxu0 0
        %1381 = vmatprep.subr.bf16.mxu0 0
        %1382 = vmatpush1.bf16.msra.mxu0 0
        %1383 = vmatprep.mubr.bf16.mxu0 %v1226
        %1384 = vmatmul.mubr.bf16.gmra.mrb[0].mxu0 %v363
        %v1385 = vpop.f32.mrb[0].mxu0
        %v1386 = vadd.f32 %v394, %v1385
        %v1387 = vpop.f32.mrb[0].mxu0
        %v1388 = vadd.f32 %v398, %v1387
        %v1389 = vpop.f32.mrb[0].mxu0
        %v1390 = vpop.f32.mrb[0].mxu0
        %1391 = vdwg.mxu0
        %1392 = vmatprep.subr.bf16.mxu0 %v921
        %1393 = vmatpush1.bf16.msra.mxu0 %v920
        %1394 = vmatprep.subr.bf16.mxu0 %v934
        %1395 = vmatpush1.bf16.msra.mxu0 %v933
        %1396 = vmatprep.subr.bf16.mxu0 %v947
        %1397 = vmatpush1.bf16.msra.mxu0 %v946
        %1398 = vmatprep.subr.bf16.mxu0 %v960
        %1399 = vmatpush1.bf16.msra.mxu0 %v959
        %1400 = vmatprep.subr.bf16.mxu0 %v973
        %1401 = vmatpush1.bf16.msra.mxu0 %v972
        %1402 = vmatprep.subr.bf16.mxu0 %v986
        %1403 = vmatpush1.bf16.msra.mxu0 %v985
        %1404 = vmatprep.subr.bf16.mxu0 %v999
        %1405 = vmatpush1.bf16.msra.mxu0 %v998
        %1406 = vmatprep.subr.bf16.mxu0 %v1012
        %1407 = vmatpush1.bf16.msra.mxu0 %v1011
        %1408 = vmatprep.subr.bf16.mxu0 %v1025
        %1409 = vmatpush1.bf16.msra.mxu0 %v1024
        %1410 = vmatprep.subr.bf16.mxu0 %v1038
        %1411 = vmatpush1.bf16.msra.mxu0 %v1037
        %1412 = vmatprep.subr.bf16.mxu0 %v1051
        %1413 = vmatpush1.bf16.msra.mxu0 %v1050
        %1414 = vmatprep.subr.bf16.mxu0 %v1064
        %1415 = vmatpush1.bf16.msra.mxu0 %v1063
        %1416 = vmatprep.subr.bf16.mxu0 0
        %1417 = vmatpush1.bf16.msra.mxu0 0
        %1418 = vmatprep.subr.bf16.mxu0 0
        %1419 = vmatpush1.bf16.msra.mxu0 0
        %1420 = vmatprep.subr.bf16.mxu0 0
        %1421 = vmatpush1.bf16.msra.mxu0 0
        %1422 = vmatprep.subr.bf16.mxu0 0
        %1423 = vmatpush1.bf16.msra.mxu0 0
        %1424 = vmatprep.mubr.bf16.mxu0 %v1226
        %1425 = vmatmul.mubr.bf16.gmra.mrb[0].mxu0 %v363
        %v1426 = vpop.f32.mrb[0].mxu0
        %v1427 = vadd.f32 %v402, %v1426
        %v1428 = vpop.f32.mrb[0].mxu0
        %v1429 = vadd.f32 %v406, %v1428
        %v1430 = vpop.f32.mrb[0].mxu0
        %v1431 = vpop.f32.mrb[0].mxu0
        %1432 = vdwg.mxu0
        %1433 = vmatprep.subr.bf16.mxu0 %v923
        %1434 = vmatpush1.bf16.msra.mxu0 %v922
        %1435 = vmatprep.subr.bf16.mxu0 %v936
        %1436 = vmatpush1.bf16.msra.mxu0 %v935
        %1437 = vmatprep.subr.bf16.mxu0 %v949
        %1438 = vmatpush1.bf16.msra.mxu0 %v948
        %1439 = vmatprep.subr.bf16.mxu0 %v962
        %1440 = vmatpush1.bf16.msra.mxu0 %v961
        %1441 = vmatprep.subr.bf16.mxu0 %v975
        %1442 = vmatpush1.bf16.msra.mxu0 %v974
        %1443 = vmatprep.subr.bf16.mxu0 %v988
        %1444 = vmatpush1.bf16.msra.mxu0 %v987
        %1445 = vmatprep.subr.bf16.mxu0 %v1001
        %1446 = vmatpush1.bf16.msra.mxu0 %v1000
        %1447 = vmatprep.subr.bf16.mxu0 %v1014
        %1448 = vmatpush1.bf16.msra.mxu0 %v1013
        %1449 = vmatprep.subr.bf16.mxu0 %v1027
        %1450 = vmatpush1.bf16.msra.mxu0 %v1026
        %1451 = vmatprep.subr.bf16.mxu0 %v1040
        %1452 = vmatpush1.bf16.msra.mxu0 %v1039
        %1453 = vmatprep.subr.bf16.mxu0 %v1053
        %1454 = vmatpush1.bf16.msra.mxu0 %v1052
        %1455 = vmatprep.subr.bf16.mxu0 %v1066
        %1456 = vmatpush1.bf16.msra.mxu0 %v1065
        %1457 = vmatprep.subr.bf16.mxu0 0
        %1458 = vmatpush1.bf16.msra.mxu0 0
        %1459 = vmatprep.subr.bf16.mxu0 0
        %1460 = vmatpush1.bf16.msra.mxu0 0
        %1461 = vmatprep.subr.bf16.mxu0 0
        %1462 = vmatpush1.bf16.msra.mxu0 0
        %1463 = vmatprep.subr.bf16.mxu0 0
        %1464 = vmatpush1.bf16.msra.mxu0 0
        %1465 = vmatprep.mubr.bf16.mxu0 %v1226
        %1466 = vmatmul.mubr.bf16.gmra.mrb[0].mxu0 %v363
        %v1467 = vpop.f32.mrb[0].mxu0
        %v1468 = vadd.f32 %v410, %v1467
        %v1469 = vpop.f32.mrb[0].mxu0
        %v1470 = vadd.f32 %v414, %v1469
        %v1471 = vpop.f32.mrb[0].mxu0
        %v1472 = vpop.f32.mrb[0].mxu0
        %1473 = vdwg.mxu0
        %1474 = vmatprep.subr.bf16.mxu0 0
        %1475 = vmatpush1.bf16.msra.mxu0 %v924
        %1476 = vmatprep.subr.bf16.mxu0 0
        %1477 = vmatpush1.bf16.msra.mxu0 %v937
        %1478 = vmatprep.subr.bf16.mxu0 0
        %1479 = vmatpush1.bf16.msra.mxu0 %v950
        %1480 = vmatprep.subr.bf16.mxu0 0
        %1481 = vmatpush1.bf16.msra.mxu0 %v963
        %1482 = vmatprep.subr.bf16.mxu0 0
        %1483 = vmatpush1.bf16.msra.mxu0 %v976
        %1484 = vmatprep.subr.bf16.mxu0 0
        %1485 = vmatpush1.bf16.msra.mxu0 %v989
        %1486 = vmatprep.subr.bf16.mxu0 0
        %1487 = vmatpush1.bf16.msra.mxu0 %v1002
        %1488 = vmatprep.subr.bf16.mxu0 0
        %1489 = vmatpush1.bf16.msra.mxu0 %v1015
        %1490 = vmatprep.subr.bf16.mxu0 0
        %1491 = vmatpush1.bf16.msra.mxu0 %v1028
        %1492 = vmatprep.subr.bf16.mxu0 0
        %1493 = vmatpush1.bf16.msra.mxu0 %v1041
        %1494 = vmatprep.subr.bf16.mxu0 0
        %1495 = vmatpush1.bf16.msra.mxu0 %v1054
        %1496 = vmatprep.subr.bf16.mxu0 0
        %1497 = vmatpush1.bf16.msra.mxu0 %v1067
        %1498 = vmatprep.subr.bf16.mxu0 0
        %1499 = vmatpush1.bf16.msra.mxu0 0
        %1500 = vmatprep.subr.bf16.mxu0 0
        %1501 = vmatpush1.bf16.msra.mxu0 0
        %1502 = vmatprep.subr.bf16.mxu0 0
        %1503 = vmatpush1.bf16.msra.mxu0 0
        %1504 = vmatprep.subr.bf16.mxu0 0
        %1505 = vmatpush1.bf16.msra.mxu0 0
        %1506 = vmatprep.mubr.bf16.mxu0 %v1226
        %1507 = vmatmul.mubr.bf16.gmra.mrb[0].mxu0 %v363
        %v1508 = vpop.f32.mrb[0].mxu0
        %v1509 = vadd.f32 %v418, %v1508
        %v1510 = vpop.f32.mrb[0].mxu0
        %v1511 = vpop.f32.mrb[0].mxu0
        %v1512 = vpop.f32.mrb[0].mxu0
        %1513 = vdwg.mxu0
        %v1514 = vmax.f32 %v1263, 0.0
        %v1515 = vmax.f32 %v1265, 0.0
        %v1516 = vmax.f32 %v1304, 0.0
        %v1517 = vmax.f32 %v1306, 0.0
        %v1518 = vmax.f32 %v1345, 0.0
        %v1519 = vmax.f32 %v1347, 0.0
        %v1520 = vmax.f32 %v1386, 0.0
        %v1521 = vmax.f32 %v1388, 0.0
        %v1522 = vmax.f32 %v1427, 0.0
        %v1523 = vmax.f32 %v1429, 0.0
        %v1524 = vmax.f32 %v1468, 0.0
        %v1525 = vmax.f32 %v1470, 0.0
        %v1526 = vmax.f32 %v1509, 0.0
        %v1527 = vld [vmem:[#allocation2] ss:$2 sm:$0xff]
        %s1528 = scalar_lea.vmem [#allocation2], 16
        %v1529 = vld [vmem:[%s1528] ss:$2 sm:$0x1f]
        %v1530 = vrot.slane %v1514, 4
        %v1531 = vadd.f32 %v1514, %v1530
        %v1532 = vrot.slane %v1531, 2
        %v1533 = vadd.f32 %v1531, %v1532
        %v1534 = vrot.slane %v1533, 1
        %v1535 = vadd.f32 %v1533, %v1534
        %v1536 = vrot.slane %v1515, 4
        %v1537 = vadd.f32 %v1515, %v1536
        %v1538 = vrot.slane %v1537, 2
        %v1539 = vadd.f32 %v1537, %v1538
        %v1540 = vrot.slane %v1539, 1
        %v1541 = vadd.f32 %v1539, %v1540
        %v1542 = vrot.slane %v1516, 4
        %v1543 = vadd.f32 %v1516, %v1542
        %v1544 = vrot.slane %v1543, 2
        %v1545 = vadd.f32 %v1543, %v1544
        %v1546 = vrot.slane %v1545, 1
        %v1547 = vadd.f32 %v1545, %v1546
        %v1548 = vrot.slane %v1517, 4
        %v1549 = vadd.f32 %v1517, %v1548
        %v1550 = vrot.slane %v1549, 2
        %v1551 = vadd.f32 %v1549, %v1550
        %v1552 = vrot.slane %v1551, 1
        %v1553 = vadd.f32 %v1551, %v1552
        %v1554 = vrot.slane %v1518, 4
        %v1555 = vadd.f32 %v1518, %v1554
        %v1556 = vrot.slane %v1555, 2
        %v1557 = vadd.f32 %v1555, %v1556
        %v1558 = vrot.slane %v1557, 1
        %v1559 = vadd.f32 %v1557, %v1558
        %v1560 = vrot.slane %v1519, 4
        %v1561 = vadd.f32 %v1519, %v1560
        %v1562 = vrot.slane %v1561, 2
        %v1563 = vadd.f32 %v1561, %v1562
        %v1564 = vrot.slane %v1563, 1
        %v1565 = vadd.f32 %v1563, %v1564
        %v1566 = vrot.slane %v1520, 4
        %v1567 = vadd.f32 %v1520, %v1566
        %v1568 = vrot.slane %v1567, 2
        %v1569 = vadd.f32 %v1567, %v1568
        %v1570 = vrot.slane %v1569, 1
        %v1571 = vadd.f32 %v1569, %v1570
        %v1572 = vrot.slane %v1521, 4
        %v1573 = vadd.f32 %v1521, %v1572
        %v1574 = vrot.slane %v1573, 2
        %v1575 = vadd.f32 %v1573, %v1574
        %v1576 = vrot.slane %v1575, 1
        %v1577 = vadd.f32 %v1575, %v1576
        %v1578 = vrot.slane %v1522, 4
        %v1579 = vadd.f32 %v1522, %v1578
        %v1580 = vrot.slane %v1579, 2
        %v1581 = vadd.f32 %v1579, %v1580
        %v1582 = vrot.slane %v1581, 1
        %v1583 = vadd.f32 %v1581, %v1582
        %v1584 = vrot.slane %v1523, 4
        %v1585 = vadd.f32 %v1523, %v1584
        %v1586 = vrot.slane %v1585, 2
        %v1587 = vadd.f32 %v1585, %v1586
        %v1588 = vrot.slane %v1587, 1
        %v1589 = vadd.f32 %v1587, %v1588
        %v1590 = vrot.slane %v1524, 4
        %v1591 = vadd.f32 %v1524, %v1590
        %v1592 = vrot.slane %v1591, 2
        %v1593 = vadd.f32 %v1591, %v1592
        %v1594 = vrot.slane %v1593, 1
        %v1595 = vadd.f32 %v1593, %v1594
        %v1596 = vrot.slane %v1525, 4
        %v1597 = vadd.f32 %v1525, %v1596
        %v1598 = vrot.slane %v1597, 2
        %v1599 = vadd.f32 %v1597, %v1598
        %v1600 = vrot.slane %v1599, 1
        %v1601 = vadd.f32 %v1599, %v1600
        %v1602 = vrot.slane %v1526, 4
        %v1603 = vadd.f32 %v1526, %v1602
        %v1604 = vrot.slane %v1603, 2
        %v1605 = vadd.f32 %v1603, %v1604
        %v1606 = vrot.slane %v1605, 1
        %v1607 = vadd.f32 %v1605, %v1606
        %v1621 = vcombine.low %v1535, %v1541
        %v1622 = vcombine.low %v1547, %v1553
        %v1623 = vcombine.low %v1559, %v1565
        %v1624 = vcombine.low %v1571, %v1577
        %v1626 = vunpack.c.l.s4 1966171168
        %v1627 = vunpack.c.0.s8 %v1626
        %v1628 = vlaneseq
        %v1629 = vshrl.u32 %v1628, 7
        %v1630 = vsub.s32 %v1627, %v1629
        %v1631 = vrot.slane %v1621, %v1630
        %v1633 = vunpack.c.l.s4 1966171168
        %v1634 = vunpack.c.0.s8 %v1633
        %v1635 = vlaneseq
        %v1636 = vshrl.u32 %v1635, 7
        %v1637 = vsub.s32 %v1634, %v1636
        %v1638 = vrot.slane %v1622, %v1637
        %v1640 = vunpack.c.l.s4 1966171168
        %v1641 = vunpack.c.0.s8 %v1640
        %v1642 = vlaneseq
        %v1643 = vshrl.u32 %v1642, 7
        %v1644 = vsub.s32 %v1641, %v1643
        %v1645 = vrot.slane %v1623, %v1644
        %v1647 = vunpack.c.l.s4 1966171168
        %v1648 = vunpack.c.0.s8 %v1647
        %v1649 = vlaneseq
        %v1650 = vshrl.u32 %v1649, 7
        %v1651 = vsub.s32 %v1648, %v1650
        %v1652 = vrot.slane %v1624, %v1651
        %v1653 = vcombine.low %v1631, %v1638
        %v1654 = vcombine.low %v1645, %v1652
        %v1656 = vunpack.c.l.s4 1966171168
        %v1657 = vunpack.c.0.s8 %v1656
        %v1658 = vlaneseq
        %v1659 = vshrl.u32 %v1658, 7
        %v1660 = vsub.s32 %v1657, %v1659
        %v1661 = vrot.slane %v1653, %v1660
        %v1663 = vunpack.c.l.s4 1966171168
        %v1664 = vunpack.c.0.s8 %v1663
        %v1665 = vlaneseq
        %v1666 = vshrl.u32 %v1665, 7
        %v1667 = vsub.s32 %v1664, %v1666
        %v1668 = vrot.slane %v1654, %v1667
        %v1669 = vcombine.low %v1661, %v1668
        %v1670 = vcombine.low %v1583, %v1589
        %v1671 = vcombine.low %v1595, %v1601
        %v1673 = vunpack.c.l.s4 1966171168
        %v1674 = vunpack.c.0.s8 %v1673
        %v1675 = vlaneseq
        %v1676 = vshrl.u32 %v1675, 7
        %v1677 = vsub.s32 %v1674, %v1676
        %v1678 = vrot.slane %v1670, %v1677
        %v1680 = vunpack.c.l.s4 1966171168
        %v1681 = vunpack.c.0.s8 %v1680
        %v1682 = vlaneseq
        %v1683 = vshrl.u32 %v1682, 7
        %v1684 = vsub.s32 %v1681, %v1683
        %v1685 = vrot.slane %v1671, %v1684
        %v1687 = vunpack.c.l.s4 1966171168
        %v1688 = vunpack.c.0.s8 %v1687
        %v1689 = vlaneseq
        %v1690 = vshrl.u32 %v1689, 7
        %v1691 = vsub.s32 %v1688, %v1690
        %v1692 = vrot.slane %v1607, %v1691
        %v1693 = vcombine.low %v1678, %v1685
        %v1695 = vunpack.c.l.s4 1966171168
        %v1696 = vunpack.c.0.s8 %v1695
        %v1697 = vlaneseq
        %v1698 = vshrl.u32 %v1697, 7
        %v1699 = vsub.s32 %v1696, %v1698
        %v1700 = vrot.slane %v1693, %v1699
        %v1702 = vunpack.c.l.s4 1966171168
        %v1703 = vunpack.c.0.s8 %v1702
        %v1704 = vlaneseq
        %v1705 = vshrl.u32 %v1704, 7
        %v1706 = vsub.s32 %v1703, %v1705
        %v1707 = vrot.slane %v1692, %v1706
        %v1708 = vcombine.low %v1700, %v1707
        %v1711 = vadd.f32 %v1527, %v1669
        %v1712 = vadd.f32 %v1529, %v1708
        %1713 = vst [vmem:[#allocation2] ss:$2 sm:$0xff] %v1711
        %v1714 = vlaneseq
        %vm1715 = vcmp.ge.s32.totalorder %v1714, 0
        %vm1716 = vcmp.lt.s32.totalorder %v1714, 640
        %vm1717 = vmand %vm1715, %vm1716
        %1718 = vst.msk [vmem:[%s1528] ss:$2 sm:$0x1f] %vm1717, %v1712
        %s1719 = scalar_lea.vmem %s166, 16 [#allocation3]
        %v1720 = vld [vmem:[%s1719] sm:$0xff]
        %v1721 = vld [vmem:[%s1719 + $0x8] sm:$0xff]
        %v1722 = vpack.c.bf16 %v1720, %v1720
        %v1723 = vpack.c.bf16 %v1721, %v1721
        %v1725 = vsel %vm1224, %v1723, 0
        %1727 = vmatprep.subr.bf16.mxu0 %v913
        %1728 = vmatpush1.bf16.msra.mxu0 %v912
        %1729 = vmatprep.subr.bf16.mxu0 %v926
        %1730 = vmatpush1.bf16.msra.mxu0 %v925
        %1731 = vmatprep.subr.bf16.mxu0 %v939
        %1732 = vmatpush1.bf16.msra.mxu0 %v938
        %1733 = vmatprep.subr.bf16.mxu0 %v952
        %1734 = vmatpush1.bf16.msra.mxu0 %v951
        %1735 = vmatprep.subr.bf16.mxu0 %v965
        %1736 = vmatpush1.bf16.msra.mxu0 %v964
        %1737 = vmatprep.subr.bf16.mxu0 %v978
        %1738 = vmatpush1.bf16.msra.mxu0 %v977
        %1739 = vmatprep.subr.bf16.mxu0 %v991
        %1740 = vmatpush1.bf16.msra.mxu0 %v990
        %1741 = vmatprep.subr.bf16.mxu0 %v1004
        %1742 = vmatpush1.bf16.msra.mxu0 %v1003
        %1743 = vmatprep.subr.bf16.mxu0 %v1017
        %1744 = vmatpush1.bf16.msra.mxu0 %v1016
        %1745 = vmatprep.subr.bf16.mxu0 %v1030
        %1746 = vmatpush1.bf16.msra.mxu0 %v1029
        %1747 = vmatprep.subr.bf16.mxu0 %v1043
        %1748 = vmatpush1.bf16.msra.mxu0 %v1042
        %1749 = vmatprep.subr.bf16.mxu0 %v1056
        %1750 = vmatpush1.bf16.msra.mxu0 %v1055
        %1751 = vmatprep.subr.bf16.mxu0 0
        %1752 = vmatpush1.bf16.msra.mxu0 0
        %1753 = vmatprep.subr.bf16.mxu0 0
        %1754 = vmatpush1.bf16.msra.mxu0 0
        %1755 = vmatprep.subr.bf16.mxu0 0
        %1756 = vmatpush1.bf16.msra.mxu0 0
        %1757 = vmatprep.subr.bf16.mxu0 0
        %1758 = vmatpush1.bf16.msra.mxu0 0
        %1759 = vmatprep.mubr.bf16.mxu0 %v1725
        %1760 = vmatmul.mubr.bf16.gmra.mrb[0].mxu0 %v1722
        %v1761 = vpop.f32.mrb[0].mxu0
        %v1762 = vadd.f32 %v370, %v1761
        %v1763 = vpop.f32.mrb[0].mxu0
        %v1764 = vadd.f32 %v374, %v1763
        %v1765 = vpop.f32.mrb[0].mxu0
        %v1766 = vpop.f32.mrb[0].mxu0
        %1767 = vdwg.mxu0
        %1768 = vmatprep.subr.bf16.mxu0 %v915
        %1769 = vmatpush1.bf16.msra.mxu0 %v914
        %1770 = vmatprep.subr.bf16.mxu0 %v928
        %1771 = vmatpush1.bf16.msra.mxu0 %v927
        %1772 = vmatprep.subr.bf16.mxu0 %v941
        %1773 = vmatpush1.bf16.msra.mxu0 %v940
        %1774 = vmatprep.subr.bf16.mxu0 %v954
        %1775 = vmatpush1.bf16.msra.mxu0 %v953
        %1776 = vmatprep.subr.bf16.mxu0 %v967
        %1777 = vmatpush1.bf16.msra.mxu0 %v966
        %1778 = vmatprep.subr.bf16.mxu0 %v980
        %1779 = vmatpush1.bf16.msra.mxu0 %v979
        %1780 = vmatprep.subr.bf16.mxu0 %v993
        %1781 = vmatpush1.bf16.msra.mxu0 %v992
        %1782 = vmatprep.subr.bf16.mxu0 %v1006
        %1783 = vmatpush1.bf16.msra.mxu0 %v1005
        %1784 = vmatprep.subr.bf16.mxu0 %v1019
        %1785 = vmatpush1.bf16.msra.mxu0 %v1018
        %1786 = vmatprep.subr.bf16.mxu0 %v1032
        %1787 = vmatpush1.bf16.msra.mxu0 %v1031
        %1788 = vmatprep.subr.bf16.mxu0 %v1045
        %1789 = vmatpush1.bf16.msra.mxu0 %v1044
        %1790 = vmatprep.subr.bf16.mxu0 %v1058
        %1791 = vmatpush1.bf16.msra.mxu0 %v1057
        %1792 = vmatprep.subr.bf16.mxu0 0
        %1793 = vmatpush1.bf16.msra.mxu0 0
        %1794 = vmatprep.subr.bf16.mxu0 0
        %1795 = vmatpush1.bf16.msra.mxu0 0
        %1796 = vmatprep.subr.bf16.mxu0 0
        %1797 = vmatpush1.bf16.msra.mxu0 0
        %1798 = vmatprep.subr.bf16.mxu0 0
        %1799 = vmatpush1.bf16.msra.mxu0 0
        %1800 = vmatprep.mubr.bf16.mxu0 %v1725
        %1801 = vmatmul.mubr.bf16.gmra.mrb[0].mxu0 %v1722
        %v1802 = vpop.f32.mrb[0].mxu0
        %v1803 = vadd.f32 %v378, %v1802
        %v1804 = vpop.f32.mrb[0].mxu0
        %v1805 = vadd.f32 %v382, %v1804
        %v1806 = vpop.f32.mrb[0].mxu0
        %v1807 = vpop.f32.mrb[0].mxu0
        %1808 = vdwg.mxu0
        %1809 = vmatprep.subr.bf16.mxu0 %v917
        %1810 = vmatpush1.bf16.msra.mxu0 %v916
        %1811 = vmatprep.subr.bf16.mxu0 %v930
        %1812 = vmatpush1.bf16.msra.mxu0 %v929
        %1813 = vmatprep.subr.bf16.mxu0 %v943
        %1814 = vmatpush1.bf16.msra.mxu0 %v942
        %1815 = vmatprep.subr.bf16.mxu0 %v956
        %1816 = vmatpush1.bf16.msra.mxu0 %v955
        %1817 = vmatprep.subr.bf16.mxu0 %v969
        %1818 = vmatpush1.bf16.msra.mxu0 %v968
        %1819 = vmatprep.subr.bf16.mxu0 %v982
        %1820 = vmatpush1.bf16.msra.mxu0 %v981
        %1821 = vmatprep.subr.bf16.mxu0 %v995
        %1822 = vmatpush1.bf16.msra.mxu0 %v994
        %1823 = vmatprep.subr.bf16.mxu0 %v1008
        %1824 = vmatpush1.bf16.msra.mxu0 %v1007
        %1825 = vmatprep.subr.bf16.mxu0 %v1021
        %1826 = vmatpush1.bf16.msra.mxu0 %v1020
        %1827 = vmatprep.subr.bf16.mxu0 %v1034
        %1828 = vmatpush1.bf16.msra.mxu0 %v1033
        %1829 = vmatprep.subr.bf16.mxu0 %v1047
        %1830 = vmatpush1.bf16.msra.mxu0 %v1046
        %1831 = vmatprep.subr.bf16.mxu0 %v1060
        %1832 = vmatpush1.bf16.msra.mxu0 %v1059
        %1833 = vmatprep.subr.bf16.mxu0 0
        %1834 = vmatpush1.bf16.msra.mxu0 0
        %1835 = vmatprep.subr.bf16.mxu0 0
        %1836 = vmatpush1.bf16.msra.mxu0 0
        %1837 = vmatprep.subr.bf16.mxu0 0
        %1838 = vmatpush1.bf16.msra.mxu0 0
        %1839 = vmatprep.subr.bf16.mxu0 0
        %1840 = vmatpush1.bf16.msra.mxu0 0
        %1841 = vmatprep.mubr.bf16.mxu0 %v1725
        %1842 = vmatmul.mubr.bf16.gmra.mrb[0].mxu0 %v1722
        %v1843 = vpop.f32.mrb[0].mxu0
        %v1844 = vadd.f32 %v386, %v1843
        %v1845 = vpop.f32.mrb[0].mxu0
        %v1846 = vadd.f32 %v390, %v1845
        %v1847 = vpop.f32.mrb[0].mxu0
        %v1848 = vpop.f32.mrb[0].mxu0
        %1849 = vdwg.mxu0
        %1850 = vmatprep.subr.bf16.mxu0 %v919
        %1851 = vmatpush1.bf16.msra.mxu0 %v918
        %1852 = vmatprep.subr.bf16.mxu0 %v932
        %1853 = vmatpush1.bf16.msra.mxu0 %v931
        %1854 = vmatprep.subr.bf16.mxu0 %v945
        %1855 = vmatpush1.bf16.msra.mxu0 %v944
        %1856 = vmatprep.subr.bf16.mxu0 %v958
        %1857 = vmatpush1.bf16.msra.mxu0 %v957
        %1858 = vmatprep.subr.bf16.mxu0 %v971
        %1859 = vmatpush1.bf16.msra.mxu0 %v970
        %1860 = vmatprep.subr.bf16.mxu0 %v984
        %1861 = vmatpush1.bf16.msra.mxu0 %v983
        %1862 = vmatprep.subr.bf16.mxu0 %v997
        %1863 = vmatpush1.bf16.msra.mxu0 %v996
        %1864 = vmatprep.subr.bf16.mxu0 %v1010
        %1865 = vmatpush1.bf16.msra.mxu0 %v1009
        %1866 = vmatprep.subr.bf16.mxu0 %v1023
        %1867 = vmatpush1.bf16.msra.mxu0 %v1022
        %1868 = vmatprep.subr.bf16.mxu0 %v1036
        %1869 = vmatpush1.bf16.msra.mxu0 %v1035
        %1870 = vmatprep.subr.bf16.mxu0 %v1049
        %1871 = vmatpush1.bf16.msra.mxu0 %v1048
        %1872 = vmatprep.subr.bf16.mxu0 %v1062
        %1873 = vmatpush1.bf16.msra.mxu0 %v1061
        %1874 = vmatprep.subr.bf16.mxu0 0
        %1875 = vmatpush1.bf16.msra.mxu0 0
        %1876 = vmatprep.subr.bf16.mxu0 0
        %1877 = vmatpush1.bf16.msra.mxu0 0
        %1878 = vmatprep.subr.bf16.mxu0 0
        %1879 = vmatpush1.bf16.msra.mxu0 0
        %1880 = vmatprep.subr.bf16.mxu0 0
        %1881 = vmatpush1.bf16.msra.mxu0 0
        %1882 = vmatprep.mubr.bf16.mxu0 %v1725
        %1883 = vmatmul.mubr.bf16.gmra.mrb[0].mxu0 %v1722
        %v1884 = vpop.f32.mrb[0].mxu0
        %v1885 = vadd.f32 %v394, %v1884
        %v1886 = vpop.f32.mrb[0].mxu0
        %v1887 = vadd.f32 %v398, %v1886
        %v1888 = vpop.f32.mrb[0].mxu0
        %v1889 = vpop.f32.mrb[0].mxu0
        %1890 = vdwg.mxu0
        %1891 = vmatprep.subr.bf16.mxu0 %v921
        %1892 = vmatpush1.bf16.msra.mxu0 %v920
        %1893 = vmatprep.subr.bf16.mxu0 %v934
        %1894 = vmatpush1.bf16.msra.mxu0 %v933
        %1895 = vmatprep.subr.bf16.mxu0 %v947
        %1896 = vmatpush1.bf16.msra.mxu0 %v946
        %1897 = vmatprep.subr.bf16.mxu0 %v960
        %1898 = vmatpush1.bf16.msra.mxu0 %v959
        %1899 = vmatprep.subr.bf16.mxu0 %v973
        %1900 = vmatpush1.bf16.msra.mxu0 %v972
        %1901 = vmatprep.subr.bf16.mxu0 %v986
        %1902 = vmatpush1.bf16.msra.mxu0 %v985
        %1903 = vmatprep.subr.bf16.mxu0 %v999
        %1904 = vmatpush1.bf16.msra.mxu0 %v998
        %1905 = vmatprep.subr.bf16.mxu0 %v1012
        %1906 = vmatpush1.bf16.msra.mxu0 %v1011
        %1907 = vmatprep.subr.bf16.mxu0 %v1025
        %1908 = vmatpush1.bf16.msra.mxu0 %v1024
        %1909 = vmatprep.subr.bf16.mxu0 %v1038
        %1910 = vmatpush1.bf16.msra.mxu0 %v1037
        %1911 = vmatprep.subr.bf16.mxu0 %v1051
        %1912 = vmatpush1.bf16.msra.mxu0 %v1050
        %1913 = vmatprep.subr.bf16.mxu0 %v1064
        %1914 = vmatpush1.bf16.msra.mxu0 %v1063
        %1915 = vmatprep.subr.bf16.mxu0 0
        %1916 = vmatpush1.bf16.msra.mxu0 0
        %1917 = vmatprep.subr.bf16.mxu0 0
        %1918 = vmatpush1.bf16.msra.mxu0 0
        %1919 = vmatprep.subr.bf16.mxu0 0
        %1920 = vmatpush1.bf16.msra.mxu0 0
        %1921 = vmatprep.subr.bf16.mxu0 0
        %1922 = vmatpush1.bf16.msra.mxu0 0
        %1923 = vmatprep.mubr.bf16.mxu0 %v1725
        %1924 = vmatmul.mubr.bf16.gmra.mrb[0].mxu0 %v1722
        %v1925 = vpop.f32.mrb[0].mxu0
        %v1926 = vadd.f32 %v402, %v1925
        %v1927 = vpop.f32.mrb[0].mxu0
        %v1928 = vadd.f32 %v406, %v1927
        %v1929 = vpop.f32.mrb[0].mxu0
        %v1930 = vpop.f32.mrb[0].mxu0
        %1931 = vdwg.mxu0
        %1932 = vmatprep.subr.bf16.mxu0 %v923
        %1933 = vmatpush1.bf16.msra.mxu0 %v922
        %1934 = vmatprep.subr.bf16.mxu0 %v936
        %1935 = vmatpush1.bf16.msra.mxu0 %v935
        %1936 = vmatprep.subr.bf16.mxu0 %v949
        %1937 = vmatpush1.bf16.msra.mxu0 %v948
        %1938 = vmatprep.subr.bf16.mxu0 %v962
        %1939 = vmatpush1.bf16.msra.mxu0 %v961
        %1940 = vmatprep.subr.bf16.mxu0 %v975
        %1941 = vmatpush1.bf16.msra.mxu0 %v974
        %1942 = vmatprep.subr.bf16.mxu0 %v988
        %1943 = vmatpush1.bf16.msra.mxu0 %v987
        %1944 = vmatprep.subr.bf16.mxu0 %v1001
        %1945 = vmatpush1.bf16.msra.mxu0 %v1000
        %1946 = vmatprep.subr.bf16.mxu0 %v1014
        %1947 = vmatpush1.bf16.msra.mxu0 %v1013
        %1948 = vmatprep.subr.bf16.mxu0 %v1027
        %1949 = vmatpush1.bf16.msra.mxu0 %v1026
        %1950 = vmatprep.subr.bf16.mxu0 %v1040
        %1951 = vmatpush1.bf16.msra.mxu0 %v1039
        %1952 = vmatprep.subr.bf16.mxu0 %v1053
        %1953 = vmatpush1.bf16.msra.mxu0 %v1052
        %1954 = vmatprep.subr.bf16.mxu0 %v1066
        %1955 = vmatpush1.bf16.msra.mxu0 %v1065
        %1956 = vmatprep.subr.bf16.mxu0 0
        %1957 = vmatpush1.bf16.msra.mxu0 0
        %1958 = vmatprep.subr.bf16.mxu0 0
        %1959 = vmatpush1.bf16.msra.mxu0 0
        %1960 = vmatprep.subr.bf16.mxu0 0
        %1961 = vmatpush1.bf16.msra.mxu0 0
        %1962 = vmatprep.subr.bf16.mxu0 0
        %1963 = vmatpush1.bf16.msra.mxu0 0
        %1964 = vmatprep.mubr.bf16.mxu0 %v1725
        %1965 = vmatmul.mubr.bf16.gmra.mrb[0].mxu0 %v1722
        %v1966 = vpop.f32.mrb[0].mxu0
        %v1967 = vadd.f32 %v410, %v1966
        %v1968 = vpop.f32.mrb[0].mxu0
        %v1969 = vadd.f32 %v414, %v1968
        %v1970 = vpop.f32.mrb[0].mxu0
        %v1971 = vpop.f32.mrb[0].mxu0
        %1972 = vdwg.mxu0
        %1973 = vmatprep.subr.bf16.mxu0 0
        %1974 = vmatpush1.bf16.msra.mxu0 %v924
        %1975 = vmatprep.subr.bf16.mxu0 0
        %1976 = vmatpush1.bf16.msra.mxu0 %v937
        %1977 = vmatprep.subr.bf16.mxu0 0
        %1978 = vmatpush1.bf16.msra.mxu0 %v950
        %1979 = vmatprep.subr.bf16.mxu0 0
        %1980 = vmatpush1.bf16.msra.mxu0 %v963
        %1981 = vmatprep.subr.bf16.mxu0 0
        %1982 = vmatpush1.bf16.msra.mxu0 %v976
        %1983 = vmatprep.subr.bf16.mxu0 0
        %1984 = vmatpush1.bf16.msra.mxu0 %v989
        %1985 = vmatprep.subr.bf16.mxu0 0
        %1986 = vmatpush1.bf16.msra.mxu0 %v1002
        %1987 = vmatprep.subr.bf16.mxu0 0
        %1988 = vmatpush1.bf16.msra.mxu0 %v1015
        %1989 = vmatprep.subr.bf16.mxu0 0
        %1990 = vmatpush1.bf16.msra.mxu0 %v1028
        %1991 = vmatprep.subr.bf16.mxu0 0
        %1992 = vmatpush1.bf16.msra.mxu0 %v1041
        %1993 = vmatprep.subr.bf16.mxu0 0
        %1994 = vmatpush1.bf16.msra.mxu0 %v1054
        %1995 = vmatprep.subr.bf16.mxu0 0
        %1996 = vmatpush1.bf16.msra.mxu0 %v1067
        %1997 = vmatprep.subr.bf16.mxu0 0
        %1998 = vmatpush1.bf16.msra.mxu0 0
        %1999 = vmatprep.subr.bf16.mxu0 0
        %2000 = vmatpush1.bf16.msra.mxu0 0
        %2001 = vmatprep.subr.bf16.mxu0 0
        %2002 = vmatpush1.bf16.msra.mxu0 0
        %2003 = vmatprep.subr.bf16.mxu0 0
        %2004 = vmatpush1.bf16.msra.mxu0 0
        %2005 = vmatprep.mubr.bf16.mxu0 %v1725
        %2006 = vmatmul.mubr.bf16.gmra.mrb[0].mxu0 %v1722
        %v2007 = vpop.f32.mrb[0].mxu0
        %v2008 = vadd.f32 %v418, %v2007
        %v2009 = vpop.f32.mrb[0].mxu0
        %v2010 = vpop.f32.mrb[0].mxu0
        %v2011 = vpop.f32.mrb[0].mxu0
        %2012 = vdwg.mxu0
        %v2013 = vmax.f32 %v1762, 0.0
        %v2014 = vmax.f32 %v1764, 0.0
        %v2015 = vmax.f32 %v1803, 0.0
        %v2016 = vmax.f32 %v1805, 0.0
        %v2017 = vmax.f32 %v1844, 0.0
        %v2018 = vmax.f32 %v1846, 0.0
        %v2019 = vmax.f32 %v1885, 0.0
        %v2020 = vmax.f32 %v1887, 0.0
        %v2021 = vmax.f32 %v1926, 0.0
        %v2022 = vmax.f32 %v1928, 0.0
        %v2023 = vmax.f32 %v1967, 0.0
        %v2024 = vmax.f32 %v1969, 0.0
        %v2025 = vmax.f32 %v2008, 0.0
        %s2026 = scalar_lea.vmem [#allocation2], 1
        %v2027 = vld [vmem:[%s2026] ss:$2 sm:$0xff]
        %s2028 = scalar_lea.vmem [#allocation2], 17
        %v2029 = vld [vmem:[%s2028] ss:$2 sm:$0x1f]
        %v2030 = vrot.slane %v2013, 4
        %v2031 = vadd.f32 %v2013, %v2030
        %v2032 = vrot.slane %v2031, 2
        %v2033 = vadd.f32 %v2031, %v2032
        %v2034 = vrot.slane %v2033, 1
        %v2035 = vadd.f32 %v2033, %v2034
        %v2036 = vrot.slane %v2014, 4
        %v2037 = vadd.f32 %v2014, %v2036
        %v2038 = vrot.slane %v2037, 2
        %v2039 = vadd.f32 %v2037, %v2038
        %v2040 = vrot.slane %v2039, 1
        %v2041 = vadd.f32 %v2039, %v2040
        %v2042 = vrot.slane %v2015, 4
        %v2043 = vadd.f32 %v2015, %v2042
        %v2044 = vrot.slane %v2043, 2
        %v2045 = vadd.f32 %v2043, %v2044
        %v2046 = vrot.slane %v2045, 1
        %v2047 = vadd.f32 %v2045, %v2046
        %v2048 = vrot.slane %v2016, 4
        %v2049 = vadd.f32 %v2016, %v2048
        %v2050 = vrot.slane %v2049, 2
        %v2051 = vadd.f32 %v2049, %v2050
        %v2052 = vrot.slane %v2051, 1
        %v2053 = vadd.f32 %v2051, %v2052
        %v2054 = vrot.slane %v2017, 4
        %v2055 = vadd.f32 %v2017, %v2054
        %v2056 = vrot.slane %v2055, 2
        %v2057 = vadd.f32 %v2055, %v2056
        %v2058 = vrot.slane %v2057, 1
        %v2059 = vadd.f32 %v2057, %v2058
        %v2060 = vrot.slane %v2018, 4
        %v2061 = vadd.f32 %v2018, %v2060
        %v2062 = vrot.slane %v2061, 2
        %v2063 = vadd.f32 %v2061, %v2062
        %v2064 = vrot.slane %v2063, 1
        %v2065 = vadd.f32 %v2063, %v2064
        %v2066 = vrot.slane %v2019, 4
        %v2067 = vadd.f32 %v2019, %v2066
        %v2068 = vrot.slane %v2067, 2
        %v2069 = vadd.f32 %v2067, %v2068
        %v2070 = vrot.slane %v2069, 1
        %v2071 = vadd.f32 %v2069, %v2070
        %v2072 = vrot.slane %v2020, 4
        %v2073 = vadd.f32 %v2020, %v2072
        %v2074 = vrot.slane %v2073, 2
        %v2075 = vadd.f32 %v2073, %v2074
        %v2076 = vrot.slane %v2075, 1
        %v2077 = vadd.f32 %v2075, %v2076
        %v2078 = vrot.slane %v2021, 4
        %v2079 = vadd.f32 %v2021, %v2078
        %v2080 = vrot.slane %v2079, 2
        %v2081 = vadd.f32 %v2079, %v2080
        %v2082 = vrot.slane %v2081, 1
        %v2083 = vadd.f32 %v2081, %v2082
        %v2084 = vrot.slane %v2022, 4
        %v2085 = vadd.f32 %v2022, %v2084
        %v2086 = vrot.slane %v2085, 2
        %v2087 = vadd.f32 %v2085, %v2086
        %v2088 = vrot.slane %v2087, 1
        %v2089 = vadd.f32 %v2087, %v2088
        %v2090 = vrot.slane %v2023, 4
        %v2091 = vadd.f32 %v2023, %v2090
        %v2092 = vrot.slane %v2091, 2
        %v2093 = vadd.f32 %v2091, %v2092
        %v2094 = vrot.slane %v2093, 1
        %v2095 = vadd.f32 %v2093, %v2094
        %v2096 = vrot.slane %v2024, 4
        %v2097 = vadd.f32 %v2024, %v2096
        %v2098 = vrot.slane %v2097, 2
        %v2099 = vadd.f32 %v2097, %v2098
        %v2100 = vrot.slane %v2099, 1
        %v2101 = vadd.f32 %v2099, %v2100
        %v2102 = vrot.slane %v2025, 4
        %v2103 = vadd.f32 %v2025, %v2102
        %v2104 = vrot.slane %v2103, 2
        %v2105 = vadd.f32 %v2103, %v2104
        %v2106 = vrot.slane %v2105, 1
        %v2107 = vadd.f32 %v2105, %v2106
        %v2121 = vcombine.low %v2035, %v2041
        %v2122 = vcombine.low %v2047, %v2053
        %v2123 = vcombine.low %v2059, %v2065
        %v2124 = vcombine.low %v2071, %v2077
        %v2126 = vunpack.c.l.s4 1966171168
        %v2127 = vunpack.c.0.s8 %v2126
        %v2128 = vlaneseq
        %v2129 = vshrl.u32 %v2128, 7
        %v2130 = vsub.s32 %v2127, %v2129
        %v2131 = vrot.slane %v2121, %v2130
        %v2133 = vunpack.c.l.s4 1966171168
        %v2134 = vunpack.c.0.s8 %v2133
        %v2135 = vlaneseq
        %v2136 = vshrl.u32 %v2135, 7
        %v2137 = vsub.s32 %v2134, %v2136
        %v2138 = vrot.slane %v2122, %v2137
        %v2140 = vunpack.c.l.s4 1966171168
        %v2141 = vunpack.c.0.s8 %v2140
        %v2142 = vlaneseq
        %v2143 = vshrl.u32 %v2142, 7
        %v2144 = vsub.s32 %v2141, %v2143
        %v2145 = vrot.slane %v2123, %v2144
        %v2147 = vunpack.c.l.s4 1966171168
        %v2148 = vunpack.c.0.s8 %v2147
        %v2149 = vlaneseq
        %v2150 = vshrl.u32 %v2149, 7
        %v2151 = vsub.s32 %v2148, %v2150
        %v2152 = vrot.slane %v2124, %v2151
        %v2153 = vcombine.low %v2131, %v2138
        %v2154 = vcombine.low %v2145, %v2152
        %v2156 = vunpack.c.l.s4 1966171168
        %v2157 = vunpack.c.0.s8 %v2156
        %v2158 = vlaneseq
        %v2159 = vshrl.u32 %v2158, 7
        %v2160 = vsub.s32 %v2157, %v2159
        %v2161 = vrot.slane %v2153, %v2160
        %v2163 = vunpack.c.l.s4 1966171168
        %v2164 = vunpack.c.0.s8 %v2163
        %v2165 = vlaneseq
        %v2166 = vshrl.u32 %v2165, 7
        %v2167 = vsub.s32 %v2164, %v2166
        %v2168 = vrot.slane %v2154, %v2167
        %v2169 = vcombine.low %v2161, %v2168
        %v2170 = vcombine.low %v2083, %v2089
        %v2171 = vcombine.low %v2095, %v2101
        %v2173 = vunpack.c.l.s4 1966171168
        %v2174 = vunpack.c.0.s8 %v2173
        %v2175 = vlaneseq
        %v2176 = vshrl.u32 %v2175, 7
        %v2177 = vsub.s32 %v2174, %v2176
        %v2178 = vrot.slane %v2170, %v2177
        %v2180 = vunpack.c.l.s4 1966171168
        %v2181 = vunpack.c.0.s8 %v2180
        %v2182 = vlaneseq
        %v2183 = vshrl.u32 %v2182, 7
        %v2184 = vsub.s32 %v2181, %v2183
        %v2185 = vrot.slane %v2171, %v2184
        %v2187 = vunpack.c.l.s4 1966171168
        %v2188 = vunpack.c.0.s8 %v2187
        %v2189 = vlaneseq
        %v2190 = vshrl.u32 %v2189, 7
        %v2191 = vsub.s32 %v2188, %v2190
        %v2192 = vrot.slane %v2107, %v2191
        %v2193 = vcombine.low %v2178, %v2185
        %v2195 = vunpack.c.l.s4 1966171168
        %v2196 = vunpack.c.0.s8 %v2195
        %v2197 = vlaneseq
        %v2198 = vshrl.u32 %v2197, 7
        %v2199 = vsub.s32 %v2196, %v2198
        %v2200 = vrot.slane %v2193, %v2199
        %v2202 = vunpack.c.l.s4 1966171168
        %v2203 = vunpack.c.0.s8 %v2202
        %v2204 = vlaneseq
        %v2205 = vshrl.u32 %v2204, 7
        %v2206 = vsub.s32 %v2203, %v2205
        %v2207 = vrot.slane %v2192, %v2206
        %v2208 = vcombine.low %v2200, %v2207
        %v2211 = vadd.f32 %v2027, %v2169
        %v2212 = vadd.f32 %v2029, %v2208
        %2213 = vst [vmem:[%s2026] ss:$2 sm:$0xff] %v2211
        %2214 = vst.msk [vmem:[%s2028] ss:$2 sm:$0x1f] %vm1717, %v2212
        %p2215 = scmp.eq.s32.totalorder %s14, 1
        // Predicated region
        $region60: #{bensity_forward.2} parent=50 // pred_check
          %p2216 = pneg %p2215
        $region61: #{bensity_forward.2} parent=50 // pred_check_branch
          %2218 = sbr.rel (%p2216) target = $region63
        $region62: #{bensity_forward.2} parent=50 // pred_region
          %v2219 = vld [vmem:[#allocation2] sm:$0xff]
          %v2220 = vld [vmem:[#allocation2 + $0x8] sm:$0xff]
          %v2221 = vld [vmem:[#allocation2 + $0x10] sm:$0xff]
          %v2222 = vld [vmem:[#allocation2 + $0x18] sm:$0x3]
          %v2223 = vmul.f32 %v2219, 0.0625
          %v2224 = vmul.f32 %v2220, 0.0625
          %v2225 = vmul.f32 %v2221, 0.0625
          %v2226 = vmul.f32 %v2222, 0.0625
          %2227 = vst [vmem:[%s3] sm:$0xff] %v2223
          %2228 = vst [vmem:[%s3 + $0x8] sm:$0xff] %v2224
          %2229 = vst [vmem:[%s3 + $0x10] sm:$0xff] %v2225
          %2230 = vst [vmem:[%s3 + $0x18] sm:$0x3] %v2226
        $region63: #{bensity_forward.2} parent=50 // pred_fallthru
          _
        // Predicated region
        $region64: #{bensity_forward.2} parent=50 // pred_check
          %p2231 = pneg %p95
        $region65: #{bensity_forward.2} parent=50 // pred_check_branch
          %2233 = sbr.rel (%p2231) target = $region67
        $region66: #{bensity_forward.2} parent=50 // pred_region
          _
        $region67: #{bensity_forward.2} parent=50 // pred_fallthru
          _
        // Predicated region
        $region68: #{bensity_forward.2} parent=50 // pred_check
          %p2234 = pneg %p95
        $region69: #{bensity_forward.2} parent=50 // pred_check_branch
          %2236 = sbr.rel (%p2234) target = $region71
        $region70: #{bensity_forward.2} parent=50 // pred_region
          _
        $region71: #{bensity_forward.2} parent=50 // pred_fallthru
          _
      $region51: #{bensity_forward.2} parent=5 // pred_fallthru
        _
      %p2237 = scmp.le.s32.totalorder 2, %s9
      // Predicated region
      $region72: #{bensity_forward.2} parent=5 // pred_check
        %p2238 = pneg %p2237
      $region73: #{bensity_forward.2} parent=5 // pred_check_branch
        %2240 = sbr.rel (%p2238) target = $region75
      $region74: #{bensity_forward.2} parent=5 // pred_region
        %s2241 = ssub.s32 %s9, 2
      $region75: #{bensity_forward.2} parent=5 // pred_fallthru
        _
    $region6: #{bensity_forward.2} parent=1 // loop_footer
      %s13 = sadd.s32 1, %s9
    $region7: #{bensity_forward.2} parent=1 // loop_footer_branch
      %8 = sbr.rel target = $region3
    $region8: #{bensity_forward.2} parent=1 // loop_exit
      _

// kernel: bensity_forward.3
$region0: #{bensity_forward.3}
  #allocation0 [shape = 'u32[]', space=smem, size = 0x4, offset = 0x4, fixed_abs, tag = 'smem constant byte address 0x4 - core index']
  #allocation1 [shape = 'u32[144,128]{1,0:T(1,128)}', space=vmem, size = 0x12000, scoped, tag = 'internal scratch']
  #allocation2 [shape = 'f32[2,128]{1,0:T(2,128)}', space=vmem, size = 0x400, scoped, tag = 'scratch operand']
  %s0 = inlined_call_operand.vmem [shape: f32[16,128], index: 0, kind: input, shape index: {}]
  %s1 = inlined_call_operand.vmem [shape: f32[2,1664], index: 1, kind: input, shape index: {}]
  %s2 = inlined_call_operand.vmem [shape: f32[128,128], index: 2, kind: input, shape index: {}]
  %s3 = inlined_call_operand.vmem [shape: f32[1,128], index: 3, kind: input, shape index: {}]
  %s4 = inlined_call_operand.vmem [shape: f32[128,128], index: 4, kind: input, shape index: {}]
  %s5 = inlined_call_operand.vmem [shape: f32[1,128], index: 5, kind: input, shape index: {}]
  %s6 = inlined_call_operand.hbm [shape: f32[128,128], index: 6, kind: input, shape index: {}]
  %s7 = inlined_call_operand.vmem [shape: f32[1,128], index: 7, kind: input, shape index: {}]
  %s8 = inlined_call_operand.hbm [shape: f32[128,128], index: 8, kind: input, shape index: {}]
  %s9 = inlined_call_operand.vmem [shape: f32[1,128], index: 9, kind: input, shape index: {}]
  %s10 = inlined_call_operand.hbm [shape: f32[128,512], index: 10, kind: input, shape index: {}]
  %s11 = inlined_call_operand.vmem [shape: f32[1,512], index: 11, kind: input, shape index: {}]
  %s12 = inlined_call_operand.vmem [shape: bf16[1664,512], index: 12, kind: input, shape index: {}]
  %s13 = inlined_call_operand.vmem [shape: f32[1,512], index: 13, kind: input, shape index: {}]
  %s14 = inlined_call_operand.hbm [shape: f32[512,128], index: 14, kind: input, shape index: {}]
  %s15 = inlined_call_operand.hbm [shape: f32[512,128], index: 15, kind: input, shape index: {}]
  %s16 = inlined_call_operand.vmem [shape: f32[1,128], index: 16, kind: input, shape index: {}]
  %s17 = inlined_call_operand.hbm [shape: f32[2,128], index: 17, kind: output, shape index: {}]
  %s18 = sld [smem:[#allocation0]]
  $region98: #{bensity_forward.3} parent=0
    _
  %s20 = ssub.s32 1, %s18
  %s21 = scalar_select 0, %s20, %s18
  $region1: #{bensity_forward.3} parent=0
    #allocation3 [shape = 'u8[65536]{0}', space=vmem, size = 0x10000, scoped, tag = 'input window, operand 6, single buffered']
    #allocation4 [shape = 's32[1]{0}', space=sflag, size = 0x4, scoped, tag = 'scoped memory for bensity_forward.3']
    #allocation5 [shape = 's32[1]{0}', space=sflag, size = 0x4, scoped, tag = 'scoped memory for bensity_forward.3']
    #allocation6 [shape = 'u8[65536]{0}', space=vmem, size = 0x10000, scoped, tag = 'input window, operand 8, single buffered']
    #allocation7 [shape = 's32[1]{0}', space=sflag, size = 0x4, scoped, tag = 'scoped memory for bensity_forward.3']
    #allocation8 [shape = 'u8[262144]{0}', space=vmem, size = 0x40000, scoped, tag = 'input window, operand 10, single buffered']
    #allocation9 [shape = 'u8[262144]{0}', space=vmem, size = 0x40000, scoped, tag = 'input window, operand 14, single buffered']
    #allocation10 [shape = 's32[1]{0}', space=sflag, size = 0x4, scoped, tag = 'scoped memory for bensity_forward.3']
    #allocation11 [shape = 'u8[262144]{0}', space=vmem, size = 0x40000, scoped, tag = 'input window, operand 15, single buffered']
    #allocation12 [shape = 'u8[1024]{0}', space=vmem, size = 0x400, scoped, tag = 'output window, operand 0, single buffered']
    %22 = vsyncpa [#allocation4], 0
    %23 = vsyncpa [#allocation7], 0
    %24 = vsyncpa [#allocation10], 0
    %25 = vsyncpa [#allocation5], 0
    // Predicated region
    $region2: #{bensity_forward.3} parent=1 // pred_check
      _
    $region3: #{bensity_forward.3} parent=1 // pred_check_branch
      %27 = sbr.rel (0) target = $region5
    $region4: #{bensity_forward.3} parent=1 // pred_region
      _
    $region5: #{bensity_forward.3} parent=1 // pred_fallthru
      _
    // Predicated region
    $region6: #{bensity_forward.3} parent=1 // pred_check
      _
    $region7: #{bensity_forward.3} parent=1 // pred_check_branch
      %29 = sbr.rel (0) target = $region9
    $region8: #{bensity_forward.3} parent=1 // pred_region
      _
    $region9: #{bensity_forward.3} parent=1 // pred_fallthru
      _
    // Predicated region
    $region10: #{bensity_forward.3} parent=1 // pred_check
      _
    $region11: #{bensity_forward.3} parent=1 // pred_check_branch
      %31 = sbr.rel (0) target = $region13
    $region12: #{bensity_forward.3} parent=1 // pred_region
      _
    $region13: #{bensity_forward.3} parent=1 // pred_fallthru
      _
    // Predicated region
    $region14: #{bensity_forward.3} parent=1 // pred_check
      _
    $region15: #{bensity_forward.3} parent=1 // pred_check_branch
      %33 = sbr.rel (0) target = $region17
    $region16: #{bensity_forward.3} parent=1 // pred_region
      _
    $region17: #{bensity_forward.3} parent=1 // pred_fallthru
      _
    // Predicated region
    $region18: #{bensity_forward.3} parent=1 // pred_check
      _
    $region19: #{bensity_forward.3} parent=1 // pred_check_branch
      %35 = sbr.rel (0) target = $region21
    $region20: #{bensity_forward.3} parent=1 // pred_region
      _
    $region21: #{bensity_forward.3} parent=1 // pred_fallthru
      _
    // Predicated region
    $region22: #{bensity_forward.3} parent=1 // pred_check
      _
    $region23: #{bensity_forward.3} parent=1 // pred_check_branch
      %37 = sbr.rel (0) target = $region25
    $region24: #{bensity_forward.3} parent=1 // pred_region
      _
    $region25: #{bensity_forward.3} parent=1 // pred_fallthru
      _
    // Predicated region
    $region26: #{bensity_forward.3} parent=1 // pred_check
      _
    $region27: #{bensity_forward.3} parent=1 // pred_check_branch
      %39 = sbr.rel (0) target = $region29
    $region28: #{bensity_forward.3} parent=1 // pred_region
      %s41 = ssub.s32 2048, 2048
      %42 = vsyncadd [#allocation4], %s41
      %s43 = sshll.u32 [#allocation3], 4
      %s44 = int_to_ptr.vmem [resolvable:$true] %s43
      %49 = dma.hbm_to_vmem [thread:$0]  %s6, 2048, %s44, [#allocation4], 128, 128, 8
    $region29: #{bensity_forward.3} parent=1 // pred_fallthru
      _
    // Predicated region
    $region30: #{bensity_forward.3} parent=1 // pred_check
      _
    $region31: #{bensity_forward.3} parent=1 // pred_check_branch
      %51 = sbr.rel (0) target = $region33
    $region32: #{bensity_forward.3} parent=1 // pred_region
      _
    $region33: #{bensity_forward.3} parent=1 // pred_fallthru
      _
    // Predicated region
    $region34: #{bensity_forward.3} parent=1 // pred_check
      _
    $region35: #{bensity_forward.3} parent=1 // pred_check_branch
      %53 = sbr.rel (0) target = $region37
    $region36: #{bensity_forward.3} parent=1 // pred_region
      %s55 = ssub.s32 2048, 2048
      %56 = vsyncadd [#allocation7], %s55
      %s57 = sshll.u32 [#allocation6], 4
      %s58 = int_to_ptr.vmem [resolvable:$true] %s57
      %63 = dma.hbm_to_vmem [thread:$0]  %s8, 2048, %s58, [#allocation7], 128, 128, 8
    $region37: #{bensity_forward.3} parent=1 // pred_fallthru
      _
    // Predicated region
    $region38: #{bensity_forward.3} parent=1 // pred_check
      _
    $region39: #{bensity_forward.3} parent=1 // pred_check_branch
      %65 = sbr.rel (0) target = $region41
    $region40: #{bensity_forward.3} parent=1 // pred_region
      _
    $region41: #{bensity_forward.3} parent=1 // pred_fallthru
      _
    // Predicated region
    $region42: #{bensity_forward.3} parent=1 // pred_check
      _
    $region43: #{bensity_forward.3} parent=1 // pred_check_branch
      %67 = sbr.rel (0) target = $region45
    $region44: #{bensity_forward.3} parent=1 // pred_region
      %s69 = ssub.s32 8192, 8192
      %70 = vsyncadd [#allocation7], %s69
      %s71 = sshll.u32 [#allocation8], 4
      %s72 = int_to_ptr.vmem [resolvable:$true] %s71
      %77 = dma.hbm_to_vmem [thread:$0]  %s10, 8192, %s72, [#allocation7], 512, 512, 32
    $region45: #{bensity_forward.3} parent=1 // pred_fallthru
      _
    // Predicated region
    $region46: #{bensity_forward.3} parent=1 // pred_check
      _
    $region47: #{bensity_forward.3} parent=1 // pred_check_branch
      %79 = sbr.rel (0) target = $region49
    $region48: #{bensity_forward.3} parent=1 // pred_region
      _
    $region49: #{bensity_forward.3} parent=1 // pred_fallthru
      _
    // Predicated region
    $region50: #{bensity_forward.3} parent=1 // pred_check
      _
    $region51: #{bensity_forward.3} parent=1 // pred_check_branch
      %81 = sbr.rel (0) target = $region53
    $region52: #{bensity_forward.3} parent=1 // pred_region
      _
    $region53: #{bensity_forward.3} parent=1 // pred_fallthru
      _
    // Predicated region
    $region54: #{bensity_forward.3} parent=1 // pred_check
      _
    $region55: #{bensity_forward.3} parent=1 // pred_check_branch
      %83 = sbr.rel (0) target = $region57
    $region56: #{bensity_forward.3} parent=1 // pred_region
      _
    $region57: #{bensity_forward.3} parent=1 // pred_fallthru
      _
    // Predicated region
    $region58: #{bensity_forward.3} parent=1 // pred_check
      _
    $region59: #{bensity_forward.3} parent=1 // pred_check_branch
      %85 = sbr.rel (0) target = $region61
    $region60: #{bensity_forward.3} parent=1 // pred_region
      %s87 = ssub.s32 8192, 8192
      %88 = vsyncadd [#allocation10], %s87
      %s89 = sshll.u32 [#allocation9], 4
      %s90 = int_to_ptr.vmem [resolvable:$true] %s89
      %95 = dma.hbm_to_vmem [thread:$0]  %s14, 8192, %s90, [#allocation10], 128, 128, 8
    $region61: #{bensity_forward.3} parent=1 // pred_fallthru
      _
    // Predicated region
    $region62: #{bensity_forward.3} parent=1 // pred_check
      _
    $region63: #{bensity_forward.3} parent=1 // pred_check_branch
      %97 = sbr.rel (0) target = $region65
    $region64: #{bensity_forward.3} parent=1 // pred_region
      %s99 = ssub.s32 8192, 8192
      %100 = vsyncadd [#allocation10], %s99
      %s101 = sshll.u32 [#allocation11], 4
      %s102 = int_to_ptr.vmem [resolvable:$true] %s101
      %107 = dma.hbm_to_vmem [thread:$0]  %s15, 8192, %s102, [#allocation10], 128, 128, 8
    $region65: #{bensity_forward.3} parent=1 // pred_fallthru
      _
    // Predicated region
    $region66: #{bensity_forward.3} parent=1 // pred_check
      _
    $region67: #{bensity_forward.3} parent=1 // pred_check_branch
      %109 = sbr.rel (0) target = $region69
    $region68: #{bensity_forward.3} parent=1 // pred_region
      _
    $region69: #{bensity_forward.3} parent=1 // pred_fallthru
      _
    // Predicated region
    $region70: #{bensity_forward.3} parent=1 // pred_check
      _
    $region71: #{bensity_forward.3} parent=1 // pred_check_branch
      %111 = sbr.rel (0) target = $region73
    $region72: #{bensity_forward.3} parent=1 // pred_region
      %112 = dma.done [#allocation4], 2048
    $region73: #{bensity_forward.3} parent=1 // pred_fallthru
      _
    // Predicated region
    $region74: #{bensity_forward.3} parent=1 // pred_check
      _
    $region75: #{bensity_forward.3} parent=1 // pred_check_branch
      %114 = sbr.rel (0) target = $region77
    $region76: #{bensity_forward.3} parent=1 // pred_region
      %115 = dma.done [#allocation7], 2048
    $region77: #{bensity_forward.3} parent=1 // pred_fallthru
      _
    // Predicated region
    $region78: #{bensity_forward.3} parent=1 // pred_check
      _
    $region79: #{bensity_forward.3} parent=1 // pred_check_branch
      %117 = sbr.rel (0) target = $region81
    $region80: #{bensity_forward.3} parent=1 // pred_region
      %118 = dma.done [#allocation7], 8192
    $region81: #{bensity_forward.3} parent=1 // pred_fallthru
      _
    // Predicated region
    $region82: #{bensity_forward.3} parent=1 // pred_check
      _
    $region83: #{bensity_forward.3} parent=1 // pred_check_branch
      %120 = sbr.rel (0) target = $region85
    $region84: #{bensity_forward.3} parent=1 // pred_region
      %121 = dma.done [#allocation10], 8192
    $region85: #{bensity_forward.3} parent=1 // pred_fallthru
      _
    // Predicated region
    $region86: #{bensity_forward.3} parent=1 // pred_check
      _
    $region87: #{bensity_forward.3} parent=1 // pred_check_branch
      %123 = sbr.rel (0) target = $region89
    $region88: #{bensity_forward.3} parent=1 // pred_region
      %124 = dma.done [#allocation10], 8192
    $region89: #{bensity_forward.3} parent=1 // pred_fallthru
      _
    %v126 = vld [vmem:[%s0] sm:$0xff]
    %v127 = vld [vmem:[%s0 + $0x8] sm:$0xff]
    %v128 = vld [vmem:[%s2] sm:$0xff]
    %v129 = vld [vmem:[%s2 + $0x8] sm:$0xff]
    %v130 = vld [vmem:[%s2 + $0x10] sm:$0xff]
    %v131 = vld [vmem:[%s2 + $0x18] sm:$0xff]
    %v132 = vld [vmem:[%s2 + $0x20] sm:$0xff]
    %v133 = vld [vmem:[%s2 + $0x28] sm:$0xff]
    %v134 = vld [vmem:[%s2 + $0x30] sm:$0xff]
    %v135 = vld [vmem:[%s2 + $0x38] sm:$0xff]
    %v136 = vld [vmem:[%s2 + $0x40] sm:$0xff]
    %v137 = vld [vmem:[%s2 + $0x48] sm:$0xff]
    %v138 = vld [vmem:[%s2 + $0x50] sm:$0xff]
    %v139 = vld [vmem:[%s2 + $0x58] sm:$0xff]
    %v140 = vld [vmem:[%s2 + $0x60] sm:$0xff]
    %v141 = vld [vmem:[%s2 + $0x68] sm:$0xff]
    %v142 = vld [vmem:[%s2 + $0x70] sm:$0xff]
    %v143 = vld [vmem:[%s2 + $0x78] sm:$0xff]
    %v144 = vld [vmem:[%s3] sm:$0x1]
    %v146 = vlaneseq
    %v147 = vshrl.u32 %v146, 7
    %v148 = vsub.s32 0, %v147
    %v149 = vrot.slane %v144, %v148
    %151 = vmatprep.subr.mxu0 0.0
    %152 = vmatpush1.msra.mxu0 %v128
    %153 = vmatprep.subr.mxu0 0.0
    %154 = vmatpush1.msra.mxu0 %v129
    %155 = vmatprep.subr.mxu0 0.0
    %156 = vmatpush1.msra.mxu0 %v130
    %157 = vmatprep.subr.mxu0 0.0
    %158 = vmatpush1.msra.mxu0 %v131
    %159 = vmatprep.subr.mxu0 0.0
    %160 = vmatpush1.msra.mxu0 %v132
    %161 = vmatprep.subr.mxu0 0.0
    %162 = vmatpush1.msra.mxu0 %v133
    %163 = vmatprep.subr.mxu0 0.0
    %164 = vmatpush1.msra.mxu0 %v134
    %165 = vmatprep.subr.mxu0 0.0
    %166 = vmatpush1.msra.mxu0 %v135
    %167 = vmatprep.subr.mxu0 0.0
    %168 = vmatpush1.msra.mxu0 %v136
    %169 = vmatprep.subr.mxu0 0.0
    %170 = vmatpush1.msra.mxu0 %v137
    %171 = vmatprep.subr.mxu0 0.0
    %172 = vmatpush1.msra.mxu0 %v138
    %173 = vmatprep.subr.mxu0 0.0
    %174 = vmatpush1.msra.mxu0 %v139
    %175 = vmatprep.subr.mxu0 0.0
    %176 = vmatpush1.msra.mxu0 %v140
    %177 = vmatprep.subr.mxu0 0.0
    %178 = vmatpush1.msra.mxu0 %v141
    %179 = vmatprep.subr.mxu0 0.0
    %180 = vmatpush1.msra.mxu0 %v142
    %181 = vmatprep.subr.mxu0 0.0
    %182 = vmatpush1.msra.mxu0 %v143
    %183 = vmatprep.subr.mxu0 0.0
    %184 = vmatpush1.msra.mxu0 0.0
    %185 = vmatprep.subr.mxu0 0.0
    %186 = vmatpush1.msra.mxu0 0.0
    %187 = vmatprep.subr.mxu0 0.0
    %188 = vmatpush1.msra.mxu0 0.0
    %189 = vmatprep.subr.mxu0 0.0
    %190 = vmatpush1.msra.mxu0 0.0
    %191 = vmatprep.subr.mxu0 0.0
    %192 = vmatpush1.msra.mxu0 0.0
    %193 = vmatprep.subr.mxu0 0.0
    %194 = vmatpush1.msra.mxu0 0.0
    %195 = vmatprep.subr.mxu0 0.0
    %196 = vmatpush1.msra.mxu0 0.0
    %197 = vmatprep.subr.mxu0 0.0
    %198 = vmatpush1.msra.mxu0 0.0
    %199 = vmatprep.subr.mxu0 0.0
    %200 = vmatpush1.msra.mxu0 0.0
    %201 = vmatprep.subr.mxu0 0.0
    %202 = vmatpush1.msra.mxu0 0.0
    %203 = vmatprep.subr.mxu0 0.0
    %204 = vmatpush1.msra.mxu0 0.0
    %205 = vmatprep.subr.mxu0 0.0
    %206 = vmatpush1.msra.mxu0 0.0
    %207 = vmatprep.subr.mxu0 0.0
    %208 = vmatpush1.msra.mxu0 0.0
    %209 = vmatprep.subr.mxu0 0.0
    %210 = vmatpush1.msra.mxu0 0.0
    %211 = vmatprep.subr.mxu0 0.0
    %212 = vmatpush1.msra.mxu0 0.0
    %213 = vmatprep.subr.mxu0 0.0
    %214 = vmatpush1.msra.mxu0 0.0
    %215 = vmatprep.mubr.f32.mxu0 0.0
    %216 = vmatmul.mubr.f32.gmra.mrb[0].mxu0 %v126
    %v217 = vpop.f32.mrb[0].mxu0
    %v218 = vadd.f32 %v149, %v217
    %v219 = vpop.f32.mrb[0].mxu0
    %220 = vmatprep.mubr.f32.mxu0 0.0
    %221 = vmatmul.mubr.f32.gmra.mrb[0].mxu0 %v127
    %v222 = vpop.f32.mrb[0].mxu0
    %v223 = vadd.f32 %v149, %v222
    %v224 = vpop.f32.mrb[0].mxu0
    %225 = vdwg.mxu0
    %v226 = vtanh.pop %v218
    %v227 = vtanh.pop %v223
    %v228 = vld [vmem:[%s4] sm:$0xff]
    %v229 = vld [vmem:[%s4 + $0x8] sm:$0xff]
    %v230 = vld [vmem:[%s4 + $0x10] sm:$0xff]
    %v231 = vld [vmem:[%s4 + $0x18] sm:$0xff]
    %v232 = vld [vmem:[%s4 + $0x20] sm:$0xff]
    %v233 = vld [vmem:[%s4 + $0x28] sm:$0xff]
    %v234 = vld [vmem:[%s4 + $0x30] sm:$0xff]
    %v235 = vld [vmem:[%s4 + $0x38] sm:$0xff]
    %v236 = vld [vmem:[%s4 + $0x40] sm:$0xff]
    %v237 = vld [vmem:[%s4 + $0x48] sm:$0xff]
    %v238 = vld [vmem:[%s4 + $0x50] sm:$0xff]
    %v239 = vld [vmem:[%s4 + $0x58] sm:$0xff]
    %v240 = vld [vmem:[%s4 + $0x60] sm:$0xff]
    %v241 = vld [vmem:[%s4 + $0x68] sm:$0xff]
    %v242 = vld [vmem:[%s4 + $0x70] sm:$0xff]
    %v243 = vld [vmem:[%s4 + $0x78] sm:$0xff]
    %v244 = vld [vmem:[%s5] sm:$0x1]
    %v246 = vlaneseq
    %v247 = vshrl.u32 %v246, 7
    %v248 = vsub.s32 0, %v247
    %v249 = vrot.slane %v244, %v248
    %251 = vmatprep.subr.mxu0 0.0
    %252 = vmatpush1.msra.mxu0 %v228
    %253 = vmatprep.subr.mxu0 0.0
    %254 = vmatpush1.msra.mxu0 %v229
    %255 = vmatprep.subr.mxu0 0.0
    %256 = vmatpush1.msra.mxu0 %v230
    %257 = vmatprep.subr.mxu0 0.0
    %258 = vmatpush1.msra.mxu0 %v231
    %259 = vmatprep.subr.mxu0 0.0
    %260 = vmatpush1.msra.mxu0 %v232
    %261 = vmatprep.subr.mxu0 0.0
    %262 = vmatpush1.msra.mxu0 %v233
    %263 = vmatprep.subr.mxu0 0.0
    %264 = vmatpush1.msra.mxu0 %v234
    %265 = vmatprep.subr.mxu0 0.0
    %266 = vmatpush1.msra.mxu0 %v235
    %267 = vmatprep.subr.mxu0 0.0
    %268 = vmatpush1.msra.mxu0 %v236
    %269 = vmatprep.subr.mxu0 0.0
    %270 = vmatpush1.msra.mxu0 %v237
    %271 = vmatprep.subr.mxu0 0.0
    %272 = vmatpush1.msra.mxu0 %v238
    %273 = vmatprep.subr.mxu0 0.0
    %274 = vmatpush1.msra.mxu0 %v239
    %275 = vmatprep.subr.mxu0 0.0
    %276 = vmatpush1.msra.mxu0 %v240
    %277 = vmatprep.subr.mxu0 0.0
    %278 = vmatpush1.msra.mxu0 %v241
    %279 = vmatprep.subr.mxu0 0.0
    %280 = vmatpush1.msra.mxu0 %v242
    %281 = vmatprep.subr.mxu0 0.0
    %282 = vmatpush1.msra.mxu0 %v243
    %283 = vmatprep.subr.mxu0 0.0
    %284 = vmatpush1.msra.mxu0 0.0
    %285 = vmatprep.subr.mxu0 0.0
    %286 = vmatpush1.msra.mxu0 0.0
    %287 = vmatprep.subr.mxu0 0.0
    %288 = vmatpush1.msra.mxu0 0.0
    %289 = vmatprep.subr.mxu0 0.0
    %290 = vmatpush1.msra.mxu0 0.0
    %291 = vmatprep.subr.mxu0 0.0
    %292 = vmatpush1.msra.mxu0 0.0
    %293 = vmatprep.subr.mxu0 0.0
    %294 = vmatpush1.msra.mxu0 0.0
    %295 = vmatprep.subr.mxu0 0.0
    %296 = vmatpush1.msra.mxu0 0.0
    %297 = vmatprep.subr.mxu0 0.0
    %298 = vmatpush1.msra.mxu0 0.0
    %299 = vmatprep.subr.mxu0 0.0
    %300 = vmatpush1.msra.mxu0 0.0
    %301 = vmatprep.subr.mxu0 0.0
    %302 = vmatpush1.msra.mxu0 0.0
    %303 = vmatprep.subr.mxu0 0.0
    %304 = vmatpush1.msra.mxu0 0.0
    %305 = vmatprep.subr.mxu0 0.0
    %306 = vmatpush1.msra.mxu0 0.0
    %307 = vmatprep.subr.mxu0 0.0
    %308 = vmatpush1.msra.mxu0 0.0
    %309 = vmatprep.subr.mxu0 0.0
    %310 = vmatpush1.msra.mxu0 0.0
    %311 = vmatprep.subr.mxu0 0.0
    %312 = vmatpush1.msra.mxu0 0.0
    %313 = vmatprep.subr.mxu0 0.0
    %314 = vmatpush1.msra.mxu0 0.0
    %315 = vmatprep.mubr.f32.mxu0 0.0
    %316 = vmatmul.mubr.f32.gmra.mrb[0].mxu0 %v226
    %v317 = vpop.f32.mrb[0].mxu0
    %v318 = vadd.f32 %v249, %v317
    %v319 = vpop.f32.mrb[0].mxu0
    %320 = vmatprep.mubr.f32.mxu0 0.0
    %321 = vmatmul.mubr.f32.gmra.mrb[0].mxu0 %v227
    %v322 = vpop.f32.mrb[0].mxu0
    %v323 = vadd.f32 %v249, %v322
    %v324 = vpop.f32.mrb[0].mxu0
    %325 = vdwg.mxu0
    %v326 = vld [vmem:[#allocation3] sm:$0xff]
    %v327 = vld [vmem:[#allocation3 + $0x8] sm:$0xff]
    %v328 = vld [vmem:[#allocation3 + $0x10] sm:$0xff]
    %v329 = vld [vmem:[#allocation3 + $0x18] sm:$0xff]
    %v330 = vld [vmem:[#allocation3 + $0x20] sm:$0xff]
    %v331 = vld [vmem:[#allocation3 + $0x28] sm:$0xff]
    %v332 = vld [vmem:[#allocation3 + $0x30] sm:$0xff]
    %v333 = vld [vmem:[#allocation3 + $0x38] sm:$0xff]
    %v334 = vld [vmem:[#allocation3 + $0x40] sm:$0xff]
    %v335 = vld [vmem:[#allocation3 + $0x48] sm:$0xff]
    %v336 = vld [vmem:[#allocation3 + $0x50] sm:$0xff]
    %v337 = vld [vmem:[#allocation3 + $0x58] sm:$0xff]
    %v338 = vld [vmem:[#allocation3 + $0x60] sm:$0xff]
    %v339 = vld [vmem:[#allocation3 + $0x68] sm:$0xff]
    %v340 = vld [vmem:[#allocation3 + $0x70] sm:$0xff]
    %v341 = vld [vmem:[#allocation3 + $0x78] sm:$0xff]
    %v342 = vld [vmem:[%s7] sm:$0x1]
    %v344 = vlaneseq
    %v345 = vshrl.u32 %v344, 7
    %v346 = vsub.s32 0, %v345
    %v347 = vrot.slane %v342, %v346
    %349 = vmatprep.subr.mxu0 0.0
    %350 = vmatpush1.msra.mxu0 %v326
    %351 = vmatprep.subr.mxu0 0.0
    %352 = vmatpush1.msra.mxu0 %v327
    %353 = vmatprep.subr.mxu0 0.0
    %354 = vmatpush1.msra.mxu0 %v328
    %355 = vmatprep.subr.mxu0 0.0
    %356 = vmatpush1.msra.mxu0 %v329
    %357 = vmatprep.subr.mxu0 0.0
    %358 = vmatpush1.msra.mxu0 %v330
    %359 = vmatprep.subr.mxu0 0.0
    %360 = vmatpush1.msra.mxu0 %v331
    %361 = vmatprep.subr.mxu0 0.0
    %362 = vmatpush1.msra.mxu0 %v332
    %363 = vmatprep.subr.mxu0 0.0
    %364 = vmatpush1.msra.mxu0 %v333
    %365 = vmatprep.subr.mxu0 0.0
    %366 = vmatpush1.msra.mxu0 %v334
    %367 = vmatprep.subr.mxu0 0.0
    %368 = vmatpush1.msra.mxu0 %v335
    %369 = vmatprep.subr.mxu0 0.0
    %370 = vmatpush1.msra.mxu0 %v336
    %371 = vmatprep.subr.mxu0 0.0
    %372 = vmatpush1.msra.mxu0 %v337
    %373 = vmatprep.subr.mxu0 0.0
    %374 = vmatpush1.msra.mxu0 %v338
    %375 = vmatprep.subr.mxu0 0.0
    %376 = vmatpush1.msra.mxu0 %v339
    %377 = vmatprep.subr.mxu0 0.0
    %378 = vmatpush1.msra.mxu0 %v340
    %379 = vmatprep.subr.mxu0 0.0
    %380 = vmatpush1.msra.mxu0 %v341
    %381 = vmatprep.subr.mxu0 0.0
    %382 = vmatpush1.msra.mxu0 0.0
    %383 = vmatprep.subr.mxu0 0.0
    %384 = vmatpush1.msra.mxu0 0.0
    %385 = vmatprep.subr.mxu0 0.0
    %386 = vmatpush1.msra.mxu0 0.0
    %387 = vmatprep.subr.mxu0 0.0
    %388 = vmatpush1.msra.mxu0 0.0
    %389 = vmatprep.subr.mxu0 0.0
    %390 = vmatpush1.msra.mxu0 0.0
    %391 = vmatprep.subr.mxu0 0.0
    %392 = vmatpush1.msra.mxu0 0.0
    %393 = vmatprep.subr.mxu0 0.0
    %394 = vmatpush1.msra.mxu0 0.0
    %395 = vmatprep.subr.mxu0 0.0
    %396 = vmatpush1.msra.mxu0 0.0
    %397 = vmatprep.subr.mxu0 0.0
    %398 = vmatpush1.msra.mxu0 0.0
    %399 = vmatprep.subr.mxu0 0.0
    %400 = vmatpush1.msra.mxu0 0.0
    %401 = vmatprep.subr.mxu0 0.0
    %402 = vmatpush1.msra.mxu0 0.0
    %403 = vmatprep.subr.mxu0 0.0
    %404 = vmatpush1.msra.mxu0 0.0
    %405 = vmatprep.subr.mxu0 0.0
    %406 = vmatpush1.msra.mxu0 0.0
    %407 = vmatprep.subr.mxu0 0.0
    %408 = vmatpush1.msra.mxu0 0.0
    %409 = vmatprep.subr.mxu0 0.0
    %410 = vmatpush1.msra.mxu0 0.0
    %411 = vmatprep.subr.mxu0 0.0
    %412 = vmatpush1.msra.mxu0 0.0
    %413 = vmatprep.mubr.f32.mxu0 0.0
    %414 = vmatmul.mubr.f32.gmra.mrb[0].mxu0 %v226
    %v415 = vpop.f32.mrb[0].mxu0
    %v416 = vadd.f32 %v347, %v415
    %v417 = vpop.f32.mrb[0].mxu0
    %418 = vmatprep.mubr.f32.mxu0 0.0
    %419 = vmatmul.mubr.f32.gmra.mrb[0].mxu0 %v227
    %v420 = vpop.f32.mrb[0].mxu0
    %v421 = vadd.f32 %v347, %v420
    %v422 = vpop.f32.mrb[0].mxu0
    %423 = vdwg.mxu0
    %v424 = vld [vmem:[#allocation6] sm:$0xff]
    %v425 = vld [vmem:[#allocation6 + $0x8] sm:$0xff]
    %v426 = vld [vmem:[#allocation6 + $0x10] sm:$0xff]
    %v427 = vld [vmem:[#allocation6 + $0x18] sm:$0xff]
    %v428 = vld [vmem:[#allocation6 + $0x20] sm:$0xff]
    %v429 = vld [vmem:[#allocation6 + $0x28] sm:$0xff]
    %v430 = vld [vmem:[#allocation6 + $0x30] sm:$0xff]
    %v431 = vld [vmem:[#allocation6 + $0x38] sm:$0xff]
    %v432 = vld [vmem:[#allocation6 + $0x40] sm:$0xff]
    %v433 = vld [vmem:[#allocation6 + $0x48] sm:$0xff]
    %v434 = vld [vmem:[#allocation6 + $0x50] sm:$0xff]
    %v435 = vld [vmem:[#allocation6 + $0x58] sm:$0xff]
    %v436 = vld [vmem:[#allocation6 + $0x60] sm:$0xff]
    %v437 = vld [vmem:[#allocation6 + $0x68] sm:$0xff]
    %v438 = vld [vmem:[#allocation6 + $0x70] sm:$0xff]
    %v439 = vld [vmem:[#allocation6 + $0x78] sm:$0xff]
    %v440 = vld [vmem:[%s9] sm:$0x1]
    %v442 = vlaneseq
    %v443 = vshrl.u32 %v442, 7
    %v444 = vsub.s32 0, %v443
    %v445 = vrot.slane %v440, %v444
    %447 = vmatprep.subr.mxu0 0.0
    %448 = vmatpush1.msra.mxu0 %v424
    %449 = vmatprep.subr.mxu0 0.0
    %450 = vmatpush1.msra.mxu0 %v425
    %451 = vmatprep.subr.mxu0 0.0
    %452 = vmatpush1.msra.mxu0 %v426
    %453 = vmatprep.subr.mxu0 0.0
    %454 = vmatpush1.msra.mxu0 %v427
    %455 = vmatprep.subr.mxu0 0.0
    %456 = vmatpush1.msra.mxu0 %v428
    %457 = vmatprep.subr.mxu0 0.0
    %458 = vmatpush1.msra.mxu0 %v429
    %459 = vmatprep.subr.mxu0 0.0
    %460 = vmatpush1.msra.mxu0 %v430
    %461 = vmatprep.subr.mxu0 0.0
    %462 = vmatpush1.msra.mxu0 %v431
    %463 = vmatprep.subr.mxu0 0.0
    %464 = vmatpush1.msra.mxu0 %v432
    %465 = vmatprep.subr.mxu0 0.0
    %466 = vmatpush1.msra.mxu0 %v433
    %467 = vmatprep.subr.mxu0 0.0
    %468 = vmatpush1.msra.mxu0 %v434
    %469 = vmatprep.subr.mxu0 0.0
    %470 = vmatpush1.msra.mxu0 %v435
    %471 = vmatprep.subr.mxu0 0.0
    %472 = vmatpush1.msra.mxu0 %v436
    %473 = vmatprep.subr.mxu0 0.0
    %474 = vmatpush1.msra.mxu0 %v437
    %475 = vmatprep.subr.mxu0 0.0
    %476 = vmatpush1.msra.mxu0 %v438
    %477 = vmatprep.subr.mxu0 0.0
    %478 = vmatpush1.msra.mxu0 %v439
    %479 = vmatprep.subr.mxu0 0.0
    %480 = vmatpush1.msra.mxu0 0.0
    %481 = vmatprep.subr.mxu0 0.0
    %482 = vmatpush1.msra.mxu0 0.0
    %483 = vmatprep.subr.mxu0 0.0
    %484 = vmatpush1.msra.mxu0 0.0
    %485 = vmatprep.subr.mxu0 0.0
    %486 = vmatpush1.msra.mxu0 0.0
    %487 = vmatprep.subr.mxu0 0.0
    %488 = vmatpush1.msra.mxu0 0.0
    %489 = vmatprep.subr.mxu0 0.0
    %490 = vmatpush1.msra.mxu0 0.0
    %491 = vmatprep.subr.mxu0 0.0
    %492 = vmatpush1.msra.mxu0 0.0
    %493 = vmatprep.subr.mxu0 0.0
    %494 = vmatpush1.msra.mxu0 0.0
    %495 = vmatprep.subr.mxu0 0.0
    %496 = vmatpush1.msra.mxu0 0.0
    %497 = vmatprep.subr.mxu0 0.0
    %498 = vmatpush1.msra.mxu0 0.0
    %499 = vmatprep.subr.mxu0 0.0
    %500 = vmatpush1.msra.mxu0 0.0
    %501 = vmatprep.subr.mxu0 0.0
    %502 = vmatpush1.msra.mxu0 0.0
    %503 = vmatprep.subr.mxu0 0.0
    %504 = vmatpush1.msra.mxu0 0.0
    %505 = vmatprep.subr.mxu0 0.0
    %506 = vmatpush1.msra.mxu0 0.0
    %507 = vmatprep.subr.mxu0 0.0
    %508 = vmatpush1.msra.mxu0 0.0
    %509 = vmatprep.subr.mxu0 0.0
    %510 = vmatpush1.msra.mxu0 0.0
    %511 = vmatprep.mubr.f32.mxu0 0.0
    %512 = vmatmul.mubr.f32.gmra.mrb[0].mxu0 %v226
    %v513 = vpop.f32.mrb[0].mxu0
    %v514 = vadd.f32 %v445, %v513
    %v515 = vpop.f32.mrb[0].mxu0
    %516 = vmatprep.mubr.f32.mxu0 0.0
    %517 = vmatmul.mubr.f32.gmra.mrb[0].mxu0 %v227
    %v518 = vpop.f32.mrb[0].mxu0
    %v519 = vadd.f32 %v445, %v518
    %v520 = vpop.f32.mrb[0].mxu0
    %521 = vdwg.mxu0
    %522 = vmatprep.subr.mxu0 0.0
    %523 = vmatpush1.xpose.msra.mxu0 %v416
    %524 = vmatprep.subr.mxu0 0.0
    %525 = vmatpush1.xpose.msra.mxu0 0.0
    %526 = vmatprep.subr.mxu0 0.0
    %527 = vmatpush1.xpose.msra.mxu0 0.0
    %528 = vmatprep.subr.mxu0 0.0
    %529 = vmatpush1.xpose.msra.mxu0 0.0
    %530 = vmatprep.subr.mxu0 0.0
    %531 = vmatpush1.xpose.msra.mxu0 0.0
    %532 = vmatprep.subr.mxu0 0.0
    %533 = vmatpush1.xpose.msra.mxu0 0.0
    %534 = vmatprep.subr.mxu0 0.0
    %535 = vmatpush1.xpose.msra.mxu0 0.0
    %536 = vmatprep.subr.mxu0 0.0
    %537 = vmatpush1.xpose.msra.mxu0 0.0
    %538 = vmatprep.subr.mxu0 0.0
    %539 = vmatpush1.xpose.msra.mxu0 0.0
    %540 = vmatprep.subr.mxu0 0.0
    %541 = vmatpush1.xpose.msra.mxu0 0.0
    %542 = vmatprep.subr.mxu0 0.0
    %543 = vmatpush1.xpose.msra.mxu0 0.0
    %544 = vmatprep.subr.mxu0 0.0
    %545 = vmatpush1.xpose.msra.mxu0 0.0
    %546 = vmatprep.subr.mxu0 0.0
    %547 = vmatpush1.xpose.msra.mxu0 0.0
    %548 = vmatprep.subr.mxu0 0.0
    %549 = vmatpush1.xpose.msra.mxu0 0.0
    %550 = vmatprep.subr.mxu0 0.0
    %551 = vmatpush1.xpose.msra.mxu0 0.0
    %552 = vmatprep.subr.mxu0 0.0
    %553 = vmatpush1.xpose.msra.mxu0 0.0
    %554 = vmatprep.subr.mxu0 0.0
    %555 = vmatpush1.xpose.msra.mxu0 0.0
    %556 = vmatprep.subr.mxu0 0.0
    %557 = vmatpush1.xpose.msra.mxu0 0.0
    %558 = vmatprep.subr.mxu0 0.0
    %559 = vmatpush1.xpose.msra.mxu0 0.0
    %560 = vmatprep.subr.mxu0 0.0
    %561 = vmatpush1.xpose.msra.mxu0 0.0
    %562 = vmatprep.subr.mxu0 0.0
    %563 = vmatpush1.xpose.msra.mxu0 0.0
    %564 = vmatprep.subr.mxu0 0.0
    %565 = vmatpush1.xpose.msra.mxu0 0.0
    %566 = vmatprep.subr.mxu0 0.0
    %567 = vmatpush1.xpose.msra.mxu0 0.0
    %568 = vmatprep.subr.mxu0 0.0
    %569 = vmatpush1.xpose.msra.mxu0 0.0
    %570 = vmatprep.subr.mxu0 0.0
    %571 = vmatpush1.xpose.msra.mxu0 0.0
    %572 = vmatprep.subr.mxu0 0.0
    %573 = vmatpush1.xpose.msra.mxu0 0.0
    %574 = vmatprep.subr.mxu0 0.0
    %575 = vmatpush1.xpose.msra.mxu0 0.0
    %576 = vmatprep.subr.mxu0 0.0
    %577 = vmatpush1.xpose.msra.mxu0 0.0
    %578 = vmatprep.subr.mxu0 0.0
    %579 = vmatpush1.xpose.msra.mxu0 0.0
    %580 = vmatprep.subr.mxu0 0.0
    %581 = vmatpush1.xpose.msra.mxu0 0.0
    %582 = vmatprep.subr.mxu0 0.0
    %583 = vmatpush1.xpose.msra.mxu0 0.0
    %584 = vmatprep.subr.mxu0 0.0
    %585 = vmatpush1.xpose.msra.mxu0 0.0
    %586 = vmatprep.mubr.f32.mxu0 0.0
    %587 = vmatmul.mubr.f32.gmra.mrb[0].mxu0 %v318
    %v588 = vpop.f32.mrb[0].mxu0
    %v589 = vadd.f32 0.0, %v588
    %v590 = vpop.f32.mrb[0].mxu0
    %591 = vdwg.mxu0
    %v592 = vmul.f32 %v589, 0.088388346
    %vm593 = vcmask 64512
    %v594 = vsel %vm593, %v592, -inf
    %595 = vmax.xlane.f32.xlu0 %v594
    %v596 = vpop.xlane.xlu0 %595
    %v597 = vsub.f32 %v592, %v596
    %v598 = vmul.f32 %v597, 1.442695
    %v599 = vpow.pop %v598
    %v600 = vsel %vm593, %v599, 0.0
    %601 = vadd.xlane.f32.xlu0 %v600
    %v602 = vpop.xlane.xlu0 %601
    %v603 = vrcp.pop %v602
    %v604 = vmul.f32 %v599, %v603
    %v606 = vsel %vm593, %v604, 0
    %608 = vmatprep.subr.mxu0 0.0
    %609 = vmatpush1.msra.mxu0 %v514
    %610 = vmatprep.subr.mxu0 0.0
    %611 = vmatpush1.msra.mxu0 0.0
    %612 = vmatprep.subr.mxu0 0.0
    %613 = vmatpush1.msra.mxu0 0.0
    %614 = vmatprep.subr.mxu0 0.0
    %615 = vmatpush1.msra.mxu0 0.0
    %616 = vmatprep.subr.mxu0 0.0
    %617 = vmatpush1.msra.mxu0 0.0
    %618 = vmatprep.subr.mxu0 0.0
    %619 = vmatpush1.msra.mxu0 0.0
    %620 = vmatprep.subr.mxu0 0.0
    %621 = vmatpush1.msra.mxu0 0.0
    %622 = vmatprep.subr.mxu0 0.0
    %623 = vmatpush1.msra.mxu0 0.0
    %624 = vmatprep.subr.mxu0 0.0
    %625 = vmatpush1.msra.mxu0 0.0
    %626 = vmatprep.subr.mxu0 0.0
    %627 = vmatpush1.msra.mxu0 0.0
    %628 = vmatprep.subr.mxu0 0.0
    %629 = vmatpush1.msra.mxu0 0.0
    %630 = vmatprep.subr.mxu0 0.0
    %631 = vmatpush1.msra.mxu0 0.0
    %632 = vmatprep.subr.mxu0 0.0
    %633 = vmatpush1.msra.mxu0 0.0
    %634 = vmatprep.subr.mxu0 0.0
    %635 = vmatpush1.msra.mxu0 0.0
    %636 = vmatprep.subr.mxu0 0.0
    %637 = vmatpush1.msra.mxu0 0.0
    %638 = vmatprep.subr.mxu0 0.0
    %639 = vmatpush1.msra.mxu0 0.0
    %640 = vmatprep.subr.mxu0 0.0
    %641 = vmatpush1.msra.mxu0 0.0
    %642 = vmatprep.subr.mxu0 0.0
    %643 = vmatpush1.msra.mxu0 0.0
    %644 = vmatprep.subr.mxu0 0.0
    %645 = vmatpush1.msra.mxu0 0.0
    %646 = vmatprep.subr.mxu0 0.0
    %647 = vmatpush1.msra.mxu0 0.0
    %648 = vmatprep.subr.mxu0 0.0
    %649 = vmatpush1.msra.mxu0 0.0
    %650 = vmatprep.subr.mxu0 0.0
    %651 = vmatpush1.msra.mxu0 0.0
    %652 = vmatprep.subr.mxu0 0.0
    %653 = vmatpush1.msra.mxu0 0.0
    %654 = vmatprep.subr.mxu0 0.0
    %655 = vmatpush1.msra.mxu0 0.0
    %656 = vmatprep.subr.mxu0 0.0
    %657 = vmatpush1.msra.mxu0 0.0
    %658 = vmatprep.subr.mxu0 0.0
    %659 = vmatpush1.msra.mxu0 0.0
    %660 = vmatprep.subr.mxu0 0.0
    %661 = vmatpush1.msra.mxu0 0.0
    %662 = vmatprep.subr.mxu0 0.0
    %663 = vmatpush1.msra.mxu0 0.0
    %664 = vmatprep.subr.mxu0 0.0
    %665 = vmatpush1.msra.mxu0 0.0
    %666 = vmatprep.subr.mxu0 0.0
    %667 = vmatpush1.msra.mxu0 0.0
    %668 = vmatprep.subr.mxu0 0.0
    %669 = vmatpush1.msra.mxu0 0.0
    %670 = vmatprep.subr.mxu0 0.0
    %671 = vmatpush1.msra.mxu0 0.0
    %672 = vmatprep.mubr.f32.mxu0 0.0
    %673 = vmatmul.mubr.f32.gmra.mrb[0].mxu0 %v606
    %v674 = vpop.f32.mrb[0].mxu0
    %v675 = vadd.f32 0.0, %v674
    %v676 = vpop.f32.mrb[0].mxu0
    %677 = vdwg.mxu0
    %v678 = vrot.slane %v675, 4
    %v679 = vadd.f32 %v675, %v678
    %v680 = vrot.slane %v679, 2
    %v681 = vadd.f32 %v679, %v680
    %v682 = vrot.slane %v681, 1
    %v683 = vadd.f32 %v681, %v682
    %v684 = vrcp.pop 8.0
    %v685 = vmul.f32 %v683, %v684
    %686 = vst [vmem:[#allocation2] sm:$0x1] %v685
    %687 = vmatprep.subr.mxu0 0.0
    %688 = vmatpush1.xpose.msra.mxu0 %v421
    %689 = vmatprep.subr.mxu0 0.0
    %690 = vmatpush1.xpose.msra.mxu0 0.0
    %691 = vmatprep.subr.mxu0 0.0
    %692 = vmatpush1.xpose.msra.mxu0 0.0
    %693 = vmatprep.subr.mxu0 0.0
    %694 = vmatpush1.xpose.msra.mxu0 0.0
    %695 = vmatprep.subr.mxu0 0.0
    %696 = vmatpush1.xpose.msra.mxu0 0.0
    %697 = vmatprep.subr.mxu0 0.0
    %698 = vmatpush1.xpose.msra.mxu0 0.0
    %699 = vmatprep.subr.mxu0 0.0
    %700 = vmatpush1.xpose.msra.mxu0 0.0
    %701 = vmatprep.subr.mxu0 0.0
    %702 = vmatpush1.xpose.msra.mxu0 0.0
    %703 = vmatprep.subr.mxu0 0.0
    %704 = vmatpush1.xpose.msra.mxu0 0.0
    %705 = vmatprep.subr.mxu0 0.0
    %706 = vmatpush1.xpose.msra.mxu0 0.0
    %707 = vmatprep.subr.mxu0 0.0
    %708 = vmatpush1.xpose.msra.mxu0 0.0
    %709 = vmatprep.subr.mxu0 0.0
    %710 = vmatpush1.xpose.msra.mxu0 0.0
    %711 = vmatprep.subr.mxu0 0.0
    %712 = vmatpush1.xpose.msra.mxu0 0.0
    %713 = vmatprep.subr.mxu0 0.0
    %714 = vmatpush1.xpose.msra.mxu0 0.0
    %715 = vmatprep.subr.mxu0 0.0
    %716 = vmatpush1.xpose.msra.mxu0 0.0
    %717 = vmatprep.subr.mxu0 0.0
    %718 = vmatpush1.xpose.msra.mxu0 0.0
    %719 = vmatprep.subr.mxu0 0.0
    %720 = vmatpush1.xpose.msra.mxu0 0.0
    %721 = vmatprep.subr.mxu0 0.0
    %722 = vmatpush1.xpose.msra.mxu0 0.0
    %723 = vmatprep.subr.mxu0 0.0
    %724 = vmatpush1.xpose.msra.mxu0 0.0
    %725 = vmatprep.subr.mxu0 0.0
    %726 = vmatpush1.xpose.msra.mxu0 0.0
    %727 = vmatprep.subr.mxu0 0.0
    %728 = vmatpush1.xpose.msra.mxu0 0.0
    %729 = vmatprep.subr.mxu0 0.0
    %730 = vmatpush1.xpose.msra.mxu0 0.0
    %731 = vmatprep.subr.mxu0 0.0
    %732 = vmatpush1.xpose.msra.mxu0 0.0
    %733 = vmatprep.subr.mxu0 0.0
    %734 = vmatpush1.xpose.msra.mxu0 0.0
    %735 = vmatprep.subr.mxu0 0.0
    %736 = vmatpush1.xpose.msra.mxu0 0.0
    %737 = vmatprep.subr.mxu0 0.0
    %738 = vmatpush1.xpose.msra.mxu0 0.0
    %739 = vmatprep.subr.mxu0 0.0
    %740 = vmatpush1.xpose.msra.mxu0 0.0
    %741 = vmatprep.subr.mxu0 0.0
    %742 = vmatpush1.xpose.msra.mxu0 0.0
    %743 = vmatprep.subr.mxu0 0.0
    %744 = vmatpush1.xpose.msra.mxu0 0.0
    %745 = vmatprep.subr.mxu0 0.0
    %746 = vmatpush1.xpose.msra.mxu0 0.0
    %747 = vmatprep.subr.mxu0 0.0
    %748 = vmatpush1.xpose.msra.mxu0 0.0
    %749 = vmatprep.subr.mxu0 0.0
    %750 = vmatpush1.xpose.msra.mxu0 0.0
    %751 = vmatprep.mubr.f32.mxu0 0.0
    %752 = vmatmul.mubr.f32.gmra.mrb[0].mxu0 %v323
    %v753 = vpop.f32.mrb[0].mxu0
    %v754 = vadd.f32 0.0, %v753
    %v755 = vpop.f32.mrb[0].mxu0
    %756 = vdwg.mxu0
    %v757 = vmul.f32 %v754, 0.088388346
    %v758 = vsel %vm593, %v757, -inf
    %759 = vmax.xlane.f32.xlu0 %v758
    %v760 = vpop.xlane.xlu0 %759
    %v761 = vsub.f32 %v757, %v760
    %v762 = vmul.f32 %v761, 1.442695
    %v763 = vpow.pop %v762
    %v764 = vsel %vm593, %v763, 0.0
    %765 = vadd.xlane.f32.xlu0 %v764
    %v766 = vpop.xlane.xlu0 %765
    %v767 = vrcp.pop %v766
    %v768 = vmul.f32 %v763, %v767
    %v770 = vsel %vm593, %v768, 0
    %772 = vmatprep.subr.mxu0 0.0
    %773 = vmatpush1.msra.mxu0 %v519
    %774 = vmatprep.subr.mxu0 0.0
    %775 = vmatpush1.msra.mxu0 0.0
    %776 = vmatprep.subr.mxu0 0.0
    %777 = vmatpush1.msra.mxu0 0.0
    %778 = vmatprep.subr.mxu0 0.0
    %779 = vmatpush1.msra.mxu0 0.0
    %780 = vmatprep.subr.mxu0 0.0
    %781 = vmatpush1.msra.mxu0 0.0
    %782 = vmatprep.subr.mxu0 0.0
    %783 = vmatpush1.msra.mxu0 0.0
    %784 = vmatprep.subr.mxu0 0.0
    %785 = vmatpush1.msra.mxu0 0.0
    %786 = vmatprep.subr.mxu0 0.0
    %787 = vmatpush1.msra.mxu0 0.0
    %788 = vmatprep.subr.mxu0 0.0
    %789 = vmatpush1.msra.mxu0 0.0
    %790 = vmatprep.subr.mxu0 0.0
    %791 = vmatpush1.msra.mxu0 0.0
    %792 = vmatprep.subr.mxu0 0.0
    %793 = vmatpush1.msra.mxu0 0.0
    %794 = vmatprep.subr.mxu0 0.0
    %795 = vmatpush1.msra.mxu0 0.0
    %796 = vmatprep.subr.mxu0 0.0
    %797 = vmatpush1.msra.mxu0 0.0
    %798 = vmatprep.subr.mxu0 0.0
    %799 = vmatpush1.msra.mxu0 0.0
    %800 = vmatprep.subr.mxu0 0.0
    %801 = vmatpush1.msra.mxu0 0.0
    %802 = vmatprep.subr.mxu0 0.0
    %803 = vmatpush1.msra.mxu0 0.0
    %804 = vmatprep.subr.mxu0 0.0
    %805 = vmatpush1.msra.mxu0 0.0
    %806 = vmatprep.subr.mxu0 0.0
    %807 = vmatpush1.msra.mxu0 0.0
    %808 = vmatprep.subr.mxu0 0.0
    %809 = vmatpush1.msra.mxu0 0.0
    %810 = vmatprep.subr.mxu0 0.0
    %811 = vmatpush1.msra.mxu0 0.0
    %812 = vmatprep.subr.mxu0 0.0
    %813 = vmatpush1.msra.mxu0 0.0
    %814 = vmatprep.subr.mxu0 0.0
    %815 = vmatpush1.msra.mxu0 0.0
    %816 = vmatprep.subr.mxu0 0.0
    %817 = vmatpush1.msra.mxu0 0.0
    %818 = vmatprep.subr.mxu0 0.0
    %819 = vmatpush1.msra.mxu0 0.0
    %820 = vmatprep.subr.mxu0 0.0
    %821 = vmatpush1.msra.mxu0 0.0
    %822 = vmatprep.subr.mxu0 0.0
    %823 = vmatpush1.msra.mxu0 0.0
    %824 = vmatprep.subr.mxu0 0.0
    %825 = vmatpush1.msra.mxu0 0.0
    %826 = vmatprep.subr.mxu0 0.0
    %827 = vmatpush1.msra.mxu0 0.0
    %828 = vmatprep.subr.mxu0 0.0
    %829 = vmatpush1.msra.mxu0 0.0
    %830 = vmatprep.subr.mxu0 0.0
    %831 = vmatpush1.msra.mxu0 0.0
    %832 = vmatprep.subr.mxu0 0.0
    %833 = vmatpush1.msra.mxu0 0.0
    %834 = vmatprep.subr.mxu0 0.0
    %835 = vmatpush1.msra.mxu0 0.0
    %836 = vmatprep.mubr.f32.mxu0 0.0
    %837 = vmatmul.mubr.f32.gmra.mrb[0].mxu0 %v770
    %v838 = vpop.f32.mrb[0].mxu0
    %v839 = vadd.f32 0.0, %v838
    %v840 = vpop.f32.mrb[0].mxu0
    %841 = vdwg.mxu0
    %v842 = vrot.slane %v839, 4
    %v843 = vadd.f32 %v839, %v842
    %v844 = vrot.slane %v843, 2
    %v845 = vadd.f32 %v843, %v844
    %v846 = vrot.slane %v845, 1
    %v847 = vadd.f32 %v845, %v846
    %v848 = vmul.f32 %v847, %v684
    %849 = vst [vmem:[#allocation2 + $0x1] sm:$0x1] %v848
    %v850 = vld [vmem:[#allocation2] sm:$0x3]
    %v851 = vld [vmem:[#allocation8] sm:$0xff]
    %v852 = vld [vmem:[#allocation8 + $0x8] sm:$0xff]
    %v853 = vld [vmem:[#allocation8 + $0x10] sm:$0xff]
    %v854 = vld [vmem:[#allocation8 + $0x18] sm:$0xff]
    %v855 = vld [vmem:[#allocation8 + $0x20] sm:$0xff]
    %v856 = vld [vmem:[#allocation8 + $0x28] sm:$0xff]
    %v857 = vld [vmem:[#allocation8 + $0x30] sm:$0xff]
    %v858 = vld [vmem:[#allocation8 + $0x38] sm:$0xff]
    %v859 = vld [vmem:[#allocation8 + $0x40] sm:$0xff]
    %v860 = vld [vmem:[#allocation8 + $0x48] sm:$0xff]
    %v861 = vld [vmem:[#allocation8 + $0x50] sm:$0xff]
    %v862 = vld [vmem:[#allocation8 + $0x58] sm:$0xff]
    %v863 = vld [vmem:[#allocation8 + $0x60] sm:$0xff]
    %v864 = vld [vmem:[#allocation8 + $0x68] sm:$0xff]
    %v865 = vld [vmem:[#allocation8 + $0x70] sm:$0xff]
    %v866 = vld [vmem:[#allocation8 + $0x78] sm:$0xff]
    %v867 = vld [vmem:[#allocation8 + $0x80] sm:$0xff]
    %v868 = vld [vmem:[#allocation8 + $0x88] sm:$0xff]
    %v869 = vld [vmem:[#allocation8 + $0x90] sm:$0xff]
    %v870 = vld [vmem:[#allocation8 + $0x98] sm:$0xff]
    %v871 = vld [vmem:[#allocation8 + $0xa0] sm:$0xff]
    %v872 = vld [vmem:[#allocation8 + $0xa8] sm:$0xff]
    %v873 = vld [vmem:[#allocation8 + $0xb0] sm:$0xff]
    %v874 = vld [vmem:[#allocation8 + $0xb8] sm:$0xff]
    %v875 = vld [vmem:[#allocation8 + $0xc0] sm:$0xff]
    %v876 = vld [vmem:[#allocation8 + $0xc8] sm:$0xff]
    %v877 = vld [vmem:[#allocation8 + $0xd0] sm:$0xff]
    %v878 = vld [vmem:[#allocation8 + $0xd8] sm:$0xff]
    %v879 = vld [vmem:[#allocation8 + $0xe0] sm:$0xff]
    %v880 = vld [vmem:[#allocation8 + $0xe8] sm:$0xff]
    %v881 = vld [vmem:[#allocation8 + $0xf0] sm:$0xff]
    %v882 = vld [vmem:[#allocation8 + $0xf8] sm:$0xff]
    %v883 = vld [vmem:[#allocation8 + $0x100] sm:$0xff]
    %v884 = vld [vmem:[#allocation8 + $0x108] sm:$0xff]
    %v885 = vld [vmem:[#allocation8 + $0x110] sm:$0xff]
    %v886 = vld [vmem:[#allocation8 + $0x118] sm:$0xff]
    %v887 = vld [vmem:[#allocation8 + $0x120] sm:$0xff]
    %v888 = vld [vmem:[#allocation8 + $0x128] sm:$0xff]
    %v889 = vld [vmem:[#allocation8 + $0x130] sm:$0xff]
    %v890 = vld [vmem:[#allocation8 + $0x138] sm:$0xff]
    %v891 = vld [vmem:[#allocation8 + $0x140] sm:$0xff]
    %v892 = vld [vmem:[#allocation8 + $0x148] sm:$0xff]
    %v893 = vld [vmem:[#allocation8 + $0x150] sm:$0xff]
    %v894 = vld [vmem:[#allocation8 + $0x158] sm:$0xff]
    %v895 = vld [vmem:[#allocation8 + $0x160] sm:$0xff]
    %v896 = vld [vmem:[#allocation8 + $0x168] sm:$0xff]
    %v897 = vld [vmem:[#allocation8 + $0x170] sm:$0xff]
    %v898 = vld [vmem:[#allocation8 + $0x178] sm:$0xff]
    %v899 = vld [vmem:[#allocation8 + $0x180] sm:$0xff]
    %v900 = vld [vmem:[#allocation8 + $0x188] sm:$0xff]
    %v901 = vld [vmem:[#allocation8 + $0x190] sm:$0xff]
    %v902 = vld [vmem:[#allocation8 + $0x198] sm:$0xff]
    %v903 = vld [vmem:[#allocation8 + $0x1a0] sm:$0xff]
    %v904 = vld [vmem:[#allocation8 + $0x1a8] sm:$0xff]
    %v905 = vld [vmem:[#allocation8 + $0x1b0] sm:$0xff]
    %v906 = vld [vmem:[#allocation8 + $0x1b8] sm:$0xff]
    %v907 = vld [vmem:[#allocation8 + $0x1c0] sm:$0xff]
    %v908 = vld [vmem:[#allocation8 + $0x1c8] sm:$0xff]
    %v909 = vld [vmem:[#allocation8 + $0x1d0] sm:$0xff]
    %v910 = vld [vmem:[#allocation8 + $0x1d8] sm:$0xff]
    %v911 = vld [vmem:[#allocation8 + $0x1e0] sm:$0xff]
    %v912 = vld [vmem:[#allocation8 + $0x1e8] sm:$0xff]
    %v913 = vld [vmem:[#allocation8 + $0x1f0] sm:$0xff]
    %v914 = vld [vmem:[#allocation8 + $0x1f8] sm:$0xff]
    %v915 = vld [vmem:[%s11] sm:$0xf]
    %v917 = vlaneseq
    %v918 = vshrl.u32 %v917, 7
    %v919 = vsub.s32 0, %v918
    %v920 = vrot.slane %v915, %v919
    %v921 = vlaneseq
    %v922 = vshrl.u32 %v921, 7
    %v923 = vsub.s32 1, %v922
    %v924 = vrot.slane %v915, %v923
    %v925 = vlaneseq
    %v926 = vshrl.u32 %v925, 7
    %v927 = vsub.s32 2, %v926
    %v928 = vrot.slane %v915, %v927
    %v929 = vlaneseq
    %v930 = vshrl.u32 %v929, 7
    %v931 = vsub.s32 3, %v930
    %v932 = vrot.slane %v915, %v931
    %937 = vmatprep.subr.mxu0 %v852
    %938 = vmatpush1.msra.mxu0 %v851
    %939 = vmatprep.subr.mxu0 %v856
    %940 = vmatpush1.msra.mxu0 %v855
    %941 = vmatprep.subr.mxu0 %v860
    %942 = vmatpush1.msra.mxu0 %v859
    %943 = vmatprep.subr.mxu0 %v864
    %944 = vmatpush1.msra.mxu0 %v863
    %945 = vmatprep.subr.mxu0 %v868
    %946 = vmatpush1.msra.mxu0 %v867
    %947 = vmatprep.subr.mxu0 %v872
    %948 = vmatpush1.msra.mxu0 %v871
    %949 = vmatprep.subr.mxu0 %v876
    %950 = vmatpush1.msra.mxu0 %v875
    %951 = vmatprep.subr.mxu0 %v880
    %952 = vmatpush1.msra.mxu0 %v879
    %953 = vmatprep.subr.mxu0 %v884
    %954 = vmatpush1.msra.mxu0 %v883
    %955 = vmatprep.subr.mxu0 %v888
    %956 = vmatpush1.msra.mxu0 %v887
    %957 = vmatprep.subr.mxu0 %v892
    %958 = vmatpush1.msra.mxu0 %v891
    %959 = vmatprep.subr.mxu0 %v896
    %960 = vmatpush1.msra.mxu0 %v895
    %961 = vmatprep.subr.mxu0 %v900
    %962 = vmatpush1.msra.mxu0 %v899
    %963 = vmatprep.subr.mxu0 %v904
    %964 = vmatpush1.msra.mxu0 %v903
    %965 = vmatprep.subr.mxu0 %v908
    %966 = vmatpush1.msra.mxu0 %v907
    %967 = vmatprep.subr.mxu0 %v912
    %968 = vmatpush1.msra.mxu0 %v911
    %969 = vmatprep.subr.mxu0 0.0
    %970 = vmatpush1.msra.mxu0 0.0
    %971 = vmatprep.subr.mxu0 0.0
    %972 = vmatpush1.msra.mxu0 0.0
    %973 = vmatprep.subr.mxu0 0.0
    %974 = vmatpush1.msra.mxu0 0.0
    %975 = vmatprep.subr.mxu0 0.0
    %976 = vmatpush1.msra.mxu0 0.0
    %977 = vmatprep.subr.mxu0 0.0
    %978 = vmatpush1.msra.mxu0 0.0
    %979 = vmatprep.subr.mxu0 0.0
    %980 = vmatpush1.msra.mxu0 0.0
    %981 = vmatprep.subr.mxu0 0.0
    %982 = vmatpush1.msra.mxu0 0.0
    %983 = vmatprep.subr.mxu0 0.0
    %984 = vmatpush1.msra.mxu0 0.0
    %985 = vmatprep.subr.mxu0 0.0
    %986 = vmatpush1.msra.mxu0 0.0
    %987 = vmatprep.subr.mxu0 0.0
    %988 = vmatpush1.msra.mxu0 0.0
    %989 = vmatprep.subr.mxu0 0.0
    %990 = vmatpush1.msra.mxu0 0.0
    %991 = vmatprep.subr.mxu0 0.0
    %992 = vmatpush1.msra.mxu0 0.0
    %993 = vmatprep.subr.mxu0 0.0
    %994 = vmatpush1.msra.mxu0 0.0
    %995 = vmatprep.subr.mxu0 0.0
    %996 = vmatpush1.msra.mxu0 0.0
    %997 = vmatprep.subr.mxu0 0.0
    %998 = vmatpush1.msra.mxu0 0.0
    %999 = vmatprep.subr.mxu0 0.0
    %1000 = vmatpush1.msra.mxu0 0.0
    %1001 = vmatprep.mubr.f32.mxu0 0.0
    %1002 = vmatmul.mubr.f32.gmra.mrb[0].mxu0 %v850
    %v1003 = vpop.f32.mrb[0].mxu0
    %v1004 = vadd.f32 %v920, %v1003
    %v1005 = vpop.f32.mrb[0].mxu0
    %v1006 = vadd.f32 %v924, %v1005
    %1007 = vdwg.mxu0
    %1008 = vmatprep.subr.mxu0 %v854
    %1009 = vmatpush1.msra.mxu0 %v853
    %1010 = vmatprep.subr.mxu0 %v858
    %1011 = vmatpush1.msra.mxu0 %v857
    %1012 = vmatprep.subr.mxu0 %v862
    %1013 = vmatpush1.msra.mxu0 %v861
    %1014 = vmatprep.subr.mxu0 %v866
    %1015 = vmatpush1.msra.mxu0 %v865
    %1016 = vmatprep.subr.mxu0 %v870
    %1017 = vmatpush1.msra.mxu0 %v869
    %1018 = vmatprep.subr.mxu0 %v874
    %1019 = vmatpush1.msra.mxu0 %v873
    %1020 = vmatprep.subr.mxu0 %v878
    %1021 = vmatpush1.msra.mxu0 %v877
    %1022 = vmatprep.subr.mxu0 %v882
    %1023 = vmatpush1.msra.mxu0 %v881
    %1024 = vmatprep.subr.mxu0 %v886
    %1025 = vmatpush1.msra.mxu0 %v885
    %1026 = vmatprep.subr.mxu0 %v890
    %1027 = vmatpush1.msra.mxu0 %v889
    %1028 = vmatprep.subr.mxu0 %v894
    %1029 = vmatpush1.msra.mxu0 %v893
    %1030 = vmatprep.subr.mxu0 %v898
    %1031 = vmatpush1.msra.mxu0 %v897
    %1032 = vmatprep.subr.mxu0 %v902
    %1033 = vmatpush1.msra.mxu0 %v901
    %1034 = vmatprep.subr.mxu0 %v906
    %1035 = vmatpush1.msra.mxu0 %v905
    %1036 = vmatprep.subr.mxu0 %v910
    %1037 = vmatpush1.msra.mxu0 %v909
    %1038 = vmatprep.subr.mxu0 %v914
    %1039 = vmatpush1.msra.mxu0 %v913
    %1040 = vmatprep.subr.mxu0 0.0
    %1041 = vmatpush1.msra.mxu0 0.0
    %1042 = vmatprep.subr.mxu0 0.0
    %1043 = vmatpush1.msra.mxu0 0.0
    %1044 = vmatprep.subr.mxu0 0.0
    %1045 = vmatpush1.msra.mxu0 0.0
    %1046 = vmatprep.subr.mxu0 0.0
    %1047 = vmatpush1.msra.mxu0 0.0
    %1048 = vmatprep.subr.mxu0 0.0
    %1049 = vmatpush1.msra.mxu0 0.0
    %1050 = vmatprep.subr.mxu0 0.0
    %1051 = vmatpush1.msra.mxu0 0.0
    %1052 = vmatprep.subr.mxu0 0.0
    %1053 = vmatpush1.msra.mxu0 0.0
    %1054 = vmatprep.subr.mxu0 0.0
    %1055 = vmatpush1.msra.mxu0 0.0
    %1056 = vmatprep.subr.mxu0 0.0
    %1057 = vmatpush1.msra.mxu0 0.0
    %1058 = vmatprep.subr.mxu0 0.0
    %1059 = vmatpush1.msra.mxu0 0.0
    %1060 = vmatprep.subr.mxu0 0.0
    %1061 = vmatpush1.msra.mxu0 0.0
    %1062 = vmatprep.subr.mxu0 0.0
    %1063 = vmatpush1.msra.mxu0 0.0
    %1064 = vmatprep.subr.mxu0 0.0
    %1065 = vmatpush1.msra.mxu0 0.0
    %1066 = vmatprep.subr.mxu0 0.0
    %1067 = vmatpush1.msra.mxu0 0.0
    %1068 = vmatprep.subr.mxu0 0.0
    %1069 = vmatpush1.msra.mxu0 0.0
    %1070 = vmatprep.subr.mxu0 0.0
    %1071 = vmatpush1.msra.mxu0 0.0
    %1072 = vmatprep.mubr.f32.mxu0 0.0
    %1073 = vmatmul.mubr.f32.gmra.mrb[0].mxu0 %v850
    %v1074 = vpop.f32.mrb[0].mxu0
    %v1075 = vadd.f32 %v928, %v1074
    %v1076 = vpop.f32.mrb[0].mxu0
    %v1077 = vadd.f32 %v932, %v1076
    %1078 = vdwg.mxu0
    %v1079 = vld [vmem:[%s1] sm:$0xff]
    %v1080 = vld [vmem:[%s1 + $0x8] sm:$0xff]
    %v1081 = vld [vmem:[%s1 + $0x10] sm:$0xff]
    %v1082 = vld [vmem:[%s1 + $0x18] sm:$0x3]
    %v1087 = vcombine.high %v1079, %v1079
    %v1089 = vunpack.c.l.s4 1983009808
    %v1090 = vunpack.c.0.s8 %v1089
    %v1091 = vlaneseq
    %v1092 = vshrl.u32 %v1091, 7
    %v1093 = vsub.s32 %v1090, %v1092
    %v1094 = vrot.slane %v1079, %v1093
    %v1096 = vunpack.c.l.s4 1983009808
    %v1097 = vunpack.c.0.s8 %v1096
    %v1098 = vlaneseq
    %v1099 = vshrl.u32 %v1098, 7
    %v1100 = vsub.s32 %v1097, %v1099
    %v1101 = vrot.slane %v1087, %v1100
    %v1102 = vcombine.high %v1094, %v1094
    %v1103 = vcombine.high %v1101, %v1101
    %v1104 = vcombine.high %v1080, %v1080
    %v1106 = vunpack.c.l.s4 1983009808
    %v1107 = vunpack.c.0.s8 %v1106
    %v1108 = vlaneseq
    %v1109 = vshrl.u32 %v1108, 7
    %v1110 = vsub.s32 %v1107, %v1109
    %v1111 = vrot.slane %v1080, %v1110
    %v1113 = vunpack.c.l.s4 1983009808
    %v1114 = vunpack.c.0.s8 %v1113
    %v1115 = vlaneseq
    %v1116 = vshrl.u32 %v1115, 7
    %v1117 = vsub.s32 %v1114, %v1116
    %v1118 = vrot.slane %v1104, %v1117
    %v1119 = vcombine.high %v1111, %v1111
    %v1120 = vcombine.high %v1118, %v1118
    %v1121 = vcombine.high %v1081, %v1081
    %v1123 = vunpack.c.l.s4 1983009808
    %v1124 = vunpack.c.0.s8 %v1123
    %v1125 = vlaneseq
    %v1126 = vshrl.u32 %v1125, 7
    %v1127 = vsub.s32 %v1124, %v1126
    %v1128 = vrot.slane %v1081, %v1127
    %v1130 = vunpack.c.l.s4 1983009808
    %v1131 = vunpack.c.0.s8 %v1130
    %v1132 = vlaneseq
    %v1133 = vshrl.u32 %v1132, 7
    %v1134 = vsub.s32 %v1131, %v1133
    %v1135 = vrot.slane %v1121, %v1134
    %v1136 = vcombine.high %v1128, %v1128
    %v1137 = vcombine.high %v1135, %v1135
    %v1139 = vunpack.c.l.s4 1983009808
    %v1140 = vunpack.c.0.s8 %v1139
    %v1141 = vlaneseq
    %v1142 = vshrl.u32 %v1141, 7
    %v1143 = vsub.s32 %v1140, %v1142
    %v1144 = vrot.slane %v1082, %v1143
    %v1158 = vpack.c.bf16 %v1094, %v1094
    %v1159 = vpack.c.bf16 %v1102, %v1102
    %v1160 = vpack.c.bf16 %v1101, %v1101
    %v1161 = vpack.c.bf16 %v1103, %v1103
    %v1162 = vpack.c.bf16 %v1111, %v1111
    %v1163 = vpack.c.bf16 %v1119, %v1119
    %v1164 = vpack.c.bf16 %v1118, %v1118
    %v1165 = vpack.c.bf16 %v1120, %v1120
    %v1166 = vpack.c.bf16 %v1128, %v1128
    %v1167 = vpack.c.bf16 %v1136, %v1136
    %v1168 = vpack.c.bf16 %v1135, %v1135
    %v1169 = vpack.c.bf16 %v1137, %v1137
    %v1170 = vpack.c.bf16 %v1144, %v1144
    %v1171 = vld [vmem:[%s12] sm:$0xff]
    %v1172 = vld [vmem:[%s12 + $0x8] sm:$0xff]
    %v1173 = vld [vmem:[%s12 + $0x10] sm:$0xff]
    %v1174 = vld [vmem:[%s12 + $0x18] sm:$0xff]
    %v1175 = vld [vmem:[%s12 + $0x20] sm:$0xff]
    %v1176 = vld [vmem:[%s12 + $0x28] sm:$0xff]
    %v1177 = vld [vmem:[%s12 + $0x30] sm:$0xff]
    %v1178 = vld [vmem:[%s12 + $0x38] sm:$0xff]
    %v1179 = vld [vmem:[%s12 + $0x40] sm:$0xff]
    %v1180 = vld [vmem:[%s12 + $0x48] sm:$0xff]
    %v1181 = vld [vmem:[%s12 + $0x50] sm:$0xff]
    %v1182 = vld [vmem:[%s12 + $0x58] sm:$0xff]
    %v1183 = vld [vmem:[%s12 + $0x60] sm:$0xff]
    %v1184 = vld [vmem:[%s12 + $0x68] sm:$0xff]
    %v1185 = vld [vmem:[%s12 + $0x70] sm:$0xff]
    %v1186 = vld [vmem:[%s12 + $0x78] sm:$0xff]
    %v1187 = vld [vmem:[%s12 + $0x80] sm:$0xff]
    %v1188 = vld [vmem:[%s12 + $0x88] sm:$0xff]
    %v1189 = vld [vmem:[%s12 + $0x90] sm:$0xff]
    %v1190 = vld [vmem:[%s12 + $0x98] sm:$0xff]
    %v1191 = vld [vmem:[%s12 + $0xa0] sm:$0xff]
    %v1192 = vld [vmem:[%s12 + $0xa8] sm:$0xff]
    %v1193 = vld [vmem:[%s12 + $0xb0] sm:$0xff]
    %v1194 = vld [vmem:[%s12 + $0xb8] sm:$0xff]
    %v1195 = vld [vmem:[%s12 + $0xc0] sm:$0xff]
    %v1196 = vld [vmem:[%s12 + $0xc8] sm:$0xff]
    %v1197 = vld [vmem:[%s12 + $0xd0] sm:$0xff]
    %v1198 = vld [vmem:[%s12 + $0xd8] sm:$0xff]
    %v1199 = vld [vmem:[%s12 + $0xe0] sm:$0xff]
    %v1200 = vld [vmem:[%s12 + $0xe8] sm:$0xff]
    %v1201 = vld [vmem:[%s12 + $0xf0] sm:$0xff]
    %v1202 = vld [vmem:[%s12 + $0xf8] sm:$0xff]
    %v1203 = vld [vmem:[%s12 + $0x100] sm:$0xff]
    %v1204 = vld [vmem:[%s12 + $0x108] sm:$0xff]
    %v1205 = vld [vmem:[%s12 + $0x110] sm:$0xff]
    %v1206 = vld [vmem:[%s12 + $0x118] sm:$0xff]
    %v1207 = vld [vmem:[%s12 + $0x120] sm:$0xff]
    %v1208 = vld [vmem:[%s12 + $0x128] sm:$0xff]
    %v1209 = vld [vmem:[%s12 + $0x130] sm:$0xff]
    %v1210 = vld [vmem:[%s12 + $0x138] sm:$0xff]
    %v1211 = vld [vmem:[%s12 + $0x140] sm:$0xff]
    %v1212 = vld [vmem:[%s12 + $0x148] sm:$0xff]
    %v1213 = vld [vmem:[%s12 + $0x150] sm:$0xff]
    %v1214 = vld [vmem:[%s12 + $0x158] sm:$0xff]
    %v1215 = vld [vmem:[%s12 + $0x160] sm:$0xff]
    %v1216 = vld [vmem:[%s12 + $0x168] sm:$0xff]
    %v1217 = vld [vmem:[%s12 + $0x170] sm:$0xff]
    %v1218 = vld [vmem:[%s12 + $0x178] sm:$0xff]
    %v1219 = vld [vmem:[%s12 + $0x180] sm:$0xff]
    %v1220 = vld [vmem:[%s12 + $0x188] sm:$0xff]
    %v1221 = vld [vmem:[%s12 + $0x190] sm:$0xff]
    %v1222 = vld [vmem:[%s12 + $0x198] sm:$0xff]
    %v1223 = vld [vmem:[%s12 + $0x1a0] sm:$0xff]
    %v1224 = vld [vmem:[%s12 + $0x1a8] sm:$0xff]
    %v1225 = vld [vmem:[%s12 + $0x1b0] sm:$0xff]
    %v1226 = vld [vmem:[%s12 + $0x1b8] sm:$0xff]
    %v1227 = vld [vmem:[%s12 + $0x1c0] sm:$0xff]
    %v1228 = vld [vmem:[%s12 + $0x1c8] sm:$0xff]
    %v1229 = vld [vmem:[%s12 + $0x1d0] sm:$0xff]
    %v1230 = vld [vmem:[%s12 + $0x1d8] sm:$0xff]
    %v1231 = vld [vmem:[%s12 + $0x1e0] sm:$0xff]
    %v1232 = vld [vmem:[%s12 + $0x1e8] sm:$0xff]
    %v1233 = vld [vmem:[%s12 + $0x1f0] sm:$0xff]
    %v1234 = vld [vmem:[%s12 + $0x1f8] sm:$0xff]
    %v1235 = vld [vmem:[%s12 + $0x200] sm:$0xff]
    %v1236 = vld [vmem:[%s12 + $0x208] sm:$0xff]
    %v1237 = vld [vmem:[%s12 + $0x210] sm:$0xff]
    %v1238 = vld [vmem:[%s12 + $0x218] sm:$0xff]
    %v1239 = vld [vmem:[%s12 + $0x220] sm:$0xff]
    %v1240 = vld [vmem:[%s12 + $0x228] sm:$0xff]
    %v1241 = vld [vmem:[%s12 + $0x230] sm:$0xff]
    %v1242 = vld [vmem:[%s12 + $0x238] sm:$0xff]
    %v1243 = vld [vmem:[%s12 + $0x240] sm:$0xff]
    %v1244 = vld [vmem:[%s12 + $0x248] sm:$0xff]
    %v1245 = vld [vmem:[%s12 + $0x250] sm:$0xff]
    %v1246 = vld [vmem:[%s12 + $0x258] sm:$0xff]
    %v1247 = vld [vmem:[%s12 + $0x260] sm:$0xff]
    %v1248 = vld [vmem:[%s12 + $0x268] sm:$0xff]
    %v1249 = vld [vmem:[%s12 + $0x270] sm:$0xff]
    %v1250 = vld [vmem:[%s12 + $0x278] sm:$0xff]
    %v1251 = vld [vmem:[%s12 + $0x280] sm:$0xff]
    %v1252 = vld [vmem:[%s12 + $0x288] sm:$0xff]
    %v1253 = vld [vmem:[%s12 + $0x290] sm:$0xff]
    %v1254 = vld [vmem:[%s12 + $0x298] sm:$0xff]
    %v1255 = vld [vmem:[%s12 + $0x2a0] sm:$0xff]
    %v1256 = vld [vmem:[%s12 + $0x2a8] sm:$0xff]
    %v1257 = vld [vmem:[%s12 + $0x2b0] sm:$0xff]
    %v1258 = vld [vmem:[%s12 + $0x2b8] sm:$0xff]
    %v1259 = vld [vmem:[%s12 + $0x2c0] sm:$0xff]
    %v1260 = vld [vmem:[%s12 + $0x2c8] sm:$0xff]
    %v1261 = vld [vmem:[%s12 + $0x2d0] sm:$0xff]
    %v1262 = vld [vmem:[%s12 + $0x2d8] sm:$0xff]
    %v1263 = vld [vmem:[%s12 + $0x2e0] sm:$0xff]
    %v1264 = vld [vmem:[%s12 + $0x2e8] sm:$0xff]
    %v1265 = vld [vmem:[%s12 + $0x2f0] sm:$0xff]
    %v1266 = vld [vmem:[%s12 + $0x2f8] sm:$0xff]
    %v1267 = vld [vmem:[%s12 + $0x300] sm:$0xff]
    %v1268 = vld [vmem:[%s12 + $0x308] sm:$0xff]
    %v1269 = vld [vmem:[%s12 + $0x310] sm:$0xff]
    %v1270 = vld [vmem:[%s12 + $0x318] sm:$0xff]
    %v1271 = vld [vmem:[%s12 + $0x320] sm:$0xff]
    %v1272 = vld [vmem:[%s12 + $0x328] sm:$0xff]
    %v1273 = vld [vmem:[%s12 + $0x330] sm:$0xff]
    %v1274 = vld [vmem:[%s12 + $0x338] sm:$0xff]
    %v1275 = vld [vmem:[%s12 + $0x340] sm:$0xff]
    %v1276 = vld [vmem:[%s12 + $0x348] sm:$0xff]
    %v1277 = vld [vmem:[%s12 + $0x350] sm:$0xff]
    %v1278 = vld [vmem:[%s12 + $0x358] sm:$0xff]
    %v1279 = vld [vmem:[%s12 + $0x360] sm:$0xff]
    %v1280 = vld [vmem:[%s12 + $0x368] sm:$0xff]
    %v1281 = vld [vmem:[%s12 + $0x370] sm:$0xff]
    %v1282 = vld [vmem:[%s12 + $0x378] sm:$0xff]
    %v1283 = vld [vmem:[%s12 + $0x380] sm:$0xff]
    %v1284 = vld [vmem:[%s12 + $0x388] sm:$0xff]
    %v1285 = vld [vmem:[%s12 + $0x390] sm:$0xff]
    %v1286 = vld [vmem:[%s12 + $0x398] sm:$0xff]
    %v1287 = vld [vmem:[%s12 + $0x3a0] sm:$0xff]
    %v1288 = vld [vmem:[%s12 + $0x3a8] sm:$0xff]
    %v1289 = vld [vmem:[%s12 + $0x3b0] sm:$0xff]
    %v1290 = vld [vmem:[%s12 + $0x3b8] sm:$0xff]
    %v1291 = vld [vmem:[%s12 + $0x3c0] sm:$0xff]
    %v1292 = vld [vmem:[%s12 + $0x3c8] sm:$0xff]
    %v1293 = vld [vmem:[%s12 + $0x3d0] sm:$0xff]
    %v1294 = vld [vmem:[%s12 + $0x3d8] sm:$0xff]
    %v1295 = vld [vmem:[%s12 + $0x3e0] sm:$0xff]
    %v1296 = vld [vmem:[%s12 + $0x3e8] sm:$0xff]
    %v1297 = vld [vmem:[%s12 + $0x3f0] sm:$0xff]
    %v1298 = vld [vmem:[%s12 + $0x3f8] sm:$0xff]
    %v1299 = vld [vmem:[%s12 + $0x400] sm:$0xff]
    %v1300 = vld [vmem:[%s12 + $0x408] sm:$0xff]
    %v1301 = vld [vmem:[%s12 + $0x410] sm:$0xff]
    %v1302 = vld [vmem:[%s12 + $0x418] sm:$0xff]
    %v1303 = vld [vmem:[%s12 + $0x420] sm:$0xff]
    %v1304 = vld [vmem:[%s12 + $0x428] sm:$0xff]
    %v1305 = vld [vmem:[%s12 + $0x430] sm:$0xff]
    %v1306 = vld [vmem:[%s12 + $0x438] sm:$0xff]
    %v1307 = vld [vmem:[%s12 + $0x440] sm:$0xff]
    %v1308 = vld [vmem:[%s12 + $0x448] sm:$0xff]
    %v1309 = vld [vmem:[%s12 + $0x450] sm:$0xff]
    %v1310 = vld [vmem:[%s12 + $0x458] sm:$0xff]
    %v1311 = vld [vmem:[%s12 + $0x460] sm:$0xff]
    %v1312 = vld [vmem:[%s12 + $0x468] sm:$0xff]
    %v1313 = vld [vmem:[%s12 + $0x470] sm:$0xff]
    %v1314 = vld [vmem:[%s12 + $0x478] sm:$0xff]
    %v1315 = vld [vmem:[%s12 + $0x480] sm:$0xff]
    %v1316 = vld [vmem:[%s12 + $0x488] sm:$0xff]
    %v1317 = vld [vmem:[%s12 + $0x490] sm:$0xff]
    %v1318 = vld [vmem:[%s12 + $0x498] sm:$0xff]
    %v1319 = vld [vmem:[%s12 + $0x4a0] sm:$0xff]
    %v1320 = vld [vmem:[%s12 + $0x4a8] sm:$0xff]
    %v1321 = vld [vmem:[%s12 + $0x4b0] sm:$0xff]
    %v1322 = vld [vmem:[%s12 + $0x4b8] sm:$0xff]
    %v1323 = vld [vmem:[%s12 + $0x4c0] sm:$0xff]
    %v1324 = vld [vmem:[%s12 + $0x4c8] sm:$0xff]
    %v1325 = vld [vmem:[%s12 + $0x4d0] sm:$0xff]
    %v1326 = vld [vmem:[%s12 + $0x4d8] sm:$0xff]
    %v1327 = vld [vmem:[%s12 + $0x4e0] sm:$0xff]
    %v1328 = vld [vmem:[%s12 + $0x4e8] sm:$0xff]
    %v1329 = vld [vmem:[%s12 + $0x4f0] sm:$0xff]
    %v1330 = vld [vmem:[%s12 + $0x4f8] sm:$0xff]
    %v1331 = vld [vmem:[%s12 + $0x500] sm:$0xff]
    %v1332 = vld [vmem:[%s12 + $0x508] sm:$0xff]
    %v1333 = vld [vmem:[%s12 + $0x510] sm:$0xff]
    %v1334 = vld [vmem:[%s12 + $0x518] sm:$0xff]
    %v1335 = vld [vmem:[%s12 + $0x520] sm:$0xff]
    %v1336 = vld [vmem:[%s12 + $0x528] sm:$0xff]
    %v1337 = vld [vmem:[%s12 + $0x530] sm:$0xff]
    %v1338 = vld [vmem:[%s12 + $0x538] sm:$0xff]
    %v1339 = vld [vmem:[%s12 + $0x540] sm:$0xff]
    %v1340 = vld [vmem:[%s12 + $0x548] sm:$0xff]
    %v1341 = vld [vmem:[%s12 + $0x550] sm:$0xff]
    %v1342 = vld [vmem:[%s12 + $0x558] sm:$0xff]
    %v1343 = vld [vmem:[%s12 + $0x560] sm:$0xff]
    %v1344 = vld [vmem:[%s12 + $0x568] sm:$0xff]
    %v1345 = vld [vmem:[%s12 + $0x570] sm:$0xff]
    %v1346 = vld [vmem:[%s12 + $0x578] sm:$0xff]
    %v1347 = vld [vmem:[%s12 + $0x580] sm:$0xff]
    %v1348 = vld [vmem:[%s12 + $0x588] sm:$0xff]
    %v1349 = vld [vmem:[%s12 + $0x590] sm:$0xff]
    %v1350 = vld [vmem:[%s12 + $0x598] sm:$0xff]
    %v1351 = vld [vmem:[%s12 + $0x5a0] sm:$0xff]
    %v1352 = vld [vmem:[%s12 + $0x5a8] sm:$0xff]
    %v1353 = vld [vmem:[%s12 + $0x5b0] sm:$0xff]
    %v1354 = vld [vmem:[%s12 + $0x5b8] sm:$0xff]
    %v1355 = vld [vmem:[%s12 + $0x5c0] sm:$0xff]
    %v1356 = vld [vmem:[%s12 + $0x5c8] sm:$0xff]
    %v1357 = vld [vmem:[%s12 + $0x5d0] sm:$0xff]
    %v1358 = vld [vmem:[%s12 + $0x5d8] sm:$0xff]
    %v1359 = vld [vmem:[%s12 + $0x5e0] sm:$0xff]
    %v1360 = vld [vmem:[%s12 + $0x5e8] sm:$0xff]
    %v1361 = vld [vmem:[%s12 + $0x5f0] sm:$0xff]
    %v1362 = vld [vmem:[%s12 + $0x5f8] sm:$0xff]
    %v1363 = vld [vmem:[%s12 + $0x600] sm:$0xff]
    %v1364 = vld [vmem:[%s12 + $0x608] sm:$0xff]
    %v1365 = vld [vmem:[%s12 + $0x610] sm:$0xff]
    %v1366 = vld [vmem:[%s12 + $0x618] sm:$0xff]
    %v1367 = vld [vmem:[%s12 + $0x620] sm:$0xff]
    %v1368 = vld [vmem:[%s12 + $0x628] sm:$0xff]
    %v1369 = vld [vmem:[%s12 + $0x630] sm:$0xff]
    %v1370 = vld [vmem:[%s12 + $0x638] sm:$0xff]
    %v1371 = vld [vmem:[%s12 + $0x640] sm:$0xff]
    %v1372 = vld [vmem:[%s12 + $0x648] sm:$0xff]
    %v1373 = vld [vmem:[%s12 + $0x650] sm:$0xff]
    %v1374 = vld [vmem:[%s12 + $0x658] sm:$0xff]
    %v1375 = vld [vmem:[%s12 + $0x660] sm:$0xff]
    %v1376 = vld [vmem:[%s12 + $0x668] sm:$0xff]
    %v1377 = vld [vmem:[%s12 + $0x670] sm:$0xff]
    %v1378 = vld [vmem:[%s12 + $0x678] sm:$0xff]
    %v1379 = vld [vmem:[%s12 + $0x680] sm:$0xff]
    %v1380 = vld [vmem:[%s12 + $0x688] sm:$0xff]
    %v1381 = vld [vmem:[%s12 + $0x690] sm:$0xff]
    %v1382 = vld [vmem:[%s12 + $0x698] sm:$0xff]
    %v1383 = vld [vmem:[%s12 + $0x6a0] sm:$0xff]
    %v1384 = vld [vmem:[%s12 + $0x6a8] sm:$0xff]
    %v1385 = vld [vmem:[%s12 + $0x6b0] sm:$0xff]
    %v1386 = vld [vmem:[%s12 + $0x6b8] sm:$0xff]
    %v1387 = vld [vmem:[%s12 + $0x6c0] sm:$0xff]
    %v1388 = vld [vmem:[%s12 + $0x6c8] sm:$0xff]
    %v1389 = vld [vmem:[%s12 + $0x6d0] sm:$0xff]
    %v1390 = vld [vmem:[%s12 + $0x6d8] sm:$0xff]
    %v1391 = vld [vmem:[%s12 + $0x6e0] sm:$0xff]
    %v1392 = vld [vmem:[%s12 + $0x6e8] sm:$0xff]
    %v1393 = vld [vmem:[%s12 + $0x6f0] sm:$0xff]
    %v1394 = vld [vmem:[%s12 + $0x6f8] sm:$0xff]
    %v1395 = vld [vmem:[%s12 + $0x700] sm:$0xff]
    %v1396 = vld [vmem:[%s12 + $0x708] sm:$0xff]
    %v1397 = vld [vmem:[%s12 + $0x710] sm:$0xff]
    %v1398 = vld [vmem:[%s12 + $0x718] sm:$0xff]
    %v1399 = vld [vmem:[%s12 + $0x720] sm:$0xff]
    %v1400 = vld [vmem:[%s12 + $0x728] sm:$0xff]
    %v1401 = vld [vmem:[%s12 + $0x730] sm:$0xff]
    %v1402 = vld [vmem:[%s12 + $0x738] sm:$0xff]
    %v1403 = vld [vmem:[%s12 + $0x740] sm:$0xff]
    %v1404 = vld [vmem:[%s12 + $0x748] sm:$0xff]
    %v1405 = vld [vmem:[%s12 + $0x750] sm:$0xff]
    %v1406 = vld [vmem:[%s12 + $0x758] sm:$0xff]
    %v1407 = vld [vmem:[%s12 + $0x760] sm:$0xff]
    %v1408 = vld [vmem:[%s12 + $0x768] sm:$0xff]
    %v1409 = vld [vmem:[%s12 + $0x770] sm:$0xff]
    %v1410 = vld [vmem:[%s12 + $0x778] sm:$0xff]
    %v1411 = vld [vmem:[%s12 + $0x780] sm:$0xff]
    %v1412 = vld [vmem:[%s12 + $0x788] sm:$0xff]
    %v1413 = vld [vmem:[%s12 + $0x790] sm:$0xff]
    %v1414 = vld [vmem:[%s12 + $0x798] sm:$0xff]
    %v1415 = vld [vmem:[%s12 + $0x7a0] sm:$0xff]
    %v1416 = vld [vmem:[%s12 + $0x7a8] sm:$0xff]
    %v1417 = vld [vmem:[%s12 + $0x7b0] sm:$0xff]
    %v1418 = vld [vmem:[%s12 + $0x7b8] sm:$0xff]
    %v1419 = vld [vmem:[%s12 + $0x7c0] sm:$0xff]
    %v1420 = vld [vmem:[%s12 + $0x7c8] sm:$0xff]
    %v1421 = vld [vmem:[%s12 + $0x7d0] sm:$0xff]
    %v1422 = vld [vmem:[%s12 + $0x7d8] sm:$0xff]
    %v1423 = vld [vmem:[%s12 + $0x7e0] sm:$0xff]
    %v1424 = vld [vmem:[%s12 + $0x7e8] sm:$0xff]
    %v1425 = vld [vmem:[%s12 + $0x7f0] sm:$0xff]
    %v1426 = vld [vmem:[%s12 + $0x7f8] sm:$0xff]
    %v1427 = vld [vmem:[%s12 + $0x800] sm:$0xff]
    %v1428 = vld [vmem:[%s12 + $0x808] sm:$0xff]
    %v1429 = vld [vmem:[%s12 + $0x810] sm:$0xff]
    %v1430 = vld [vmem:[%s12 + $0x818] sm:$0xff]
    %v1431 = vld [vmem:[%s12 + $0x820] sm:$0xff]
    %v1432 = vld [vmem:[%s12 + $0x828] sm:$0xff]
    %v1433 = vld [vmem:[%s12 + $0x830] sm:$0xff]
    %v1434 = vld [vmem:[%s12 + $0x838] sm:$0xff]
    %v1435 = vld [vmem:[%s12 + $0x840] sm:$0xff]
    %v1436 = vld [vmem:[%s12 + $0x848] sm:$0xff]
    %v1437 = vld [vmem:[%s12 + $0x850] sm:$0xff]
    %v1438 = vld [vmem:[%s12 + $0x858] sm:$0xff]
    %v1439 = vld [vmem:[%s12 + $0x860] sm:$0xff]
    %v1440 = vld [vmem:[%s12 + $0x868] sm:$0xff]
    %v1441 = vld [vmem:[%s12 + $0x870] sm:$0xff]
    %v1442 = vld [vmem:[%s12 + $0x878] sm:$0xff]
    %v1443 = vld [vmem:[%s12 + $0x880] sm:$0xff]
    %v1444 = vld [vmem:[%s12 + $0x888] sm:$0xff]
    %v1445 = vld [vmem:[%s12 + $0x890] sm:$0xff]
    %v1446 = vld [vmem:[%s12 + $0x898] sm:$0xff]
    %v1447 = vld [vmem:[%s12 + $0x8a0] sm:$0xff]
    %v1448 = vld [vmem:[%s12 + $0x8a8] sm:$0xff]
    %v1449 = vld [vmem:[%s12 + $0x8b0] sm:$0xff]
    %v1450 = vld [vmem:[%s12 + $0x8b8] sm:$0xff]
    %v1451 = vld [vmem:[%s12 + $0x8c0] sm:$0xff]
    %v1452 = vld [vmem:[%s12 + $0x8c8] sm:$0xff]
    %v1453 = vld [vmem:[%s12 + $0x8d0] sm:$0xff]
    %v1454 = vld [vmem:[%s12 + $0x8d8] sm:$0xff]
    %v1455 = vld [vmem:[%s12 + $0x8e0] sm:$0xff]
    %v1456 = vld [vmem:[%s12 + $0x8e8] sm:$0xff]
    %v1457 = vld [vmem:[%s12 + $0x8f0] sm:$0xff]
    %v1458 = vld [vmem:[%s12 + $0x8f8] sm:$0xff]
    %v1459 = vld [vmem:[%s12 + $0x900] sm:$0xff]
    %v1460 = vld [vmem:[%s12 + $0x908] sm:$0xff]
    %v1461 = vld [vmem:[%s12 + $0x910] sm:$0xff]
    %v1462 = vld [vmem:[%s12 + $0x918] sm:$0xff]
    %v1463 = vld [vmem:[%s12 + $0x920] sm:$0xff]
    %v1464 = vld [vmem:[%s12 + $0x928] sm:$0xff]
    %v1465 = vld [vmem:[%s12 + $0x930] sm:$0xff]
    %v1466 = vld [vmem:[%s12 + $0x938] sm:$0xff]
    %v1467 = vld [vmem:[%s12 + $0x940] sm:$0xff]
    %v1468 = vld [vmem:[%s12 + $0x948] sm:$0xff]
    %v1469 = vld [vmem:[%s12 + $0x950] sm:$0xff]
    %v1470 = vld [vmem:[%s12 + $0x958] sm:$0xff]
    %v1471 = vld [vmem:[%s12 + $0x960] sm:$0xff]
    %v1472 = vld [vmem:[%s12 + $0x968] sm:$0xff]
    %v1473 = vld [vmem:[%s12 + $0x970] sm:$0xff]
    %v1474 = vld [vmem:[%s12 + $0x978] sm:$0xff]
    %v1475 = vld [vmem:[%s12 + $0x980] sm:$0xff]
    %v1476 = vld [vmem:[%s12 + $0x988] sm:$0xff]
    %v1477 = vld [vmem:[%s12 + $0x990] sm:$0xff]
    %v1478 = vld [vmem:[%s12 + $0x998] sm:$0xff]
    %v1479 = vld [vmem:[%s12 + $0x9a0] sm:$0xff]
    %v1480 = vld [vmem:[%s12 + $0x9a8] sm:$0xff]
    %v1481 = vld [vmem:[%s12 + $0x9b0] sm:$0xff]
    %v1482 = vld [vmem:[%s12 + $0x9b8] sm:$0xff]
    %v1483 = vld [vmem:[%s12 + $0x9c0] sm:$0xff]
    %v1484 = vld [vmem:[%s12 + $0x9c8] sm:$0xff]
    %v1485 = vld [vmem:[%s12 + $0x9d0] sm:$0xff]
    %v1486 = vld [vmem:[%s12 + $0x9d8] sm:$0xff]
    %v1487 = vld [vmem:[%s12 + $0x9e0] sm:$0xff]
    %v1488 = vld [vmem:[%s12 + $0x9e8] sm:$0xff]
    %v1489 = vld [vmem:[%s12 + $0x9f0] sm:$0xff]
    %v1490 = vld [vmem:[%s12 + $0x9f8] sm:$0xff]
    %v1491 = vld [vmem:[%s12 + $0xa00] sm:$0xff]
    %v1492 = vld [vmem:[%s12 + $0xa08] sm:$0xff]
    %v1493 = vld [vmem:[%s12 + $0xa10] sm:$0xff]
    %v1494 = vld [vmem:[%s12 + $0xa18] sm:$0xff]
    %v1495 = vld [vmem:[%s12 + $0xa20] sm:$0xff]
    %v1496 = vld [vmem:[%s12 + $0xa28] sm:$0xff]
    %v1497 = vld [vmem:[%s12 + $0xa30] sm:$0xff]
    %v1498 = vld [vmem:[%s12 + $0xa38] sm:$0xff]
    %v1499 = vld [vmem:[%s12 + $0xa40] sm:$0xff]
    %v1500 = vld [vmem:[%s12 + $0xa48] sm:$0xff]
    %v1501 = vld [vmem:[%s12 + $0xa50] sm:$0xff]
    %v1502 = vld [vmem:[%s12 + $0xa58] sm:$0xff]
    %v1503 = vld [vmem:[%s12 + $0xa60] sm:$0xff]
    %v1504 = vld [vmem:[%s12 + $0xa68] sm:$0xff]
    %v1505 = vld [vmem:[%s12 + $0xa70] sm:$0xff]
    %v1506 = vld [vmem:[%s12 + $0xa78] sm:$0xff]
    %v1507 = vld [vmem:[%s12 + $0xa80] sm:$0xff]
    %v1508 = vld [vmem:[%s12 + $0xa88] sm:$0xff]
    %v1509 = vld [vmem:[%s12 + $0xa90] sm:$0xff]
    %v1510 = vld [vmem:[%s12 + $0xa98] sm:$0xff]
    %v1511 = vld [vmem:[%s12 + $0xaa0] sm:$0xff]
    %v1512 = vld [vmem:[%s12 + $0xaa8] sm:$0xff]
    %v1513 = vld [vmem:[%s12 + $0xab0] sm:$0xff]
    %v1514 = vld [vmem:[%s12 + $0xab8] sm:$0xff]
    %v1515 = vld [vmem:[%s12 + $0xac0] sm:$0xff]
    %v1516 = vld [vmem:[%s12 + $0xac8] sm:$0xff]
    %v1517 = vld [vmem:[%s12 + $0xad0] sm:$0xff]
    %v1518 = vld [vmem:[%s12 + $0xad8] sm:$0xff]
    %v1519 = vld [vmem:[%s12 + $0xae0] sm:$0xff]
    %v1520 = vld [vmem:[%s12 + $0xae8] sm:$0xff]
    %v1521 = vld [vmem:[%s12 + $0xaf0] sm:$0xff]
    %v1522 = vld [vmem:[%s12 + $0xaf8] sm:$0xff]
    %v1523 = vld [vmem:[%s12 + $0xb00] sm:$0xff]
    %v1524 = vld [vmem:[%s12 + $0xb08] sm:$0xff]
    %v1525 = vld [vmem:[%s12 + $0xb10] sm:$0xff]
    %v1526 = vld [vmem:[%s12 + $0xb18] sm:$0xff]
    %v1527 = vld [vmem:[%s12 + $0xb20] sm:$0xff]
    %v1528 = vld [vmem:[%s12 + $0xb28] sm:$0xff]
    %v1529 = vld [vmem:[%s12 + $0xb30] sm:$0xff]
    %v1530 = vld [vmem:[%s12 + $0xb38] sm:$0xff]
    %v1531 = vld [vmem:[%s12 + $0xb40] sm:$0xff]
    %v1532 = vld [vmem:[%s12 + $0xb48] sm:$0xff]
    %v1533 = vld [vmem:[%s12 + $0xb50] sm:$0xff]
    %v1534 = vld [vmem:[%s12 + $0xb58] sm:$0xff]
    %v1535 = vld [vmem:[%s12 + $0xb60] sm:$0xff]
    %v1536 = vld [vmem:[%s12 + $0xb68] sm:$0xff]
    %v1537 = vld [vmem:[%s12 + $0xb70] sm:$0xff]
    %v1538 = vld [vmem:[%s12 + $0xb78] sm:$0xff]
    %v1539 = vld [vmem:[%s12 + $0xb80] sm:$0xff]
    %v1540 = vld [vmem:[%s12 + $0xb88] sm:$0xff]
    %v1541 = vld [vmem:[%s12 + $0xb90] sm:$0xff]
    %v1542 = vld [vmem:[%s12 + $0xb98] sm:$0xff]
    %v1543 = vld [vmem:[%s12 + $0xba0] sm:$0xff]
    %v1544 = vld [vmem:[%s12 + $0xba8] sm:$0xff]
    %v1545 = vld [vmem:[%s12 + $0xbb0] sm:$0xff]
    %v1546 = vld [vmem:[%s12 + $0xbb8] sm:$0xff]
    %v1547 = vld [vmem:[%s12 + $0xbc0] sm:$0xff]
    %v1548 = vld [vmem:[%s12 + $0xbc8] sm:$0xff]
    %v1549 = vld [vmem:[%s12 + $0xbd0] sm:$0xff]
    %v1550 = vld [vmem:[%s12 + $0xbd8] sm:$0xff]
    %v1551 = vld [vmem:[%s12 + $0xbe0] sm:$0xff]
    %v1552 = vld [vmem:[%s12 + $0xbe8] sm:$0xff]
    %v1553 = vld [vmem:[%s12 + $0xbf0] sm:$0xff]
    %v1554 = vld [vmem:[%s12 + $0xbf8] sm:$0xff]
    %v1555 = vld [vmem:[%s12 + $0xc00] sm:$0xff]
    %v1556 = vld [vmem:[%s12 + $0xc08] sm:$0xff]
    %v1557 = vld [vmem:[%s12 + $0xc10] sm:$0xff]
    %v1558 = vld [vmem:[%s12 + $0xc18] sm:$0xff]
    %v1559 = vld [vmem:[%s12 + $0xc20] sm:$0xff]
    %v1560 = vld [vmem:[%s12 + $0xc28] sm:$0xff]
    %v1561 = vld [vmem:[%s12 + $0xc30] sm:$0xff]
    %v1562 = vld [vmem:[%s12 + $0xc38] sm:$0xff]
    %v1563 = vld [vmem:[%s12 + $0xc40] sm:$0xff]
    %v1564 = vld [vmem:[%s12 + $0xc48] sm:$0xff]
    %v1565 = vld [vmem:[%s12 + $0xc50] sm:$0xff]
    %v1566 = vld [vmem:[%s12 + $0xc58] sm:$0xff]
    %v1567 = vld [vmem:[%s12 + $0xc60] sm:$0xff]
    %v1568 = vld [vmem:[%s12 + $0xc68] sm:$0xff]
    %v1569 = vld [vmem:[%s12 + $0xc70] sm:$0xff]
    %v1570 = vld [vmem:[%s12 + $0xc78] sm:$0xff]
    %v1571 = vld [vmem:[%s12 + $0xc80] sm:$0xff]
    %v1572 = vld [vmem:[%s12 + $0xc88] sm:$0xff]
    %v1573 = vld [vmem:[%s12 + $0xc90] sm:$0xff]
    %v1574 = vld [vmem:[%s12 + $0xc98] sm:$0xff]
    %v1575 = vld [vmem:[%s12 + $0xca0] sm:$0xff]
    %v1576 = vld [vmem:[%s12 + $0xca8] sm:$0xff]
    %v1577 = vld [vmem:[%s12 + $0xcb0] sm:$0xff]
    %v1578 = vld [vmem:[%s12 + $0xcb8] sm:$0xff]
    %v1579 = vld [vmem:[%s12 + $0xcc0] sm:$0xff]
    %v1580 = vld [vmem:[%s12 + $0xcc8] sm:$0xff]
    %v1581 = vld [vmem:[%s12 + $0xcd0] sm:$0xff]
    %v1582 = vld [vmem:[%s12 + $0xcd8] sm:$0xff]
    %v1583 = vld [vmem:[%s12 + $0xce0] sm:$0xff]
    %v1584 = vld [vmem:[%s12 + $0xce8] sm:$0xff]
    %v1585 = vld [vmem:[%s12 + $0xcf0] sm:$0xff]
    %v1586 = vld [vmem:[%s12 + $0xcf8] sm:$0xff]
    %v1587 = vld [vmem:[%s13] sm:$0xf]
    %v1589 = vlaneseq
    %v1590 = vshrl.u32 %v1589, 7
    %v1591 = vsub.s32 0, %v1590
    %v1592 = vrot.slane %v1587, %v1591
    %v1593 = vlaneseq
    %v1594 = vshrl.u32 %v1593, 7
    %v1595 = vsub.s32 1, %v1594
    %v1596 = vrot.slane %v1587, %v1595
    %v1597 = vlaneseq
    %v1598 = vshrl.u32 %v1597, 7
    %v1599 = vsub.s32 2, %v1598
    %v1600 = vrot.slane %v1587, %v1599
    %v1601 = vlaneseq
    %v1602 = vshrl.u32 %v1601, 7
    %v1603 = vsub.s32 3, %v1602
    %v1604 = vrot.slane %v1587, %v1603
    %v2025 = vunpack.c.l.b16 %v1171
    %v2026 = vunpack.c.h.b16 %v1171
    %v2027 = vunpack.c.l.b16 %v1172
    %v2028 = vunpack.c.h.b16 %v1172
    %v2029 = vunpack.c.l.b16 %v1173
    %v2030 = vunpack.c.h.b16 %v1173
    %v2031 = vunpack.c.l.b16 %v1174
    %v2032 = vunpack.c.h.b16 %v1174
    %v2033 = vunpack.c.l.b16 %v1175
    %v2034 = vunpack.c.h.b16 %v1175
    %v2035 = vunpack.c.l.b16 %v1176
    %v2036 = vunpack.c.h.b16 %v1176
    %v2037 = vunpack.c.l.b16 %v1177
    %v2038 = vunpack.c.h.b16 %v1177
    %v2039 = vunpack.c.l.b16 %v1178
    %v2040 = vunpack.c.h.b16 %v1178
    %v2041 = vunpack.c.l.b16 %v1179
    %v2042 = vunpack.c.h.b16 %v1179
    %v2043 = vunpack.c.l.b16 %v1180
    %v2044 = vunpack.c.h.b16 %v1180
    %v2045 = vunpack.c.l.b16 %v1181
    %v2046 = vunpack.c.h.b16 %v1181
    %v2047 = vunpack.c.l.b16 %v1182
    %v2048 = vunpack.c.h.b16 %v1182
    %v2049 = vunpack.c.l.b16 %v1183
    %v2050 = vunpack.c.h.b16 %v1183
    %v2051 = vunpack.c.l.b16 %v1184
    %v2052 = vunpack.c.h.b16 %v1184
    %v2053 = vunpack.c.l.b16 %v1185
    %v2054 = vunpack.c.h.b16 %v1185
    %v2055 = vunpack.c.l.b16 %v1186
    %v2056 = vunpack.c.h.b16 %v1186
    %v2057 = vunpack.c.l.b16 %v1187
    %v2058 = vunpack.c.h.b16 %v1187
    %v2059 = vunpack.c.l.b16 %v1188
    %v2060 = vunpack.c.h.b16 %v1188
    %v2061 = vunpack.c.l.b16 %v1189
    %v2062 = vunpack.c.h.b16 %v1189
    %v2063 = vunpack.c.l.b16 %v1190
    %v2064 = vunpack.c.h.b16 %v1190
    %v2065 = vunpack.c.l.b16 %v1191
    %v2066 = vunpack.c.h.b16 %v1191
    %v2067 = vunpack.c.l.b16 %v1192
    %v2068 = vunpack.c.h.b16 %v1192
    %v2069 = vunpack.c.l.b16 %v1193
    %v2070 = vunpack.c.h.b16 %v1193
    %v2071 = vunpack.c.l.b16 %v1194
    %v2072 = vunpack.c.h.b16 %v1194
    %v2073 = vunpack.c.l.b16 %v1195
    %v2074 = vunpack.c.h.b16 %v1195
    %v2075 = vunpack.c.l.b16 %v1196
    %v2076 = vunpack.c.h.b16 %v1196
    %v2077 = vunpack.c.l.b16 %v1197
    %v2078 = vunpack.c.h.b16 %v1197
    %v2079 = vunpack.c.l.b16 %v1198
    %v2080 = vunpack.c.h.b16 %v1198
    %v2081 = vunpack.c.l.b16 %v1199
    %v2082 = vunpack.c.h.b16 %v1199
    %v2083 = vunpack.c.l.b16 %v1200
    %v2084 = vunpack.c.h.b16 %v1200
    %v2085 = vunpack.c.l.b16 %v1201
    %v2086 = vunpack.c.h.b16 %v1201
    %v2087 = vunpack.c.l.b16 %v1202
    %v2088 = vunpack.c.h.b16 %v1202
    %v2089 = vunpack.c.l.b16 %v1203
    %v2090 = vunpack.c.h.b16 %v1203
    %v2091 = vunpack.c.l.b16 %v1204
    %v2092 = vunpack.c.h.b16 %v1204
    %v2093 = vunpack.c.l.b16 %v1205
    %v2094 = vunpack.c.h.b16 %v1205
    %v2095 = vunpack.c.l.b16 %v1206
    %v2096 = vunpack.c.h.b16 %v1206
    %v2097 = vunpack.c.l.b16 %v1207
    %v2098 = vunpack.c.h.b16 %v1207
    %v2099 = vunpack.c.l.b16 %v1208
    %v2100 = vunpack.c.h.b16 %v1208
    %v2101 = vunpack.c.l.b16 %v1209
    %v2102 = vunpack.c.h.b16 %v1209
    %v2103 = vunpack.c.l.b16 %v1210
    %v2104 = vunpack.c.h.b16 %v1210
    %v2105 = vunpack.c.l.b16 %v1211
    %v2106 = vunpack.c.h.b16 %v1211
    %v2107 = vunpack.c.l.b16 %v1212
    %v2108 = vunpack.c.h.b16 %v1212
    %v2109 = vunpack.c.l.b16 %v1213
    %v2110 = vunpack.c.h.b16 %v1213
    %v2111 = vunpack.c.l.b16 %v1214
    %v2112 = vunpack.c.h.b16 %v1214
    %v2113 = vunpack.c.l.b16 %v1215
    %v2114 = vunpack.c.h.b16 %v1215
    %v2115 = vunpack.c.l.b16 %v1216
    %v2116 = vunpack.c.h.b16 %v1216
    %v2117 = vunpack.c.l.b16 %v1217
    %v2118 = vunpack.c.h.b16 %v1217
    %v2119 = vunpack.c.l.b16 %v1218
    %v2120 = vunpack.c.h.b16 %v1218
    %v2121 = vunpack.c.l.b16 %v1219
    %v2122 = vunpack.c.h.b16 %v1219
    %v2123 = vunpack.c.l.b16 %v1220
    %v2124 = vunpack.c.h.b16 %v1220
    %v2125 = vunpack.c.l.b16 %v1221
    %v2126 = vunpack.c.h.b16 %v1221
    %v2127 = vunpack.c.l.b16 %v1222
    %v2128 = vunpack.c.h.b16 %v1222
    %v2129 = vunpack.c.l.b16 %v1223
    %v2130 = vunpack.c.h.b16 %v1223
    %v2131 = vunpack.c.l.b16 %v1224
    %v2132 = vunpack.c.h.b16 %v1224
    %v2133 = vunpack.c.l.b16 %v1225
    %v2134 = vunpack.c.h.b16 %v1225
    %v2135 = vunpack.c.l.b16 %v1226
    %v2136 = vunpack.c.h.b16 %v1226
    %v2137 = vunpack.c.l.b16 %v1227
    %v2138 = vunpack.c.h.b16 %v1227
    %v2139 = vunpack.c.l.b16 %v1228
    %v2140 = vunpack.c.h.b16 %v1228
    %v2141 = vunpack.c.l.b16 %v1229
    %v2142 = vunpack.c.h.b16 %v1229
    %v2143 = vunpack.c.l.b16 %v1230
    %v2144 = vunpack.c.h.b16 %v1230
    %v2145 = vunpack.c.l.b16 %v1231
    %v2146 = vunpack.c.h.b16 %v1231
    %v2147 = vunpack.c.l.b16 %v1232
    %v2148 = vunpack.c.h.b16 %v1232
    %v2149 = vunpack.c.l.b16 %v1233
    %v2150 = vunpack.c.h.b16 %v1233
    %v2151 = vunpack.c.l.b16 %v1234
    %v2152 = vunpack.c.h.b16 %v1234
    %v2153 = vunpack.c.l.b16 %v1235
    %v2154 = vunpack.c.h.b16 %v1235
    %v2155 = vunpack.c.l.b16 %v1236
    %v2156 = vunpack.c.h.b16 %v1236
    %v2157 = vunpack.c.l.b16 %v1237
    %v2158 = vunpack.c.h.b16 %v1237
    %v2159 = vunpack.c.l.b16 %v1238
    %v2160 = vunpack.c.h.b16 %v1238
    %v2161 = vunpack.c.l.b16 %v1239
    %v2162 = vunpack.c.h.b16 %v1239
    %v2163 = vunpack.c.l.b16 %v1240
    %v2164 = vunpack.c.h.b16 %v1240
    %v2165 = vunpack.c.l.b16 %v1241
    %v2166 = vunpack.c.h.b16 %v1241
    %v2167 = vunpack.c.l.b16 %v1242
    %v2168 = vunpack.c.h.b16 %v1242
    %v2169 = vunpack.c.l.b16 %v1243
    %v2170 = vunpack.c.h.b16 %v1243
    %v2171 = vunpack.c.l.b16 %v1244
    %v2172 = vunpack.c.h.b16 %v1244
    %v2173 = vunpack.c.l.b16 %v1245
    %v2174 = vunpack.c.h.b16 %v1245
    %v2175 = vunpack.c.l.b16 %v1246
    %v2176 = vunpack.c.h.b16 %v1246
    %v2177 = vunpack.c.l.b16 %v1247
    %v2178 = vunpack.c.h.b16 %v1247
    %v2179 = vunpack.c.l.b16 %v1248
    %v2180 = vunpack.c.h.b16 %v1248
    %v2181 = vunpack.c.l.b16 %v1249
    %v2182 = vunpack.c.h.b16 %v1249
    %v2183 = vunpack.c.l.b16 %v1250
    %v2184 = vunpack.c.h.b16 %v1250
    %v2185 = vunpack.c.l.b16 %v1251
    %v2186 = vunpack.c.h.b16 %v1251
    %v2187 = vunpack.c.l.b16 %v1252
    %v2188 = vunpack.c.h.b16 %v1252
    %v2189 = vunpack.c.l.b16 %v1253
    %v2190 = vunpack.c.h.b16 %v1253
    %v2191 = vunpack.c.l.b16 %v1254
    %v2192 = vunpack.c.h.b16 %v1254
    %v2193 = vunpack.c.l.b16 %v1255
    %v2194 = vunpack.c.h.b16 %v1255
    %v2195 = vunpack.c.l.b16 %v1256
    %v2196 = vunpack.c.h.b16 %v1256
    %v2197 = vunpack.c.l.b16 %v1257
    %v2198 = vunpack.c.h.b16 %v1257
    %v2199 = vunpack.c.l.b16 %v1258
    %v2200 = vunpack.c.h.b16 %v1258
    %v2201 = vunpack.c.l.b16 %v1259
    %v2202 = vunpack.c.h.b16 %v1259
    %v2203 = vunpack.c.l.b16 %v1260
    %v2204 = vunpack.c.h.b16 %v1260
    %v2205 = vunpack.c.l.b16 %v1261
    %v2206 = vunpack.c.h.b16 %v1261
    %v2207 = vunpack.c.l.b16 %v1262
    %v2208 = vunpack.c.h.b16 %v1262
    %v2209 = vunpack.c.l.b16 %v1263
    %v2210 = vunpack.c.h.b16 %v1263
    %v2211 = vunpack.c.l.b16 %v1264
    %v2212 = vunpack.c.h.b16 %v1264
    %v2213 = vunpack.c.l.b16 %v1265
    %v2214 = vunpack.c.h.b16 %v1265
    %v2215 = vunpack.c.l.b16 %v1266
    %v2216 = vunpack.c.h.b16 %v1266
    %v2217 = vunpack.c.l.b16 %v1267
    %v2218 = vunpack.c.h.b16 %v1267
    %v2219 = vunpack.c.l.b16 %v1268
    %v2220 = vunpack.c.h.b16 %v1268
    %v2221 = vunpack.c.l.b16 %v1269
    %v2222 = vunpack.c.h.b16 %v1269
    %v2223 = vunpack.c.l.b16 %v1270
    %v2224 = vunpack.c.h.b16 %v1270
    %v2225 = vunpack.c.l.b16 %v1271
    %v2226 = vunpack.c.h.b16 %v1271
    %v2227 = vunpack.c.l.b16 %v1272
    %v2228 = vunpack.c.h.b16 %v1272
    %v2229 = vunpack.c.l.b16 %v1273
    %v2230 = vunpack.c.h.b16 %v1273
    %v2231 = vunpack.c.l.b16 %v1274
    %v2232 = vunpack.c.h.b16 %v1274
    %v2233 = vunpack.c.l.b16 %v1275
    %v2234 = vunpack.c.h.b16 %v1275
    %v2235 = vunpack.c.l.b16 %v1276
    %v2236 = vunpack.c.h.b16 %v1276
    %v2237 = vunpack.c.l.b16 %v1277
    %v2238 = vunpack.c.h.b16 %v1277
    %v2239 = vunpack.c.l.b16 %v1278
    %v2240 = vunpack.c.h.b16 %v1278
    %v2241 = vunpack.c.l.b16 %v1279
    %v2242 = vunpack.c.h.b16 %v1279
    %v2243 = vunpack.c.l.b16 %v1280
    %v2244 = vunpack.c.h.b16 %v1280
    %v2245 = vunpack.c.l.b16 %v1281
    %v2246 = vunpack.c.h.b16 %v1281
    %v2247 = vunpack.c.l.b16 %v1282
    %v2248 = vunpack.c.h.b16 %v1282
    %v2249 = vunpack.c.l.b16 %v1283
    %v2250 = vunpack.c.h.b16 %v1283
    %v2251 = vunpack.c.l.b16 %v1284
    %v2252 = vunpack.c.h.b16 %v1284
    %v2253 = vunpack.c.l.b16 %v1285
    %v2254 = vunpack.c.h.b16 %v1285
    %v2255 = vunpack.c.l.b16 %v1286
    %v2256 = vunpack.c.h.b16 %v1286
    %v2257 = vunpack.c.l.b16 %v1287
    %v2258 = vunpack.c.h.b16 %v1287
    %v2259 = vunpack.c.l.b16 %v1288
    %v2260 = vunpack.c.h.b16 %v1288
    %v2261 = vunpack.c.l.b16 %v1289
    %v2262 = vunpack.c.h.b16 %v1289
    %v2263 = vunpack.c.l.b16 %v1290
    %v2264 = vunpack.c.h.b16 %v1290
    %v2265 = vunpack.c.l.b16 %v1291
    %v2266 = vunpack.c.h.b16 %v1291
    %v2267 = vunpack.c.l.b16 %v1292
    %v2268 = vunpack.c.h.b16 %v1292
    %v2269 = vunpack.c.l.b16 %v1293
    %v2270 = vunpack.c.h.b16 %v1293
    %v2271 = vunpack.c.l.b16 %v1294
    %v2272 = vunpack.c.h.b16 %v1294
    %v2273 = vunpack.c.l.b16 %v1295
    %v2274 = vunpack.c.h.b16 %v1295
    %v2275 = vunpack.c.l.b16 %v1296
    %v2276 = vunpack.c.h.b16 %v1296
    %v2277 = vunpack.c.l.b16 %v1297
    %v2278 = vunpack.c.h.b16 %v1297
    %v2279 = vunpack.c.l.b16 %v1298
    %v2280 = vunpack.c.h.b16 %v1298
    %v2281 = vunpack.c.l.b16 %v1299
    %v2282 = vunpack.c.h.b16 %v1299
    %v2283 = vunpack.c.l.b16 %v1300
    %v2284 = vunpack.c.h.b16 %v1300
    %v2285 = vunpack.c.l.b16 %v1301
    %v2286 = vunpack.c.h.b16 %v1301
    %v2287 = vunpack.c.l.b16 %v1302
    %v2288 = vunpack.c.h.b16 %v1302
    %v2289 = vunpack.c.l.b16 %v1303
    %v2290 = vunpack.c.h.b16 %v1303
    %v2291 = vunpack.c.l.b16 %v1304
    %v2292 = vunpack.c.h.b16 %v1304
    %v2293 = vunpack.c.l.b16 %v1305
    %v2294 = vunpack.c.h.b16 %v1305
    %v2295 = vunpack.c.l.b16 %v1306
    %v2296 = vunpack.c.h.b16 %v1306
    %v2297 = vunpack.c.l.b16 %v1307
    %v2298 = vunpack.c.h.b16 %v1307
    %v2299 = vunpack.c.l.b16 %v1308
    %v2300 = vunpack.c.h.b16 %v1308
    %v2301 = vunpack.c.l.b16 %v1309
    %v2302 = vunpack.c.h.b16 %v1309
    %v2303 = vunpack.c.l.b16 %v1310
    %v2304 = vunpack.c.h.b16 %v1310
    %v2305 = vunpack.c.l.b16 %v1311
    %v2306 = vunpack.c.h.b16 %v1311
    %v2307 = vunpack.c.l.b16 %v1312
    %v2308 = vunpack.c.h.b16 %v1312
    %v2309 = vunpack.c.l.b16 %v1313
    %v2310 = vunpack.c.h.b16 %v1313
    %v2311 = vunpack.c.l.b16 %v1314
    %v2312 = vunpack.c.h.b16 %v1314
    %v2313 = vunpack.c.l.b16 %v1315
    %v2314 = vunpack.c.h.b16 %v1315
    %v2315 = vunpack.c.l.b16 %v1316
    %v2316 = vunpack.c.h.b16 %v1316
    %v2317 = vunpack.c.l.b16 %v1317
    %v2318 = vunpack.c.h.b16 %v1317
    %v2319 = vunpack.c.l.b16 %v1318
    %v2320 = vunpack.c.h.b16 %v1318
    %v2321 = vunpack.c.l.b16 %v1319
    %v2322 = vunpack.c.h.b16 %v1319
    %v2323 = vunpack.c.l.b16 %v1320
    %v2324 = vunpack.c.h.b16 %v1320
    %v2325 = vunpack.c.l.b16 %v1321
    %v2326 = vunpack.c.h.b16 %v1321
    %v2327 = vunpack.c.l.b16 %v1322
    %v2328 = vunpack.c.h.b16 %v1322
    %v2329 = vunpack.c.l.b16 %v1323
    %v2330 = vunpack.c.h.b16 %v1323
    %v2331 = vunpack.c.l.b16 %v1324
    %v2332 = vunpack.c.h.b16 %v1324
    %v2333 = vunpack.c.l.b16 %v1325
    %v2334 = vunpack.c.h.b16 %v1325
    %v2335 = vunpack.c.l.b16 %v1326
    %v2336 = vunpack.c.h.b16 %v1326
    %v2337 = vunpack.c.l.b16 %v1327
    %v2338 = vunpack.c.h.b16 %v1327
    %v2339 = vunpack.c.l.b16 %v1328
    %v2340 = vunpack.c.h.b16 %v1328
    %v2341 = vunpack.c.l.b16 %v1329
    %v2342 = vunpack.c.h.b16 %v1329
    %v2343 = vunpack.c.l.b16 %v1330
    %v2344 = vunpack.c.h.b16 %v1330
    %v2345 = vunpack.c.l.b16 %v1331
    %v2346 = vunpack.c.h.b16 %v1331
    %v2347 = vunpack.c.l.b16 %v1332
    %v2348 = vunpack.c.h.b16 %v1332
    %v2349 = vunpack.c.l.b16 %v1333
    %v2350 = vunpack.c.h.b16 %v1333
    %v2351 = vunpack.c.l.b16 %v1334
    %v2352 = vunpack.c.h.b16 %v1334
    %v2353 = vunpack.c.l.b16 %v1335
    %v2354 = vunpack.c.h.b16 %v1335
    %v2355 = vunpack.c.l.b16 %v1336
    %v2356 = vunpack.c.h.b16 %v1336
    %v2357 = vunpack.c.l.b16 %v1337
    %v2358 = vunpack.c.h.b16 %v1337
    %v2359 = vunpack.c.l.b16 %v1338
    %v2360 = vunpack.c.h.b16 %v1338
    %v2361 = vunpack.c.l.b16 %v1339
    %v2362 = vunpack.c.h.b16 %v1339
    %v2363 = vunpack.c.l.b16 %v1340
    %v2364 = vunpack.c.h.b16 %v1340
    %v2365 = vunpack.c.l.b16 %v1341
    %v2366 = vunpack.c.h.b16 %v1341
    %v2367 = vunpack.c.l.b16 %v1342
    %v2368 = vunpack.c.h.b16 %v1342
    %v2369 = vunpack.c.l.b16 %v1343
    %v2370 = vunpack.c.h.b16 %v1343
    %v2371 = vunpack.c.l.b16 %v1344
    %v2372 = vunpack.c.h.b16 %v1344
    %v2373 = vunpack.c.l.b16 %v1345
    %v2374 = vunpack.c.h.b16 %v1345
    %v2375 = vunpack.c.l.b16 %v1346
    %v2376 = vunpack.c.h.b16 %v1346
    %v2377 = vunpack.c.l.b16 %v1347
    %v2378 = vunpack.c.h.b16 %v1347
    %v2379 = vunpack.c.l.b16 %v1348
    %v2380 = vunpack.c.h.b16 %v1348
    %v2381 = vunpack.c.l.b16 %v1349
    %v2382 = vunpack.c.h.b16 %v1349
    %v2383 = vunpack.c.l.b16 %v1350
    %v2384 = vunpack.c.h.b16 %v1350
    %v2385 = vunpack.c.l.b16 %v1351
    %v2386 = vunpack.c.h.b16 %v1351
    %v2387 = vunpack.c.l.b16 %v1352
    %v2388 = vunpack.c.h.b16 %v1352
    %v2389 = vunpack.c.l.b16 %v1353
    %v2390 = vunpack.c.h.b16 %v1353
    %v2391 = vunpack.c.l.b16 %v1354
    %v2392 = vunpack.c.h.b16 %v1354
    %v2393 = vunpack.c.l.b16 %v1355
    %v2394 = vunpack.c.h.b16 %v1355
    %v2395 = vunpack.c.l.b16 %v1356
    %v2396 = vunpack.c.h.b16 %v1356
    %v2397 = vunpack.c.l.b16 %v1357
    %v2398 = vunpack.c.h.b16 %v1357
    %v2399 = vunpack.c.l.b16 %v1358
    %v2400 = vunpack.c.h.b16 %v1358
    %v2401 = vunpack.c.l.b16 %v1359
    %v2402 = vunpack.c.h.b16 %v1359
    %v2403 = vunpack.c.l.b16 %v1360
    %v2404 = vunpack.c.h.b16 %v1360
    %v2405 = vunpack.c.l.b16 %v1361
    %v2406 = vunpack.c.h.b16 %v1361
    %v2407 = vunpack.c.l.b16 %v1362
    %v2408 = vunpack.c.h.b16 %v1362
    %v2409 = vunpack.c.l.b16 %v1363
    %v2410 = vunpack.c.h.b16 %v1363
    %v2411 = vunpack.c.l.b16 %v1364
    %v2412 = vunpack.c.h.b16 %v1364
    %v2413 = vunpack.c.l.b16 %v1365
    %v2414 = vunpack.c.h.b16 %v1365
    %v2415 = vunpack.c.l.b16 %v1366
    %v2416 = vunpack.c.h.b16 %v1366
    %v2417 = vunpack.c.l.b16 %v1367
    %v2418 = vunpack.c.h.b16 %v1367
    %v2419 = vunpack.c.l.b16 %v1368
    %v2420 = vunpack.c.h.b16 %v1368
    %v2421 = vunpack.c.l.b16 %v1369
    %v2422 = vunpack.c.h.b16 %v1369
    %v2423 = vunpack.c.l.b16 %v1370
    %v2424 = vunpack.c.h.b16 %v1370
    %v2425 = vunpack.c.l.b16 %v1371
    %v2426 = vunpack.c.h.b16 %v1371
    %v2427 = vunpack.c.l.b16 %v1372
    %v2428 = vunpack.c.h.b16 %v1372
    %v2429 = vunpack.c.l.b16 %v1373
    %v2430 = vunpack.c.h.b16 %v1373
    %v2431 = vunpack.c.l.b16 %v1374
    %v2432 = vunpack.c.h.b16 %v1374
    %v2433 = vunpack.c.l.b16 %v1375
    %v2434 = vunpack.c.h.b16 %v1375
    %v2435 = vunpack.c.l.b16 %v1376
    %v2436 = vunpack.c.h.b16 %v1376
    %v2437 = vunpack.c.l.b16 %v1377
    %v2438 = vunpack.c.h.b16 %v1377
    %v2439 = vunpack.c.l.b16 %v1378
    %v2440 = vunpack.c.h.b16 %v1378
    %v2441 = vunpack.c.l.b16 %v1379
    %v2442 = vunpack.c.h.b16 %v1379
    %v2443 = vunpack.c.l.b16 %v1380
    %v2444 = vunpack.c.h.b16 %v1380
    %v2445 = vunpack.c.l.b16 %v1381
    %v2446 = vunpack.c.h.b16 %v1381
    %v2447 = vunpack.c.l.b16 %v1382
    %v2448 = vunpack.c.h.b16 %v1382
    %v2449 = vunpack.c.l.b16 %v1383
    %v2450 = vunpack.c.h.b16 %v1383
    %v2451 = vunpack.c.l.b16 %v1384
    %v2452 = vunpack.c.h.b16 %v1384
    %v2453 = vunpack.c.l.b16 %v1385
    %v2454 = vunpack.c.h.b16 %v1385
    %v2455 = vunpack.c.l.b16 %v1386
    %v2456 = vunpack.c.h.b16 %v1386
    %v2457 = vunpack.c.l.b16 %v1387
    %v2458 = vunpack.c.h.b16 %v1387
    %v2459 = vunpack.c.l.b16 %v1388
    %v2460 = vunpack.c.h.b16 %v1388
    %v2461 = vunpack.c.l.b16 %v1389
    %v2462 = vunpack.c.h.b16 %v1389
    %v2463 = vunpack.c.l.b16 %v1390
    %v2464 = vunpack.c.h.b16 %v1390
    %v2465 = vunpack.c.l.b16 %v1391
    %v2466 = vunpack.c.h.b16 %v1391
    %v2467 = vunpack.c.l.b16 %v1392
    %v2468 = vunpack.c.h.b16 %v1392
    %v2469 = vunpack.c.l.b16 %v1393
    %v2470 = vunpack.c.h.b16 %v1393
    %v2471 = vunpack.c.l.b16 %v1394
    %v2472 = vunpack.c.h.b16 %v1394
    %v2473 = vunpack.c.l.b16 %v1395
    %v2474 = vunpack.c.h.b16 %v1395
    %v2475 = vunpack.c.l.b16 %v1396
    %v2476 = vunpack.c.h.b16 %v1396
    %v2477 = vunpack.c.l.b16 %v1397
    %v2478 = vunpack.c.h.b16 %v1397
    %v2479 = vunpack.c.l.b16 %v1398
    %v2480 = vunpack.c.h.b16 %v1398
    %v2481 = vunpack.c.l.b16 %v1399
    %v2482 = vunpack.c.h.b16 %v1399
    %v2483 = vunpack.c.l.b16 %v1400
    %v2484 = vunpack.c.h.b16 %v1400
    %v2485 = vunpack.c.l.b16 %v1401
    %v2486 = vunpack.c.h.b16 %v1401
    %v2487 = vunpack.c.l.b16 %v1402
    %v2488 = vunpack.c.h.b16 %v1402
    %v2489 = vunpack.c.l.b16 %v1403
    %v2490 = vunpack.c.h.b16 %v1403
    %v2491 = vunpack.c.l.b16 %v1404
    %v2492 = vunpack.c.h.b16 %v1404
    %v2493 = vunpack.c.l.b16 %v1405
    %v2494 = vunpack.c.h.b16 %v1405
    %v2495 = vunpack.c.l.b16 %v1406
    %v2496 = vunpack.c.h.b16 %v1406
    %v2497 = vunpack.c.l.b16 %v1407
    %v2498 = vunpack.c.h.b16 %v1407
    %v2499 = vunpack.c.l.b16 %v1408
    %v2500 = vunpack.c.h.b16 %v1408
    %v2501 = vunpack.c.l.b16 %v1409
    %v2502 = vunpack.c.h.b16 %v1409
    %v2503 = vunpack.c.l.b16 %v1410
    %v2504 = vunpack.c.h.b16 %v1410
    %v2505 = vunpack.c.l.b16 %v1411
    %v2506 = vunpack.c.h.b16 %v1411
    %v2507 = vunpack.c.l.b16 %v1412
    %v2508 = vunpack.c.h.b16 %v1412
    %v2509 = vunpack.c.l.b16 %v1413
    %v2510 = vunpack.c.h.b16 %v1413
    %v2511 = vunpack.c.l.b16 %v1414
    %v2512 = vunpack.c.h.b16 %v1414
    %v2513 = vunpack.c.l.b16 %v1415
    %v2514 = vunpack.c.h.b16 %v1415
    %v2515 = vunpack.c.l.b16 %v1416
    %v2516 = vunpack.c.h.b16 %v1416
    %v2517 = vunpack.c.l.b16 %v1417
    %v2518 = vunpack.c.h.b16 %v1417
    %v2519 = vunpack.c.l.b16 %v1418
    %v2520 = vunpack.c.h.b16 %v1418
    %v2521 = vunpack.c.l.b16 %v1419
    %v2522 = vunpack.c.h.b16 %v1419
    %v2523 = vunpack.c.l.b16 %v1420
    %v2524 = vunpack.c.h.b16 %v1420
    %v2525 = vunpack.c.l.b16 %v1421
    %v2526 = vunpack.c.h.b16 %v1421
    %v2527 = vunpack.c.l.b16 %v1422
    %v2528 = vunpack.c.h.b16 %v1422
    %v2529 = vunpack.c.l.b16 %v1423
    %v2530 = vunpack.c.h.b16 %v1423
    %v2531 = vunpack.c.l.b16 %v1424
    %v2532 = vunpack.c.h.b16 %v1424
    %v2533 = vunpack.c.l.b16 %v1425
    %v2534 = vunpack.c.h.b16 %v1425
    %v2535 = vunpack.c.l.b16 %v1426
    %v2536 = vunpack.c.h.b16 %v1426
    %v2537 = vunpack.c.l.b16 %v1427
    %v2538 = vunpack.c.h.b16 %v1427
    %v2539 = vunpack.c.l.b16 %v1428
    %v2540 = vunpack.c.h.b16 %v1428
    %v2541 = vunpack.c.l.b16 %v1429
    %v2542 = vunpack.c.h.b16 %v1429
    %v2543 = vunpack.c.l.b16 %v1430
    %v2544 = vunpack.c.h.b16 %v1430
    %v2545 = vunpack.c.l.b16 %v1431
    %v2546 = vunpack.c.h.b16 %v1431
    %v2547 = vunpack.c.l.b16 %v1432
    %v2548 = vunpack.c.h.b16 %v1432
    %v2549 = vunpack.c.l.b16 %v1433
    %v2550 = vunpack.c.h.b16 %v1433
    %v2551 = vunpack.c.l.b16 %v1434
    %v2552 = vunpack.c.h.b16 %v1434
    %v2553 = vunpack.c.l.b16 %v1435
    %v2554 = vunpack.c.h.b16 %v1435
    %v2555 = vunpack.c.l.b16 %v1436
    %v2556 = vunpack.c.h.b16 %v1436
    %v2557 = vunpack.c.l.b16 %v1437
    %v2558 = vunpack.c.h.b16 %v1437
    %v2559 = vunpack.c.l.b16 %v1438
    %v2560 = vunpack.c.h.b16 %v1438
    %v2561 = vunpack.c.l.b16 %v1439
    %v2562 = vunpack.c.h.b16 %v1439
    %v2563 = vunpack.c.l.b16 %v1440
    %v2564 = vunpack.c.h.b16 %v1440
    %v2565 = vunpack.c.l.b16 %v1441
    %v2566 = vunpack.c.h.b16 %v1441
    %v2567 = vunpack.c.l.b16 %v1442
    %v2568 = vunpack.c.h.b16 %v1442
    %v2569 = vunpack.c.l.b16 %v1443
    %v2570 = vunpack.c.h.b16 %v1443
    %v2571 = vunpack.c.l.b16 %v1444
    %v2572 = vunpack.c.h.b16 %v1444
    %v2573 = vunpack.c.l.b16 %v1445
    %v2574 = vunpack.c.h.b16 %v1445
    %v2575 = vunpack.c.l.b16 %v1446
    %v2576 = vunpack.c.h.b16 %v1446
    %v2577 = vunpack.c.l.b16 %v1447
    %v2578 = vunpack.c.h.b16 %v1447
    %v2579 = vunpack.c.l.b16 %v1448
    %v2580 = vunpack.c.h.b16 %v1448
    %v2581 = vunpack.c.l.b16 %v1449
    %v2582 = vunpack.c.h.b16 %v1449
    %v2583 = vunpack.c.l.b16 %v1450
    %v2584 = vunpack.c.h.b16 %v1450
    %v2585 = vunpack.c.l.b16 %v1451
    %v2586 = vunpack.c.h.b16 %v1451
    %v2587 = vunpack.c.l.b16 %v1452
    %v2588 = vunpack.c.h.b16 %v1452
    %v2589 = vunpack.c.l.b16 %v1453
    %v2590 = vunpack.c.h.b16 %v1453
    %v2591 = vunpack.c.l.b16 %v1454
    %v2592 = vunpack.c.h.b16 %v1454
    %v2593 = vunpack.c.l.b16 %v1455
    %v2594 = vunpack.c.h.b16 %v1455
    %v2595 = vunpack.c.l.b16 %v1456
    %v2596 = vunpack.c.h.b16 %v1456
    %v2597 = vunpack.c.l.b16 %v1457
    %v2598 = vunpack.c.h.b16 %v1457
    %v2599 = vunpack.c.l.b16 %v1458
    %v2600 = vunpack.c.h.b16 %v1458
    %v2601 = vunpack.c.l.b16 %v1459
    %v2602 = vunpack.c.h.b16 %v1459
    %v2603 = vunpack.c.l.b16 %v1460
    %v2604 = vunpack.c.h.b16 %v1460
    %v2605 = vunpack.c.l.b16 %v1461
    %v2606 = vunpack.c.h.b16 %v1461
    %v2607 = vunpack.c.l.b16 %v1462
    %v2608 = vunpack.c.h.b16 %v1462
    %v2609 = vunpack.c.l.b16 %v1463
    %v2610 = vunpack.c.h.b16 %v1463
    %v2611 = vunpack.c.l.b16 %v1464
    %v2612 = vunpack.c.h.b16 %v1464
    %v2613 = vunpack.c.l.b16 %v1465
    %v2614 = vunpack.c.h.b16 %v1465
    %v2615 = vunpack.c.l.b16 %v1466
    %v2616 = vunpack.c.h.b16 %v1466
    %v2617 = vunpack.c.l.b16 %v1467
    %v2618 = vunpack.c.h.b16 %v1467
    %v2619 = vunpack.c.l.b16 %v1468
    %v2620 = vunpack.c.h.b16 %v1468
    %v2621 = vunpack.c.l.b16 %v1469
    %v2622 = vunpack.c.h.b16 %v1469
    %v2623 = vunpack.c.l.b16 %v1470
    %v2624 = vunpack.c.h.b16 %v1470
    %v2625 = vunpack.c.l.b16 %v1471
    %v2626 = vunpack.c.h.b16 %v1471
    %v2627 = vunpack.c.l.b16 %v1472
    %v2628 = vunpack.c.h.b16 %v1472
    %v2629 = vunpack.c.l.b16 %v1473
    %v2630 = vunpack.c.h.b16 %v1473
    %v2631 = vunpack.c.l.b16 %v1474
    %v2632 = vunpack.c.h.b16 %v1474
    %v2633 = vunpack.c.l.b16 %v1475
    %v2634 = vunpack.c.h.b16 %v1475
    %v2635 = vunpack.c.l.b16 %v1476
    %v2636 = vunpack.c.h.b16 %v1476
    %v2637 = vunpack.c.l.b16 %v1477
    %v2638 = vunpack.c.h.b16 %v1477
    %v2639 = vunpack.c.l.b16 %v1478
    %v2640 = vunpack.c.h.b16 %v1478
    %v2641 = vunpack.c.l.b16 %v1479
    %v2642 = vunpack.c.h.b16 %v1479
    %v2643 = vunpack.c.l.b16 %v1480
    %v2644 = vunpack.c.h.b16 %v1480
    %v2645 = vunpack.c.l.b16 %v1481
    %v2646 = vunpack.c.h.b16 %v1481
    %v2647 = vunpack.c.l.b16 %v1482
    %v2648 = vunpack.c.h.b16 %v1482
    %v2649 = vunpack.c.l.b16 %v1483
    %v2650 = vunpack.c.h.b16 %v1483
    %v2651 = vunpack.c.l.b16 %v1484
    %v2652 = vunpack.c.h.b16 %v1484
    %v2653 = vunpack.c.l.b16 %v1485
    %v2654 = vunpack.c.h.b16 %v1485
    %v2655 = vunpack.c.l.b16 %v1486
    %v2656 = vunpack.c.h.b16 %v1486
    %v2657 = vunpack.c.l.b16 %v1487
    %v2658 = vunpack.c.h.b16 %v1487
    %v2659 = vunpack.c.l.b16 %v1488
    %v2660 = vunpack.c.h.b16 %v1488
    %v2661 = vunpack.c.l.b16 %v1489
    %v2662 = vunpack.c.h.b16 %v1489
    %v2663 = vunpack.c.l.b16 %v1490
    %v2664 = vunpack.c.h.b16 %v1490
    %v2665 = vunpack.c.l.b16 %v1491
    %v2666 = vunpack.c.h.b16 %v1491
    %v2667 = vunpack.c.l.b16 %v1492
    %v2668 = vunpack.c.h.b16 %v1492
    %v2669 = vunpack.c.l.b16 %v1493
    %v2670 = vunpack.c.h.b16 %v1493
    %v2671 = vunpack.c.l.b16 %v1494
    %v2672 = vunpack.c.h.b16 %v1494
    %v2673 = vunpack.c.l.b16 %v1495
    %v2674 = vunpack.c.h.b16 %v1495
    %v2675 = vunpack.c.l.b16 %v1496
    %v2676 = vunpack.c.h.b16 %v1496
    %v2677 = vunpack.c.l.b16 %v1497
    %v2678 = vunpack.c.h.b16 %v1497
    %v2679 = vunpack.c.l.b16 %v1498
    %v2680 = vunpack.c.h.b16 %v1498
    %v2681 = vunpack.c.l.b16 %v1499
    %v2682 = vunpack.c.h.b16 %v1499
    %v2683 = vunpack.c.l.b16 %v1500
    %v2684 = vunpack.c.h.b16 %v1500
    %v2685 = vunpack.c.l.b16 %v1501
    %v2686 = vunpack.c.h.b16 %v1501
    %v2687 = vunpack.c.l.b16 %v1502
    %v2688 = vunpack.c.h.b16 %v1502
    %v2689 = vunpack.c.l.b16 %v1503
    %v2690 = vunpack.c.h.b16 %v1503
    %v2691 = vunpack.c.l.b16 %v1504
    %v2692 = vunpack.c.h.b16 %v1504
    %v2693 = vunpack.c.l.b16 %v1505
    %v2694 = vunpack.c.h.b16 %v1505
    %v2695 = vunpack.c.l.b16 %v1506
    %v2696 = vunpack.c.h.b16 %v1506
    %v2697 = vunpack.c.l.b16 %v1507
    %v2698 = vunpack.c.h.b16 %v1507
    %v2699 = vunpack.c.l.b16 %v1508
    %v2700 = vunpack.c.h.b16 %v1508
    %v2701 = vunpack.c.l.b16 %v1509
    %v2702 = vunpack.c.h.b16 %v1509
    %v2703 = vunpack.c.l.b16 %v1510
    %v2704 = vunpack.c.h.b16 %v1510
    %v2705 = vunpack.c.l.b16 %v1511
    %v2706 = vunpack.c.h.b16 %v1511
    %v2707 = vunpack.c.l.b16 %v1512
    %v2708 = vunpack.c.h.b16 %v1512
    %v2709 = vunpack.c.l.b16 %v1513
    %v2710 = vunpack.c.h.b16 %v1513
    %v2711 = vunpack.c.l.b16 %v1514
    %v2712 = vunpack.c.h.b16 %v1514
    %v2713 = vunpack.c.l.b16 %v1515
    %v2714 = vunpack.c.h.b16 %v1515
    %v2715 = vunpack.c.l.b16 %v1516
    %v2716 = vunpack.c.h.b16 %v1516
    %v2717 = vunpack.c.l.b16 %v1517
    %v2718 = vunpack.c.h.b16 %v1517
    %v2719 = vunpack.c.l.b16 %v1518
    %v2720 = vunpack.c.h.b16 %v1518
    %v2721 = vunpack.c.l.b16 %v1519
    %v2722 = vunpack.c.h.b16 %v1519
    %v2723 = vunpack.c.l.b16 %v1520
    %v2724 = vunpack.c.h.b16 %v1520
    %v2725 = vunpack.c.l.b16 %v1521
    %v2726 = vunpack.c.h.b16 %v1521
    %v2727 = vunpack.c.l.b16 %v1522
    %v2728 = vunpack.c.h.b16 %v1522
    %v2729 = vunpack.c.l.b16 %v1523
    %v2730 = vunpack.c.h.b16 %v1523
    %v2731 = vunpack.c.l.b16 %v1524
    %v2732 = vunpack.c.h.b16 %v1524
    %v2733 = vunpack.c.l.b16 %v1525
    %v2734 = vunpack.c.h.b16 %v1525
    %v2735 = vunpack.c.l.b16 %v1526
    %v2736 = vunpack.c.h.b16 %v1526
    %v2737 = vunpack.c.l.b16 %v1527
    %v2738 = vunpack.c.h.b16 %v1527
    %v2739 = vunpack.c.l.b16 %v1528
    %v2740 = vunpack.c.h.b16 %v1528
    %v2741 = vunpack.c.l.b16 %v1529
    %v2742 = vunpack.c.h.b16 %v1529
    %v2743 = vunpack.c.l.b16 %v1530
    %v2744 = vunpack.c.h.b16 %v1530
    %v2745 = vunpack.c.l.b16 %v1531
    %v2746 = vunpack.c.h.b16 %v1531
    %v2747 = vunpack.c.l.b16 %v1532
    %v2748 = vunpack.c.h.b16 %v1532
    %v2749 = vunpack.c.l.b16 %v1533
    %v2750 = vunpack.c.h.b16 %v1533
    %v2751 = vunpack.c.l.b16 %v1534
    %v2752 = vunpack.c.h.b16 %v1534
    %v2753 = vunpack.c.l.b16 %v1535
    %v2754 = vunpack.c.h.b16 %v1535
    %v2755 = vunpack.c.l.b16 %v1536
    %v2756 = vunpack.c.h.b16 %v1536
    %v2757 = vunpack.c.l.b16 %v1537
    %v2758 = vunpack.c.h.b16 %v1537
    %v2759 = vunpack.c.l.b16 %v1538
    %v2760 = vunpack.c.h.b16 %v1538
    %v2761 = vunpack.c.l.b16 %v1539
    %v2762 = vunpack.c.h.b16 %v1539
    %v2763 = vunpack.c.l.b16 %v1540
    %v2764 = vunpack.c.h.b16 %v1540
    %v2765 = vunpack.c.l.b16 %v1541
    %v2766 = vunpack.c.h.b16 %v1541
    %v2767 = vunpack.c.l.b16 %v1542
    %v2768 = vunpack.c.h.b16 %v1542
    %v2769 = vunpack.c.l.b16 %v1543
    %v2770 = vunpack.c.h.b16 %v1543
    %v2771 = vunpack.c.l.b16 %v1544
    %v2772 = vunpack.c.h.b16 %v1544
    %v2773 = vunpack.c.l.b16 %v1545
    %v2774 = vunpack.c.h.b16 %v1545
    %v2775 = vunpack.c.l.b16 %v1546
    %v2776 = vunpack.c.h.b16 %v1546
    %v2777 = vunpack.c.l.b16 %v1547
    %v2778 = vunpack.c.h.b16 %v1547
    %v2779 = vunpack.c.l.b16 %v1548
    %v2780 = vunpack.c.h.b16 %v1548
    %v2781 = vunpack.c.l.b16 %v1549
    %v2782 = vunpack.c.h.b16 %v1549
    %v2783 = vunpack.c.l.b16 %v1550
    %v2784 = vunpack.c.h.b16 %v1550
    %v2785 = vunpack.c.l.b16 %v1551
    %v2786 = vunpack.c.h.b16 %v1551
    %v2787 = vunpack.c.l.b16 %v1552
    %v2788 = vunpack.c.h.b16 %v1552
    %v2789 = vunpack.c.l.b16 %v1553
    %v2790 = vunpack.c.h.b16 %v1553
    %v2791 = vunpack.c.l.b16 %v1554
    %v2792 = vunpack.c.h.b16 %v1554
    %v2793 = vunpack.c.l.b16 %v1555
    %v2794 = vunpack.c.h.b16 %v1555
    %v2795 = vunpack.c.l.b16 %v1556
    %v2796 = vunpack.c.h.b16 %v1556
    %v2797 = vunpack.c.l.b16 %v1557
    %v2798 = vunpack.c.h.b16 %v1557
    %v2799 = vunpack.c.l.b16 %v1558
    %v2800 = vunpack.c.h.b16 %v1558
    %v2801 = vunpack.c.l.b16 %v1559
    %v2802 = vunpack.c.h.b16 %v1559
    %v2803 = vunpack.c.l.b16 %v1560
    %v2804 = vunpack.c.h.b16 %v1560
    %v2805 = vunpack.c.l.b16 %v1561
    %v2806 = vunpack.c.h.b16 %v1561
    %v2807 = vunpack.c.l.b16 %v1562
    %v2808 = vunpack.c.h.b16 %v1562
    %v2809 = vunpack.c.l.b16 %v1563
    %v2810 = vunpack.c.h.b16 %v1563
    %v2811 = vunpack.c.l.b16 %v1564
    %v2812 = vunpack.c.h.b16 %v1564
    %v2813 = vunpack.c.l.b16 %v1565
    %v2814 = vunpack.c.h.b16 %v1565
    %v2815 = vunpack.c.l.b16 %v1566
    %v2816 = vunpack.c.h.b16 %v1566
    %v2817 = vunpack.c.l.b16 %v1567
    %v2818 = vunpack.c.h.b16 %v1567
    %v2819 = vunpack.c.l.b16 %v1568
    %v2820 = vunpack.c.h.b16 %v1568
    %v2821 = vunpack.c.l.b16 %v1569
    %v2822 = vunpack.c.h.b16 %v1569
    %v2823 = vunpack.c.l.b16 %v1570
    %v2824 = vunpack.c.h.b16 %v1570
    %v2825 = vunpack.c.l.b16 %v1571
    %v2826 = vunpack.c.h.b16 %v1571
    %v2827 = vunpack.c.l.b16 %v1572
    %v2828 = vunpack.c.h.b16 %v1572
    %v2829 = vunpack.c.l.b16 %v1573
    %v2830 = vunpack.c.h.b16 %v1573
    %v2831 = vunpack.c.l.b16 %v1574
    %v2832 = vunpack.c.h.b16 %v1574
    %v2833 = vunpack.c.l.b16 %v1575
    %v2834 = vunpack.c.h.b16 %v1575
    %v2835 = vunpack.c.l.b16 %v1576
    %v2836 = vunpack.c.h.b16 %v1576
    %v2837 = vunpack.c.l.b16 %v1577
    %v2838 = vunpack.c.h.b16 %v1577
    %v2839 = vunpack.c.l.b16 %v1578
    %v2840 = vunpack.c.h.b16 %v1578
    %v2841 = vunpack.c.l.b16 %v1579
    %v2842 = vunpack.c.h.b16 %v1579
    %v2843 = vunpack.c.l.b16 %v1580
    %v2844 = vunpack.c.h.b16 %v1580
    %v2845 = vunpack.c.l.b16 %v1581
    %v2846 = vunpack.c.h.b16 %v1581
    %v2847 = vunpack.c.l.b16 %v1582
    %v2848 = vunpack.c.h.b16 %v1582
    %v2849 = vunpack.c.l.b16 %v1583
    %v2850 = vunpack.c.h.b16 %v1583
    %v2851 = vunpack.c.l.b16 %v1584
    %v2852 = vunpack.c.h.b16 %v1584
    %v2853 = vunpack.c.l.b16 %v1585
    %v2854 = vunpack.c.h.b16 %v1585
    %v2855 = vunpack.c.l.b16 %v1586
    %v2856 = vunpack.c.h.b16 %v1586
    %v2857 = vpack.c.b16 %v2029, %v2025
    %v2858 = vpack.c.b16 %v2030, %v2026
    %v2859 = vpack.c.b16 %v2031, %v2027
    %v2860 = vpack.c.b16 %v2032, %v2028
    %v2861 = vpack.c.b16 %v2037, %v2033
    %v2862 = vpack.c.b16 %v2038, %v2034
    %v2863 = vpack.c.b16 %v2039, %v2035
    %v2864 = vpack.c.b16 %v2040, %v2036
    %v2865 = vpack.c.b16 %v2045, %v2041
    %v2866 = vpack.c.b16 %v2046, %v2042
    %v2867 = vpack.c.b16 %v2047, %v2043
    %v2868 = vpack.c.b16 %v2048, %v2044
    %v2869 = vpack.c.b16 %v2053, %v2049
    %v2870 = vpack.c.b16 %v2054, %v2050
    %v2871 = vpack.c.b16 %v2055, %v2051
    %v2872 = vpack.c.b16 %v2056, %v2052
    %v2873 = vpack.c.b16 %v2061, %v2057
    %v2874 = vpack.c.b16 %v2062, %v2058
    %v2875 = vpack.c.b16 %v2063, %v2059
    %v2876 = vpack.c.b16 %v2064, %v2060
    %v2877 = vpack.c.b16 %v2069, %v2065
    %v2878 = vpack.c.b16 %v2070, %v2066
    %v2879 = vpack.c.b16 %v2071, %v2067
    %v2880 = vpack.c.b16 %v2072, %v2068
    %v2881 = vpack.c.b16 %v2077, %v2073
    %v2882 = vpack.c.b16 %v2078, %v2074
    %v2883 = vpack.c.b16 %v2079, %v2075
    %v2884 = vpack.c.b16 %v2080, %v2076
    %v2885 = vpack.c.b16 %v2085, %v2081
    %v2886 = vpack.c.b16 %v2086, %v2082
    %v2887 = vpack.c.b16 %v2087, %v2083
    %v2888 = vpack.c.b16 %v2088, %v2084
    %v2889 = vpack.c.b16 %v2093, %v2089
    %v2890 = vpack.c.b16 %v2094, %v2090
    %v2891 = vpack.c.b16 %v2095, %v2091
    %v2892 = vpack.c.b16 %v2096, %v2092
    %v2893 = vpack.c.b16 %v2101, %v2097
    %v2894 = vpack.c.b16 %v2102, %v2098
    %v2895 = vpack.c.b16 %v2103, %v2099
    %v2896 = vpack.c.b16 %v2104, %v2100
    %v2897 = vpack.c.b16 %v2109, %v2105
    %v2898 = vpack.c.b16 %v2110, %v2106
    %v2899 = vpack.c.b16 %v2111, %v2107
    %v2900 = vpack.c.b16 %v2112, %v2108
    %v2901 = vpack.c.b16 %v2117, %v2113
    %v2902 = vpack.c.b16 %v2118, %v2114
    %v2903 = vpack.c.b16 %v2119, %v2115
    %v2904 = vpack.c.b16 %v2120, %v2116
    %v2905 = vpack.c.b16 %v2125, %v2121
    %v2906 = vpack.c.b16 %v2126, %v2122
    %v2907 = vpack.c.b16 %v2127, %v2123
    %v2908 = vpack.c.b16 %v2128, %v2124
    %v2909 = vpack.c.b16 %v2133, %v2129
    %v2910 = vpack.c.b16 %v2134, %v2130
    %v2911 = vpack.c.b16 %v2135, %v2131
    %v2912 = vpack.c.b16 %v2136, %v2132
    %v2913 = vpack.c.b16 %v2141, %v2137
    %v2914 = vpack.c.b16 %v2142, %v2138
    %v2915 = vpack.c.b16 %v2143, %v2139
    %v2916 = vpack.c.b16 %v2144, %v2140
    %v2917 = vpack.c.b16 %v2149, %v2145
    %v2918 = vpack.c.b16 %v2150, %v2146
    %v2919 = vpack.c.b16 %v2151, %v2147
    %v2920 = vpack.c.b16 %v2152, %v2148
    %v2921 = vpack.c.b16 %v2157, %v2153
    %v2922 = vpack.c.b16 %v2158, %v2154
    %v2923 = vpack.c.b16 %v2159, %v2155
    %v2924 = vpack.c.b16 %v2160, %v2156
    %v2925 = vpack.c.b16 %v2165, %v2161
    %v2926 = vpack.c.b16 %v2166, %v2162
    %v2927 = vpack.c.b16 %v2167, %v2163
    %v2928 = vpack.c.b16 %v2168, %v2164
    %v2929 = vpack.c.b16 %v2173, %v2169
    %v2930 = vpack.c.b16 %v2174, %v2170
    %v2931 = vpack.c.b16 %v2175, %v2171
    %v2932 = vpack.c.b16 %v2176, %v2172
    %v2933 = vpack.c.b16 %v2181, %v2177
    %v2934 = vpack.c.b16 %v2182, %v2178
    %v2935 = vpack.c.b16 %v2183, %v2179
    %v2936 = vpack.c.b16 %v2184, %v2180
    %v2937 = vpack.c.b16 %v2189, %v2185
    %v2938 = vpack.c.b16 %v2190, %v2186
    %v2939 = vpack.c.b16 %v2191, %v2187
    %v2940 = vpack.c.b16 %v2192, %v2188
    %v2941 = vpack.c.b16 %v2197, %v2193
    %v2942 = vpack.c.b16 %v2198, %v2194
    %v2943 = vpack.c.b16 %v2199, %v2195
    %v2944 = vpack.c.b16 %v2200, %v2196
    %v2945 = vpack.c.b16 %v2205, %v2201
    %v2946 = vpack.c.b16 %v2206, %v2202
    %v2947 = vpack.c.b16 %v2207, %v2203
    %v2948 = vpack.c.b16 %v2208, %v2204
    %v2949 = vpack.c.b16 %v2213, %v2209
    %v2950 = vpack.c.b16 %v2214, %v2210
    %v2951 = vpack.c.b16 %v2215, %v2211
    %v2952 = vpack.c.b16 %v2216, %v2212
    %v2953 = vpack.c.b16 %v2221, %v2217
    %v2954 = vpack.c.b16 %v2222, %v2218
    %v2955 = vpack.c.b16 %v2223, %v2219
    %v2956 = vpack.c.b16 %v2224, %v2220
    %v2957 = vpack.c.b16 %v2229, %v2225
    %v2958 = vpack.c.b16 %v2230, %v2226
    %v2959 = vpack.c.b16 %v2231, %v2227
    %v2960 = vpack.c.b16 %v2232, %v2228
    %v2961 = vpack.c.b16 %v2237, %v2233
    %v2962 = vpack.c.b16 %v2238, %v2234
    %v2963 = vpack.c.b16 %v2239, %v2235
    %v2964 = vpack.c.b16 %v2240, %v2236
    %v2965 = vpack.c.b16 %v2245, %v2241
    %v2966 = vpack.c.b16 %v2246, %v2242
    %v2967 = vpack.c.b16 %v2247, %v2243
    %v2968 = vpack.c.b16 %v2248, %v2244
    %v2969 = vpack.c.b16 %v2253, %v2249
    %v2970 = vpack.c.b16 %v2254, %v2250
    %v2971 = vpack.c.b16 %v2255, %v2251
    %v2972 = vpack.c.b16 %v2256, %v2252
    %v2973 = vpack.c.b16 %v2261, %v2257
    %v2974 = vpack.c.b16 %v2262, %v2258
    %v2975 = vpack.c.b16 %v2263, %v2259
    %v2976 = vpack.c.b16 %v2264, %v2260
    %v2977 = vpack.c.b16 %v2269, %v2265
    %v2978 = vpack.c.b16 %v2270, %v2266
    %v2979 = vpack.c.b16 %v2271, %v2267
    %v2980 = vpack.c.b16 %v2272, %v2268
    %v2981 = vpack.c.b16 %v2277, %v2273
    %v2982 = vpack.c.b16 %v2278, %v2274
    %v2983 = vpack.c.b16 %v2279, %v2275
    %v2984 = vpack.c.b16 %v2280, %v2276
    %v2985 = vpack.c.b16 %v2285, %v2281
    %v2986 = vpack.c.b16 %v2286, %v2282
    %v2987 = vpack.c.b16 %v2287, %v2283
    %v2988 = vpack.c.b16 %v2288, %v2284
    %v2989 = vpack.c.b16 %v2293, %v2289
    %v2990 = vpack.c.b16 %v2294, %v2290
    %v2991 = vpack.c.b16 %v2295, %v2291
    %v2992 = vpack.c.b16 %v2296, %v2292
    %v2993 = vpack.c.b16 %v2301, %v2297
    %v2994 = vpack.c.b16 %v2302, %v2298
    %v2995 = vpack.c.b16 %v2303, %v2299
    %v2996 = vpack.c.b16 %v2304, %v2300
    %v2997 = vpack.c.b16 %v2309, %v2305
    %v2998 = vpack.c.b16 %v2310, %v2306
    %v2999 = vpack.c.b16 %v2311, %v2307
    %v3000 = vpack.c.b16 %v2312, %v2308
    %v3001 = vpack.c.b16 %v2317, %v2313
    %v3002 = vpack.c.b16 %v2318, %v2314
    %v3003 = vpack.c.b16 %v2319, %v2315
    %v3004 = vpack.c.b16 %v2320, %v2316
    %v3005 = vpack.c.b16 %v2325, %v2321
    %v3006 = vpack.c.b16 %v2326, %v2322
    %v3007 = vpack.c.b16 %v2327, %v2323
    %v3008 = vpack.c.b16 %v2328, %v2324
    %v3009 = vpack.c.b16 %v2333, %v2329
    %v3010 = vpack.c.b16 %v2334, %v2330
    %v3011 = vpack.c.b16 %v2335, %v2331
    %v3012 = vpack.c.b16 %v2336, %v2332
    %v3013 = vpack.c.b16 %v2341, %v2337
    %v3014 = vpack.c.b16 %v2342, %v2338
    %v3015 = vpack.c.b16 %v2343, %v2339
    %v3016 = vpack.c.b16 %v2344, %v2340
    %v3017 = vpack.c.b16 %v2349, %v2345
    %v3018 = vpack.c.b16 %v2350, %v2346
    %v3019 = vpack.c.b16 %v2351, %v2347
    %v3020 = vpack.c.b16 %v2352, %v2348
    %v3021 = vpack.c.b16 %v2357, %v2353
    %v3022 = vpack.c.b16 %v2358, %v2354
    %v3023 = vpack.c.b16 %v2359, %v2355
    %v3024 = vpack.c.b16 %v2360, %v2356
    %v3025 = vpack.c.b16 %v2365, %v2361
    %v3026 = vpack.c.b16 %v2366, %v2362
    %v3027 = vpack.c.b16 %v2367, %v2363
    %v3028 = vpack.c.b16 %v2368, %v2364
    %v3029 = vpack.c.b16 %v2373, %v2369
    %v3030 = vpack.c.b16 %v2374, %v2370
    %v3031 = vpack.c.b16 %v2375, %v2371
    %v3032 = vpack.c.b16 %v2376, %v2372
    %v3033 = vpack.c.b16 %v2381, %v2377
    %v3034 = vpack.c.b16 %v2382, %v2378
    %v3035 = vpack.c.b16 %v2383, %v2379
    %v3036 = vpack.c.b16 %v2384, %v2380
    %v3037 = vpack.c.b16 %v2389, %v2385
    %v3038 = vpack.c.b16 %v2390, %v2386
    %v3039 = vpack.c.b16 %v2391, %v2387
    %v3040 = vpack.c.b16 %v2392, %v2388
    %v3041 = vpack.c.b16 %v2397, %v2393
    %v3042 = vpack.c.b16 %v2398, %v2394
    %v3043 = vpack.c.b16 %v2399, %v2395
    %v3044 = vpack.c.b16 %v2400, %v2396
    %v3045 = vpack.c.b16 %v2405, %v2401
    %v3046 = vpack.c.b16 %v2406, %v2402
    %v3047 = vpack.c.b16 %v2407, %v2403
    %v3048 = vpack.c.b16 %v2408, %v2404
    %v3049 = vpack.c.b16 %v2413, %v2409
    %v3050 = vpack.c.b16 %v2414, %v2410
    %v3051 = vpack.c.b16 %v2415, %v2411
    %v3052 = vpack.c.b16 %v2416, %v2412
    %v3053 = vpack.c.b16 %v2421, %v2417
    %v3054 = vpack.c.b16 %v2422, %v2418
    %v3055 = vpack.c.b16 %v2423, %v2419
    %v3056 = vpack.c.b16 %v2424, %v2420
    %v3057 = vpack.c.b16 %v2429, %v2425
    %v3058 = vpack.c.b16 %v2430, %v2426
    %v3059 = vpack.c.b16 %v2431, %v2427
    %v3060 = vpack.c.b16 %v2432, %v2428
    %v3061 = vpack.c.b16 %v2437, %v2433
    %v3062 = vpack.c.b16 %v2438, %v2434
    %v3063 = vpack.c.b16 %v2439, %v2435
    %v3064 = vpack.c.b16 %v2440, %v2436
    %v3065 = vpack.c.b16 %v2445, %v2441
    %v3066 = vpack.c.b16 %v2446, %v2442
    %v3067 = vpack.c.b16 %v2447, %v2443
    %v3068 = vpack.c.b16 %v2448, %v2444
    %v3069 = vpack.c.b16 %v2453, %v2449
    %v3070 = vpack.c.b16 %v2454, %v2450
    %v3071 = vpack.c.b16 %v2455, %v2451
    %v3072 = vpack.c.b16 %v2456, %v2452
    %v3073 = vpack.c.b16 %v2461, %v2457
    %v3074 = vpack.c.b16 %v2462, %v2458
    %v3075 = vpack.c.b16 %v2463, %v2459
    %v3076 = vpack.c.b16 %v2464, %v2460
    %v3077 = vpack.c.b16 %v2469, %v2465
    %v3078 = vpack.c.b16 %v2470, %v2466
    %v3079 = vpack.c.b16 %v2471, %v2467
    %v3080 = vpack.c.b16 %v2472, %v2468
    %v3081 = vpack.c.b16 %v2477, %v2473
    %v3082 = vpack.c.b16 %v2478, %v2474
    %v3083 = vpack.c.b16 %v2479, %v2475
    %v3084 = vpack.c.b16 %v2480, %v2476
    %v3085 = vpack.c.b16 %v2485, %v2481
    %v3086 = vpack.c.b16 %v2486, %v2482
    %v3087 = vpack.c.b16 %v2487, %v2483
    %v3088 = vpack.c.b16 %v2488, %v2484
    %v3089 = vpack.c.b16 %v2493, %v2489
    %v3090 = vpack.c.b16 %v2494, %v2490
    %v3091 = vpack.c.b16 %v2495, %v2491
    %v3092 = vpack.c.b16 %v2496, %v2492
    %v3093 = vpack.c.b16 %v2501, %v2497
    %v3094 = vpack.c.b16 %v2502, %v2498
    %v3095 = vpack.c.b16 %v2503, %v2499
    %v3096 = vpack.c.b16 %v2504, %v2500
    %v3097 = vpack.c.b16 %v2509, %v2505
    %v3098 = vpack.c.b16 %v2510, %v2506
    %v3099 = vpack.c.b16 %v2511, %v2507
    %v3100 = vpack.c.b16 %v2512, %v2508
    %v3101 = vpack.c.b16 %v2517, %v2513
    %v3102 = vpack.c.b16 %v2518, %v2514
    %v3103 = vpack.c.b16 %v2519, %v2515
    %v3104 = vpack.c.b16 %v2520, %v2516
    %v3105 = vpack.c.b16 %v2525, %v2521
    %v3106 = vpack.c.b16 %v2526, %v2522
    %v3107 = vpack.c.b16 %v2527, %v2523
    %v3108 = vpack.c.b16 %v2528, %v2524
    %v3109 = vpack.c.b16 %v2533, %v2529
    %v3110 = vpack.c.b16 %v2534, %v2530
    %v3111 = vpack.c.b16 %v2535, %v2531
    %v3112 = vpack.c.b16 %v2536, %v2532
    %v3113 = vpack.c.b16 %v2541, %v2537
    %v3114 = vpack.c.b16 %v2542, %v2538
    %v3115 = vpack.c.b16 %v2543, %v2539
    %v3116 = vpack.c.b16 %v2544, %v2540
    %v3117 = vpack.c.b16 %v2549, %v2545
    %v3118 = vpack.c.b16 %v2550, %v2546
    %v3119 = vpack.c.b16 %v2551, %v2547
    %v3120 = vpack.c.b16 %v2552, %v2548
    %v3121 = vpack.c.b16 %v2557, %v2553
    %v3122 = vpack.c.b16 %v2558, %v2554
    %v3123 = vpack.c.b16 %v2559, %v2555
    %v3124 = vpack.c.b16 %v2560, %v2556
    %v3125 = vpack.c.b16 %v2565, %v2561
    %v3126 = vpack.c.b16 %v2566, %v2562
    %v3127 = vpack.c.b16 %v2567, %v2563
    %v3128 = vpack.c.b16 %v2568, %v2564
    %v3129 = vpack.c.b16 %v2573, %v2569
    %v3130 = vpack.c.b16 %v2574, %v2570
    %v3131 = vpack.c.b16 %v2575, %v2571
    %v3132 = vpack.c.b16 %v2576, %v2572
    %v3133 = vpack.c.b16 %v2581, %v2577
    %v3134 = vpack.c.b16 %v2582, %v2578
    %v3135 = vpack.c.b16 %v2583, %v2579
    %v3136 = vpack.c.b16 %v2584, %v2580
    %v3137 = vpack.c.b16 %v2589, %v2585
    %v3138 = vpack.c.b16 %v2590, %v2586
    %v3139 = vpack.c.b16 %v2591, %v2587
    %v3140 = vpack.c.b16 %v2592, %v2588
    %v3141 = vpack.c.b16 %v2597, %v2593
    %v3142 = vpack.c.b16 %v2598, %v2594
    %v3143 = vpack.c.b16 %v2599, %v2595
    %v3144 = vpack.c.b16 %v2600, %v2596
    %v3145 = vpack.c.b16 %v2605, %v2601
    %v3146 = vpack.c.b16 %v2606, %v2602
    %v3147 = vpack.c.b16 %v2607, %v2603
    %v3148 = vpack.c.b16 %v2608, %v2604
    %v3149 = vpack.c.b16 %v2613, %v2609
    %v3150 = vpack.c.b16 %v2614, %v2610
    %v3151 = vpack.c.b16 %v2615, %v2611
    %v3152 = vpack.c.b16 %v2616, %v2612
    %v3153 = vpack.c.b16 %v2621, %v2617
    %v3154 = vpack.c.b16 %v2622, %v2618
    %v3155 = vpack.c.b16 %v2623, %v2619
    %v3156 = vpack.c.b16 %v2624, %v2620
    %v3157 = vpack.c.b16 %v2629, %v2625
    %v3158 = vpack.c.b16 %v2630, %v2626
    %v3159 = vpack.c.b16 %v2631, %v2627
    %v3160 = vpack.c.b16 %v2632, %v2628
    %v3161 = vpack.c.b16 %v2637, %v2633
    %v3162 = vpack.c.b16 %v2638, %v2634
    %v3163 = vpack.c.b16 %v2639, %v2635
    %v3164 = vpack.c.b16 %v2640, %v2636
    %v3165 = vpack.c.b16 %v2645, %v2641
    %v3166 = vpack.c.b16 %v2646, %v2642
    %v3167 = vpack.c.b16 %v2647, %v2643
    %v3168 = vpack.c.b16 %v2648, %v2644
    %v3169 = vpack.c.b16 %v2653, %v2649
    %v3170 = vpack.c.b16 %v2654, %v2650
    %v3171 = vpack.c.b16 %v2655, %v2651
    %v3172 = vpack.c.b16 %v2656, %v2652
    %v3173 = vpack.c.b16 %v2661, %v2657
    %v3174 = vpack.c.b16 %v2662, %v2658
    %v3175 = vpack.c.b16 %v2663, %v2659
    %v3176 = vpack.c.b16 %v2664, %v2660
    %v3177 = vpack.c.b16 %v2669, %v2665
    %v3178 = vpack.c.b16 %v2670, %v2666
    %v3179 = vpack.c.b16 %v2671, %v2667
    %v3180 = vpack.c.b16 %v2672, %v2668
    %v3181 = vpack.c.b16 %v2677, %v2673
    %v3182 = vpack.c.b16 %v2678, %v2674
    %v3183 = vpack.c.b16 %v2679, %v2675
    %v3184 = vpack.c.b16 %v2680, %v2676
    %v3185 = vpack.c.b16 %v2685, %v2681
    %v3186 = vpack.c.b16 %v2686, %v2682
    %v3187 = vpack.c.b16 %v2687, %v2683
    %v3188 = vpack.c.b16 %v2688, %v2684
    %v3189 = vpack.c.b16 %v2693, %v2689
    %v3190 = vpack.c.b16 %v2694, %v2690
    %v3191 = vpack.c.b16 %v2695, %v2691
    %v3192 = vpack.c.b16 %v2696, %v2692
    %v3193 = vpack.c.b16 %v2701, %v2697
    %v3194 = vpack.c.b16 %v2702, %v2698
    %v3195 = vpack.c.b16 %v2703, %v2699
    %v3196 = vpack.c.b16 %v2704, %v2700
    %v3197 = vpack.c.b16 %v2709, %v2705
    %v3198 = vpack.c.b16 %v2710, %v2706
    %v3199 = vpack.c.b16 %v2711, %v2707
    %v3200 = vpack.c.b16 %v2712, %v2708
    %v3201 = vpack.c.b16 %v2717, %v2713
    %v3202 = vpack.c.b16 %v2718, %v2714
    %v3203 = vpack.c.b16 %v2719, %v2715
    %v3204 = vpack.c.b16 %v2720, %v2716
    %v3205 = vpack.c.b16 %v2725, %v2721
    %v3206 = vpack.c.b16 %v2726, %v2722
    %v3207 = vpack.c.b16 %v2727, %v2723
    %v3208 = vpack.c.b16 %v2728, %v2724
    %v3209 = vpack.c.b16 %v2733, %v2729
    %v3210 = vpack.c.b16 %v2734, %v2730
    %v3211 = vpack.c.b16 %v2735, %v2731
    %v3212 = vpack.c.b16 %v2736, %v2732
    %v3213 = vpack.c.b16 %v2741, %v2737
    %v3214 = vpack.c.b16 %v2742, %v2738
    %v3215 = vpack.c.b16 %v2743, %v2739
    %v3216 = vpack.c.b16 %v2744, %v2740
    %v3217 = vpack.c.b16 %v2749, %v2745
    %v3218 = vpack.c.b16 %v2750, %v2746
    %v3219 = vpack.c.b16 %v2751, %v2747
    %v3220 = vpack.c.b16 %v2752, %v2748
    %v3221 = vpack.c.b16 %v2757, %v2753
    %v3222 = vpack.c.b16 %v2758, %v2754
    %v3223 = vpack.c.b16 %v2759, %v2755
    %v3224 = vpack.c.b16 %v2760, %v2756
    %v3225 = vpack.c.b16 %v2765, %v2761
    %v3226 = vpack.c.b16 %v2766, %v2762
    %v3227 = vpack.c.b16 %v2767, %v2763
    %v3228 = vpack.c.b16 %v2768, %v2764
    %v3229 = vpack.c.b16 %v2773, %v2769
    %v3230 = vpack.c.b16 %v2774, %v2770
    %v3231 = vpack.c.b16 %v2775, %v2771
    %v3232 = vpack.c.b16 %v2776, %v2772
    %v3233 = vpack.c.b16 %v2781, %v2777
    %v3234 = vpack.c.b16 %v2782, %v2778
    %v3235 = vpack.c.b16 %v2783, %v2779
    %v3236 = vpack.c.b16 %v2784, %v2780
    %v3237 = vpack.c.b16 %v2789, %v2785
    %v3238 = vpack.c.b16 %v2790, %v2786
    %v3239 = vpack.c.b16 %v2791, %v2787
    %v3240 = vpack.c.b16 %v2792, %v2788
    %v3241 = vpack.c.b16 %v2797, %v2793
    %v3242 = vpack.c.b16 %v2798, %v2794
    %v3243 = vpack.c.b16 %v2799, %v2795
    %v3244 = vpack.c.b16 %v2800, %v2796
    %v3245 = vpack.c.b16 %v2805, %v2801
    %v3246 = vpack.c.b16 %v2806, %v2802
    %v3247 = vpack.c.b16 %v2807, %v2803
    %v3248 = vpack.c.b16 %v2808, %v2804
    %v3249 = vpack.c.b16 %v2813, %v2809
    %v3250 = vpack.c.b16 %v2814, %v2810
    %v3251 = vpack.c.b16 %v2815, %v2811
    %v3252 = vpack.c.b16 %v2816, %v2812
    %v3253 = vpack.c.b16 %v2821, %v2817
    %v3254 = vpack.c.b16 %v2822, %v2818
    %v3255 = vpack.c.b16 %v2823, %v2819
    %v3256 = vpack.c.b16 %v2824, %v2820
    %v3257 = vpack.c.b16 %v2829, %v2825
    %v3258 = vpack.c.b16 %v2830, %v2826
    %v3259 = vpack.c.b16 %v2831, %v2827
    %v3260 = vpack.c.b16 %v2832, %v2828
    %v3261 = vpack.c.b16 %v2837, %v2833
    %v3262 = vpack.c.b16 %v2838, %v2834
    %v3263 = vpack.c.b16 %v2839, %v2835
    %v3264 = vpack.c.b16 %v2840, %v2836
    %v3265 = vpack.c.b16 %v2845, %v2841
    %v3266 = vpack.c.b16 %v2846, %v2842
    %v3267 = vpack.c.b16 %v2847, %v2843
    %v3268 = vpack.c.b16 %v2848, %v2844
    %v3269 = vpack.c.b16 %v2853, %v2849
    %v3270 = vpack.c.b16 %v2854, %v2850
    %v3271 = vpack.c.b16 %v2855, %v2851
    %v3272 = vpack.c.b16 %v2856, %v2852
    %3689 = vmatprep.subr.bf16.mxu0 %v2858
    %3690 = vmatpush1.bf16.msra.mxu0 %v2857
    %3691 = vmatprep.subr.bf16.mxu0 %v2862
    %3692 = vmatpush1.bf16.msra.mxu0 %v2861
    %3693 = vmatprep.subr.bf16.mxu0 %v2866
    %3694 = vmatpush1.bf16.msra.mxu0 %v2865
    %3695 = vmatprep.subr.bf16.mxu0 %v2870
    %3696 = vmatpush1.bf16.msra.mxu0 %v2869
    %3697 = vmatprep.subr.bf16.mxu0 %v2874
    %3698 = vmatpush1.bf16.msra.mxu0 %v2873
    %3699 = vmatprep.subr.bf16.mxu0 %v2878
    %3700 = vmatpush1.bf16.msra.mxu0 %v2877
    %3701 = vmatprep.subr.bf16.mxu0 %v2882
    %3702 = vmatpush1.bf16.msra.mxu0 %v2881
    %3703 = vmatprep.subr.bf16.mxu0 %v2886
    %3704 = vmatpush1.bf16.msra.mxu0 %v2885
    %3705 = vmatprep.subr.bf16.mxu0 %v2890
    %3706 = vmatpush1.bf16.msra.mxu0 %v2889
    %3707 = vmatprep.subr.bf16.mxu0 %v2894
    %3708 = vmatpush1.bf16.msra.mxu0 %v2893
    %3709 = vmatprep.subr.bf16.mxu0 %v2898
    %3710 = vmatpush1.bf16.msra.mxu0 %v2897
    %3711 = vmatprep.subr.bf16.mxu0 %v2902
    %3712 = vmatpush1.bf16.msra.mxu0 %v2901
    %3713 = vmatprep.subr.bf16.mxu0 %v2906
    %3714 = vmatpush1.bf16.msra.mxu0 %v2905
    %3715 = vmatprep.subr.bf16.mxu0 %v2910
    %3716 = vmatpush1.bf16.msra.mxu0 %v2909
    %3717 = vmatprep.subr.bf16.mxu0 %v2914
    %3718 = vmatpush1.bf16.msra.mxu0 %v2913
    %3719 = vmatprep.subr.bf16.mxu0 %v2918
    %3720 = vmatpush1.bf16.msra.mxu0 %v2917
    %3721 = vmatprep.mubr.bf16.mxu0 %v1159
    %3722 = vmatmul.mubr.bf16.gmra.mrb[0].mxu0 %v1158
    %v3723 = vpop.f32.mrb[0].mxu0
    %v3724 = vadd.f32 %v1592, %v3723
    %v3725 = vpop.f32.mrb[0].mxu0
    %v3726 = vadd.f32 %v1596, %v3725
    %v3727 = vpop.f32.mrb[0].mxu0
    %v3728 = vpop.f32.mrb[0].mxu0
    %3729 = vdwg.mxu0
    %3730 = vmatprep.subr.bf16.mxu0 %v2922
    %3731 = vmatpush1.bf16.msra.mxu0 %v2921
    %3732 = vmatprep.subr.bf16.mxu0 %v2926
    %3733 = vmatpush1.bf16.msra.mxu0 %v2925
    %3734 = vmatprep.subr.bf16.mxu0 %v2930
    %3735 = vmatpush1.bf16.msra.mxu0 %v2929
    %3736 = vmatprep.subr.bf16.mxu0 %v2934
    %3737 = vmatpush1.bf16.msra.mxu0 %v2933
    %3738 = vmatprep.subr.bf16.mxu0 %v2938
    %3739 = vmatpush1.bf16.msra.mxu0 %v2937
    %3740 = vmatprep.subr.bf16.mxu0 %v2942
    %3741 = vmatpush1.bf16.msra.mxu0 %v2941
    %3742 = vmatprep.subr.bf16.mxu0 %v2946
    %3743 = vmatpush1.bf16.msra.mxu0 %v2945
    %3744 = vmatprep.subr.bf16.mxu0 %v2950
    %3745 = vmatpush1.bf16.msra.mxu0 %v2949
    %3746 = vmatprep.subr.bf16.mxu0 %v2954
    %3747 = vmatpush1.bf16.msra.mxu0 %v2953
    %3748 = vmatprep.subr.bf16.mxu0 %v2958
    %3749 = vmatpush1.bf16.msra.mxu0 %v2957
    %3750 = vmatprep.subr.bf16.mxu0 %v2962
    %3751 = vmatpush1.bf16.msra.mxu0 %v2961
    %3752 = vmatprep.subr.bf16.mxu0 %v2966
    %3753 = vmatpush1.bf16.msra.mxu0 %v2965
    %3754 = vmatprep.subr.bf16.mxu0 %v2970
    %3755 = vmatpush1.bf16.msra.mxu0 %v2969
    %3756 = vmatprep.subr.bf16.mxu0 %v2974
    %3757 = vmatpush1.bf16.msra.mxu0 %v2973
    %3758 = vmatprep.subr.bf16.mxu0 %v2978
    %3759 = vmatpush1.bf16.msra.mxu0 %v2977
    %3760 = vmatprep.subr.bf16.mxu0 %v2982
    %3761 = vmatpush1.bf16.msra.mxu0 %v2981
    %3762 = vmatprep.mubr.bf16.mxu0 %v1161
    %3763 = vmatmul.mubr.bf16.gmra.mrb[0].mxu0 %v1160
    %v3764 = vpop.f32.mrb[0].mxu0
    %v3765 = vadd.f32 %v3724, %v3764
    %v3766 = vpop.f32.mrb[0].mxu0
    %v3767 = vadd.f32 %v3726, %v3766
    %v3768 = vpop.f32.mrb[0].mxu0
    %v3769 = vpop.f32.mrb[0].mxu0
    %3770 = vdwg.mxu0
    %3771 = vmatprep.subr.bf16.mxu0 %v2986
    %3772 = vmatpush1.bf16.msra.mxu0 %v2985
    %3773 = vmatprep.subr.bf16.mxu0 %v2990
    %3774 = vmatpush1.bf16.msra.mxu0 %v2989
    %3775 = vmatprep.subr.bf16.mxu0 %v2994
    %3776 = vmatpush1.bf16.msra.mxu0 %v2993
    %3777 = vmatprep.subr.bf16.mxu0 %v2998
    %3778 = vmatpush1.bf16.msra.mxu0 %v2997
    %3779 = vmatprep.subr.bf16.mxu0 %v3002
    %3780 = vmatpush1.bf16.msra.mxu0 %v3001
    %3781 = vmatprep.subr.bf16.mxu0 %v3006
    %3782 = vmatpush1.bf16.msra.mxu0 %v3005
    %3783 = vmatprep.subr.bf16.mxu0 %v3010
    %3784 = vmatpush1.bf16.msra.mxu0 %v3009
    %3785 = vmatprep.subr.bf16.mxu0 %v3014
    %3786 = vmatpush1.bf16.msra.mxu0 %v3013
    %3787 = vmatprep.subr.bf16.mxu0 %v3018
    %3788 = vmatpush1.bf16.msra.mxu0 %v3017
    %3789 = vmatprep.subr.bf16.mxu0 %v3022
    %3790 = vmatpush1.bf16.msra.mxu0 %v3021
    %3791 = vmatprep.subr.bf16.mxu0 %v3026
    %3792 = vmatpush1.bf16.msra.mxu0 %v3025
    %3793 = vmatprep.subr.bf16.mxu0 %v3030
    %3794 = vmatpush1.bf16.msra.mxu0 %v3029
    %3795 = vmatprep.subr.bf16.mxu0 %v3034
    %3796 = vmatpush1.bf16.msra.mxu0 %v3033
    %3797 = vmatprep.subr.bf16.mxu0 %v3038
    %3798 = vmatpush1.bf16.msra.mxu0 %v3037
    %3799 = vmatprep.subr.bf16.mxu0 %v3042
    %3800 = vmatpush1.bf16.msra.mxu0 %v3041
    %3801 = vmatprep.subr.bf16.mxu0 %v3046
    %3802 = vmatpush1.bf16.msra.mxu0 %v3045
    %3803 = vmatprep.mubr.bf16.mxu0 %v1163
    %3804 = vmatmul.mubr.bf16.gmra.mrb[0].mxu0 %v1162
    %v3805 = vpop.f32.mrb[0].mxu0
    %v3806 = vadd.f32 %v3765, %v3805
    %v3807 = vpop.f32.mrb[0].mxu0
    %v3808 = vadd.f32 %v3767, %v3807
    %v3809 = vpop.f32.mrb[0].mxu0
    %v3810 = vpop.f32.mrb[0].mxu0
    %3811 = vdwg.mxu0
    %3812 = vmatprep.subr.bf16.mxu0 %v3050
    %3813 = vmatpush1.bf16.msra.mxu0 %v3049
    %3814 = vmatprep.subr.bf16.mxu0 %v3054
    %3815 = vmatpush1.bf16.msra.mxu0 %v3053
    %3816 = vmatprep.subr.bf16.mxu0 %v3058
    %3817 = vmatpush1.bf16.msra.mxu0 %v3057
    %3818 = vmatprep.subr.bf16.mxu0 %v3062
    %3819 = vmatpush1.bf16.msra.mxu0 %v3061
    %3820 = vmatprep.subr.bf16.mxu0 %v3066
    %3821 = vmatpush1.bf16.msra.mxu0 %v3065
    %3822 = vmatprep.subr.bf16.mxu0 %v3070
    %3823 = vmatpush1.bf16.msra.mxu0 %v3069
    %3824 = vmatprep.subr.bf16.mxu0 %v3074
    %3825 = vmatpush1.bf16.msra.mxu0 %v3073
    %3826 = vmatprep.subr.bf16.mxu0 %v3078
    %3827 = vmatpush1.bf16.msra.mxu0 %v3077
    %3828 = vmatprep.subr.bf16.mxu0 %v3082
    %3829 = vmatpush1.bf16.msra.mxu0 %v3081
    %3830 = vmatprep.subr.bf16.mxu0 %v3086
    %3831 = vmatpush1.bf16.msra.mxu0 %v3085
    %3832 = vmatprep.subr.bf16.mxu0 %v3090
    %3833 = vmatpush1.bf16.msra.mxu0 %v3089
    %3834 = vmatprep.subr.bf16.mxu0 %v3094
    %3835 = vmatpush1.bf16.msra.mxu0 %v3093
    %3836 = vmatprep.subr.bf16.mxu0 %v3098
    %3837 = vmatpush1.bf16.msra.mxu0 %v3097
    %3838 = vmatprep.subr.bf16.mxu0 %v3102
    %3839 = vmatpush1.bf16.msra.mxu0 %v3101
    %3840 = vmatprep.subr.bf16.mxu0 %v3106
    %3841 = vmatpush1.bf16.msra.mxu0 %v3105
    %3842 = vmatprep.subr.bf16.mxu0 %v3110
    %3843 = vmatpush1.bf16.msra.mxu0 %v3109
    %3844 = vmatprep.mubr.bf16.mxu0 %v1165
    %3845 = vmatmul.mubr.bf16.gmra.mrb[0].mxu0 %v1164
    %v3846 = vpop.f32.mrb[0].mxu0
    %v3847 = vadd.f32 %v3806, %v3846
    %v3848 = vpop.f32.mrb[0].mxu0
    %v3849 = vadd.f32 %v3808, %v3848
    %v3850 = vpop.f32.mrb[0].mxu0
    %v3851 = vpop.f32.mrb[0].mxu0
    %3852 = vdwg.mxu0
    %3853 = vmatprep.subr.bf16.mxu0 %v3114
    %3854 = vmatpush1.bf16.msra.mxu0 %v3113
    %3855 = vmatprep.subr.bf16.mxu0 %v3118
    %3856 = vmatpush1.bf16.msra.mxu0 %v3117
    %3857 = vmatprep.subr.bf16.mxu0 %v3122
    %3858 = vmatpush1.bf16.msra.mxu0 %v3121
    %3859 = vmatprep.subr.bf16.mxu0 %v3126
    %3860 = vmatpush1.bf16.msra.mxu0 %v3125
    %3861 = vmatprep.subr.bf16.mxu0 %v3130
    %3862 = vmatpush1.bf16.msra.mxu0 %v3129
    %3863 = vmatprep.subr.bf16.mxu0 %v3134
    %3864 = vmatpush1.bf16.msra.mxu0 %v3133
    %3865 = vmatprep.subr.bf16.mxu0 %v3138
    %3866 = vmatpush1.bf16.msra.mxu0 %v3137
    %3867 = vmatprep.subr.bf16.mxu0 %v3142
    %3868 = vmatpush1.bf16.msra.mxu0 %v3141
    %3869 = vmatprep.subr.bf16.mxu0 %v3146
    %3870 = vmatpush1.bf16.msra.mxu0 %v3145
    %3871 = vmatprep.subr.bf16.mxu0 %v3150
    %3872 = vmatpush1.bf16.msra.mxu0 %v3149
    %3873 = vmatprep.subr.bf16.mxu0 %v3154
    %3874 = vmatpush1.bf16.msra.mxu0 %v3153
    %3875 = vmatprep.subr.bf16.mxu0 %v3158
    %3876 = vmatpush1.bf16.msra.mxu0 %v3157
    %3877 = vmatprep.subr.bf16.mxu0 %v3162
    %3878 = vmatpush1.bf16.msra.mxu0 %v3161
    %3879 = vmatprep.subr.bf16.mxu0 %v3166
    %3880 = vmatpush1.bf16.msra.mxu0 %v3165
    %3881 = vmatprep.subr.bf16.mxu0 %v3170
    %3882 = vmatpush1.bf16.msra.mxu0 %v3169
    %3883 = vmatprep.subr.bf16.mxu0 %v3174
    %3884 = vmatpush1.bf16.msra.mxu0 %v3173
    %3885 = vmatprep.mubr.bf16.mxu0 %v1167
    %3886 = vmatmul.mubr.bf16.gmra.mrb[0].mxu0 %v1166
    %v3887 = vpop.f32.mrb[0].mxu0
    %v3888 = vadd.f32 %v3847, %v3887
    %v3889 = vpop.f32.mrb[0].mxu0
    %v3890 = vadd.f32 %v3849, %v3889
    %v3891 = vpop.f32.mrb[0].mxu0
    %v3892 = vpop.f32.mrb[0].mxu0
    %3893 = vdwg.mxu0
    %3894 = vmatprep.subr.bf16.mxu0 %v3178
    %3895 = vmatpush1.bf16.msra.mxu0 %v3177
    %3896 = vmatprep.subr.bf16.mxu0 %v3182
    %3897 = vmatpush1.bf16.msra.mxu0 %v3181
    %3898 = vmatprep.subr.bf16.mxu0 %v3186
    %3899 = vmatpush1.bf16.msra.mxu0 %v3185
    %3900 = vmatprep.subr.bf16.mxu0 %v3190
    %3901 = vmatpush1.bf16.msra.mxu0 %v3189
    %3902 = vmatprep.subr.bf16.mxu0 %v3194
    %3903 = vmatpush1.bf16.msra.mxu0 %v3193
    %3904 = vmatprep.subr.bf16.mxu0 %v3198
    %3905 = vmatpush1.bf16.msra.mxu0 %v3197
    %3906 = vmatprep.subr.bf16.mxu0 %v3202
    %3907 = vmatpush1.bf16.msra.mxu0 %v3201
    %3908 = vmatprep.subr.bf16.mxu0 %v3206
    %3909 = vmatpush1.bf16.msra.mxu0 %v3205
    %3910 = vmatprep.subr.bf16.mxu0 %v3210
    %3911 = vmatpush1.bf16.msra.mxu0 %v3209
    %3912 = vmatprep.subr.bf16.mxu0 %v3214
    %3913 = vmatpush1.bf16.msra.mxu0 %v3213
    %3914 = vmatprep.subr.bf16.mxu0 %v3218
    %3915 = vmatpush1.bf16.msra.mxu0 %v3217
    %3916 = vmatprep.subr.bf16.mxu0 %v3222
    %3917 = vmatpush1.bf16.msra.mxu0 %v3221
    %3918 = vmatprep.subr.bf16.mxu0 %v3226
    %3919 = vmatpush1.bf16.msra.mxu0 %v3225
    %3920 = vmatprep.subr.bf16.mxu0 %v3230
    %3921 = vmatpush1.bf16.msra.mxu0 %v3229
    %3922 = vmatprep.subr.bf16.mxu0 %v3234
    %3923 = vmatpush1.bf16.msra.mxu0 %v3233
    %3924 = vmatprep.subr.bf16.mxu0 %v3238
    %3925 = vmatpush1.bf16.msra.mxu0 %v3237
    %3926 = vmatprep.mubr.bf16.mxu0 %v1169
    %3927 = vmatmul.mubr.bf16.gmra.mrb[0].mxu0 %v1168
    %v3928 = vpop.f32.mrb[0].mxu0
    %v3929 = vadd.f32 %v3888, %v3928
    %v3930 = vpop.f32.mrb[0].mxu0
    %v3931 = vadd.f32 %v3890, %v3930
    %v3932 = vpop.f32.mrb[0].mxu0
    %v3933 = vpop.f32.mrb[0].mxu0
    %3934 = vdwg.mxu0
    %3935 = vmatprep.subr.bf16.mxu0 %v3242
    %3936 = vmatpush1.bf16.msra.mxu0 %v3241
    %3937 = vmatprep.subr.bf16.mxu0 %v3246
    %3938 = vmatpush1.bf16.msra.mxu0 %v3245
    %3939 = vmatprep.subr.bf16.mxu0 %v3250
    %3940 = vmatpush1.bf16.msra.mxu0 %v3249
    %3941 = vmatprep.subr.bf16.mxu0 %v3254
    %3942 = vmatpush1.bf16.msra.mxu0 %v3253
    %3943 = vmatprep.subr.bf16.mxu0 %v3258
    %3944 = vmatpush1.bf16.msra.mxu0 %v3257
    %3945 = vmatprep.subr.bf16.mxu0 %v3262
    %3946 = vmatpush1.bf16.msra.mxu0 %v3261
    %3947 = vmatprep.subr.bf16.mxu0 %v3266
    %3948 = vmatpush1.bf16.msra.mxu0 %v3265
    %3949 = vmatprep.subr.bf16.mxu0 %v3270
    %3950 = vmatpush1.bf16.msra.mxu0 %v3269
    %3951 = vmatprep.subr.bf16.mxu0 0
    %3952 = vmatpush1.bf16.msra.mxu0 0
    %3953 = vmatprep.subr.bf16.mxu0 0
    %3954 = vmatpush1.bf16.msra.mxu0 0
    %3955 = vmatprep.subr.bf16.mxu0 0
    %3956 = vmatpush1.bf16.msra.mxu0 0
    %3957 = vmatprep.subr.bf16.mxu0 0
    %3958 = vmatpush1.bf16.msra.mxu0 0
    %3959 = vmatprep.subr.bf16.mxu0 0
    %3960 = vmatpush1.bf16.msra.mxu0 0
    %3961 = vmatprep.subr.bf16.mxu0 0
    %3962 = vmatpush1.bf16.msra.mxu0 0
    %3963 = vmatprep.subr.bf16.mxu0 0
    %3964 = vmatpush1.bf16.msra.mxu0 0
    %3965 = vmatprep.subr.bf16.mxu0 0
    %3966 = vmatpush1.bf16.msra.mxu0 0
    %3967 = vmatprep.mubr.bf16.mxu0 0
    %3968 = vmatmul.mubr.bf16.gmra.mrb[0].mxu0 %v1170
    %v3969 = vpop.f32.mrb[0].mxu0
    %v3970 = vadd.f32 %v3929, %v3969
    %v3971 = vpop.f32.mrb[0].mxu0
    %v3972 = vadd.f32 %v3931, %v3971
    %v3973 = vpop.f32.mrb[0].mxu0
    %v3974 = vpop.f32.mrb[0].mxu0
    %3975 = vdwg.mxu0
    %3976 = vmatprep.subr.bf16.mxu0 %v2860
    %3977 = vmatpush1.bf16.msra.mxu0 %v2859
    %3978 = vmatprep.subr.bf16.mxu0 %v2864
    %3979 = vmatpush1.bf16.msra.mxu0 %v2863
    %3980 = vmatprep.subr.bf16.mxu0 %v2868
    %3981 = vmatpush1.bf16.msra.mxu0 %v2867
    %3982 = vmatprep.subr.bf16.mxu0 %v2872
    %3983 = vmatpush1.bf16.msra.mxu0 %v2871
    %3984 = vmatprep.subr.bf16.mxu0 %v2876
    %3985 = vmatpush1.bf16.msra.mxu0 %v2875
    %3986 = vmatprep.subr.bf16.mxu0 %v2880
    %3987 = vmatpush1.bf16.msra.mxu0 %v2879
    %3988 = vmatprep.subr.bf16.mxu0 %v2884
    %3989 = vmatpush1.bf16.msra.mxu0 %v2883
    %3990 = vmatprep.subr.bf16.mxu0 %v2888
    %3991 = vmatpush1.bf16.msra.mxu0 %v2887
    %3992 = vmatprep.subr.bf16.mxu0 %v2892
    %3993 = vmatpush1.bf16.msra.mxu0 %v2891
    %3994 = vmatprep.subr.bf16.mxu0 %v2896
    %3995 = vmatpush1.bf16.msra.mxu0 %v2895
    %3996 = vmatprep.subr.bf16.mxu0 %v2900
    %3997 = vmatpush1.bf16.msra.mxu0 %v2899
    %3998 = vmatprep.subr.bf16.mxu0 %v2904
    %3999 = vmatpush1.bf16.msra.mxu0 %v2903
    %4000 = vmatprep.subr.bf16.mxu0 %v2908
    %4001 = vmatpush1.bf16.msra.mxu0 %v2907
    %4002 = vmatprep.subr.bf16.mxu0 %v2912
    %4003 = vmatpush1.bf16.msra.mxu0 %v2911
    %4004 = vmatprep.subr.bf16.mxu0 %v2916
    %4005 = vmatpush1.bf16.msra.mxu0 %v2915
    %4006 = vmatprep.subr.bf16.mxu0 %v2920
    %4007 = vmatpush1.bf16.msra.mxu0 %v2919
    %4008 = vmatprep.mubr.bf16.mxu0 %v1159
    %4009 = vmatmul.mubr.bf16.gmra.mrb[0].mxu0 %v1158
    %v4010 = vpop.f32.mrb[0].mxu0
    %v4011 = vadd.f32 %v1600, %v4010
    %v4012 = vpop.f32.mrb[0].mxu0
    %v4013 = vadd.f32 %v1604, %v4012
    %v4014 = vpop.f32.mrb[0].mxu0
    %v4015 = vpop.f32.mrb[0].mxu0
    %4016 = vdwg.mxu0
    %4017 = vmatprep.subr.bf16.mxu0 %v2924
    %4018 = vmatpush1.bf16.msra.mxu0 %v2923
    %4019 = vmatprep.subr.bf16.mxu0 %v2928
    %4020 = vmatpush1.bf16.msra.mxu0 %v2927
    %4021 = vmatprep.subr.bf16.mxu0 %v2932
    %4022 = vmatpush1.bf16.msra.mxu0 %v2931
    %4023 = vmatprep.subr.bf16.mxu0 %v2936
    %4024 = vmatpush1.bf16.msra.mxu0 %v2935
    %4025 = vmatprep.subr.bf16.mxu0 %v2940
    %4026 = vmatpush1.bf16.msra.mxu0 %v2939
    %4027 = vmatprep.subr.bf16.mxu0 %v2944
    %4028 = vmatpush1.bf16.msra.mxu0 %v2943
    %4029 = vmatprep.subr.bf16.mxu0 %v2948
    %4030 = vmatpush1.bf16.msra.mxu0 %v2947
    %4031 = vmatprep.subr.bf16.mxu0 %v2952
    %4032 = vmatpush1.bf16.msra.mxu0 %v2951
    %4033 = vmatprep.subr.bf16.mxu0 %v2956
    %4034 = vmatpush1.bf16.msra.mxu0 %v2955
    %4035 = vmatprep.subr.bf16.mxu0 %v2960
    %4036 = vmatpush1.bf16.msra.mxu0 %v2959
    %4037 = vmatprep.subr.bf16.mxu0 %v2964
    %4038 = vmatpush1.bf16.msra.mxu0 %v2963
    %4039 = vmatprep.subr.bf16.mxu0 %v2968
    %4040 = vmatpush1.bf16.msra.mxu0 %v2967
    %4041 = vmatprep.subr.bf16.mxu0 %v2972
    %4042 = vmatpush1.bf16.msra.mxu0 %v2971
    %4043 = vmatprep.subr.bf16.mxu0 %v2976
    %4044 = vmatpush1.bf16.msra.mxu0 %v2975
    %4045 = vmatprep.subr.bf16.mxu0 %v2980
    %4046 = vmatpush1.bf16.msra.mxu0 %v2979
    %4047 = vmatprep.subr.bf16.mxu0 %v2984
    %4048 = vmatpush1.bf16.msra.mxu0 %v2983
    %4049 = vmatprep.mubr.bf16.mxu0 %v1161
    %4050 = vmatmul.mubr.bf16.gmra.mrb[0].mxu0 %v1160
    %v4051 = vpop.f32.mrb[0].mxu0
    %v4052 = vadd.f32 %v4011, %v4051
    %v4053 = vpop.f32.mrb[0].mxu0
    %v4054 = vadd.f32 %v4013, %v4053
    %v4055 = vpop.f32.mrb[0].mxu0
    %v4056 = vpop.f32.mrb[0].mxu0
    %4057 = vdwg.mxu0
    %4058 = vmatprep.subr.bf16.mxu0 %v2988
    %4059 = vmatpush1.bf16.msra.mxu0 %v2987
    %4060 = vmatprep.subr.bf16.mxu0 %v2992
    %4061 = vmatpush1.bf16.msra.mxu0 %v2991
    %4062 = vmatprep.subr.bf16.mxu0 %v2996
    %4063 = vmatpush1.bf16.msra.mxu0 %v2995
    %4064 = vmatprep.subr.bf16.mxu0 %v3000
    %4065 = vmatpush1.bf16.msra.mxu0 %v2999
    %4066 = vmatprep.subr.bf16.mxu0 %v3004
    %4067 = vmatpush1.bf16.msra.mxu0 %v3003
    %4068 = vmatprep.subr.bf16.mxu0 %v3008
    %4069 = vmatpush1.bf16.msra.mxu0 %v3007
    %4070 = vmatprep.subr.bf16.mxu0 %v3012
    %4071 = vmatpush1.bf16.msra.mxu0 %v3011
    %4072 = vmatprep.subr.bf16.mxu0 %v3016
    %4073 = vmatpush1.bf16.msra.mxu0 %v3015
    %4074 = vmatprep.subr.bf16.mxu0 %v3020
    %4075 = vmatpush1.bf16.msra.mxu0 %v3019
    %4076 = vmatprep.subr.bf16.mxu0 %v3024
    %4077 = vmatpush1.bf16.msra.mxu0 %v3023
    %4078 = vmatprep.subr.bf16.mxu0 %v3028
    %4079 = vmatpush1.bf16.msra.mxu0 %v3027
    %4080 = vmatprep.subr.bf16.mxu0 %v3032
    %4081 = vmatpush1.bf16.msra.mxu0 %v3031
    %4082 = vmatprep.subr.bf16.mxu0 %v3036
    %4083 = vmatpush1.bf16.msra.mxu0 %v3035
    %4084 = vmatprep.subr.bf16.mxu0 %v3040
    %4085 = vmatpush1.bf16.msra.mxu0 %v3039
    %4086 = vmatprep.subr.bf16.mxu0 %v3044
    %4087 = vmatpush1.bf16.msra.mxu0 %v3043
    %4088 = vmatprep.subr.bf16.mxu0 %v3048
    %4089 = vmatpush1.bf16.msra.mxu0 %v3047
    %4090 = vmatprep.mubr.bf16.mxu0 %v1163
    %4091 = vmatmul.mubr.bf16.gmra.mrb[0].mxu0 %v1162
    %v4092 = vpop.f32.mrb[0].mxu0
    %v4093 = vadd.f32 %v4052, %v4092
    %v4094 = vpop.f32.mrb[0].mxu0
    %v4095 = vadd.f32 %v4054, %v4094
    %v4096 = vpop.f32.mrb[0].mxu0
    %v4097 = vpop.f32.mrb[0].mxu0
    %4098 = vdwg.mxu0
    %4099 = vmatprep.subr.bf16.mxu0 %v3052
    %4100 = vmatpush1.bf16.msra.mxu0 %v3051
    %4101 = vmatprep.subr.bf16.mxu0 %v3056
    %4102 = vmatpush1.bf16.msra.mxu0 %v3055
    %4103 = vmatprep.subr.bf16.mxu0 %v3060
    %4104 = vmatpush1.bf16.msra.mxu0 %v3059
    %4105 = vmatprep.subr.bf16.mxu0 %v3064
    %4106 = vmatpush1.bf16.msra.mxu0 %v3063
    %4107 = vmatprep.subr.bf16.mxu0 %v3068
    %4108 = vmatpush1.bf16.msra.mxu0 %v3067
    %4109 = vmatprep.subr.bf16.mxu0 %v3072
    %4110 = vmatpush1.bf16.msra.mxu0 %v3071
    %4111 = vmatprep.subr.bf16.mxu0 %v3076
    %4112 = vmatpush1.bf16.msra.mxu0 %v3075
    %4113 = vmatprep.subr.bf16.mxu0 %v3080
    %4114 = vmatpush1.bf16.msra.mxu0 %v3079
    %4115 = vmatprep.subr.bf16.mxu0 %v3084
    %4116 = vmatpush1.bf16.msra.mxu0 %v3083
    %4117 = vmatprep.subr.bf16.mxu0 %v3088
    %4118 = vmatpush1.bf16.msra.mxu0 %v3087
    %4119 = vmatprep.subr.bf16.mxu0 %v3092
    %4120 = vmatpush1.bf16.msra.mxu0 %v3091
    %4121 = vmatprep.subr.bf16.mxu0 %v3096
    %4122 = vmatpush1.bf16.msra.mxu0 %v3095
    %4123 = vmatprep.subr.bf16.mxu0 %v3100
    %4124 = vmatpush1.bf16.msra.mxu0 %v3099
    %4125 = vmatprep.subr.bf16.mxu0 %v3104
    %4126 = vmatpush1.bf16.msra.mxu0 %v3103
    %4127 = vmatprep.subr.bf16.mxu0 %v3108
    %4128 = vmatpush1.bf16.msra.mxu0 %v3107
    %4129 = vmatprep.subr.bf16.mxu0 %v3112
    %4130 = vmatpush1.bf16.msra.mxu0 %v3111
    %4131 = vmatprep.mubr.bf16.mxu0 %v1165
    %4132 = vmatmul.mubr.bf16.gmra.mrb[0].mxu0 %v1164
    %v4133 = vpop.f32.mrb[0].mxu0
    %v4134 = vadd.f32 %v4093, %v4133
    %v4135 = vpop.f32.mrb[0].mxu0
    %v4136 = vadd.f32 %v4095, %v4135
    %v4137 = vpop.f32.mrb[0].mxu0
    %v4138 = vpop.f32.mrb[0].mxu0
    %4139 = vdwg.mxu0
    %4140 = vmatprep.subr.bf16.mxu0 %v3116
    %4141 = vmatpush1.bf16.msra.mxu0 %v3115
    %4142 = vmatprep.subr.bf16.mxu0 %v3120
    %4143 = vmatpush1.bf16.msra.mxu0 %v3119
    %4144 = vmatprep.subr.bf16.mxu0 %v3124
    %4145 = vmatpush1.bf16.msra.mxu0 %v3123
    %4146 = vmatprep.subr.bf16.mxu0 %v3128
    %4147 = vmatpush1.bf16.msra.mxu0 %v3127
    %4148 = vmatprep.subr.bf16.mxu0 %v3132
    %4149 = vmatpush1.bf16.msra.mxu0 %v3131
    %4150 = vmatprep.subr.bf16.mxu0 %v3136
    %4151 = vmatpush1.bf16.msra.mxu0 %v3135
    %4152 = vmatprep.subr.bf16.mxu0 %v3140
    %4153 = vmatpush1.bf16.msra.mxu0 %v3139
    %4154 = vmatprep.subr.bf16.mxu0 %v3144
    %4155 = vmatpush1.bf16.msra.mxu0 %v3143
    %4156 = vmatprep.subr.bf16.mxu0 %v3148
    %4157 = vmatpush1.bf16.msra.mxu0 %v3147
    %4158 = vmatprep.subr.bf16.mxu0 %v3152
    %4159 = vmatpush1.bf16.msra.mxu0 %v3151
    %4160 = vmatprep.subr.bf16.mxu0 %v3156
    %4161 = vmatpush1.bf16.msra.mxu0 %v3155
    %4162 = vmatprep.subr.bf16.mxu0 %v3160
    %4163 = vmatpush1.bf16.msra.mxu0 %v3159
    %4164 = vmatprep.subr.bf16.mxu0 %v3164
    %4165 = vmatpush1.bf16.msra.mxu0 %v3163
    %4166 = vmatprep.subr.bf16.mxu0 %v3168
    %4167 = vmatpush1.bf16.msra.mxu0 %v3167
    %4168 = vmatprep.subr.bf16.mxu0 %v3172
    %4169 = vmatpush1.bf16.msra.mxu0 %v3171
    %4170 = vmatprep.subr.bf16.mxu0 %v3176
    %4171 = vmatpush1.bf16.msra.mxu0 %v3175
    %4172 = vmatprep.mubr.bf16.mxu0 %v1167
    %4173 = vmatmul.mubr.bf16.gmra.mrb[0].mxu0 %v1166
    %v4174 = vpop.f32.mrb[0].mxu0
    %v4175 = vadd.f32 %v4134, %v4174
    %v4176 = vpop.f32.mrb[0].mxu0
    %v4177 = vadd.f32 %v4136, %v4176
    %v4178 = vpop.f32.mrb[0].mxu0
    %v4179 = vpop.f32.mrb[0].mxu0
    %4180 = vdwg.mxu0
    %4181 = vmatprep.subr.bf16.mxu0 %v3180
    %4182 = vmatpush1.bf16.msra.mxu0 %v3179
    %4183 = vmatprep.subr.bf16.mxu0 %v3184
    %4184 = vmatpush1.bf16.msra.mxu0 %v3183
    %4185 = vmatprep.subr.bf16.mxu0 %v3188
    %4186 = vmatpush1.bf16.msra.mxu0 %v3187
    %4187 = vmatprep.subr.bf16.mxu0 %v3192
    %4188 = vmatpush1.bf16.msra.mxu0 %v3191
    %4189 = vmatprep.subr.bf16.mxu0 %v3196
    %4190 = vmatpush1.bf16.msra.mxu0 %v3195
    %4191 = vmatprep.subr.bf16.mxu0 %v3200
    %4192 = vmatpush1.bf16.msra.mxu0 %v3199
    %4193 = vmatprep.subr.bf16.mxu0 %v3204
    %4194 = vmatpush1.bf16.msra.mxu0 %v3203
    %4195 = vmatprep.subr.bf16.mxu0 %v3208
    %4196 = vmatpush1.bf16.msra.mxu0 %v3207
    %4197 = vmatprep.subr.bf16.mxu0 %v3212
    %4198 = vmatpush1.bf16.msra.mxu0 %v3211
    %4199 = vmatprep.subr.bf16.mxu0 %v3216
    %4200 = vmatpush1.bf16.msra.mxu0 %v3215
    %4201 = vmatprep.subr.bf16.mxu0 %v3220
    %4202 = vmatpush1.bf16.msra.mxu0 %v3219
    %4203 = vmatprep.subr.bf16.mxu0 %v3224
    %4204 = vmatpush1.bf16.msra.mxu0 %v3223
    %4205 = vmatprep.subr.bf16.mxu0 %v3228
    %4206 = vmatpush1.bf16.msra.mxu0 %v3227
    %4207 = vmatprep.subr.bf16.mxu0 %v3232
    %4208 = vmatpush1.bf16.msra.mxu0 %v3231
    %4209 = vmatprep.subr.bf16.mxu0 %v3236
    %4210 = vmatpush1.bf16.msra.mxu0 %v3235
    %4211 = vmatprep.subr.bf16.mxu0 %v3240
    %4212 = vmatpush1.bf16.msra.mxu0 %v3239
    %4213 = vmatprep.mubr.bf16.mxu0 %v1169
    %4214 = vmatmul.mubr.bf16.gmra.mrb[0].mxu0 %v1168
    %v4215 = vpop.f32.mrb[0].mxu0
    %v4216 = vadd.f32 %v4175, %v4215
    %v4217 = vpop.f32.mrb[0].mxu0
    %v4218 = vadd.f32 %v4177, %v4217
    %v4219 = vpop.f32.mrb[0].mxu0
    %v4220 = vpop.f32.mrb[0].mxu0
    %4221 = vdwg.mxu0
    %4222 = vmatprep.subr.bf16.mxu0 %v3244
    %4223 = vmatpush1.bf16.msra.mxu0 %v3243
    %4224 = vmatprep.subr.bf16.mxu0 %v3248
    %4225 = vmatpush1.bf16.msra.mxu0 %v3247
    %4226 = vmatprep.subr.bf16.mxu0 %v3252
    %4227 = vmatpush1.bf16.msra.mxu0 %v3251
    %4228 = vmatprep.subr.bf16.mxu0 %v3256
    %4229 = vmatpush1.bf16.msra.mxu0 %v3255
    %4230 = vmatprep.subr.bf16.mxu0 %v3260
    %4231 = vmatpush1.bf16.msra.mxu0 %v3259
    %4232 = vmatprep.subr.bf16.mxu0 %v3264
    %4233 = vmatpush1.bf16.msra.mxu0 %v3263
    %4234 = vmatprep.subr.bf16.mxu0 %v3268
    %4235 = vmatpush1.bf16.msra.mxu0 %v3267
    %4236 = vmatprep.subr.bf16.mxu0 %v3272
    %4237 = vmatpush1.bf16.msra.mxu0 %v3271
    %4238 = vmatprep.subr.bf16.mxu0 0
    %4239 = vmatpush1.bf16.msra.mxu0 0
    %4240 = vmatprep.subr.bf16.mxu0 0
    %4241 = vmatpush1.bf16.msra.mxu0 0
    %4242 = vmatprep.subr.bf16.mxu0 0
    %4243 = vmatpush1.bf16.msra.mxu0 0
    %4244 = vmatprep.subr.bf16.mxu0 0
    %4245 = vmatpush1.bf16.msra.mxu0 0
    %4246 = vmatprep.subr.bf16.mxu0 0
    %4247 = vmatpush1.bf16.msra.mxu0 0
    %4248 = vmatprep.subr.bf16.mxu0 0
    %4249 = vmatpush1.bf16.msra.mxu0 0
    %4250 = vmatprep.subr.bf16.mxu0 0
    %4251 = vmatpush1.bf16.msra.mxu0 0
    %4252 = vmatprep.subr.bf16.mxu0 0
    %4253 = vmatpush1.bf16.msra.mxu0 0
    %4254 = vmatprep.mubr.bf16.mxu0 0
    %4255 = vmatmul.mubr.bf16.gmra.mrb[0].mxu0 %v1170
    %v4256 = vpop.f32.mrb[0].mxu0
    %v4257 = vadd.f32 %v4216, %v4256
    %v4258 = vpop.f32.mrb[0].mxu0
    %v4259 = vadd.f32 %v4218, %v4258
    %v4260 = vpop.f32.mrb[0].mxu0
    %v4261 = vpop.f32.mrb[0].mxu0
    %4262 = vdwg.mxu0
    %v4263 = vld [vmem:[#allocation9] sm:$0xff]
    %v4264 = vld [vmem:[#allocation9 + $0x8] sm:$0xff]
    %v4265 = vld [vmem:[#allocation9 + $0x10] sm:$0xff]
    %v4266 = vld [vmem:[#allocation9 + $0x18] sm:$0xff]
    %v4267 = vld [vmem:[#allocation9 + $0x20] sm:$0xff]
    %v4268 = vld [vmem:[#allocation9 + $0x28] sm:$0xff]
    %v4269 = vld [vmem:[#allocation9 + $0x30] sm:$0xff]
    %v4270 = vld [vmem:[#allocation9 + $0x38] sm:$0xff]
    %v4271 = vld [vmem:[#allocation9 + $0x40] sm:$0xff]
    %v4272 = vld [vmem:[#allocation9 + $0x48] sm:$0xff]
    %v4273 = vld [vmem:[#allocation9 + $0x50] sm:$0xff]
    %v4274 = vld [vmem:[#allocation9 + $0x58] sm:$0xff]
    %v4275 = vld [vmem:[#allocation9 + $0x60] sm:$0xff]
    %v4276 = vld [vmem:[#allocation9 + $0x68] sm:$0xff]
    %v4277 = vld [vmem:[#allocation9 + $0x70] sm:$0xff]
    %v4278 = vld [vmem:[#allocation9 + $0x78] sm:$0xff]
    %v4279 = vld [vmem:[#allocation9 + $0x80] sm:$0xff]
    %v4280 = vld [vmem:[#allocation9 + $0x88] sm:$0xff]
    %v4281 = vld [vmem:[#allocation9 + $0x90] sm:$0xff]
    %v4282 = vld [vmem:[#allocation9 + $0x98] sm:$0xff]
    %v4283 = vld [vmem:[#allocation9 + $0xa0] sm:$0xff]
    %v4284 = vld [vmem:[#allocation9 + $0xa8] sm:$0xff]
    %v4285 = vld [vmem:[#allocation9 + $0xb0] sm:$0xff]
    %v4286 = vld [vmem:[#allocation9 + $0xb8] sm:$0xff]
    %v4287 = vld [vmem:[#allocation9 + $0xc0] sm:$0xff]
    %v4288 = vld [vmem:[#allocation9 + $0xc8] sm:$0xff]
    %v4289 = vld [vmem:[#allocation9 + $0xd0] sm:$0xff]
    %v4290 = vld [vmem:[#allocation9 + $0xd8] sm:$0xff]
    %v4291 = vld [vmem:[#allocation9 + $0xe0] sm:$0xff]
    %v4292 = vld [vmem:[#allocation9 + $0xe8] sm:$0xff]
    %v4293 = vld [vmem:[#allocation9 + $0xf0] sm:$0xff]
    %v4294 = vld [vmem:[#allocation9 + $0xf8] sm:$0xff]
    %v4295 = vld [vmem:[#allocation9 + $0x100] sm:$0xff]
    %v4296 = vld [vmem:[#allocation9 + $0x108] sm:$0xff]
    %v4297 = vld [vmem:[#allocation9 + $0x110] sm:$0xff]
    %v4298 = vld [vmem:[#allocation9 + $0x118] sm:$0xff]
    %v4299 = vld [vmem:[#allocation9 + $0x120] sm:$0xff]
    %v4300 = vld [vmem:[#allocation9 + $0x128] sm:$0xff]
    %v4301 = vld [vmem:[#allocation9 + $0x130] sm:$0xff]
    %v4302 = vld [vmem:[#allocation9 + $0x138] sm:$0xff]
    %v4303 = vld [vmem:[#allocation9 + $0x140] sm:$0xff]
    %v4304 = vld [vmem:[#allocation9 + $0x148] sm:$0xff]
    %v4305 = vld [vmem:[#allocation9 + $0x150] sm:$0xff]
    %v4306 = vld [vmem:[#allocation9 + $0x158] sm:$0xff]
    %v4307 = vld [vmem:[#allocation9 + $0x160] sm:$0xff]
    %v4308 = vld [vmem:[#allocation9 + $0x168] sm:$0xff]
    %v4309 = vld [vmem:[#allocation9 + $0x170] sm:$0xff]
    %v4310 = vld [vmem:[#allocation9 + $0x178] sm:$0xff]
    %v4311 = vld [vmem:[#allocation9 + $0x180] sm:$0xff]
    %v4312 = vld [vmem:[#allocation9 + $0x188] sm:$0xff]
    %v4313 = vld [vmem:[#allocation9 + $0x190] sm:$0xff]
    %v4314 = vld [vmem:[#allocation9 + $0x198] sm:$0xff]
    %v4315 = vld [vmem:[#allocation9 + $0x1a0] sm:$0xff]
    %v4316 = vld [vmem:[#allocation9 + $0x1a8] sm:$0xff]
    %v4317 = vld [vmem:[#allocation9 + $0x1b0] sm:$0xff]
    %v4318 = vld [vmem:[#allocation9 + $0x1b8] sm:$0xff]
    %v4319 = vld [vmem:[#allocation9 + $0x1c0] sm:$0xff]
    %v4320 = vld [vmem:[#allocation9 + $0x1c8] sm:$0xff]
    %v4321 = vld [vmem:[#allocation9 + $0x1d0] sm:$0xff]
    %v4322 = vld [vmem:[#allocation9 + $0x1d8] sm:$0xff]
    %v4323 = vld [vmem:[#allocation9 + $0x1e0] sm:$0xff]
    %v4324 = vld [vmem:[#allocation9 + $0x1e8] sm:$0xff]
    %v4325 = vld [vmem:[#allocation9 + $0x1f0] sm:$0xff]
    %v4326 = vld [vmem:[#allocation9 + $0x1f8] sm:$0xff]
    %v4327 = vld [vmem:[#allocation11] sm:$0xff]
    %v4328 = vld [vmem:[#allocation11 + $0x8] sm:$0xff]
    %v4329 = vld [vmem:[#allocation11 + $0x10] sm:$0xff]
    %v4330 = vld [vmem:[#allocation11 + $0x18] sm:$0xff]
    %v4331 = vld [vmem:[#allocation11 + $0x20] sm:$0xff]
    %v4332 = vld [vmem:[#allocation11 + $0x28] sm:$0xff]
    %v4333 = vld [vmem:[#allocation11 + $0x30] sm:$0xff]
    %v4334 = vld [vmem:[#allocation11 + $0x38] sm:$0xff]
    %v4335 = vld [vmem:[#allocation11 + $0x40] sm:$0xff]
    %v4336 = vld [vmem:[#allocation11 + $0x48] sm:$0xff]
    %v4337 = vld [vmem:[#allocation11 + $0x50] sm:$0xff]
    %v4338 = vld [vmem:[#allocation11 + $0x58] sm:$0xff]
    %v4339 = vld [vmem:[#allocation11 + $0x60] sm:$0xff]
    %v4340 = vld [vmem:[#allocation11 + $0x68] sm:$0xff]
    %v4341 = vld [vmem:[#allocation11 + $0x70] sm:$0xff]
    %v4342 = vld [vmem:[#allocation11 + $0x78] sm:$0xff]
    %v4343 = vld [vmem:[#allocation11 + $0x80] sm:$0xff]
    %v4344 = vld [vmem:[#allocation11 + $0x88] sm:$0xff]
    %v4345 = vld [vmem:[#allocation11 + $0x90] sm:$0xff]
    %v4346 = vld [vmem:[#allocation11 + $0x98] sm:$0xff]
    %v4347 = vld [vmem:[#allocation11 + $0xa0] sm:$0xff]
    %v4348 = vld [vmem:[#allocation11 + $0xa8] sm:$0xff]
    %v4349 = vld [vmem:[#allocation11 + $0xb0] sm:$0xff]
    %v4350 = vld [vmem:[#allocation11 + $0xb8] sm:$0xff]
    %v4351 = vld [vmem:[#allocation11 + $0xc0] sm:$0xff]
    %v4352 = vld [vmem:[#allocation11 + $0xc8] sm:$0xff]
    %v4353 = vld [vmem:[#allocation11 + $0xd0] sm:$0xff]
    %v4354 = vld [vmem:[#allocation11 + $0xd8] sm:$0xff]
    %v4355 = vld [vmem:[#allocation11 + $0xe0] sm:$0xff]
    %v4356 = vld [vmem:[#allocation11 + $0xe8] sm:$0xff]
    %v4357 = vld [vmem:[#allocation11 + $0xf0] sm:$0xff]
    %v4358 = vld [vmem:[#allocation11 + $0xf8] sm:$0xff]
    %v4359 = vld [vmem:[#allocation11 + $0x100] sm:$0xff]
    %v4360 = vld [vmem:[#allocation11 + $0x108] sm:$0xff]
    %v4361 = vld [vmem:[#allocation11 + $0x110] sm:$0xff]
    %v4362 = vld [vmem:[#allocation11 + $0x118] sm:$0xff]
    %v4363 = vld [vmem:[#allocation11 + $0x120] sm:$0xff]
    %v4364 = vld [vmem:[#allocation11 + $0x128] sm:$0xff]
    %v4365 = vld [vmem:[#allocation11 + $0x130] sm:$0xff]
    %v4366 = vld [vmem:[#allocation11 + $0x138] sm:$0xff]
    %v4367 = vld [vmem:[#allocation11 + $0x140] sm:$0xff]
    %v4368 = vld [vmem:[#allocation11 + $0x148] sm:$0xff]
    %v4369 = vld [vmem:[#allocation11 + $0x150] sm:$0xff]
    %v4370 = vld [vmem:[#allocation11 + $0x158] sm:$0xff]
    %v4371 = vld [vmem:[#allocation11 + $0x160] sm:$0xff]
    %v4372 = vld [vmem:[#allocation11 + $0x168] sm:$0xff]
    %v4373 = vld [vmem:[#allocation11 + $0x170] sm:$0xff]
    %v4374 = vld [vmem:[#allocation11 + $0x178] sm:$0xff]
    %v4375 = vld [vmem:[#allocation11 + $0x180] sm:$0xff]
    %v4376 = vld [vmem:[#allocation11 + $0x188] sm:$0xff]
    %v4377 = vld [vmem:[#allocation11 + $0x190] sm:$0xff]
    %v4378 = vld [vmem:[#allocation11 + $0x198] sm:$0xff]
    %v4379 = vld [vmem:[#allocation11 + $0x1a0] sm:$0xff]
    %v4380 = vld [vmem:[#allocation11 + $0x1a8] sm:$0xff]
    %v4381 = vld [vmem:[#allocation11 + $0x1b0] sm:$0xff]
    %v4382 = vld [vmem:[#allocation11 + $0x1b8] sm:$0xff]
    %v4383 = vld [vmem:[#allocation11 + $0x1c0] sm:$0xff]
    %v4384 = vld [vmem:[#allocation11 + $0x1c8] sm:$0xff]
    %v4385 = vld [vmem:[#allocation11 + $0x1d0] sm:$0xff]
    %v4386 = vld [vmem:[#allocation11 + $0x1d8] sm:$0xff]
    %v4387 = vld [vmem:[#allocation11 + $0x1e0] sm:$0xff]
    %v4388 = vld [vmem:[#allocation11 + $0x1e8] sm:$0xff]
    %v4389 = vld [vmem:[#allocation11 + $0x1f0] sm:$0xff]
    %v4390 = vld [vmem:[#allocation11 + $0x1f8] sm:$0xff]
    %4391 = vmatprep.subr.mxu0 0.0
    %4392 = vmatpush1.msra.mxu0 %v4327
    %4393 = vmatprep.subr.mxu0 0.0
    %4394 = vmatpush1.msra.mxu0 %v4328
    %4395 = vmatprep.subr.mxu0 0.0
    %4396 = vmatpush1.msra.mxu0 %v4329
    %4397 = vmatprep.subr.mxu0 0.0
    %4398 = vmatpush1.msra.mxu0 %v4330
    %4399 = vmatprep.subr.mxu0 0.0
    %4400 = vmatpush1.msra.mxu0 %v4331
    %4401 = vmatprep.subr.mxu0 0.0
    %4402 = vmatpush1.msra.mxu0 %v4332
    %4403 = vmatprep.subr.mxu0 0.0
    %4404 = vmatpush1.msra.mxu0 %v4333
    %4405 = vmatprep.subr.mxu0 0.0
    %4406 = vmatpush1.msra.mxu0 %v4334
    %4407 = vmatprep.subr.mxu0 0.0
    %4408 = vmatpush1.msra.mxu0 %v4335
    %4409 = vmatprep.subr.mxu0 0.0
    %4410 = vmatpush1.msra.mxu0 %v4336
    %4411 = vmatprep.subr.mxu0 0.0
    %4412 = vmatpush1.msra.mxu0 %v4337
    %4413 = vmatprep.subr.mxu0 0.0
    %4414 = vmatpush1.msra.mxu0 %v4338
    %4415 = vmatprep.subr.mxu0 0.0
    %4416 = vmatpush1.msra.mxu0 %v4339
    %4417 = vmatprep.subr.mxu0 0.0
    %4418 = vmatpush1.msra.mxu0 %v4340
    %4419 = vmatprep.subr.mxu0 0.0
    %4420 = vmatpush1.msra.mxu0 %v4341
    %4421 = vmatprep.subr.mxu0 0.0
    %4422 = vmatpush1.msra.mxu0 %v4342
    %4423 = vmatprep.subr.mxu0 0.0
    %4424 = vmatpush1.msra.mxu0 %v4343
    %4425 = vmatprep.subr.mxu0 0.0
    %4426 = vmatpush1.msra.mxu0 %v4344
    %4427 = vmatprep.subr.mxu0 0.0
    %4428 = vmatpush1.msra.mxu0 %v4345
    %4429 = vmatprep.subr.mxu0 0.0
    %4430 = vmatpush1.msra.mxu0 %v4346
    %4431 = vmatprep.subr.mxu0 0.0
    %4432 = vmatpush1.msra.mxu0 %v4347
    %4433 = vmatprep.subr.mxu0 0.0
    %4434 = vmatpush1.msra.mxu0 %v4348
    %4435 = vmatprep.subr.mxu0 0.0
    %4436 = vmatpush1.msra.mxu0 %v4349
    %4437 = vmatprep.subr.mxu0 0.0
    %4438 = vmatpush1.msra.mxu0 %v4350
    %4439 = vmatprep.subr.mxu0 0.0
    %4440 = vmatpush1.msra.mxu0 %v4351
    %4441 = vmatprep.subr.mxu0 0.0
    %4442 = vmatpush1.msra.mxu0 %v4352
    %4443 = vmatprep.subr.mxu0 0.0
    %4444 = vmatpush1.msra.mxu0 %v4353
    %4445 = vmatprep.subr.mxu0 0.0
    %4446 = vmatpush1.msra.mxu0 %v4354
    %4447 = vmatprep.subr.mxu0 0.0
    %4448 = vmatpush1.msra.mxu0 %v4355
    %4449 = vmatprep.subr.mxu0 0.0
    %4450 = vmatpush1.msra.mxu0 %v4356
    %4451 = vmatprep.subr.mxu0 0.0
    %4452 = vmatpush1.msra.mxu0 %v4357
    %4453 = vmatprep.subr.mxu0 0.0
    %4454 = vmatpush1.msra.mxu0 %v4358
    %4455 = vmatprep.mubr.f32.mxu0 %v1006
    %4456 = vmatmul.mubr.f32.gmra.mrb[0].mxu0 %v1004
    %v4457 = vpop.f32.mrb[0].mxu0
    %v4458 = vadd.f32 0.0, %v4457
    %v4459 = vpop.f32.mrb[0].mxu0
    %4460 = vdwg.mxu0
    %4461 = vmatprep.subr.mxu0 0.0
    %4462 = vmatpush1.msra.mxu0 %v4359
    %4463 = vmatprep.subr.mxu0 0.0
    %4464 = vmatpush1.msra.mxu0 %v4360
    %4465 = vmatprep.subr.mxu0 0.0
    %4466 = vmatpush1.msra.mxu0 %v4361
    %4467 = vmatprep.subr.mxu0 0.0
    %4468 = vmatpush1.msra.mxu0 %v4362
    %4469 = vmatprep.subr.mxu0 0.0
    %4470 = vmatpush1.msra.mxu0 %v4363
    %4471 = vmatprep.subr.mxu0 0.0
    %4472 = vmatpush1.msra.mxu0 %v4364
    %4473 = vmatprep.subr.mxu0 0.0
    %4474 = vmatpush1.msra.mxu0 %v4365
    %4475 = vmatprep.subr.mxu0 0.0
    %4476 = vmatpush1.msra.mxu0 %v4366
    %4477 = vmatprep.subr.mxu0 0.0
    %4478 = vmatpush1.msra.mxu0 %v4367
    %4479 = vmatprep.subr.mxu0 0.0
    %4480 = vmatpush1.msra.mxu0 %v4368
    %4481 = vmatprep.subr.mxu0 0.0
    %4482 = vmatpush1.msra.mxu0 %v4369
    %4483 = vmatprep.subr.mxu0 0.0
    %4484 = vmatpush1.msra.mxu0 %v4370
    %4485 = vmatprep.subr.mxu0 0.0
    %4486 = vmatpush1.msra.mxu0 %v4371
    %4487 = vmatprep.subr.mxu0 0.0
    %4488 = vmatpush1.msra.mxu0 %v4372
    %4489 = vmatprep.subr.mxu0 0.0
    %4490 = vmatpush1.msra.mxu0 %v4373
    %4491 = vmatprep.subr.mxu0 0.0
    %4492 = vmatpush1.msra.mxu0 %v4374
    %4493 = vmatprep.subr.mxu0 0.0
    %4494 = vmatpush1.msra.mxu0 %v4375
    %4495 = vmatprep.subr.mxu0 0.0
    %4496 = vmatpush1.msra.mxu0 %v4376
    %4497 = vmatprep.subr.mxu0 0.0
    %4498 = vmatpush1.msra.mxu0 %v4377
    %4499 = vmatprep.subr.mxu0 0.0
    %4500 = vmatpush1.msra.mxu0 %v4378
    %4501 = vmatprep.subr.mxu0 0.0
    %4502 = vmatpush1.msra.mxu0 %v4379
    %4503 = vmatprep.subr.mxu0 0.0
    %4504 = vmatpush1.msra.mxu0 %v4380
    %4505 = vmatprep.subr.mxu0 0.0
    %4506 = vmatpush1.msra.mxu0 %v4381
    %4507 = vmatprep.subr.mxu0 0.0
    %4508 = vmatpush1.msra.mxu0 %v4382
    %4509 = vmatprep.subr.mxu0 0.0
    %4510 = vmatpush1.msra.mxu0 %v4383
    %4511 = vmatprep.subr.mxu0 0.0
    %4512 = vmatpush1.msra.mxu0 %v4384
    %4513 = vmatprep.subr.mxu0 0.0
    %4514 = vmatpush1.msra.mxu0 %v4385
    %4515 = vmatprep.subr.mxu0 0.0
    %4516 = vmatpush1.msra.mxu0 %v4386
    %4517 = vmatprep.subr.mxu0 0.0
    %4518 = vmatpush1.msra.mxu0 %v4387
    %4519 = vmatprep.subr.mxu0 0.0
    %4520 = vmatpush1.msra.mxu0 %v4388
    %4521 = vmatprep.subr.mxu0 0.0
    %4522 = vmatpush1.msra.mxu0 %v4389
    %4523 = vmatprep.subr.mxu0 0.0
    %4524 = vmatpush1.msra.mxu0 %v4390
    %4525 = vmatprep.mubr.f32.mxu0 %v1077
    %4526 = vmatmul.mubr.f32.gmra.mrb[0].mxu0 %v1075
    %v4527 = vpop.f32.mrb[0].mxu0
    %v4528 = vadd.f32 %v4458, %v4527
    %v4529 = vpop.f32.mrb[0].mxu0
    %4530 = vdwg.mxu0
    %4531 = vmatprep.subr.mxu0 0.0
    %4532 = vmatpush1.msra.mxu0 %v4263
    %4533 = vmatprep.subr.mxu0 0.0
    %4534 = vmatpush1.msra.mxu0 %v4264
    %4535 = vmatprep.subr.mxu0 0.0
    %4536 = vmatpush1.msra.mxu0 %v4265
    %4537 = vmatprep.subr.mxu0 0.0
    %4538 = vmatpush1.msra.mxu0 %v4266
    %4539 = vmatprep.subr.mxu0 0.0
    %4540 = vmatpush1.msra.mxu0 %v4267
    %4541 = vmatprep.subr.mxu0 0.0
    %4542 = vmatpush1.msra.mxu0 %v4268
    %4543 = vmatprep.subr.mxu0 0.0
    %4544 = vmatpush1.msra.mxu0 %v4269
    %4545 = vmatprep.subr.mxu0 0.0
    %4546 = vmatpush1.msra.mxu0 %v4270
    %4547 = vmatprep.subr.mxu0 0.0
    %4548 = vmatpush1.msra.mxu0 %v4271
    %4549 = vmatprep.subr.mxu0 0.0
    %4550 = vmatpush1.msra.mxu0 %v4272
    %4551 = vmatprep.subr.mxu0 0.0
    %4552 = vmatpush1.msra.mxu0 %v4273
    %4553 = vmatprep.subr.mxu0 0.0
    %4554 = vmatpush1.msra.mxu0 %v4274
    %4555 = vmatprep.subr.mxu0 0.0
    %4556 = vmatpush1.msra.mxu0 %v4275
    %4557 = vmatprep.subr.mxu0 0.0
    %4558 = vmatpush1.msra.mxu0 %v4276
    %4559 = vmatprep.subr.mxu0 0.0
    %4560 = vmatpush1.msra.mxu0 %v4277
    %4561 = vmatprep.subr.mxu0 0.0
    %4562 = vmatpush1.msra.mxu0 %v4278
    %4563 = vmatprep.subr.mxu0 0.0
    %4564 = vmatpush1.msra.mxu0 %v4279
    %4565 = vmatprep.subr.mxu0 0.0
    %4566 = vmatpush1.msra.mxu0 %v4280
    %4567 = vmatprep.subr.mxu0 0.0
    %4568 = vmatpush1.msra.mxu0 %v4281
    %4569 = vmatprep.subr.mxu0 0.0
    %4570 = vmatpush1.msra.mxu0 %v4282
    %4571 = vmatprep.subr.mxu0 0.0
    %4572 = vmatpush1.msra.mxu0 %v4283
    %4573 = vmatprep.subr.mxu0 0.0
    %4574 = vmatpush1.msra.mxu0 %v4284
    %4575 = vmatprep.subr.mxu0 0.0
    %4576 = vmatpush1.msra.mxu0 %v4285
    %4577 = vmatprep.subr.mxu0 0.0
    %4578 = vmatpush1.msra.mxu0 %v4286
    %4579 = vmatprep.subr.mxu0 0.0
    %4580 = vmatpush1.msra.mxu0 %v4287
    %4581 = vmatprep.subr.mxu0 0.0
    %4582 = vmatpush1.msra.mxu0 %v4288
    %4583 = vmatprep.subr.mxu0 0.0
    %4584 = vmatpush1.msra.mxu0 %v4289
    %4585 = vmatprep.subr.mxu0 0.0
    %4586 = vmatpush1.msra.mxu0 %v4290
    %4587 = vmatprep.subr.mxu0 0.0
    %4588 = vmatpush1.msra.mxu0 %v4291
    %4589 = vmatprep.subr.mxu0 0.0
    %4590 = vmatpush1.msra.mxu0 %v4292
    %4591 = vmatprep.subr.mxu0 0.0
    %4592 = vmatpush1.msra.mxu0 %v4293
    %4593 = vmatprep.subr.mxu0 0.0
    %4594 = vmatpush1.msra.mxu0 %v4294
    %4595 = vmatprep.mubr.f32.mxu0 %v3972
    %4596 = vmatmul.mubr.f32.gmra.mrb[0].mxu0 %v3970
    %v4597 = vpop.f32.mrb[0].mxu0
    %v4598 = vadd.f32 %v4528, %v4597
    %v4599 = vpop.f32.mrb[0].mxu0
    %4600 = vdwg.mxu0
    %4601 = vmatprep.subr.mxu0 0.0
    %4602 = vmatpush1.msra.mxu0 %v4295
    %4603 = vmatprep.subr.mxu0 0.0
    %4604 = vmatpush1.msra.mxu0 %v4296
    %4605 = vmatprep.subr.mxu0 0.0
    %4606 = vmatpush1.msra.mxu0 %v4297
    %4607 = vmatprep.subr.mxu0 0.0
    %4608 = vmatpush1.msra.mxu0 %v4298
    %4609 = vmatprep.subr.mxu0 0.0
    %4610 = vmatpush1.msra.mxu0 %v4299
    %4611 = vmatprep.subr.mxu0 0.0
    %4612 = vmatpush1.msra.mxu0 %v4300
    %4613 = vmatprep.subr.mxu0 0.0
    %4614 = vmatpush1.msra.mxu0 %v4301
    %4615 = vmatprep.subr.mxu0 0.0
    %4616 = vmatpush1.msra.mxu0 %v4302
    %4617 = vmatprep.subr.mxu0 0.0
    %4618 = vmatpush1.msra.mxu0 %v4303
    %4619 = vmatprep.subr.mxu0 0.0
    %4620 = vmatpush1.msra.mxu0 %v4304
    %4621 = vmatprep.subr.mxu0 0.0
    %4622 = vmatpush1.msra.mxu0 %v4305
    %4623 = vmatprep.subr.mxu0 0.0
    %4624 = vmatpush1.msra.mxu0 %v4306
    %4625 = vmatprep.subr.mxu0 0.0
    %4626 = vmatpush1.msra.mxu0 %v4307
    %4627 = vmatprep.subr.mxu0 0.0
    %4628 = vmatpush1.msra.mxu0 %v4308
    %4629 = vmatprep.subr.mxu0 0.0
    %4630 = vmatpush1.msra.mxu0 %v4309
    %4631 = vmatprep.subr.mxu0 0.0
    %4632 = vmatpush1.msra.mxu0 %v4310
    %4633 = vmatprep.subr.mxu0 0.0
    %4634 = vmatpush1.msra.mxu0 %v4311
    %4635 = vmatprep.subr.mxu0 0.0
    %4636 = vmatpush1.msra.mxu0 %v4312
    %4637 = vmatprep.subr.mxu0 0.0
    %4638 = vmatpush1.msra.mxu0 %v4313
    %4639 = vmatprep.subr.mxu0 0.0
    %4640 = vmatpush1.msra.mxu0 %v4314
    %4641 = vmatprep.subr.mxu0 0.0
    %4642 = vmatpush1.msra.mxu0 %v4315
    %4643 = vmatprep.subr.mxu0 0.0
    %4644 = vmatpush1.msra.mxu0 %v4316
    %4645 = vmatprep.subr.mxu0 0.0
    %4646 = vmatpush1.msra.mxu0 %v4317
    %4647 = vmatprep.subr.mxu0 0.0
    %4648 = vmatpush1.msra.mxu0 %v4318
    %4649 = vmatprep.subr.mxu0 0.0
    %4650 = vmatpush1.msra.mxu0 %v4319
    %4651 = vmatprep.subr.mxu0 0.0
    %4652 = vmatpush1.msra.mxu0 %v4320
    %4653 = vmatprep.subr.mxu0 0.0
    %4654 = vmatpush1.msra.mxu0 %v4321
    %4655 = vmatprep.subr.mxu0 0.0
    %4656 = vmatpush1.msra.mxu0 %v4322
    %4657 = vmatprep.subr.mxu0 0.0
    %4658 = vmatpush1.msra.mxu0 %v4323
    %4659 = vmatprep.subr.mxu0 0.0
    %4660 = vmatpush1.msra.mxu0 %v4324
    %4661 = vmatprep.subr.mxu0 0.0
    %4662 = vmatpush1.msra.mxu0 %v4325
    %4663 = vmatprep.subr.mxu0 0.0
    %4664 = vmatpush1.msra.mxu0 %v4326
    %4665 = vmatprep.mubr.f32.mxu0 %v4259
    %4666 = vmatmul.mubr.f32.gmra.mrb[0].mxu0 %v4257
    %v4667 = vpop.f32.mrb[0].mxu0
    %v4668 = vadd.f32 %v4598, %v4667
    %v4669 = vpop.f32.mrb[0].mxu0
    %4670 = vdwg.mxu0
    %v4671 = vld [vmem:[%s16] sm:$0x1]
    %v4673 = vlaneseq
    %v4674 = vshrl.u32 %v4673, 7
    %v4675 = vsub.s32 0, %v4674
    %v4676 = vrot.slane %v4671, %v4675
    %v4678 = vadd.f32 %v4668, %v4676
    %4679 = vst [vmem:[#allocation12] sm:$0x3] %v4678
    // Predicated region
    $region90: #{bensity_forward.3} parent=1 // pred_check
      _
    $region91: #{bensity_forward.3} parent=1 // pred_check_branch
      %4681 = sbr.rel (0) target = $region93
    $region92: #{bensity_forward.3} parent=1 // pred_region
      %s4683 = ssub.s32 32, 32
      %4684 = vsyncadd [#allocation5], %s4683
      %s4686 = sshll.u32 [#allocation12], 4
      %s4687 = int_to_ptr.vmem [resolvable:$true] %s4686
      %4689 = dma.vmem_to_hbm [thread:$0]  %s4687, 32, %s17, [#allocation5]
    $region93: #{bensity_forward.3} parent=1 // pred_fallthru
      _
    // Predicated region
    $region94: #{bensity_forward.3} parent=1 // pred_check
      _
    $region95: #{bensity_forward.3} parent=1 // pred_check_branch
      %4691 = sbr.rel (0) target = $region97
    $region96: #{bensity_forward.3} parent=1 // pred_region
      %4692 = dma.done [#allocation5], 32
    $region97: #{bensity_forward.3} parent=1 // pred_fallthru
      _
    %4693 = vsyncpa [#allocation4], 1
    %4694 = vsyncpa [#allocation7], 1
    %4695 = vsyncpa [#allocation10], 1
    %4696 = vsyncpa [#allocation5], 1

</llo_original>
